<compile_context>
chip_gen: v7x
topology: tpu7x:2x2x1
jax: 0.10.0
libtpu: 0.0.40
codegen_flags: <defaults>
</compile_context>

<pallas_src>
import functools

import jax
import jax.numpy as jnp
from jax.experimental import pallas as pl
from jax.experimental.pallas import tpu as pltpu


# --------------------------------------------------------------------------
# generation-dependent budgets
# --------------------------------------------------------------------------
@functools.lru_cache(maxsize=None)
def _hw_budget():
    """(vmem_limit_bytes, row_tile_target) derived from the TPU generation."""
    cap = 0
    try:
        info = pltpu.get_tpu_info()
        cap = int(getattr(info, "vmem_capacity_bytes", 0) or 0)
    except Exception:
        cap = 0
    if cap >= 96 * 1024 * 1024:           # v5e / v6e: 128 MiB physical VMEM
        return 96 * 1024 * 1024, 512
    return 44 * 1024 * 1024, 256          # v7x (64 MiB) or unknown: stay conservative


def _pick_row_tile(n):
    """Largest row tile <= target that divides n and keeps sublane alignment."""
    target = _hw_budget()[1]
    if n <= target:
        return n
    for t in range(target, 7, -1):
        if n % t == 0 and t % 8 == 0:
            return t
    return n  # n not a multiple of 8: fall back to one full block (still valid)


def _cparams(n_axes):
    return pltpu.CompilerParams(
        dimension_semantics=("parallel",) * n_axes,
        vmem_limit_bytes=_hw_budget()[0],
    )


# --------------------------------------------------------------------------
# grid-invariant (VMEM-resident) weight specs, single-buffered when supported
# --------------------------------------------------------------------------
def _probe_single_buffered_weights():
    """Compile a tiny kernel with pipeline_mode=pl.Buffered(1) on an invariant block.
    Returns pl.Buffered(1) if it lowers/runs, else None (double-buffered fallback)."""
    try:
        def _k(x_ref, w_ref, o_ref):
            o_ref[...] = x_ref[...] + w_ref[...]

        wspec = pl.BlockSpec((8, 128), lambda i: (0, 0),
                             pipeline_mode=pl.Buffered(1))
        f = pl.pallas_call(
            _k,
            out_shape=jax.ShapeDtypeStruct((16, 128), jnp.float32),
            grid=(2,),
            in_specs=[pl.BlockSpec((8, 128), lambda i: (i, 0)), wspec],
            out_specs=pl.BlockSpec((8, 128), lambda i: (i, 0)),
        )
        jax.block_until_ready(f(jnp.zeros((16, 128), jnp.float32),
                                jnp.ones((8, 128), jnp.float32)))
        return pl.Buffered(1)
    except Exception:
        return None


_WEIGHT_PIPELINE_MODE = _probe_single_buffered_weights()


def _rep(shape):
    """BlockSpec for a grid-invariant (weight/bias) whole array on a 1-D grid."""
    nd = len(shape)
    imap = lambda *i, _nd=nd: (0,) * _nd
    if _WEIGHT_PIPELINE_MODE is not None:
        return pl.BlockSpec(shape, imap, pipeline_mode=_WEIGHT_PIPELINE_MODE)
    return pl.BlockSpec(shape, imap)


# --------------------------------------------------------------------------
# helpers
# --------------------------------------------------------------------------
def _layernorm(x, g, b, eps=1e-5):
    mu = jnp.mean(x, axis=-1, keepdims=True)
    xc = x - mu
    var = jnp.mean(xc * xc, axis=-1, keepdims=True)
    return xc * jax.lax.rsqrt(var + eps) * g + b


def _bf16(x):
    return x.astype(jnp.bfloat16)


# --------------------------------------------------------------------------
# Pallas kernels
# --------------------------------------------------------------------------
def _linear_ln_kernel(x_ref, w_ref, b_ref, g_ref, beta_ref, o_ref):
    """o = LayerNorm(x @ w + b)   (stem: conv1 k=1 fused with layer_norm1)."""
    y = jnp.dot(_bf16(x_ref[...]), _bf16(w_ref[...]),
                preferred_element_type=jnp.float32) + b_ref[...]
    o_ref[...] = _layernorm(y, g_ref[...], beta_ref[...])


def _ln_linear_kernel(x_ref, g_ref, beta_ref, w_ref, b_ref, o_ref):
    """o = LayerNorm(x) @ w + b   (final layer_norm2 fused with vocab head)."""
    y = _layernorm(x_ref[...], g_ref[...], beta_ref[...])
    o_ref[...] = jnp.dot(_bf16(y), _bf16(w_ref[...]),
                         preferred_element_type=jnp.float32) + b_ref[...]


def _attn_ffn_kernel(x_ref, wqkv_ref, bqkv_ref, wo_ref, bo_ref,
                     w1_ref, b1_ref, w2_ref, b2_ref, o_ref, *, num_heads, scale):
    """Per-batch fused:  x1 = x + out_proj(MHA(x,x,x));  o = x1 + FFN1(x1)."""
    x = x_ref[0]                                          # (T, D) f32
    d = x.shape[-1]
    hd = d // num_heads
    qkv = jnp.dot(_bf16(x), _bf16(wqkv_ref[...]),
                  preferred_element_type=jnp.float32) + bqkv_ref[...]
    # fold softmax scale into q: one (T, D) multiply instead of a (T, T) one per head
    q = _bf16(qkv[:, :d] * scale)
    k = _bf16(qkv[:, d:2 * d])
    v = _bf16(qkv[:, 2 * d:])
    wo = _bf16(wo_ref[...])
    attn_out = jnp.zeros_like(x)                          # (T, D) f32 accumulator
    # TODO(synk): flash-style KV-block / query-block tiling for long T (v7x megacore).
    for h in range(num_heads):                            # static unroll over heads
        lo = h * hd
        s = jax.lax.dot_general(q[:, lo:lo + hd], k[:, lo:lo + hd],
                                (((1,), (1,)), ((), ())),
                                preferred_element_type=jnp.float32)       # (T, T)
        s = s - jnp.max(s, axis=-1, keepdims=True)
        p = jnp.exp(s)
        p = p * pl.reciprocal(jnp.sum(p, axis=-1, keepdims=True), approx=True)
        ctx = jnp.dot(_bf16(p), v[:, lo:lo + hd],
                      preferred_element_type=jnp.float32)                 # (T, hd)
        # accumulate out-projection through wo row-slices: no lane-granularity concat
        attn_out = attn_out + jnp.dot(_bf16(ctx), wo[lo:lo + hd, :],
                                      preferred_element_type=jnp.float32)
    x1 = x + attn_out + bo_ref[...]
    # FFN1 + residual fused in (saves one full (B,T,D) HBM round trip)
    h1 = jnp.maximum(jnp.dot(_bf16(x1), _bf16(w1_ref[...]),
                             preferred_element_type=jnp.float32) + b1_ref[...], 0.0)
    o_ref[0] = x1 + jnp.dot(_bf16(h1), _bf16(w2_ref[...]),
                            preferred_element_type=jnp.float32) + b2_ref[...]


def _conv_ln_ffn_kernel(x_ref, wpw_ref, bpw_ref, wk_ref, bk_ref,
                        g_ref, beta_ref, w1_ref, b1_ref, w2_ref, b2_ref,
                        o_ref, *, taps):
    """Per-batch fused conv sub-block + LayerNorm + FFN2 (+ both residuals):
         h    = relu(x @ wpw + bpw)                  (pointwise conv, k=1)
         conv = sum_k h_shift(k) @ wk[k]             (k-tap 'same' conv, per-tap matmuls)
         x2   = x + relu(conv + bk)
         y    = LayerNorm(x2);  o = y + FFN2(y)
    """
    x = x_ref[0]                                          # (T, D)
    t = x.shape[0]
    dmid = wpw_ref.shape[1]                               # 2*D
    dout = wk_ref.shape[1]                                # D
    h = jnp.maximum(jnp.dot(_bf16(x), _bf16(wpw_ref[...]),
                            preferred_element_type=jnp.float32) + bpw_ref[...], 0.0)
    pad = (taps - 1) // 2
    zeros = jnp.zeros((pad, dmid), jnp.float32)
    hp = jnp.concatenate([zeros, h, zeros], axis=0)       # in-VMEM zero halo, (T+taps-1, 2D)
    wk = _bf16(wk_ref[...])                               # (taps*2D, D)
    acc = jnp.zeros((t, dout), jnp.float32)
    for k in range(taps):                                 # per-tap accumulating matmuls
        acc = acc + jnp.dot(_bf16(hp[k:k + t, :]), wk[k * dmid:(k + 1) * dmid, :],
                            preferred_element_type=jnp.float32)
    x2 = x + jnp.maximum(acc + bk_ref[...], 0.0)
    y = _layernorm(x2, g_ref[...], beta_ref[...])
    h2 = jnp.maximum(jnp.dot(_bf16(y), _bf16(w1_ref[...]),
                             preferred_element_type=jnp.float32) + b1_ref[...], 0.0)
    o_ref[0] = y + jnp.dot(_bf16(h2), _bf16(w2_ref[...]),
                           preferred_element_type=jnp.float32) + b2_ref[...]


# --------------------------------------------------------------------------
# pallas_call wrappers
# --------------------------------------------------------------------------
def linear_ln(x, w, b, g, beta):
    n, din = x.shape
    dout = w.shape[1]
    tile = _pick_row_tile(n)
    return pl.pallas_call(
        _linear_ln_kernel,
        out_shape=jax.ShapeDtypeStruct((n, dout), jnp.float32),
        grid=(n // tile,),
        in_specs=[pl.BlockSpec((tile, din), lambda i: (i, 0)),
                  _rep(w.shape), _rep(b.shape), _rep(g.shape), _rep(beta.shape)],
        out_specs=pl.BlockSpec((tile, dout), lambda i: (i, 0)),
        compiler_params=_cparams(1),
    )(x, w, b, g, beta)


def ln_linear(x, g, beta, w, b):
    """LayerNorm + vocab projection; output lane-padded to a multiple of 128 so the
    kernel issues unmasked (lane-dense) stores; padding is sliced off outside."""
    n, d = x.shape
    dout = w.shape[1]
    dpad = ((dout + 127) // 128) * 128
    if dpad != dout:
        w = jnp.pad(w, ((0, 0), (0, dpad - dout)))
        b = jnp.pad(b, ((0, 0), (0, dpad - dout)))
    tile = _pick_row_tile(n)
    out = pl.pallas_call(
        _ln_linear_kernel,
        out_shape=jax.ShapeDtypeStruct((n, dpad), jnp.float32),
        grid=(n // tile,),
        in_specs=[pl.BlockSpec((tile, d), lambda i: (i, 0)),
                  _rep(g.shape), _rep(beta.shape), _rep(w.shape), _rep(b.shape)],
        out_specs=pl.BlockSpec((tile, dpad), lambda i: (i, 0)),
        compiler_params=_cparams(1),
    )(x, g, beta, w, b)
    return out[:, :dout]


def attn_ffn_block(x, wqkv, bqkv, wo, bo, w1, b1, w2, b2, num_heads):
    b, t, d = x.shape
    scale = 1.0 / float((d // num_heads) ** 0.5)
    kern = functools.partial(_attn_ffn_kernel, num_heads=num_heads, scale=scale)
    return pl.pallas_call(
        kern,
        out_shape=jax.ShapeDtypeStruct((b, t, d), jnp.float32),
        grid=(b,),
        in_specs=[pl.BlockSpec((1, t, d), lambda i: (i, 0, 0)),
                  _rep(wqkv.shape), _rep(bqkv.shape), _rep(wo.shape), _rep(bo.shape),
                  _rep(w1.shape), _rep(b1.shape), _rep(w2.shape), _rep(b2.shape)],
        out_specs=pl.BlockSpec((1, t, d), lambda i: (i, 0, 0)),
        compiler_params=_cparams(1),
    )(x, wqkv, bqkv, wo, bo, w1, b1, w2, b2)


def conv_ln_ffn_block(x, wpw, bpw, wk, bk, g, beta, w1, b1, w2, b2, taps):
    b, t, d = x.shape
    kern = functools.partial(_conv_ln_ffn_kernel, taps=taps)
    return pl.pallas_call(
        kern,
        out_shape=jax.ShapeDtypeStruct((b, t, d), jnp.float32),
        grid=(b,),
        in_specs=[pl.BlockSpec((1, t, d), lambda i: (i, 0, 0)),
                  _rep(wpw.shape), _rep(bpw.shape), _rep(wk.shape), _rep(bk.shape),
                  _rep(g.shape), _rep(beta.shape),
                  _rep(w1.shape), _rep(b1.shape), _rep(w2.shape), _rep(b2.shape)],
        out_specs=pl.BlockSpec((1, t, d), lambda i: (i, 0, 0)),
        compiler_params=_cparams(1),
    )(x, wpw, bpw, wk, bk, g, beta, w1, b1, w2, b2)


# --------------------------------------------------------------------------
# parameters (deterministic synthetic init; weights pre-transposed so every
# kernel computes x @ W; k=5 conv weight pre-flattened to (K*Cin, Cout))
# --------------------------------------------------------------------------
def init_params(key, n_mels, d, vocab, n_blocks=5, conv_k=5):
    keys = iter(jax.random.split(key, 16 + 16 * n_blocks))

    def nrm(shape, scale=0.05):
        return scale * jax.random.normal(next(keys), shape, jnp.float32)

    p = {
        "conv1_w": nrm((n_mels, d)),
        "conv1_b": nrm((1, d)),
        "ln1_g": jnp.ones((1, d), jnp.float32),
        "ln1_b": jnp.zeros((1, d), jnp.float32),
        "ln2_g": jnp.ones((1, d), jnp.float32),
        "ln2_b": jnp.zeros((1, d), jnp.float32),
        "out_w": nrm((d, vocab)),
        "out_b": nrm((1, vocab)),
        "blocks": [],
    }
    for _ in range(n_blocks):
        blk = {
            # MultiheadAttention in/out projections
            "in_w": nrm((d, 3 * d)),
            "in_b": nrm((1, 3 * d)),
            "out_w": nrm((d, d)),
            "out_b": nrm((1, d)),
            # FeedForwardModule 1
            "ff1_w1": nrm((d, 4 * d)),
            "ff1_b1": nrm((1, 4 * d)),
            "ff1_w2": nrm((4 * d, d)),
            "ff1_b2": nrm((1, d)),
            # conv block: pointwise (k=1) conv, then k=5 conv (flattened (K*Cin, Cout))
            "cpw_w": nrm((d, 2 * d)),
            "cpw_b": nrm((1, 2 * d)),
            "ck5_w": nrm((conv_k, 2 * d, d)).reshape(conv_k * 2 * d, d),
            "ck5_b": nrm((1, d)),
            # internal LayerNorm
            "ln_g": jnp.ones((1, d), jnp.float32),
            "ln_b": jnp.zeros((1, d), jnp.float32),
            # FeedForwardModule 2
            "ff2_w1": nrm((d, 4 * d)),
            "ff2_b1": nrm((1, 4 * d)),
            "ff2_w2": nrm((4 * d, d)),
            "ff2_b2": nrm((1, d)),
        }
        p["blocks"].append(blk)
    return p


# --------------------------------------------------------------------------
# forward pass (single (B, T, D) layout; one transpose at the very end)
# --------------------------------------------------------------------------
def conformer_block(x, p, num_heads, conv_k=5):
    # attention + out-proj + residual + FFN1 + residual — one fused kernel per batch
    x = attn_ffn_block(x, p["in_w"], p["in_b"], p["out_w"], p["out_b"],
                       p["ff1_w1"], p["ff1_b1"], p["ff1_w2"], p["ff1_b2"], num_heads)
    # pointwise conv + k=5 conv + residual + LayerNorm + FFN2 + residual — fused
    x = conv_ln_ffn_block(x, p["cpw_w"], p["cpw_b"], p["ck5_w"], p["ck5_b"],
                          p["ln_g"], p["ln_b"],
                          p["ff2_w1"], p["ff2_b1"], p["ff2_w2"], p["ff2_b2"], conv_k)
    return x


def asr_forward(x, params, num_heads=8):
    # x: (B, n_mels, T) — PyTorch Conv1d NCW input
    b, n_mels, t = x.shape
    d = params["conv1_w"].shape[1]
    # stem: conv1 (kernel size 1) == per-frame linear over mels, fused with layer_norm1
    xm = x.transpose(0, 2, 1).reshape(b * t, n_mels)
    h = linear_ln(xm, params["conv1_w"], params["conv1_b"],
                  params["ln1_g"], params["ln1_b"]).reshape(b, t, d)
    for blk in params["blocks"]:
        h = conformer_block(h, blk, num_heads)
    # head: layer_norm2 + vocab projection (lane-padded internally), fused
    logits = ln_linear(h.reshape(b * t, d), params["ln2_g"], params["ln2_b"],
                       params["out_w"], params["out_b"])
    vocab = params["out_w"].shape[1]
    # back to PyTorch's (T, B, vocab) output layout
    return logits.reshape(b, t, vocab).transpose(1, 0, 2)


# --------------------------------------------------------------------------
if __name__ == "__main__":
    B, N_MELS, T = 2, 8, 16
    HIDDEN, HEADS, VOCAB = 128, 8, 16   # hidden divisible by 8 heads (head_dim = 16)

    key = jax.random.PRNGKey(0)
    kx, kp = jax.random.split(key)
    x = jax.random.normal(kx, (B, N_MELS, T), jnp.float32)
    params = init_params(kp, N_MELS, HIDDEN, VOCAB)

    out = jax.jit(lambda inp: asr_forward(inp, params, HEADS))(x)
    out = jax.block_until_ready(out)

    assert out.shape == (T, B, VOCAB), out.shape
    assert bool(jnp.all(jnp.isfinite(out)))
    print("KERNEL_OK")
</pallas_src>

<mosaic_0001>
module attributes {stable_mosaic.version = 11 : i64} {
  func.func @_k(%arg0: i32, %arg1: memref<8x128xf32, #tpu.memory_space<vmem>>, %arg2: memref<8x128xf32, #tpu.memory_space<vmem>>, %arg3: memref<8x128xf32, #tpu.memory_space<vmem>>) attributes {dimension_semantics = [#tpu.dimension_semantics<arbitrary>], iteration_bounds = array<i64: 2>, scalar_prefetch = 0 : i64, scratch_operands = 0 : i64, tpu.core_type = #tpu.core_type<tc>, window_params = [{transform_indices = @transform_0, window_bounds = array<i64: 8, 128>}, {pipeline_mode = #tpu.pipeline_mode<synchronous>, transform_indices = @transform_1, window_bounds = array<i64: 8, 128>}, {transform_indices = @transform_2, window_bounds = array<i64: 8, 128>}]} {
    %c0 = arith.constant 0 : index
    %c0_0 = arith.constant 0 : index
    %0 = vector.load %arg1[%c0, %c0_0] : memref<8x128xf32, #tpu.memory_space<vmem>>, vector<8x128xf32>
    %c0_1 = arith.constant 0 : index
    %c0_2 = arith.constant 0 : index
    %1 = vector.load %arg2[%c0_1, %c0_2] : memref<8x128xf32, #tpu.memory_space<vmem>>, vector<8x128xf32>
    %2 = arith.addf %0, %1 : vector<8x128xf32>
    %c0_3 = arith.constant 0 : index
    %c0_4 = arith.constant 0 : index
    %3 = vector.load %arg3[%c0_3, %c0_4] : memref<8x128xf32, #tpu.memory_space<vmem>>, vector<8x128xf32>
    tpu.vector_store %arg3[%c0_3, %c0_4], %2 {strides = array<i32>} : memref<8x128xf32, #tpu.memory_space<vmem>>, vector<8x128xf32>,
    return
  }
  func.func @transform_0(%arg0: i32) -> (i32, i32) {
    %c0_i32 = arith.constant 0 : i32
    %c0_i32_0 = arith.constant 0 : i32
    return %arg0, %c0_i32 : i32, i32
  }
  func.func @transform_1(%arg0: i32) -> (i32, i32) {
    %c0_i32 = arith.constant 0 : i32
    %c0_i32_0 = arith.constant 0 : i32
    %c0_i32_1 = arith.constant 0 : i32
    return %c0_i32, %c0_i32_0 : i32, i32
  }
  func.func @transform_2(%arg0: i32) -> (i32, i32) {
    %c0_i32 = arith.constant 0 : i32
    %c0_i32_0 = arith.constant 0 : i32
    return %arg0, %c0_i32 : i32, i32
  }
}

module attributes {stable_mosaic.version = 11 : i64} {
  func.func @_attn_ffn_kernel(%arg0: i32, %arg1: memref<1x16x128xf32, #tpu.memory_space<vmem>>, %arg2: memref<128x384xf32, #tpu.memory_space<vmem>>, %arg3: memref<1x384xf32, #tpu.memory_space<vmem>>, %arg4: memref<128x128xf32, #tpu.memory_space<vmem>>, %arg5: memref<1x128xf32, #tpu.memory_space<vmem>>, %arg6: memref<128x512xf32, #tpu.memory_space<vmem>>, %arg7: memref<1x512xf32, #tpu.memory_space<vmem>>, %arg8: memref<512x128xf32, #tpu.memory_space<vmem>>, %arg9: memref<1x128xf32, #tpu.memory_space<vmem>>, %arg10: memref<1x16x128xf32, #tpu.memory_space<vmem>>) attributes {dimension_semantics = [#tpu.dimension_semantics<parallel>], iteration_bounds = array<i64: 2>, scalar_prefetch = 0 : i64, scratch_operands = 0 : i64, tpu.core_type = #tpu.core_type<tc>, window_params = [{transform_indices = @transform_0, window_bounds = array<i64: 1, 16, 128>}, {pipeline_mode = #tpu.pipeline_mode<synchronous>, transform_indices = @transform_1, window_bounds = array<i64: 128, 384>}, {pipeline_mode = #tpu.pipeline_mode<synchronous>, transform_indices = @transform_2, window_bounds = array<i64: 1, 384>}, {pipeline_mode = #tpu.pipeline_mode<synchronous>, transform_indices = @transform_3, window_bounds = array<i64: 128, 128>}, {pipeline_mode = #tpu.pipeline_mode<synchronous>, transform_indices = @transform_4, window_bounds = array<i64: 1, 128>}, {pipeline_mode = #tpu.pipeline_mode<synchronous>, transform_indices = @transform_5, window_bounds = array<i64: 128, 512>}, {pipeline_mode = #tpu.pipeline_mode<synchronous>, transform_indices = @transform_6, window_bounds = array<i64: 1, 512>}, {pipeline_mode = #tpu.pipeline_mode<synchronous>, transform_indices = @transform_7, window_bounds = array<i64: 512, 128>}, {pipeline_mode = #tpu.pipeline_mode<synchronous>, transform_indices = @transform_8, window_bounds = array<i64: 1, 128>}, {transform_indices = @transform_9, window_bounds = array<i64: 1, 16, 128>}]} {
    %c0 = arith.constant 0 : index
    %c0_0 = arith.constant 0 : index
    %c0_1 = arith.constant 0 : index
    %0 = vector.load %arg1[%c0, %c0_0, %c0_1] : memref<1x16x128xf32, #tpu.memory_space<vmem>>, vector<1x16x128xf32>
    %1 = vector.shape_cast %0 : vector<1x16x128xf32> to vector<16x128xf32>
    %2 = arith.truncf %1 : vector<16x128xf32> to vector<16x128xbf16>
    %c0_2 = arith.constant 0 : index
    %c0_3 = arith.constant 0 : index
    %3 = vector.load %arg2[%c0_2, %c0_3] : memref<128x384xf32, #tpu.memory_space<vmem>>, vector<128x384xf32>
    %4 = arith.truncf %3 : vector<128x384xf32> to vector<128x384xbf16>
    %cst = arith.constant dense<0.000000e+00> : vector<16x384xf32>
    %5 = tpu.matmul %2, %4, %cst {dimension_numbers = #tpu.dot_dimension_numbers<[1], [0], [0], [1], [0, 0, 1, 1], [], []>} : vector<16x128xbf16>, vector<128x384xbf16>, vector<16x384xf32> -> vector<16x384xf32>
    %c0_4 = arith.constant 0 : index
    %c0_5 = arith.constant 0 : index
    %6 = vector.load %arg3[%c0_4, %c0_5] : memref<1x384xf32, #tpu.memory_space<vmem>>, vector<1x384xf32>
    %7 = vector.broadcast %6 : vector<1x384xf32> to vector<16x384xf32>
    %8 = arith.addf %5, %7 : vector<16x384xf32>
    %9 = vector.extract_strided_slice %8 {offsets = [0, 0], sizes = [16, 128], strides = [1, 1]} : vector<16x384xf32> to vector<16x128xf32>
    %cst_6 = arith.constant 2.500000e-01 : f32
    %10 = vector.broadcast %cst_6 : f32 to vector<16x128xf32>
    %11 = arith.mulf %9, %10 : vector<16x128xf32>
    %12 = arith.truncf %11 : vector<16x128xf32> to vector<16x128xbf16>
    %13 = vector.extract_strided_slice %8 {offsets = [0, 128], sizes = [16, 128], strides = [1, 1]} : vector<16x384xf32> to vector<16x128xf32>
    %14 = arith.truncf %13 : vector<16x128xf32> to vector<16x128xbf16>
    %15 = vector.extract_strided_slice %8 {offsets = [0, 256], sizes = [16, 128], strides = [1, 1]} : vector<16x384xf32> to vector<16x128xf32>
    %16 = arith.truncf %15 : vector<16x128xf32> to vector<16x128xbf16>
    %c0_7 = arith.constant 0 : index
    %c0_8 = arith.constant 0 : index
    %17 = vector.load %arg4[%c0_7, %c0_8] : memref<128x128xf32, #tpu.memory_space<vmem>>, vector<128x128xf32>
    %18 = arith.truncf %17 : vector<128x128xf32> to vector<128x128xbf16>
    %cst_9 = arith.constant 0.000000e+00 : f32
    %19 = vector.broadcast %cst_9 : f32 to vector<16x128xf32>
    %20 = vector.extract_strided_slice %12 {offsets = [0, 0], sizes = [16, 16], strides = [1, 1]} : vector<16x128xbf16> to vector<16x16xbf16>
    %21 = vector.extract_strided_slice %14 {offsets = [0, 0], sizes = [16, 16], strides = [1, 1]} : vector<16x128xbf16> to vector<16x16xbf16>
    %cst_10 = arith.constant dense<0.000000e+00> : vector<16x16xf32>
    %22 = tpu.matmul %20, %21, %cst_10 {dimension_numbers = #tpu.dot_dimension_numbers<[1], [1], [0], [0], [0, 0, 1, 0], [], []>} : vector<16x16xbf16>, vector<16x16xbf16>, vector<16x16xf32> -> vector<16x16xf32>
    %cst_11 = arith.constant dense<0xFF800000> : vector<16xf32>
    %23 = vector.multi_reduction <maximumf>, %22, %cst_11 [1] : vector<16x16xf32> to vector<16xf32>
    %24 = vector.shape_cast %23 : vector<16xf32> to vector<16x1xf32>
    %25 = vector.broadcast %24 : vector<16x1xf32> to vector<16x16xf32>
    %26 = arith.subf %22, %25 : vector<16x16xf32>
    %27 = math.exp %26 : vector<16x16xf32>
    %cst_12 = arith.constant dense<0.000000e+00> : vector<16xf32>
    %28 = vector.multi_reduction <add>, %27, %cst_12 [1] : vector<16x16xf32> to vector<16xf32>
    %29 = vector.shape_cast %28 : vector<16xf32> to vector<16x1xf32>
    %30 = tpu.reciprocal %29 {approx = true} : vector<16x1xf32> -> vector<16x1xf32>
    %31 = vector.broadcast %30 : vector<16x1xf32> to vector<16x16xf32>
    %32 = arith.mulf %27, %31 : vector<16x16xf32>
    %33 = arith.truncf %32 : vector<16x16xf32> to vector<16x16xbf16>
    %34 = vector.extract_strided_slice %16 {offsets = [0, 0], sizes = [16, 16], strides = [1, 1]} : vector<16x128xbf16> to vector<16x16xbf16>
    %cst_13 = arith.constant dense<0.000000e+00> : vector<16x16xf32>
    %35 = tpu.matmul %33, %34, %cst_13 {dimension_numbers = #tpu.dot_dimension_numbers<[1], [0], [0], [1], [0, 0, 1, 1], [], []>} : vector<16x16xbf16>, vector<16x16xbf16>, vector<16x16xf32> -> vector<16x16xf32>
    %36 = arith.truncf %35 : vector<16x16xf32> to vector<16x16xbf16>
    %37 = vector.extract_strided_slice %18 {offsets = [0, 0], sizes = [16, 128], strides = [1, 1]} : vector<128x128xbf16> to vector<16x128xbf16>
    %cst_14 = arith.constant dense<0.000000e+00> : vector<16x128xf32>
    %38 = tpu.matmul %36, %37, %cst_14 {dimension_numbers = #tpu.dot_dimension_numbers<[1], [0], [0], [1], [0, 0, 1, 1], [], []>} : vector<16x16xbf16>, vector<16x128xbf16>, vector<16x128xf32> -> vector<16x128xf32>
    %39 = arith.addf %19, %38 : vector<16x128xf32>
    %40 = vector.extract_strided_slice %12 {offsets = [0, 16], sizes = [16, 16], strides = [1, 1]} : vector<16x128xbf16> to vector<16x16xbf16>
    %41 = vector.extract_strided_slice %14 {offsets = [0, 16], sizes = [16, 16], strides = [1, 1]} : vector<16x128xbf16> to vector<16x16xbf16>
    %cst_15 = arith.constant dense<0.000000e+00> : vector<16x16xf32>
    %42 = tpu.matmul %40, %41, %cst_15 {dimension_numbers = #tpu.dot_dimension_numbers<[1], [1], [0], [0], [0, 0, 1, 0], [], []>} : vector<16x16xbf16>, vector<16x16xbf16>, vector<16x16xf32> -> vector<16x16xf32>
    %cst_16 = arith.constant dense<0xFF800000> : vector<16xf32>
    %43 = vector.multi_reduction <maximumf>, %42, %cst_16 [1] : vector<16x16xf32> to vector<16xf32>
    %44 = vector.shape_cast %43 : vector<16xf32> to vector<16x1xf32>
    %45 = vector.broadcast %44 : vector<16x1xf32> to vector<16x16xf32>
    %46 = arith.subf %42, %45 : vector<16x16xf32>
    %47 = math.exp %46 : vector<16x16xf32>
    %cst_17 = arith.constant dense<0.000000e+00> : vector<16xf32>
    %48 = vector.multi_reduction <add>, %47, %cst_17 [1] : vector<16x16xf32> to vector<16xf32>
    %49 = vector.shape_cast %48 : vector<16xf32> to vector<16x1xf32>
    %50 = tpu.reciprocal %49 {approx = true} : vector<16x1xf32> -> vector<16x1xf32>
    %51 = vector.broadcast %50 : vector<16x1xf32> to vector<16x16xf32>
    %52 = arith.mulf %47, %51 : vector<16x16xf32>
    %53 = arith.truncf %52 : vector<16x16xf32> to vector<16x16xbf16>
    %54 = vector.extract_strided_slice %16 {offsets = [0, 16], sizes = [16, 16], strides = [1, 1]} : vector<16x128xbf16> to vector<16x16xbf16>
    %cst_18 = arith.constant dense<0.000000e+00> : vector<16x16xf32>
    %55 = tpu.matmul %53, %54, %cst_18 {dimension_numbers = #tpu.dot_dimension_numbers<[1], [0], [0], [1], [0, 0, 1, 1], [], []>} : vector<16x16xbf16>, vector<16x16xbf16>, vector<16x16xf32> -> vector<16x16xf32>
    %56 = arith.truncf %55 : vector<16x16xf32> to vector<16x16xbf16>
    %57 = vector.extract_strided_slice %18 {offsets = [16, 0], sizes = [16, 128], strides = [1, 1]} : vector<128x128xbf16> to vector<16x128xbf16>
    %cst_19 = arith.constant dense<0.000000e+00> : vector<16x128xf32>
    %58 = tpu.matmul %56, %57, %cst_19 {dimension_numbers = #tpu.dot_dimension_numbers<[1], [0], [0], [1], [0, 0, 1, 1], [], []>} : vector<16x16xbf16>, vector<16x128xbf16>, vector<16x128xf32> -> vector<16x128xf32>
    %59 = arith.addf %39, %58 : vector<16x128xf32>
    %60 = vector.extract_strided_slice %12 {offsets = [0, 32], sizes = [16, 16], strides = [1, 1]} : vector<16x128xbf16> to vector<16x16xbf16>
    %61 = vector.extract_strided_slice %14 {offsets = [0, 32], sizes = [16, 16], strides = [1, 1]} : vector<16x128xbf16> to vector<16x16xbf16>
    %cst_20 = arith.constant dense<0.000000e+00> : vector<16x16xf32>
    %62 = tpu.matmul %60, %61, %cst_20 {dimension_numbers = #tpu.dot_dimension_numbers<[1], [1], [0], [0], [0, 0, 1, 0], [], []>} : vector<16x16xbf16>, vector<16x16xbf16>, vector<16x16xf32> -> vector<16x16xf32>
    %cst_21 = arith.constant dense<0xFF800000> : vector<16xf32>
    %63 = vector.multi_reduction <maximumf>, %62, %cst_21 [1] : vector<16x16xf32> to vector<16xf32>
    %64 = vector.shape_cast %63 : vector<16xf32> to vector<16x1xf32>
    %65 = vector.broadcast %64 : vector<16x1xf32> to vector<16x16xf32>
    %66 = arith.subf %62, %65 : vector<16x16xf32>
    %67 = math.exp %66 : vector<16x16xf32>
    %cst_22 = arith.constant dense<0.000000e+00> : vector<16xf32>
    %68 = vector.multi_reduction <add>, %67, %cst_22 [1] : vector<16x16xf32> to vector<16xf32>
    %69 = vector.shape_cast %68 : vector<16xf32> to vector<16x1xf32>
    %70 = tpu.reciprocal %69 {approx = true} : vector<16x1xf32> -> vector<16x1xf32>
    %71 = vector.broadcast %70 : vector<16x1xf32> to vector<16x16xf32>
    %72 = arith.mulf %67, %71 : vector<16x16xf32>
    %73 = arith.truncf %72 : vector<16x16xf32> to vector<16x16xbf16>
    %74 = vector.extract_strided_slice %16 {offsets = [0, 32], sizes = [16, 16], strides = [1, 1]} : vector<16x128xbf16> to vector<16x16xbf16>
    %cst_23 = arith.constant dense<0.000000e+00> : vector<16x16xf32>
    %75 = tpu.matmul %73, %74, %cst_23 {dimension_numbers = #tpu.dot_dimension_numbers<[1], [0], [0], [1], [0, 0, 1, 1], [], []>} : vector<16x16xbf16>, vector<16x16xbf16>, vector<16x16xf32> -> vector<16x16xf32>
    %76 = arith.truncf %75 : vector<16x16xf32> to vector<16x16xbf16>
    %77 = vector.extract_strided_slice %18 {offsets = [32, 0], sizes = [16, 128], strides = [1, 1]} : vector<128x128xbf16> to vector<16x128xbf16>
    %cst_24 = arith.constant dense<0.000000e+00> : vector<16x128xf32>
    %78 = tpu.matmul %76, %77, %cst_24 {dimension_numbers = #tpu.dot_dimension_numbers<[1], [0], [0], [1], [0, 0, 1, 1], [], []>} : vector<16x16xbf16>, vector<16x128xbf16>, vector<16x128xf32> -> vector<16x128xf32>
    %79 = arith.addf %59, %78 : vector<16x128xf32>
    %80 = vector.extract_strided_slice %12 {offsets = [0, 48], sizes = [16, 16], strides = [1, 1]} : vector<16x128xbf16> to vector<16x16xbf16>
    %81 = vector.extract_strided_slice %14 {offsets = [0, 48], sizes = [16, 16], strides = [1, 1]} : vector<16x128xbf16> to vector<16x16xbf16>
    %cst_25 = arith.constant dense<0.000000e+00> : vector<16x16xf32>
    %82 = tpu.matmul %80, %81, %cst_25 {dimension_numbers = #tpu.dot_dimension_numbers<[1], [1], [0], [0], [0, 0, 1, 0], [], []>} : vector<16x16xbf16>, vector<16x16xbf16>, vector<16x16xf32> -> vector<16x16xf32>
    %cst_26 = arith.constant dense<0xFF800000> : vector<16xf32>
    %83 = vector.multi_reduction <maximumf>, %82, %cst_26 [1] : vector<16x16xf32> to vector<16xf32>
    %84 = vector.shape_cast %83 : vector<16xf32> to vector<16x1xf32>
    %85 = vector.broadcast %84 : vector<16x1xf32> to vector<16x16xf32>
    %86 = arith.subf %82, %85 : vector<16x16xf32>
    %87 = math.exp %86 : vector<16x16xf32>
    %cst_27 = arith.constant dense<0.000000e+00> : vector<16xf32>
    %88 = vector.multi_reduction <add>, %87, %cst_27 [1] : vector<16x16xf32> to vector<16xf32>
    %89 = vector.shape_cast %88 : vector<16xf32> to vector<16x1xf32>
    %90 = tpu.reciprocal %89 {approx = true} : vector<16x1xf32> -> vector<16x1xf32>
    %91 = vector.broadcast %90 : vector<16x1xf32> to vector<16x16xf32>
    %92 = arith.mulf %87, %91 : vector<16x16xf32>
    %93 = arith.truncf %92 : vector<16x16xf32> to vector<16x16xbf16>
    %94 = vector.extract_strided_slice %16 {offsets = [0, 48], sizes = [16, 16], strides = [1, 1]} : vector<16x128xbf16> to vector<16x16xbf16>
    %cst_28 = arith.constant dense<0.000000e+00> : vector<16x16xf32>
    %95 = tpu.matmul %93, %94, %cst_28 {dimension_numbers = #tpu.dot_dimension_numbers<[1], [0], [0], [1], [0, 0, 1, 1], [], []>} : vector<16x16xbf16>, vector<16x16xbf16>, vector<16x16xf32> -> vector<16x16xf32>
    %96 = arith.truncf %95 : vector<16x16xf32> to vector<16x16xbf16>
    %97 = vector.extract_strided_slice %18 {offsets = [48, 0], sizes = [16, 128], strides = [1, 1]} : vector<128x128xbf16> to vector<16x128xbf16>
    %cst_29 = arith.constant dense<0.000000e+00> : vector<16x128xf32>
    %98 = tpu.matmul %96, %97, %cst_29 {dimension_numbers = #tpu.dot_dimension_numbers<[1], [0], [0], [1], [0, 0, 1, 1], [], []>} : vector<16x16xbf16>, vector<16x128xbf16>, vector<16x128xf32> -> vector<16x128xf32>
    %99 = arith.addf %79, %98 : vector<16x128xf32>
    %100 = vector.extract_strided_slice %12 {offsets = [0, 64], sizes = [16, 16], strides = [1, 1]} : vector<16x128xbf16> to vector<16x16xbf16>
    %101 = vector.extract_strided_slice %14 {offsets = [0, 64], sizes = [16, 16], strides = [1, 1]} : vector<16x128xbf16> to vector<16x16xbf16>
    %cst_30 = arith.constant dense<0.000000e+00> : vector<16x16xf32>
    %102 = tpu.matmul %100, %101, %cst_30 {dimension_numbers = #tpu.dot_dimension_numbers<[1], [1], [0], [0], [0, 0, 1, 0], [], []>} : vector<16x16xbf16>, vector<16x16xbf16>, vector<16x16xf32> -> vector<16x16xf32>
    %cst_31 = arith.constant dense<0xFF800000> : vector<16xf32>
    %103 = vector.multi_reduction <maximumf>, %102, %cst_31 [1] : vector<16x16xf32> to vector<16xf32>
    %104 = vector.shape_cast %103 : vector<16xf32> to vector<16x1xf32>
    %105 = vector.broadcast %104 : vector<16x1xf32> to vector<16x16xf32>
    %106 = arith.subf %102, %105 : vector<16x16xf32>
    %107 = math.exp %106 : vector<16x16xf32>
    %cst_32 = arith.constant dense<0.000000e+00> : vector<16xf32>
    %108 = vector.multi_reduction <add>, %107, %cst_32 [1] : vector<16x16xf32> to vector<16xf32>
    %109 = vector.shape_cast %108 : vector<16xf32> to vector<16x1xf32>
    %110 = tpu.reciprocal %109 {approx = true} : vector<16x1xf32> -> vector<16x1xf32>
    %111 = vector.broadcast %110 : vector<16x1xf32> to vector<16x16xf32>
    %112 = arith.mulf %107, %111 : vector<16x16xf32>
    %113 = arith.truncf %112 : vector<16x16xf32> to vector<16x16xbf16>
    %114 = vector.extract_strided_slice %16 {offsets = [0, 64], sizes = [16, 16], strides = [1, 1]} : vector<16x128xbf16> to vector<16x16xbf16>
    %cst_33 = arith.constant dense<0.000000e+00> : vector<16x16xf32>
    %115 = tpu.matmul %113, %114, %cst_33 {dimension_numbers = #tpu.dot_dimension_numbers<[1], [0], [0], [1], [0, 0, 1, 1], [], []>} : vector<16x16xbf16>, vector<16x16xbf16>, vector<16x16xf32> -> vector<16x16xf32>
    %116 = arith.truncf %115 : vector<16x16xf32> to vector<16x16xbf16>
    %117 = vector.extract_strided_slice %18 {offsets = [64, 0], sizes = [16, 128], strides = [1, 1]} : vector<128x128xbf16> to vector<16x128xbf16>
    %cst_34 = arith.constant dense<0.000000e+00> : vector<16x128xf32>
    %118 = tpu.matmul %116, %117, %cst_34 {dimension_numbers = #tpu.dot_dimension_numbers<[1], [0], [0], [1], [0, 0, 1, 1], [], []>} : vector<16x16xbf16>, vector<16x128xbf16>, vector<16x128xf32> -> vector<16x128xf32>
    %119 = arith.addf %99, %118 : vector<16x128xf32>
    %120 = vector.extract_strided_slice %12 {offsets = [0, 80], sizes = [16, 16], strides = [1, 1]} : vector<16x128xbf16> to vector<16x16xbf16>
    %121 = vector.extract_strided_slice %14 {offsets = [0, 80], sizes = [16, 16], strides = [1, 1]} : vector<16x128xbf16> to vector<16x16xbf16>
    %cst_35 = arith.constant dense<0.000000e+00> : vector<16x16xf32>
    %122 = tpu.matmul %120, %121, %cst_35 {dimension_numbers = #tpu.dot_dimension_numbers<[1], [1], [0], [0], [0, 0, 1, 0], [], []>} : vector<16x16xbf16>, vector<16x16xbf16>, vector<16x16xf32> -> vector<16x16xf32>
    %cst_36 = arith.constant dense<0xFF800000> : vector<16xf32>
    %123 = vector.multi_reduction <maximumf>, %122, %cst_36 [1] : vector<16x16xf32> to vector<16xf32>
    %124 = vector.shape_cast %123 : vector<16xf32> to vector<16x1xf32>
    %125 = vector.broadcast %124 : vector<16x1xf32> to vector<16x16xf32>
    %126 = arith.subf %122, %125 : vector<16x16xf32>
    %127 = math.exp %126 : vector<16x16xf32>
    %cst_37 = arith.constant dense<0.000000e+00> : vector<16xf32>
    %128 = vector.multi_reduction <add>, %127, %cst_37 [1] : vector<16x16xf32> to vector<16xf32>
    %129 = vector.shape_cast %128 : vector<16xf32> to vector<16x1xf32>
    %130 = tpu.reciprocal %129 {approx = true} : vector<16x1xf32> -> vector<16x1xf32>
    %131 = vector.broadcast %130 : vector<16x1xf32> to vector<16x16xf32>
    %132 = arith.mulf %127, %131 : vector<16x16xf32>
    %133 = arith.truncf %132 : vector<16x16xf32> to vector<16x16xbf16>
    %134 = vector.extract_strided_slice %16 {offsets = [0, 80], sizes = [16, 16], strides = [1, 1]} : vector<16x128xbf16> to vector<16x16xbf16>
    %cst_38 = arith.constant dense<0.000000e+00> : vector<16x16xf32>
    %135 = tpu.matmul %133, %134, %cst_38 {dimension_numbers = #tpu.dot_dimension_numbers<[1], [0], [0], [1], [0, 0, 1, 1], [], []>} : vector<16x16xbf16>, vector<16x16xbf16>, vector<16x16xf32> -> vector<16x16xf32>
    %136 = arith.truncf %135 : vector<16x16xf32> to vector<16x16xbf16>
    %137 = vector.extract_strided_slice %18 {offsets = [80, 0], sizes = [16, 128], strides = [1, 1]} : vector<128x128xbf16> to vector<16x128xbf16>
    %cst_39 = arith.constant dense<0.000000e+00> : vector<16x128xf32>
    %138 = tpu.matmul %136, %137, %cst_39 {dimension_numbers = #tpu.dot_dimension_numbers<[1], [0], [0], [1], [0, 0, 1, 1], [], []>} : vector<16x16xbf16>, vector<16x128xbf16>, vector<16x128xf32> -> vector<16x128xf32>
    %139 = arith.addf %119, %138 : vector<16x128xf32>
    %140 = vector.extract_strided_slice %12 {offsets = [0, 96], sizes = [16, 16], strides = [1, 1]} : vector<16x128xbf16> to vector<16x16xbf16>
    %141 = vector.extract_strided_slice %14 {offsets = [0, 96], sizes = [16, 16], strides = [1, 1]} : vector<16x128xbf16> to vector<16x16xbf16>
    %cst_40 = arith.constant dense<0.000000e+00> : vector<16x16xf32>
    %142 = tpu.matmul %140, %141, %cst_40 {dimension_numbers = #tpu.dot_dimension_numbers<[1], [1], [0], [0], [0, 0, 1, 0], [], []>} : vector<16x16xbf16>, vector<16x16xbf16>, vector<16x16xf32> -> vector<16x16xf32>
    %cst_41 = arith.constant dense<0xFF800000> : vector<16xf32>
    %143 = vector.multi_reduction <maximumf>, %142, %cst_41 [1] : vector<16x16xf32> to vector<16xf32>
    %144 = vector.shape_cast %143 : vector<16xf32> to vector<16x1xf32>
    %145 = vector.broadcast %144 : vector<16x1xf32> to vector<16x16xf32>
    %146 = arith.subf %142, %145 : vector<16x16xf32>
    %147 = math.exp %146 : vector<16x16xf32>
    %cst_42 = arith.constant dense<0.000000e+00> : vector<16xf32>
    %148 = vector.multi_reduction <add>, %147, %cst_42 [1] : vector<16x16xf32> to vector<16xf32>
    %149 = vector.shape_cast %148 : vector<16xf32> to vector<16x1xf32>
    %150 = tpu.reciprocal %149 {approx = true} : vector<16x1xf32> -> vector<16x1xf32>
    %151 = vector.broadcast %150 : vector<16x1xf32> to vector<16x16xf32>
    %152 = arith.mulf %147, %151 : vector<16x16xf32>
    %153 = arith.truncf %152 : vector<16x16xf32> to vector<16x16xbf16>
    %154 = vector.extract_strided_slice %16 {offsets = [0, 96], sizes = [16, 16], strides = [1, 1]} : vector<16x128xbf16> to vector<16x16xbf16>
    %cst_43 = arith.constant dense<0.000000e+00> : vector<16x16xf32>
    %155 = tpu.matmul %153, %154, %cst_43 {dimension_numbers = #tpu.dot_dimension_numbers<[1], [0], [0], [1], [0, 0, 1, 1], [], []>} : vector<16x16xbf16>, vector<16x16xbf16>, vector<16x16xf32> -> vector<16x16xf32>
    %156 = arith.truncf %155 : vector<16x16xf32> to vector<16x16xbf16>
    %157 = vector.extract_strided_slice %18 {offsets = [96, 0], sizes = [16, 128], strides = [1, 1]} : vector<128x128xbf16> to vector<16x128xbf16>
    %cst_44 = arith.constant dense<0.000000e+00> : vector<16x128xf32>
    %158 = tpu.matmul %156, %157, %cst_44 {dimension_numbers = #tpu.dot_dimension_numbers<[1], [0], [0], [1], [0, 0, 1, 1], [], []>} : vector<16x16xbf16>, vector<16x128xbf16>, vector<16x128xf32> -> vector<16x128xf32>
    %159 = arith.addf %139, %158 : vector<16x128xf32>
    %160 = vector.extract_strided_slice %12 {offsets = [0, 112], sizes = [16, 16], strides = [1, 1]} : vector<16x128xbf16> to vector<16x16xbf16>
    %161 = vector.extract_strided_slice %14 {offsets = [0, 112], sizes = [16, 16], strides = [1, 1]} : vector<16x128xbf16> to vector<16x16xbf16>
    %cst_45 = arith.constant dense<0.000000e+00> : vector<16x16xf32>
    %162 = tpu.matmul %160, %161, %cst_45 {dimension_numbers = #tpu.dot_dimension_numbers<[1], [1], [0], [0], [0, 0, 1, 0], [], []>} : vector<16x16xbf16>, vector<16x16xbf16>, vector<16x16xf32> -> vector<16x16xf32>
    %cst_46 = arith.constant dense<0xFF800000> : vector<16xf32>
    %163 = vector.multi_reduction <maximumf>, %162, %cst_46 [1] : vector<16x16xf32> to vector<16xf32>
    %164 = vector.shape_cast %163 : vector<16xf32> to vector<16x1xf32>
    %165 = vector.broadcast %164 : vector<16x1xf32> to vector<16x16xf32>
    %166 = arith.subf %162, %165 : vector<16x16xf32>
    %167 = math.exp %166 : vector<16x16xf32>
    %cst_47 = arith.constant dense<0.000000e+00> : vector<16xf32>
    %168 = vector.multi_reduction <add>, %167, %cst_47 [1] : vector<16x16xf32> to vector<16xf32>
    %169 = vector.shape_cast %168 : vector<16xf32> to vector<16x1xf32>
    %170 = tpu.reciprocal %169 {approx = true} : vector<16x1xf32> -> vector<16x1xf32>
    %171 = vector.broadcast %170 : vector<16x1xf32> to vector<16x16xf32>
    %172 = arith.mulf %167, %171 : vector<16x16xf32>
    %173 = arith.truncf %172 : vector<16x16xf32> to vector<16x16xbf16>
    %174 = vector.extract_strided_slice %16 {offsets = [0, 112], sizes = [16, 16], strides = [1, 1]} : vector<16x128xbf16> to vector<16x16xbf16>
    %cst_48 = arith.constant dense<0.000000e+00> : vector<16x16xf32>
    %175 = tpu.matmul %173, %174, %cst_48 {dimension_numbers = #tpu.dot_dimension_numbers<[1], [0], [0], [1], [0, 0, 1, 1], [], []>} : vector<16x16xbf16>, vector<16x16xbf16>, vector<16x16xf32> -> vector<16x16xf32>
    %176 = arith.truncf %175 : vector<16x16xf32> to vector<16x16xbf16>
    %177 = vector.extract_strided_slice %18 {offsets = [112, 0], sizes = [16, 128], strides = [1, 1]} : vector<128x128xbf16> to vector<16x128xbf16>
    %cst_49 = arith.constant dense<0.000000e+00> : vector<16x128xf32>
    %178 = tpu.matmul %176, %177, %cst_49 {dimension_numbers = #tpu.dot_dimension_numbers<[1], [0], [0], [1], [0, 0, 1, 1], [], []>} : vector<16x16xbf16>, vector<16x128xbf16>, vector<16x128xf32> -> vector<16x128xf32>
    %179 = arith.addf %159, %178 : vector<16x128xf32>
    %180 = arith.addf %1, %179 : vector<16x128xf32>
    %c0_50 = arith.constant 0 : index
    %c0_51 = arith.constant 0 : index
    %181 = vector.load %arg5[%c0_50, %c0_51] : memref<1x128xf32, #tpu.memory_space<vmem>>, vector<1x128xf32>
    %182 = vector.broadcast %181 : vector<1x128xf32> to vector<16x128xf32>
    %183 = arith.addf %180, %182 : vector<16x128xf32>
    %184 = arith.truncf %183 : vector<16x128xf32> to vector<16x128xbf16>
    %c0_52 = arith.constant 0 : index
    %c0_53 = arith.constant 0 : index
    %185 = vector.load %arg6[%c0_52, %c0_53] : memref<128x512xf32, #tpu.memory_space<vmem>>, vector<128x512xf32>
    %186 = arith.truncf %185 : vector<128x512xf32> to vector<128x512xbf16>
    %cst_54 = arith.constant dense<0.000000e+00> : vector<16x512xf32>
    %187 = tpu.matmul %184, %186, %cst_54 {dimension_numbers = #tpu.dot_dimension_numbers<[1], [0], [0], [1], [0, 0, 1, 1], [], []>} : vector<16x128xbf16>, vector<128x512xbf16>, vector<16x512xf32> -> vector<16x512xf32>
    %c0_55 = arith.constant 0 : index
    %c0_56 = arith.constant 0 : index
    %188 = vector.load %arg7[%c0_55, %c0_56] : memref<1x512xf32, #tpu.memory_space<vmem>>, vector<1x512xf32>
    %189 = vector.broadcast %188 : vector<1x512xf32> to vector<16x512xf32>
    %190 = arith.addf %187, %189 : vector<16x512xf32>
    %cst_57 = arith.constant 0.000000e+00 : f32
    %191 = vector.broadcast %cst_57 : f32 to vector<16x512xf32>
    %192 = arith.maximumf %190, %191 : vector<16x512xf32>
    %193 = arith.truncf %192 : vector<16x512xf32> to vector<16x512xbf16>
    %c0_58 = arith.constant 0 : index
    %c0_59 = arith.constant 0 : index
    %194 = vector.load %arg8[%c0_58, %c0_59] : memref<512x128xf32, #tpu.memory_space<vmem>>, vector<512x128xf32>
    %195 = arith.truncf %194 : vector<512x128xf32> to vector<512x128xbf16>
    %cst_60 = arith.constant dense<0.000000e+00> : vector<16x128xf32>
    %196 = tpu.matmul %193, %195, %cst_60 {dimension_numbers = #tpu.dot_dimension_numbers<[1], [0], [0], [1], [0, 0, 1, 1], [], []>} : vector<16x512xbf16>, vector<512x128xbf16>, vector<16x128xf32> -> vector<16x128xf32>
    %197 = arith.addf %183, %196 : vector<16x128xf32>
    %c0_61 = arith.constant 0 : index
    %c0_62 = arith.constant 0 : index
    %198 = vector.load %arg9[%c0_61, %c0_62] : memref<1x128xf32, #tpu.memory_space<vmem>>, vector<1x128xf32>
    %199 = vector.broadcast %198 : vector<1x128xf32> to vector<16x128xf32>
    %200 = arith.addf %197, %199 : vector<16x128xf32>
    %c0_63 = arith.constant 0 : index
    %c0_64 = arith.constant 0 : index
    %c0_65 = arith.constant 0 : index
    %201 = vector.load %arg10[%c0_63, %c0_64, %c0_65] : memref<1x16x128xf32, #tpu.memory_space<vmem>>, vector<1x16x128xf32>
    %202 = vector.shape_cast %201 : vector<1x16x128xf32> to vector<16x128xf32>
    %203 = vector.shape_cast %200 : vector<16x128xf32> to vector<1x16x128xf32>
    tpu.vector_store %arg10[%c0_63, %c0_64, %c0_65], %203 {strides = array<i32>} : memref<1x16x128xf32, #tpu.memory_space<vmem>>, vector<1x16x128xf32>,
    return
  }
  func.func @transform_0(%arg0: i32) -> (i32, i32, i32) {
    %c0_i32 = arith.constant 0 : i32
    %c0_i32_0 = arith.constant 0 : i32
    %c0_i32_1 = arith.constant 0 : i32
    return %arg0, %c0_i32, %c0_i32_0 : i32, i32, i32
  }
  func.func @transform_1(%arg0: i32) -> (i32, i32) {
    %c0_i32 = arith.constant 0 : i32
    %c0_i32_0 = arith.constant 0 : i32
    %c0_i32_1 = arith.constant 0 : i32
    return %c0_i32, %c0_i32_0 : i32, i32
  }
  func.func @transform_2(%arg0: i32) -> (i32, i32) {
    %c0_i32 = arith.constant 0 : i32
    %c0_i32_0 = arith.constant 0 : i32
    %c0_i32_1 = arith.constant 0 : i32
    return %c0_i32, %c0_i32_0 : i32, i32
  }
  func.func @transform_3(%arg0: i32) -> (i32, i32) {
    %c0_i32 = arith.constant 0 : i32
    %c0_i32_0 = arith.constant 0 : i32
    %c0_i32_1 = arith.constant 0 : i32
    return %c0_i32, %c0_i32_0 : i32, i32
  }
  func.func @transform_4(%arg0: i32) -> (i32, i32) {
    %c0_i32 = arith.constant 0 : i32
    %c0_i32_0 = arith.constant 0 : i32
    %c0_i32_1 = arith.constant 0 : i32
    return %c0_i32, %c0_i32_0 : i32, i32
  }
  func.func @transform_5(%arg0: i32) -> (i32, i32) {
    %c0_i32 = arith.constant 0 : i32
    %c0_i32_0 = arith.constant 0 : i32
    %c0_i32_1 = arith.constant 0 : i32
    return %c0_i32, %c0_i32_0 : i32, i32
  }
  func.func @transform_6(%arg0: i32) -> (i32, i32) {
    %c0_i32 = arith.constant 0 : i32
    %c0_i32_0 = arith.constant 0 : i32
    %c0_i32_1 = arith.constant 0 : i32
    return %c0_i32, %c0_i32_0 : i32, i32
  }
  func.func @transform_7(%arg0: i32) -> (i32, i32) {
    %c0_i32 = arith.constant 0 : i32
    %c0_i32_0 = arith.constant 0 : i32
    %c0_i32_1 = arith.constant 0 : i32
    return %c0_i32, %c0_i32_0 : i32, i32
  }
  func.func @transform_8(%arg0: i32) -> (i32, i32) {
    %c0_i32 = arith.constant 0 : i32
    %c0_i32_0 = arith.constant 0 : i32
    %c0_i32_1 = arith.constant 0 : i32
    return %c0_i32, %c0_i32_0 : i32, i32
  }
  func.func @transform_9(%arg0: i32) -> (i32, i32, i32) {
    %c0_i32 = arith.constant 0 : i32
    %c0_i32_0 = arith.constant 0 : i32
    %c0_i32_1 = arith.constant 0 : i32
    return %arg0, %c0_i32, %c0_i32_0 : i32, i32, i32
  }
}

module attributes {stable_mosaic.version = 11 : i64} {
  func.func @_attn_ffn_kernel(%arg0: i32, %arg1: memref<1x16x128xf32, #tpu.memory_space<vmem>>, %arg2: memref<128x384xf32, #tpu.memory_space<vmem>>, %arg3: memref<1x384xf32, #tpu.memory_space<vmem>>, %arg4: memref<128x128xf32, #tpu.memory_space<vmem>>, %arg5: memref<1x128xf32, #tpu.memory_space<vmem>>, %arg6: memref<128x512xf32, #tpu.memory_space<vmem>>, %arg7: memref<1x512xf32, #tpu.memory_space<vmem>>, %arg8: memref<512x128xf32, #tpu.memory_space<vmem>>, %arg9: memref<1x128xf32, #tpu.memory_space<vmem>>, %arg10: memref<1x16x128xf32, #tpu.memory_space<vmem>>) attributes {dimension_semantics = [#tpu.dimension_semantics<parallel>], iteration_bounds = array<i64: 2>, scalar_prefetch = 0 : i64, scratch_operands = 0 : i64, tpu.core_type = #tpu.core_type<tc>, window_params = [{transform_indices = @transform_0, window_bounds = array<i64: 1, 16, 128>}, {pipeline_mode = #tpu.pipeline_mode<synchronous>, transform_indices = @transform_1, window_bounds = array<i64: 128, 384>}, {pipeline_mode = #tpu.pipeline_mode<synchronous>, transform_indices = @transform_2, window_bounds = array<i64: 1, 384>}, {pipeline_mode = #tpu.pipeline_mode<synchronous>, transform_indices = @transform_3, window_bounds = array<i64: 128, 128>}, {pipeline_mode = #tpu.pipeline_mode<synchronous>, transform_indices = @transform_4, window_bounds = array<i64: 1, 128>}, {pipeline_mode = #tpu.pipeline_mode<synchronous>, transform_indices = @transform_5, window_bounds = array<i64: 128, 512>}, {pipeline_mode = #tpu.pipeline_mode<synchronous>, transform_indices = @transform_6, window_bounds = array<i64: 1, 512>}, {pipeline_mode = #tpu.pipeline_mode<synchronous>, transform_indices = @transform_7, window_bounds = array<i64: 512, 128>}, {pipeline_mode = #tpu.pipeline_mode<synchronous>, transform_indices = @transform_8, window_bounds = array<i64: 1, 128>}, {transform_indices = @transform_9, window_bounds = array<i64: 1, 16, 128>}]} {
    %c0 = arith.constant 0 : index
    %c0_0 = arith.constant 0 : index
    %c0_1 = arith.constant 0 : index
    %0 = vector.load %arg1[%c0, %c0_0, %c0_1] : memref<1x16x128xf32, #tpu.memory_space<vmem>>, vector<1x16x128xf32>
    %1 = vector.shape_cast %0 : vector<1x16x128xf32> to vector<16x128xf32>
    %2 = arith.truncf %1 : vector<16x128xf32> to vector<16x128xbf16>
    %c0_2 = arith.constant 0 : index
    %c0_3 = arith.constant 0 : index
    %3 = vector.load %arg2[%c0_2, %c0_3] : memref<128x384xf32, #tpu.memory_space<vmem>>, vector<128x384xf32>
    %4 = arith.truncf %3 : vector<128x384xf32> to vector<128x384xbf16>
    %cst = arith.constant dense<0.000000e+00> : vector<16x384xf32>
    %5 = tpu.matmul %2, %4, %cst {dimension_numbers = #tpu.dot_dimension_numbers<[1], [0], [0], [1], [0, 0, 1, 1], [], []>} : vector<16x128xbf16>, vector<128x384xbf16>, vector<16x384xf32> -> vector<16x384xf32>
    %c0_4 = arith.constant 0 : index
    %c0_5 = arith.constant 0 : index
    %6 = vector.load %arg3[%c0_4, %c0_5] : memref<1x384xf32, #tpu.memory_space<vmem>>, vector<1x384xf32>
    %7 = vector.broadcast %6 : vector<1x384xf32> to vector<16x384xf32>
    %8 = arith.addf %5, %7 : vector<16x384xf32>
    %9 = vector.extract_strided_slice %8 {offsets = [0, 0], sizes = [16, 128], strides = [1, 1]} : vector<16x384xf32> to vector<16x128xf32>
    %cst_6 = arith.constant 2.500000e-01 : f32
    %10 = vector.broadcast %cst_6 : f32 to vector<16x128xf32>
    %11 = arith.mulf %9, %10 : vector<16x128xf32>
    %12 = arith.truncf %11 : vector<16x128xf32> to vector<16x128xbf16>
    %13 = vector.extract_strided_slice %8 {offsets = [0, 128], sizes = [16, 128], strides = [1, 1]} : vector<16x384xf32> to vector<16x128xf32>
    %14 = arith.truncf %13 : vector<16x128xf32> to vector<16x128xbf16>
    %15 = vector.extract_strided_slice %8 {offsets = [0, 256], sizes = [16, 128], strides = [1, 1]} : vector<16x384xf32> to vector<16x128xf32>
    %16 = arith.truncf %15 : vector<16x128xf32> to vector<16x128xbf16>
    %c0_7 = arith.constant 0 : index
    %c0_8 = arith.constant 0 : index
    %17 = vector.load %arg4[%c0_7, %c0_8] : memref<128x128xf32, #tpu.memory_space<vmem>>, vector<128x128xf32>
    %18 = arith.truncf %17 : vector<128x128xf32> to vector<128x128xbf16>
    %cst_9 = arith.constant 0.000000e+00 : f32
    %19 = vector.broadcast %cst_9 : f32 to vector<16x128xf32>
    %20 = vector.extract_strided_slice %12 {offsets = [0, 0], sizes = [16, 16], strides = [1, 1]} : vector<16x128xbf16> to vector<16x16xbf16>
    %21 = vector.extract_strided_slice %14 {offsets = [0, 0], sizes = [16, 16], strides = [1, 1]} : vector<16x128xbf16> to vector<16x16xbf16>
    %cst_10 = arith.constant dense<0.000000e+00> : vector<16x16xf32>
    %22 = tpu.matmul %20, %21, %cst_10 {dimension_numbers = #tpu.dot_dimension_numbers<[1], [1], [0], [0], [0, 0, 1, 0], [], []>} : vector<16x16xbf16>, vector<16x16xbf16>, vector<16x16xf32> -> vector<16x16xf32>
    %cst_11 = arith.constant dense<0xFF800000> : vector<16xf32>
    %23 = vector.multi_reduction <maximumf>, %22, %cst_11 [1] : vector<16x16xf32> to vector<16xf32>
    %24 = vector.shape_cast %23 : vector<16xf32> to vector<16x1xf32>
    %25 = vector.broadcast %24 : vector<16x1xf32> to vector<16x16xf32>
    %26 = arith.subf %22, %25 : vector<16x16xf32>
    %27 = math.exp %26 : vector<16x16xf32>
    %cst_12 = arith.constant dense<0.000000e+00> : vector<16xf32>
    %28 = vector.multi_reduction <add>, %27, %cst_12 [1] : vector<16x16xf32> to vector<16xf32>
    %29 = vector.shape_cast %28 : vector<16xf32> to vector<16x1xf32>
    %30 = tpu.reciprocal %29 {approx = true} : vector<16x1xf32> -> vector<16x1xf32>
    %31 = vector.broadcast %30 : vector<16x1xf32> to vector<16x16xf32>
    %32 = arith.mulf %27, %31 : vector<16x16xf32>
    %33 = arith.truncf %32 : vector<16x16xf32> to vector<16x16xbf16>
    %34 = vector.extract_strided_slice %16 {offsets = [0, 0], sizes = [16, 16], strides = [1, 1]} : vector<16x128xbf16> to vector<16x16xbf16>
    %cst_13 = arith.constant dense<0.000000e+00> : vector<16x16xf32>
    %35 = tpu.matmul %33, %34, %cst_13 {dimension_numbers = #tpu.dot_dimension_numbers<[1], [0], [0], [1], [0, 0, 1, 1], [], []>} : vector<16x16xbf16>, vector<16x16xbf16>, vector<16x16xf32> -> vector<16x16xf32>
    %36 = arith.truncf %35 : vector<16x16xf32> to vector<16x16xbf16>
    %37 = vector.extract_strided_slice %18 {offsets = [0, 0], sizes = [16, 128], strides = [1, 1]} : vector<128x128xbf16> to vector<16x128xbf16>
    %cst_14 = arith.constant dense<0.000000e+00> : vector<16x128xf32>
    %38 = tpu.matmul %36, %37, %cst_14 {dimension_numbers = #tpu.dot_dimension_numbers<[1], [0], [0], [1], [0, 0, 1, 1], [], []>} : vector<16x16xbf16>, vector<16x128xbf16>, vector<16x128xf32> -> vector<16x128xf32>
    %39 = arith.addf %19, %38 : vector<16x128xf32>
    %40 = vector.extract_strided_slice %12 {offsets = [0, 16], sizes = [16, 16], strides = [1, 1]} : vector<16x128xbf16> to vector<16x16xbf16>
    %41 = vector.extract_strided_slice %14 {offsets = [0, 16], sizes = [16, 16], strides = [1, 1]} : vector<16x128xbf16> to vector<16x16xbf16>
    %cst_15 = arith.constant dense<0.000000e+00> : vector<16x16xf32>
    %42 = tpu.matmul %40, %41, %cst_15 {dimension_numbers = #tpu.dot_dimension_numbers<[1], [1], [0], [0], [0, 0, 1, 0], [], []>} : vector<16x16xbf16>, vector<16x16xbf16>, vector<16x16xf32> -> vector<16x16xf32>
    %cst_16 = arith.constant dense<0xFF800000> : vector<16xf32>
    %43 = vector.multi_reduction <maximumf>, %42, %cst_16 [1] : vector<16x16xf32> to vector<16xf32>
    %44 = vector.shape_cast %43 : vector<16xf32> to vector<16x1xf32>
    %45 = vector.broadcast %44 : vector<16x1xf32> to vector<16x16xf32>
    %46 = arith.subf %42, %45 : vector<16x16xf32>
    %47 = math.exp %46 : vector<16x16xf32>
    %cst_17 = arith.constant dense<0.000000e+00> : vector<16xf32>
    %48 = vector.multi_reduction <add>, %47, %cst_17 [1] : vector<16x16xf32> to vector<16xf32>
    %49 = vector.shape_cast %48 : vector<16xf32> to vector<16x1xf32>
    %50 = tpu.reciprocal %49 {approx = true} : vector<16x1xf32> -> vector<16x1xf32>
    %51 = vector.broadcast %50 : vector<16x1xf32> to vector<16x16xf32>
    %52 = arith.mulf %47, %51 : vector<16x16xf32>
    %53 = arith.truncf %52 : vector<16x16xf32> to vector<16x16xbf16>
    %54 = vector.extract_strided_slice %16 {offsets = [0, 16], sizes = [16, 16], strides = [1, 1]} : vector<16x128xbf16> to vector<16x16xbf16>
    %cst_18 = arith.constant dense<0.000000e+00> : vector<16x16xf32>
    %55 = tpu.matmul %53, %54, %cst_18 {dimension_numbers = #tpu.dot_dimension_numbers<[1], [0], [0], [1], [0, 0, 1, 1], [], []>} : vector<16x16xbf16>, vector<16x16xbf16>, vector<16x16xf32> -> vector<16x16xf32>
    %56 = arith.truncf %55 : vector<16x16xf32> to vector<16x16xbf16>
    %57 = vector.extract_strided_slice %18 {offsets = [16, 0], sizes = [16, 128], strides = [1, 1]} : vector<128x128xbf16> to vector<16x128xbf16>
    %cst_19 = arith.constant dense<0.000000e+00> : vector<16x128xf32>
    %58 = tpu.matmul %56, %57, %cst_19 {dimension_numbers = #tpu.dot_dimension_numbers<[1], [0], [0], [1], [0, 0, 1, 1], [], []>} : vector<16x16xbf16>, vector<16x128xbf16>, vector<16x128xf32> -> vector<16x128xf32>
    %59 = arith.addf %39, %58 : vector<16x128xf32>
    %60 = vector.extract_strided_slice %12 {offsets = [0, 32], sizes = [16, 16], strides = [1, 1]} : vector<16x128xbf16> to vector<16x16xbf16>
    %61 = vector.extract_strided_slice %14 {offsets = [0, 32], sizes = [16, 16], strides = [1, 1]} : vector<16x128xbf16> to vector<16x16xbf16>
    %cst_20 = arith.constant dense<0.000000e+00> : vector<16x16xf32>
    %62 = tpu.matmul %60, %61, %cst_20 {dimension_numbers = #tpu.dot_dimension_numbers<[1], [1], [0], [0], [0, 0, 1, 0], [], []>} : vector<16x16xbf16>, vector<16x16xbf16>, vector<16x16xf32> -> vector<16x16xf32>
    %cst_21 = arith.constant dense<0xFF800000> : vector<16xf32>
    %63 = vector.multi_reduction <maximumf>, %62, %cst_21 [1] : vector<16x16xf32> to vector<16xf32>
    %64 = vector.shape_cast %63 : vector<16xf32> to vector<16x1xf32>
    %65 = vector.broadcast %64 : vector<16x1xf32> to vector<16x16xf32>
    %66 = arith.subf %62, %65 : vector<16x16xf32>
    %67 = math.exp %66 : vector<16x16xf32>
    %cst_22 = arith.constant dense<0.000000e+00> : vector<16xf32>
    %68 = vector.multi_reduction <add>, %67, %cst_22 [1] : vector<16x16xf32> to vector<16xf32>
    %69 = vector.shape_cast %68 : vector<16xf32> to vector<16x1xf32>
    %70 = tpu.reciprocal %69 {approx = true} : vector<16x1xf32> -> vector<16x1xf32>
    %71 = vector.broadcast %70 : vector<16x1xf32> to vector<16x16xf32>
    %72 = arith.mulf %67, %71 : vector<16x16xf32>
    %73 = arith.truncf %72 : vector<16x16xf32> to vector<16x16xbf16>
    %74 = vector.extract_strided_slice %16 {offsets = [0, 32], sizes = [16, 16], strides = [1, 1]} : vector<16x128xbf16> to vector<16x16xbf16>
    %cst_23 = arith.constant dense<0.000000e+00> : vector<16x16xf32>
    %75 = tpu.matmul %73, %74, %cst_23 {dimension_numbers = #tpu.dot_dimension_numbers<[1], [0], [0], [1], [0, 0, 1, 1], [], []>} : vector<16x16xbf16>, vector<16x16xbf16>, vector<16x16xf32> -> vector<16x16xf32>
    %76 = arith.truncf %75 : vector<16x16xf32> to vector<16x16xbf16>
    %77 = vector.extract_strided_slice %18 {offsets = [32, 0], sizes = [16, 128], strides = [1, 1]} : vector<128x128xbf16> to vector<16x128xbf16>
    %cst_24 = arith.constant dense<0.000000e+00> : vector<16x128xf32>
    %78 = tpu.matmul %76, %77, %cst_24 {dimension_numbers = #tpu.dot_dimension_numbers<[1], [0], [0], [1], [0, 0, 1, 1], [], []>} : vector<16x16xbf16>, vector<16x128xbf16>, vector<16x128xf32> -> vector<16x128xf32>
    %79 = arith.addf %59, %78 : vector<16x128xf32>
    %80 = vector.extract_strided_slice %12 {offsets = [0, 48], sizes = [16, 16], strides = [1, 1]} : vector<16x128xbf16> to vector<16x16xbf16>
    %81 = vector.extract_strided_slice %14 {offsets = [0, 48], sizes = [16, 16], strides = [1, 1]} : vector<16x128xbf16> to vector<16x16xbf16>
    %cst_25 = arith.constant dense<0.000000e+00> : vector<16x16xf32>
    %82 = tpu.matmul %80, %81, %cst_25 {dimension_numbers = #tpu.dot_dimension_numbers<[1], [1], [0], [0], [0, 0, 1, 0], [], []>} : vector<16x16xbf16>, vector<16x16xbf16>, vector<16x16xf32> -> vector<16x16xf32>
    %cst_26 = arith.constant dense<0xFF800000> : vector<16xf32>
    %83 = vector.multi_reduction <maximumf>, %82, %cst_26 [1] : vector<16x16xf32> to vector<16xf32>
    %84 = vector.shape_cast %83 : vector<16xf32> to vector<16x1xf32>
    %85 = vector.broadcast %84 : vector<16x1xf32> to vector<16x16xf32>
    %86 = arith.subf %82, %85 : vector<16x16xf32>
    %87 = math.exp %86 : vector<16x16xf32>
    %cst_27 = arith.constant dense<0.000000e+00> : vector<16xf32>
    %88 = vector.multi_reduction <add>, %87, %cst_27 [1] : vector<16x16xf32> to vector<16xf32>
    %89 = vector.shape_cast %88 : vector<16xf32> to vector<16x1xf32>
    %90 = tpu.reciprocal %89 {approx = true} : vector<16x1xf32> -> vector<16x1xf32>
    %91 = vector.broadcast %90 : vector<16x1xf32> to vector<16x16xf32>
    %92 = arith.mulf %87, %91 : vector<16x16xf32>
    %93 = arith.truncf %92 : vector<16x16xf32> to vector<16x16xbf16>
    %94 = vector.extract_strided_slice %16 {offsets = [0, 48], sizes = [16, 16], strides = [1, 1]} : vector<16x128xbf16> to vector<16x16xbf16>
    %cst_28 = arith.constant dense<0.000000e+00> : vector<16x16xf32>
    %95 = tpu.matmul %93, %94, %cst_28 {dimension_numbers = #tpu.dot_dimension_numbers<[1], [0], [0], [1], [0, 0, 1, 1], [], []>} : vector<16x16xbf16>, vector<16x16xbf16>, vector<16x16xf32> -> vector<16x16xf32>
    %96 = arith.truncf %95 : vector<16x16xf32> to vector<16x16xbf16>
    %97 = vector.extract_strided_slice %18 {offsets = [48, 0], sizes = [16, 128], strides = [1, 1]} : vector<128x128xbf16> to vector<16x128xbf16>
    %cst_29 = arith.constant dense<0.000000e+00> : vector<16x128xf32>
    %98 = tpu.matmul %96, %97, %cst_29 {dimension_numbers = #tpu.dot_dimension_numbers<[1], [0], [0], [1], [0, 0, 1, 1], [], []>} : vector<16x16xbf16>, vector<16x128xbf16>, vector<16x128xf32> -> vector<16x128xf32>
    %99 = arith.addf %79, %98 : vector<16x128xf32>
    %100 = vector.extract_strided_slice %12 {offsets = [0, 64], sizes = [16, 16], strides = [1, 1]} : vector<16x128xbf16> to vector<16x16xbf16>
    %101 = vector.extract_strided_slice %14 {offsets = [0, 64], sizes = [16, 16], strides = [1, 1]} : vector<16x128xbf16> to vector<16x16xbf16>
    %cst_30 = arith.constant dense<0.000000e+00> : vector<16x16xf32>
    %102 = tpu.matmul %100, %101, %cst_30 {dimension_numbers = #tpu.dot_dimension_numbers<[1], [1], [0], [0], [0, 0, 1, 0], [], []>} : vector<16x16xbf16>, vector<16x16xbf16>, vector<16x16xf32> -> vector<16x16xf32>
    %cst_31 = arith.constant dense<0xFF800000> : vector<16xf32>
    %103 = vector.multi_reduction <maximumf>, %102, %cst_31 [1] : vector<16x16xf32> to vector<16xf32>
    %104 = vector.shape_cast %103 : vector<16xf32> to vector<16x1xf32>
    %105 = vector.broadcast %104 : vector<16x1xf32> to vector<16x16xf32>
    %106 = arith.subf %102, %105 : vector<16x16xf32>
    %107 = math.exp %106 : vector<16x16xf32>
    %cst_32 = arith.constant dense<0.000000e+00> : vector<16xf32>
    %108 = vector.multi_reduction <add>, %107, %cst_32 [1] : vector<16x16xf32> to vector<16xf32>
    %109 = vector.shape_cast %108 : vector<16xf32> to vector<16x1xf32>
    %110 = tpu.reciprocal %109 {approx = true} : vector<16x1xf32> -> vector<16x1xf32>
    %111 = vector.broadcast %110 : vector<16x1xf32> to vector<16x16xf32>
    %112 = arith.mulf %107, %111 : vector<16x16xf32>
    %113 = arith.truncf %112 : vector<16x16xf32> to vector<16x16xbf16>
    %114 = vector.extract_strided_slice %16 {offsets = [0, 64], sizes = [16, 16], strides = [1, 1]} : vector<16x128xbf16> to vector<16x16xbf16>
    %cst_33 = arith.constant dense<0.000000e+00> : vector<16x16xf32>
    %115 = tpu.matmul %113, %114, %cst_33 {dimension_numbers = #tpu.dot_dimension_numbers<[1], [0], [0], [1], [0, 0, 1, 1], [], []>} : vector<16x16xbf16>, vector<16x16xbf16>, vector<16x16xf32> -> vector<16x16xf32>
    %116 = arith.truncf %115 : vector<16x16xf32> to vector<16x16xbf16>
    %117 = vector.extract_strided_slice %18 {offsets = [64, 0], sizes = [16, 128], strides = [1, 1]} : vector<128x128xbf16> to vector<16x128xbf16>
    %cst_34 = arith.constant dense<0.000000e+00> : vector<16x128xf32>
    %118 = tpu.matmul %116, %117, %cst_34 {dimension_numbers = #tpu.dot_dimension_numbers<[1], [0], [0], [1], [0, 0, 1, 1], [], []>} : vector<16x16xbf16>, vector<16x128xbf16>, vector<16x128xf32> -> vector<16x128xf32>
    %119 = arith.addf %99, %118 : vector<16x128xf32>
    %120 = vector.extract_strided_slice %12 {offsets = [0, 80], sizes = [16, 16], strides = [1, 1]} : vector<16x128xbf16> to vector<16x16xbf16>
    %121 = vector.extract_strided_slice %14 {offsets = [0, 80], sizes = [16, 16], strides = [1, 1]} : vector<16x128xbf16> to vector<16x16xbf16>
    %cst_35 = arith.constant dense<0.000000e+00> : vector<16x16xf32>
    %122 = tpu.matmul %120, %121, %cst_35 {dimension_numbers = #tpu.dot_dimension_numbers<[1], [1], [0], [0], [0, 0, 1, 0], [], []>} : vector<16x16xbf16>, vector<16x16xbf16>, vector<16x16xf32> -> vector<16x16xf32>
    %cst_36 = arith.constant dense<0xFF800000> : vector<16xf32>
    %123 = vector.multi_reduction <maximumf>, %122, %cst_36 [1] : vector<16x16xf32> to vector<16xf32>
    %124 = vector.shape_cast %123 : vector<16xf32> to vector<16x1xf32>
    %125 = vector.broadcast %124 : vector<16x1xf32> to vector<16x16xf32>
    %126 = arith.subf %122, %125 : vector<16x16xf32>
    %127 = math.exp %126 : vector<16x16xf32>
    %cst_37 = arith.constant dense<0.000000e+00> : vector<16xf32>
    %128 = vector.multi_reduction <add>, %127, %cst_37 [1] : vector<16x16xf32> to vector<16xf32>
    %129 = vector.shape_cast %128 : vector<16xf32> to vector<16x1xf32>
    %130 = tpu.reciprocal %129 {approx = true} : vector<16x1xf32> -> vector<16x1xf32>
    %131 = vector.broadcast %130 : vector<16x1xf32> to vector<16x16xf32>
    %132 = arith.mulf %127, %131 : vector<16x16xf32>
    %133 = arith.truncf %132 : vector<16x16xf32> to vector<16x16xbf16>
    %134 = vector.extract_strided_slice %16 {offsets = [0, 80], sizes = [16, 16], strides = [1, 1]} : vector<16x128xbf16> to vector<16x16xbf16>
    %cst_38 = arith.constant dense<0.000000e+00> : vector<16x16xf32>
    %135 = tpu.matmul %133, %134, %cst_38 {dimension_numbers = #tpu.dot_dimension_numbers<[1], [0], [0], [1], [0, 0, 1, 1], [], []>} : vector<16x16xbf16>, vector<16x16xbf16>, vector<16x16xf32> -> vector<16x16xf32>
    %136 = arith.truncf %135 : vector<16x16xf32> to vector<16x16xbf16>
    %137 = vector.extract_strided_slice %18 {offsets = [80, 0], sizes = [16, 128], strides = [1, 1]} : vector<128x128xbf16> to vector<16x128xbf16>
    %cst_39 = arith.constant dense<0.000000e+00> : vector<16x128xf32>
    %138 = tpu.matmul %136, %137, %cst_39 {dimension_numbers = #tpu.dot_dimension_numbers<[1], [0], [0], [1], [0, 0, 1, 1], [], []>} : vector<16x16xbf16>, vector<16x128xbf16>, vector<16x128xf32> -> vector<16x128xf32>
    %139 = arith.addf %119, %138 : vector<16x128xf32>
    %140 = vector.extract_strided_slice %12 {offsets = [0, 96], sizes = [16, 16], strides = [1, 1]} : vector<16x128xbf16> to vector<16x16xbf16>
    %141 = vector.extract_strided_slice %14 {offsets = [0, 96], sizes = [16, 16], strides = [1, 1]} : vector<16x128xbf16> to vector<16x16xbf16>
    %cst_40 = arith.constant dense<0.000000e+00> : vector<16x16xf32>
    %142 = tpu.matmul %140, %141, %cst_40 {dimension_numbers = #tpu.dot_dimension_numbers<[1], [1], [0], [0], [0, 0, 1, 0], [], []>} : vector<16x16xbf16>, vector<16x16xbf16>, vector<16x16xf32> -> vector<16x16xf32>
    %cst_41 = arith.constant dense<0xFF800000> : vector<16xf32>
    %143 = vector.multi_reduction <maximumf>, %142, %cst_41 [1] : vector<16x16xf32> to vector<16xf32>
    %144 = vector.shape_cast %143 : vector<16xf32> to vector<16x1xf32>
    %145 = vector.broadcast %144 : vector<16x1xf32> to vector<16x16xf32>
    %146 = arith.subf %142, %145 : vector<16x16xf32>
    %147 = math.exp %146 : vector<16x16xf32>
    %cst_42 = arith.constant dense<0.000000e+00> : vector<16xf32>
    %148 = vector.multi_reduction <add>, %147, %cst_42 [1] : vector<16x16xf32> to vector<16xf32>
    %149 = vector.shape_cast %148 : vector<16xf32> to vector<16x1xf32>
    %150 = tpu.reciprocal %149 {approx = true} : vector<16x1xf32> -> vector<16x1xf32>
    %151 = vector.broadcast %150 : vector<16x1xf32> to vector<16x16xf32>
    %152 = arith.mulf %147, %151 : vector<16x16xf32>
    %153 = arith.truncf %152 : vector<16x16xf32> to vector<16x16xbf16>
    %154 = vector.extract_strided_slice %16 {offsets = [0, 96], sizes = [16, 16], strides = [1, 1]} : vector<16x128xbf16> to vector<16x16xbf16>
    %cst_43 = arith.constant dense<0.000000e+00> : vector<16x16xf32>
    %155 = tpu.matmul %153, %154, %cst_43 {dimension_numbers = #tpu.dot_dimension_numbers<[1], [0], [0], [1], [0, 0, 1, 1], [], []>} : vector<16x16xbf16>, vector<16x16xbf16>, vector<16x16xf32> -> vector<16x16xf32>
    %156 = arith.truncf %155 : vector<16x16xf32> to vector<16x16xbf16>
    %157 = vector.extract_strided_slice %18 {offsets = [96, 0], sizes = [16, 128], strides = [1, 1]} : vector<128x128xbf16> to vector<16x128xbf16>
    %cst_44 = arith.constant dense<0.000000e+00> : vector<16x128xf32>
    %158 = tpu.matmul %156, %157, %cst_44 {dimension_numbers = #tpu.dot_dimension_numbers<[1], [0], [0], [1], [0, 0, 1, 1], [], []>} : vector<16x16xbf16>, vector<16x128xbf16>, vector<16x128xf32> -> vector<16x128xf32>
    %159 = arith.addf %139, %158 : vector<16x128xf32>
    %160 = vector.extract_strided_slice %12 {offsets = [0, 112], sizes = [16, 16], strides = [1, 1]} : vector<16x128xbf16> to vector<16x16xbf16>
    %161 = vector.extract_strided_slice %14 {offsets = [0, 112], sizes = [16, 16], strides = [1, 1]} : vector<16x128xbf16> to vector<16x16xbf16>
    %cst_45 = arith.constant dense<0.000000e+00> : vector<16x16xf32>
    %162 = tpu.matmul %160, %161, %cst_45 {dimension_numbers = #tpu.dot_dimension_numbers<[1], [1], [0], [0], [0, 0, 1, 0], [], []>} : vector<16x16xbf16>, vector<16x16xbf16>, vector<16x16xf32> -> vector<16x16xf32>
    %cst_46 = arith.constant dense<0xFF800000> : vector<16xf32>
    %163 = vector.multi_reduction <maximumf>, %162, %cst_46 [1] : vector<16x16xf32> to vector<16xf32>
    %164 = vector.shape_cast %163 : vector<16xf32> to vector<16x1xf32>
    %165 = vector.broadcast %164 : vector<16x1xf32> to vector<16x16xf32>
    %166 = arith.subf %162, %165 : vector<16x16xf32>
    %167 = math.exp %166 : vector<16x16xf32>
    %cst_47 = arith.constant dense<0.000000e+00> : vector<16xf32>
    %168 = vector.multi_reduction <add>, %167, %cst_47 [1] : vector<16x16xf32> to vector<16xf32>
    %169 = vector.shape_cast %168 : vector<16xf32> to vector<16x1xf32>
    %170 = tpu.reciprocal %169 {approx = true} : vector<16x1xf32> -> vector<16x1xf32>
    %171 = vector.broadcast %170 : vector<16x1xf32> to vector<16x16xf32>
    %172 = arith.mulf %167, %171 : vector<16x16xf32>
    %173 = arith.truncf %172 : vector<16x16xf32> to vector<16x16xbf16>
    %174 = vector.extract_strided_slice %16 {offsets = [0, 112], sizes = [16, 16], strides = [1, 1]} : vector<16x128xbf16> to vector<16x16xbf16>
    %cst_48 = arith.constant dense<0.000000e+00> : vector<16x16xf32>
    %175 = tpu.matmul %173, %174, %cst_48 {dimension_numbers = #tpu.dot_dimension_numbers<[1], [0], [0], [1], [0, 0, 1, 1], [], []>} : vector<16x16xbf16>, vector<16x16xbf16>, vector<16x16xf32> -> vector<16x16xf32>
    %176 = arith.truncf %175 : vector<16x16xf32> to vector<16x16xbf16>
    %177 = vector.extract_strided_slice %18 {offsets = [112, 0], sizes = [16, 128], strides = [1, 1]} : vector<128x128xbf16> to vector<16x128xbf16>
    %cst_49 = arith.constant dense<0.000000e+00> : vector<16x128xf32>
    %178 = tpu.matmul %176, %177, %cst_49 {dimension_numbers = #tpu.dot_dimension_numbers<[1], [0], [0], [1], [0, 0, 1, 1], [], []>} : vector<16x16xbf16>, vector<16x128xbf16>, vector<16x128xf32> -> vector<16x128xf32>
    %179 = arith.addf %159, %178 : vector<16x128xf32>
    %180 = arith.addf %1, %179 : vector<16x128xf32>
    %c0_50 = arith.constant 0 : index
    %c0_51 = arith.constant 0 : index
    %181 = vector.load %arg5[%c0_50, %c0_51] : memref<1x128xf32, #tpu.memory_space<vmem>>, vector<1x128xf32>
    %182 = vector.broadcast %181 : vector<1x128xf32> to vector<16x128xf32>
    %183 = arith.addf %180, %182 : vector<16x128xf32>
    %184 = arith.truncf %183 : vector<16x128xf32> to vector<16x128xbf16>
    %c0_52 = arith.constant 0 : index
    %c0_53 = arith.constant 0 : index
    %185 = vector.load %arg6[%c0_52, %c0_53] : memref<128x512xf32, #tpu.memory_space<vmem>>, vector<128x512xf32>
    %186 = arith.truncf %185 : vector<128x512xf32> to vector<128x512xbf16>
    %cst_54 = arith.constant dense<0.000000e+00> : vector<16x512xf32>
    %187 = tpu.matmul %184, %186, %cst_54 {dimension_numbers = #tpu.dot_dimension_numbers<[1], [0], [0], [1], [0, 0, 1, 1], [], []>} : vector<16x128xbf16>, vector<128x512xbf16>, vector<16x512xf32> -> vector<16x512xf32>
    %c0_55 = arith.constant 0 : index
    %c0_56 = arith.constant 0 : index
    %188 = vector.load %arg7[%c0_55, %c0_56] : memref<1x512xf32, #tpu.memory_space<vmem>>, vector<1x512xf32>
    %189 = vector.broadcast %188 : vector<1x512xf32> to vector<16x512xf32>
    %190 = arith.addf %187, %189 : vector<16x512xf32>
    %cst_57 = arith.constant 0.000000e+00 : f32
    %191 = vector.broadcast %cst_57 : f32 to vector<16x512xf32>
    %192 = arith.maximumf %190, %191 : vector<16x512xf32>
    %193 = arith.truncf %192 : vector<16x512xf32> to vector<16x512xbf16>
    %c0_58 = arith.constant 0 : index
    %c0_59 = arith.constant 0 : index
    %194 = vector.load %arg8[%c0_58, %c0_59] : memref<512x128xf32, #tpu.memory_space<vmem>>, vector<512x128xf32>
    %195 = arith.truncf %194 : vector<512x128xf32> to vector<512x128xbf16>
    %cst_60 = arith.constant dense<0.000000e+00> : vector<16x128xf32>
    %196 = tpu.matmul %193, %195, %cst_60 {dimension_numbers = #tpu.dot_dimension_numbers<[1], [0], [0], [1], [0, 0, 1, 1], [], []>} : vector<16x512xbf16>, vector<512x128xbf16>, vector<16x128xf32> -> vector<16x128xf32>
    %197 = arith.addf %183, %196 : vector<16x128xf32>
    %c0_61 = arith.constant 0 : index
    %c0_62 = arith.constant 0 : index
    %198 = vector.load %arg9[%c0_61, %c0_62] : memref<1x128xf32, #tpu.memory_space<vmem>>, vector<1x128xf32>
    %199 = vector.broadcast %198 : vector<1x128xf32> to vector<16x128xf32>
    %200 = arith.addf %197, %199 : vector<16x128xf32>
    %c0_63 = arith.constant 0 : index
    %c0_64 = arith.constant 0 : index
    %c0_65 = arith.constant 0 : index
    %201 = vector.load %arg10[%c0_63, %c0_64, %c0_65] : memref<1x16x128xf32, #tpu.memory_space<vmem>>, vector<1x16x128xf32>
    %202 = vector.shape_cast %201 : vector<1x16x128xf32> to vector<16x128xf32>
    %203 = vector.shape_cast %200 : vector<16x128xf32> to vector<1x16x128xf32>
    tpu.vector_store %arg10[%c0_63, %c0_64, %c0_65], %203 {strides = array<i32>} : memref<1x16x128xf32, #tpu.memory_space<vmem>>, vector<1x16x128xf32>,
    return
  }
  func.func @transform_0(%arg0: i32) -> (i32, i32, i32) {
    %c0_i32 = arith.constant 0 : i32
    %c0_i32_0 = arith.constant 0 : i32
    %c0_i32_1 = arith.constant 0 : i32
    return %arg0, %c0_i32, %c0_i32_0 : i32, i32, i32
  }
  func.func @transform_1(%arg0: i32) -> (i32, i32) {
    %c0_i32 = arith.constant 0 : i32
    %c0_i32_0 = arith.constant 0 : i32
    %c0_i32_1 = arith.constant 0 : i32
    return %c0_i32, %c0_i32_0 : i32, i32
  }
  func.func @transform_2(%arg0: i32) -> (i32, i32) {
    %c0_i32 = arith.constant 0 : i32
    %c0_i32_0 = arith.constant 0 : i32
    %c0_i32_1 = arith.constant 0 : i32
    return %c0_i32, %c0_i32_0 : i32, i32
  }
  func.func @transform_3(%arg0: i32) -> (i32, i32) {
    %c0_i32 = arith.constant 0 : i32
    %c0_i32_0 = arith.constant 0 : i32
    %c0_i32_1 = arith.constant 0 : i32
    return %c0_i32, %c0_i32_0 : i32, i32
  }
  func.func @transform_4(%arg0: i32) -> (i32, i32) {
    %c0_i32 = arith.constant 0 : i32
    %c0_i32_0 = arith.constant 0 : i32
    %c0_i32_1 = arith.constant 0 : i32
    return %c0_i32, %c0_i32_0 : i32, i32
  }
  func.func @transform_5(%arg0: i32) -> (i32, i32) {
    %c0_i32 = arith.constant 0 : i32
    %c0_i32_0 = arith.constant 0 : i32
    %c0_i32_1 = arith.constant 0 : i32
    return %c0_i32, %c0_i32_0 : i32, i32
  }
  func.func @transform_6(%arg0: i32) -> (i32, i32) {
    %c0_i32 = arith.constant 0 : i32
    %c0_i32_0 = arith.constant 0 : i32
    %c0_i32_1 = arith.constant 0 : i32
    return %c0_i32, %c0_i32_0 : i32, i32
  }
  func.func @transform_7(%arg0: i32) -> (i32, i32) {
    %c0_i32 = arith.constant 0 : i32
    %c0_i32_0 = arith.constant 0 : i32
    %c0_i32_1 = arith.constant 0 : i32
    return %c0_i32, %c0_i32_0 : i32, i32
  }
  func.func @transform_8(%arg0: i32) -> (i32, i32) {
    %c0_i32 = arith.constant 0 : i32
    %c0_i32_0 = arith.constant 0 : i32
    %c0_i32_1 = arith.constant 0 : i32
    return %c0_i32, %c0_i32_0 : i32, i32
  }
  func.func @transform_9(%arg0: i32) -> (i32, i32, i32) {
    %c0_i32 = arith.constant 0 : i32
    %c0_i32_0 = arith.constant 0 : i32
    %c0_i32_1 = arith.constant 0 : i32
    return %arg0, %c0_i32, %c0_i32_0 : i32, i32, i32
  }
}

module attributes {stable_mosaic.version = 11 : i64} {
  func.func @_linear_ln_kernel(%arg0: i32, %arg1: memref<32x8xf32, #tpu.memory_space<vmem>>, %arg2: memref<8x128xf32, #tpu.memory_space<vmem>>, %arg3: memref<1x128xf32, #tpu.memory_space<vmem>>, %arg4: memref<1x128xf32, #tpu.memory_space<vmem>>, %arg5: memref<1x128xf32, #tpu.memory_space<vmem>>, %arg6: memref<32x128xf32, #tpu.memory_space<vmem>>) attributes {dimension_semantics = [#tpu.dimension_semantics<parallel>], iteration_bounds = array<i64: 1>, scalar_prefetch = 0 : i64, scratch_operands = 0 : i64, tpu.core_type = #tpu.core_type<tc>, window_params = [{transform_indices = @transform_0, window_bounds = array<i64: 32, 8>}, {pipeline_mode = #tpu.pipeline_mode<synchronous>, transform_indices = @transform_1, window_bounds = array<i64: 8, 128>}, {pipeline_mode = #tpu.pipeline_mode<synchronous>, transform_indices = @transform_2, window_bounds = array<i64: 1, 128>}, {pipeline_mode = #tpu.pipeline_mode<synchronous>, transform_indices = @transform_3, window_bounds = array<i64: 1, 128>}, {pipeline_mode = #tpu.pipeline_mode<synchronous>, transform_indices = @transform_4, window_bounds = array<i64: 1, 128>}, {transform_indices = @transform_5, window_bounds = array<i64: 32, 128>}]} {
    %c0 = arith.constant 0 : index
    %c0_0 = arith.constant 0 : index
    %0 = vector.load %arg1[%c0, %c0_0] : memref<32x8xf32, #tpu.memory_space<vmem>>, vector<32x8xf32>
    %1 = arith.truncf %0 : vector<32x8xf32> to vector<32x8xbf16>
    %c0_1 = arith.constant 0 : index
    %c0_2 = arith.constant 0 : index
    %2 = vector.load %arg2[%c0_1, %c0_2] : memref<8x128xf32, #tpu.memory_space<vmem>>, vector<8x128xf32>
    %3 = arith.truncf %2 : vector<8x128xf32> to vector<8x128xbf16>
    %cst = arith.constant dense<0.000000e+00> : vector<32x128xf32>
    %4 = tpu.matmul %1, %3, %cst {dimension_numbers = #tpu.dot_dimension_numbers<[1], [0], [0], [1], [0, 0, 1, 1], [], []>} : vector<32x8xbf16>, vector<8x128xbf16>, vector<32x128xf32> -> vector<32x128xf32>
    %c0_3 = arith.constant 0 : index
    %c0_4 = arith.constant 0 : index
    %5 = vector.load %arg3[%c0_3, %c0_4] : memref<1x128xf32, #tpu.memory_space<vmem>>, vector<1x128xf32>
    %6 = vector.broadcast %5 : vector<1x128xf32> to vector<32x128xf32>
    %7 = arith.addf %4, %6 : vector<32x128xf32>
    %c0_5 = arith.constant 0 : index
    %c0_6 = arith.constant 0 : index
    %8 = vector.load %arg4[%c0_5, %c0_6] : memref<1x128xf32, #tpu.memory_space<vmem>>, vector<1x128xf32>
    %c0_7 = arith.constant 0 : index
    %c0_8 = arith.constant 0 : index
    %9 = vector.load %arg5[%c0_7, %c0_8] : memref<1x128xf32, #tpu.memory_space<vmem>>, vector<1x128xf32>
    %cst_9 = arith.constant dense<0.000000e+00> : vector<32xf32>
    %10 = vector.multi_reduction <add>, %7, %cst_9 [1] : vector<32x128xf32> to vector<32xf32>
    %11 = vector.shape_cast %10 : vector<32xf32> to vector<32x1xf32>
    %cst_10 = arith.constant 1.280000e+02 : f32
    %12 = vector.broadcast %cst_10 : f32 to vector<32x1xf32>
    %13 = arith.divf %11, %12 : vector<32x1xf32>
    %14 = vector.broadcast %13 : vector<32x1xf32> to vector<32x128xf32>
    %15 = arith.subf %7, %14 : vector<32x128xf32>
    %16 = arith.mulf %15, %15 : vector<32x128xf32>
    %cst_11 = arith.constant dense<0.000000e+00> : vector<32xf32>
    %17 = vector.multi_reduction <add>, %16, %cst_11 [1] : vector<32x128xf32> to vector<32xf32>
    %18 = vector.shape_cast %17 : vector<32xf32> to vector<32x1xf32>
    %cst_12 = arith.constant 1.280000e+02 : f32
    %19 = vector.broadcast %cst_12 : f32 to vector<32x1xf32>
    %20 = arith.divf %18, %19 : vector<32x1xf32>
    %cst_13 = arith.constant 9.99999974E-6 : f32
    %21 = vector.broadcast %cst_13 : f32 to vector<32x1xf32>
    %22 = arith.addf %20, %21 : vector<32x1xf32>
    %23 = math.rsqrt %22 : vector<32x1xf32>
    %24 = vector.broadcast %23 : vector<32x1xf32> to vector<32x128xf32>
    %25 = arith.mulf %15, %24 : vector<32x128xf32>
    %26 = vector.broadcast %8 : vector<1x128xf32> to vector<32x128xf32>
    %27 = arith.mulf %25, %26 : vector<32x128xf32>
    %28 = vector.broadcast %9 : vector<1x128xf32> to vector<32x128xf32>
    %29 = arith.addf %27, %28 : vector<32x128xf32>
    %c0_14 = arith.constant 0 : index
    %c0_15 = arith.constant 0 : index
    %30 = vector.load %arg6[%c0_14, %c0_15] : memref<32x128xf32, #tpu.memory_space<vmem>>, vector<32x128xf32>
    tpu.vector_store %arg6[%c0_14, %c0_15], %29 {strides = array<i32>} : memref<32x128xf32, #tpu.memory_space<vmem>>, vector<32x128xf32>,
    return
  }
  func.func @transform_0(%arg0: i32) -> (i32, i32) {
    %c0_i32 = arith.constant 0 : i32
    %c0_i32_0 = arith.constant 0 : i32
    return %arg0, %c0_i32 : i32, i32
  }
  func.func @transform_1(%arg0: i32) -> (i32, i32) {
    %c0_i32 = arith.constant 0 : i32
    %c0_i32_0 = arith.constant 0 : i32
    %c0_i32_1 = arith.constant 0 : i32
    return %c0_i32, %c0_i32_0 : i32, i32
  }
  func.func @transform_2(%arg0: i32) -> (i32, i32) {
    %c0_i32 = arith.constant 0 : i32
    %c0_i32_0 = arith.constant 0 : i32
    %c0_i32_1 = arith.constant 0 : i32
    return %c0_i32, %c0_i32_0 : i32, i32
  }
  func.func @transform_3(%arg0: i32) -> (i32, i32) {
    %c0_i32 = arith.constant 0 : i32
    %c0_i32_0 = arith.constant 0 : i32
    %c0_i32_1 = arith.constant 0 : i32
    return %c0_i32, %c0_i32_0 : i32, i32
  }
  func.func @transform_4(%arg0: i32) -> (i32, i32) {
    %c0_i32 = arith.constant 0 : i32
    %c0_i32_0 = arith.constant 0 : i32
    %c0_i32_1 = arith.constant 0 : i32
    return %c0_i32, %c0_i32_0 : i32, i32
  }
  func.func @transform_5(%arg0: i32) -> (i32, i32) {
    %c0_i32 = arith.constant 0 : i32
    %c0_i32_0 = arith.constant 0 : i32
    return %arg0, %c0_i32 : i32, i32
  }
}

module attributes {stable_mosaic.version = 11 : i64} {
  func.func @_conv_ln_ffn_kernel(%arg0: i32, %arg1: memref<1x16x128xf32, #tpu.memory_space<vmem>>, %arg2: memref<128x256xf32, #tpu.memory_space<vmem>>, %arg3: memref<1x256xf32, #tpu.memory_space<vmem>>, %arg4: memref<1280x128xf32, #tpu.memory_space<vmem>>, %arg5: memref<1x128xf32, #tpu.memory_space<vmem>>, %arg6: memref<1x128xf32, #tpu.memory_space<vmem>>, %arg7: memref<1x128xf32, #tpu.memory_space<vmem>>, %arg8: memref<128x512xf32, #tpu.memory_space<vmem>>, %arg9: memref<1x512xf32, #tpu.memory_space<vmem>>, %arg10: memref<512x128xf32, #tpu.memory_space<vmem>>, %arg11: memref<1x128xf32, #tpu.memory_space<vmem>>, %arg12: memref<1x16x128xf32, #tpu.memory_space<vmem>>) attributes {dimension_semantics = [#tpu.dimension_semantics<parallel>], iteration_bounds = array<i64: 2>, scalar_prefetch = 0 : i64, scratch_operands = 0 : i64, tpu.core_type = #tpu.core_type<tc>, window_params = [{transform_indices = @transform_0, window_bounds = array<i64: 1, 16, 128>}, {pipeline_mode = #tpu.pipeline_mode<synchronous>, transform_indices = @transform_1, window_bounds = array<i64: 128, 256>}, {pipeline_mode = #tpu.pipeline_mode<synchronous>, transform_indices = @transform_2, window_bounds = array<i64: 1, 256>}, {pipeline_mode = #tpu.pipeline_mode<synchronous>, transform_indices = @transform_3, window_bounds = array<i64: 1280, 128>}, {pipeline_mode = #tpu.pipeline_mode<synchronous>, transform_indices = @transform_4, window_bounds = array<i64: 1, 128>}, {pipeline_mode = #tpu.pipeline_mode<synchronous>, transform_indices = @transform_5, window_bounds = array<i64: 1, 128>}, {pipeline_mode = #tpu.pipeline_mode<synchronous>, transform_indices = @transform_6, window_bounds = array<i64: 1, 128>}, {pipeline_mode = #tpu.pipeline_mode<synchronous>, transform_indices = @transform_7, window_bounds = array<i64: 128, 512>}, {pipeline_mode = #tpu.pipeline_mode<synchronous>, transform_indices = @transform_8, window_bounds = array<i64: 1, 512>}, {pipeline_mode = #tpu.pipeline_mode<synchronous>, transform_indices = @transform_9, window_bounds = array<i64: 512, 128>}, {pipeline_mode = #tpu.pipeline_mode<synchronous>, transform_indices = @transform_10, window_bounds = array<i64: 1, 128>}, {transform_indices = @transform_11, window_bounds = array<i64: 1, 16, 128>}]} {
    %c0 = arith.constant 0 : index
    %c0_0 = arith.constant 0 : index
    %c0_1 = arith.constant 0 : index
    %0 = vector.load %arg1[%c0, %c0_0, %c0_1] : memref<1x16x128xf32, #tpu.memory_space<vmem>>, vector<1x16x128xf32>
    %1 = vector.shape_cast %0 : vector<1x16x128xf32> to vector<16x128xf32>
    %2 = arith.truncf %1 : vector<16x128xf32> to vector<16x128xbf16>
    %c0_2 = arith.constant 0 : index
    %c0_3 = arith.constant 0 : index
    %3 = vector.load %arg2[%c0_2, %c0_3] : memref<128x256xf32, #tpu.memory_space<vmem>>, vector<128x256xf32>
    %4 = arith.truncf %3 : vector<128x256xf32> to vector<128x256xbf16>
    %cst = arith.constant dense<0.000000e+00> : vector<16x256xf32>
    %5 = tpu.matmul %2, %4, %cst {dimension_numbers = #tpu.dot_dimension_numbers<[1], [0], [0], [1], [0, 0, 1, 1], [], []>} : vector<16x128xbf16>, vector<128x256xbf16>, vector<16x256xf32> -> vector<16x256xf32>
    %c0_4 = arith.constant 0 : index
    %c0_5 = arith.constant 0 : index
    %6 = vector.load %arg3[%c0_4, %c0_5] : memref<1x256xf32, #tpu.memory_space<vmem>>, vector<1x256xf32>
    %7 = vector.broadcast %6 : vector<1x256xf32> to vector<16x256xf32>
    %8 = arith.addf %5, %7 : vector<16x256xf32>
    %cst_6 = arith.constant 0.000000e+00 : f32
    %9 = vector.broadcast %cst_6 : f32 to vector<16x256xf32>
    %10 = arith.maximumf %8, %9 : vector<16x256xf32>
    %cst_7 = arith.constant 0.000000e+00 : f32
    %11 = vector.broadcast %cst_7 : f32 to vector<2x256xf32>
    %12 = tpu.concatenate %11, %10, %11 in 0 : vector<2x256xf32>, vector<16x256xf32>, vector<2x256xf32> -> vector<20x256xf32>
    %c0_8 = arith.constant 0 : index
    %c0_9 = arith.constant 0 : index
    %13 = vector.load %arg4[%c0_8, %c0_9] : memref<1280x128xf32, #tpu.memory_space<vmem>>, vector<1280x128xf32>
    %14 = arith.truncf %13 : vector<1280x128xf32> to vector<1280x128xbf16>
    %cst_10 = arith.constant 0.000000e+00 : f32
    %15 = vector.broadcast %cst_10 : f32 to vector<16x128xf32>
    %16 = vector.extract_strided_slice %12 {offsets = [0, 0], sizes = [16, 256], strides = [1, 1]} : vector<20x256xf32> to vector<16x256xf32>
    %17 = arith.truncf %16 : vector<16x256xf32> to vector<16x256xbf16>
    %18 = vector.extract_strided_slice %14 {offsets = [0, 0], sizes = [256, 128], strides = [1, 1]} : vector<1280x128xbf16> to vector<256x128xbf16>
    %cst_11 = arith.constant dense<0.000000e+00> : vector<16x128xf32>
    %19 = tpu.matmul %17, %18, %cst_11 {dimension_numbers = #tpu.dot_dimension_numbers<[1], [0], [0], [1], [0, 0, 1, 1], [], []>} : vector<16x256xbf16>, vector<256x128xbf16>, vector<16x128xf32> -> vector<16x128xf32>
    %20 = arith.addf %15, %19 : vector<16x128xf32>
    %21 = vector.extract_strided_slice %12 {offsets = [1, 0], sizes = [16, 256], strides = [1, 1]} : vector<20x256xf32> to vector<16x256xf32>
    %22 = arith.truncf %21 : vector<16x256xf32> to vector<16x256xbf16>
    %23 = vector.extract_strided_slice %14 {offsets = [256, 0], sizes = [256, 128], strides = [1, 1]} : vector<1280x128xbf16> to vector<256x128xbf16>
    %cst_12 = arith.constant dense<0.000000e+00> : vector<16x128xf32>
    %24 = tpu.matmul %22, %23, %cst_12 {dimension_numbers = #tpu.dot_dimension_numbers<[1], [0], [0], [1], [0, 0, 1, 1], [], []>} : vector<16x256xbf16>, vector<256x128xbf16>, vector<16x128xf32> -> vector<16x128xf32>
    %25 = arith.addf %20, %24 : vector<16x128xf32>
    %26 = vector.extract_strided_slice %12 {offsets = [2, 0], sizes = [16, 256], strides = [1, 1]} : vector<20x256xf32> to vector<16x256xf32>
    %27 = arith.truncf %26 : vector<16x256xf32> to vector<16x256xbf16>
    %28 = vector.extract_strided_slice %14 {offsets = [512, 0], sizes = [256, 128], strides = [1, 1]} : vector<1280x128xbf16> to vector<256x128xbf16>
    %cst_13 = arith.constant dense<0.000000e+00> : vector<16x128xf32>
    %29 = tpu.matmul %27, %28, %cst_13 {dimension_numbers = #tpu.dot_dimension_numbers<[1], [0], [0], [1], [0, 0, 1, 1], [], []>} : vector<16x256xbf16>, vector<256x128xbf16>, vector<16x128xf32> -> vector<16x128xf32>
    %30 = arith.addf %25, %29 : vector<16x128xf32>
    %31 = vector.extract_strided_slice %12 {offsets = [3, 0], sizes = [16, 256], strides = [1, 1]} : vector<20x256xf32> to vector<16x256xf32>
    %32 = arith.truncf %31 : vector<16x256xf32> to vector<16x256xbf16>
    %33 = vector.extract_strided_slice %14 {offsets = [768, 0], sizes = [256, 128], strides = [1, 1]} : vector<1280x128xbf16> to vector<256x128xbf16>
    %cst_14 = arith.constant dense<0.000000e+00> : vector<16x128xf32>
    %34 = tpu.matmul %32, %33, %cst_14 {dimension_numbers = #tpu.dot_dimension_numbers<[1], [0], [0], [1], [0, 0, 1, 1], [], []>} : vector<16x256xbf16>, vector<256x128xbf16>, vector<16x128xf32> -> vector<16x128xf32>
    %35 = arith.addf %30, %34 : vector<16x128xf32>
    %36 = vector.extract_strided_slice %12 {offsets = [4, 0], sizes = [16, 256], strides = [1, 1]} : vector<20x256xf32> to vector<16x256xf32>
    %37 = arith.truncf %36 : vector<16x256xf32> to vector<16x256xbf16>
    %38 = vector.extract_strided_slice %14 {offsets = [1024, 0], sizes = [256, 128], strides = [1, 1]} : vector<1280x128xbf16> to vector<256x128xbf16>
    %cst_15 = arith.constant dense<0.000000e+00> : vector<16x128xf32>
    %39 = tpu.matmul %37, %38, %cst_15 {dimension_numbers = #tpu.dot_dimension_numbers<[1], [0], [0], [1], [0, 0, 1, 1], [], []>} : vector<16x256xbf16>, vector<256x128xbf16>, vector<16x128xf32> -> vector<16x128xf32>
    %40 = arith.addf %35, %39 : vector<16x128xf32>
    %c0_16 = arith.constant 0 : index
    %c0_17 = arith.constant 0 : index
    %41 = vector.load %arg5[%c0_16, %c0_17] : memref<1x128xf32, #tpu.memory_space<vmem>>, vector<1x128xf32>
    %42 = vector.broadcast %41 : vector<1x128xf32> to vector<16x128xf32>
    %43 = arith.addf %40, %42 : vector<16x128xf32>
    %cst_18 = arith.constant 0.000000e+00 : f32
    %44 = vector.broadcast %cst_18 : f32 to vector<16x128xf32>
    %45 = arith.maximumf %43, %44 : vector<16x128xf32>
    %46 = arith.addf %1, %45 : vector<16x128xf32>
    %c0_19 = arith.constant 0 : index
    %c0_20 = arith.constant 0 : index
    %47 = vector.load %arg6[%c0_19, %c0_20] : memref<1x128xf32, #tpu.memory_space<vmem>>, vector<1x128xf32>
    %c0_21 = arith.constant 0 : index
    %c0_22 = arith.constant 0 : index
    %48 = vector.load %arg7[%c0_21, %c0_22] : memref<1x128xf32, #tpu.memory_space<vmem>>, vector<1x128xf32>
    %cst_23 = arith.constant dense<0.000000e+00> : vector<16xf32>
    %49 = vector.multi_reduction <add>, %46, %cst_23 [1] : vector<16x128xf32> to vector<16xf32>
    %50 = vector.shape_cast %49 : vector<16xf32> to vector<16x1xf32>
    %cst_24 = arith.constant 1.280000e+02 : f32
    %51 = vector.broadcast %cst_24 : f32 to vector<16x1xf32>
    %52 = arith.divf %50, %51 : vector<16x1xf32>
    %53 = vector.broadcast %52 : vector<16x1xf32> to vector<16x128xf32>
    %54 = arith.subf %46, %53 : vector<16x128xf32>
    %55 = arith.mulf %54, %54 : vector<16x128xf32>
    %cst_25 = arith.constant dense<0.000000e+00> : vector<16xf32>
    %56 = vector.multi_reduction <add>, %55, %cst_25 [1] : vector<16x128xf32> to vector<16xf32>
    %57 = vector.shape_cast %56 : vector<16xf32> to vector<16x1xf32>
    %cst_26 = arith.constant 1.280000e+02 : f32
    %58 = vector.broadcast %cst_26 : f32 to vector<16x1xf32>
    %59 = arith.divf %57, %58 : vector<16x1xf32>
    %cst_27 = arith.constant 9.99999974E-6 : f32
    %60 = vector.broadcast %cst_27 : f32 to vector<16x1xf32>
    %61 = arith.addf %59, %60 : vector<16x1xf32>
    %62 = math.rsqrt %61 : vector<16x1xf32>
    %63 = vector.broadcast %62 : vector<16x1xf32> to vector<16x128xf32>
    %64 = arith.mulf %54, %63 : vector<16x128xf32>
    %65 = vector.broadcast %47 : vector<1x128xf32> to vector<16x128xf32>
    %66 = arith.mulf %64, %65 : vector<16x128xf32>
    %67 = vector.broadcast %48 : vector<1x128xf32> to vector<16x128xf32>
    %68 = arith.addf %66, %67 : vector<16x128xf32>
    %69 = arith.truncf %68 : vector<16x128xf32> to vector<16x128xbf16>
    %c0_28 = arith.constant 0 : index
    %c0_29 = arith.constant 0 : index
    %70 = vector.load %arg8[%c0_28, %c0_29] : memref<128x512xf32, #tpu.memory_space<vmem>>, vector<128x512xf32>
    %71 = arith.truncf %70 : vector<128x512xf32> to vector<128x512xbf16>
    %cst_30 = arith.constant dense<0.000000e+00> : vector<16x512xf32>
    %72 = tpu.matmul %69, %71, %cst_30 {dimension_numbers = #tpu.dot_dimension_numbers<[1], [0], [0], [1], [0, 0, 1, 1], [], []>} : vector<16x128xbf16>, vector<128x512xbf16>, vector<16x512xf32> -> vector<16x512xf32>
    %c0_31 = arith.constant 0 : index
    %c0_32 = arith.constant 0 : index
    %73 = vector.load %arg9[%c0_31, %c0_32] : memref<1x512xf32, #tpu.memory_space<vmem>>, vector<1x512xf32>
    %74 = vector.broadcast %73 : vector<1x512xf32> to vector<16x512xf32>
    %75 = arith.addf %72, %74 : vector<16x512xf32>
    %cst_33 = arith.constant 0.000000e+00 : f32
    %76 = vector.broadcast %cst_33 : f32 to vector<16x512xf32>
    %77 = arith.maximumf %75, %76 : vector<16x512xf32>
    %78 = arith.truncf %77 : vector<16x512xf32> to vector<16x512xbf16>
    %c0_34 = arith.constant 0 : index
    %c0_35 = arith.constant 0 : index
    %79 = vector.load %arg10[%c0_34, %c0_35] : memref<512x128xf32, #tpu.memory_space<vmem>>, vector<512x128xf32>
    %80 = arith.truncf %79 : vector<512x128xf32> to vector<512x128xbf16>
    %cst_36 = arith.constant dense<0.000000e+00> : vector<16x128xf32>
    %81 = tpu.matmul %78, %80, %cst_36 {dimension_numbers = #tpu.dot_dimension_numbers<[1], [0], [0], [1], [0, 0, 1, 1], [], []>} : vector<16x512xbf16>, vector<512x128xbf16>, vector<16x128xf32> -> vector<16x128xf32>
    %82 = arith.addf %68, %81 : vector<16x128xf32>
    %c0_37 = arith.constant 0 : index
    %c0_38 = arith.constant 0 : index
    %83 = vector.load %arg11[%c0_37, %c0_38] : memref<1x128xf32, #tpu.memory_space<vmem>>, vector<1x128xf32>
    %84 = vector.broadcast %83 : vector<1x128xf32> to vector<16x128xf32>
    %85 = arith.addf %82, %84 : vector<16x128xf32>
    %c0_39 = arith.constant 0 : index
    %c0_40 = arith.constant 0 : index
    %c0_41 = arith.constant 0 : index
    %86 = vector.load %arg12[%c0_39, %c0_40, %c0_41] : memref<1x16x128xf32, #tpu.memory_space<vmem>>, vector<1x16x128xf32>
    %87 = vector.shape_cast %86 : vector<1x16x128xf32> to vector<16x128xf32>
    %88 = vector.shape_cast %85 : vector<16x128xf32> to vector<1x16x128xf32>
    tpu.vector_store %arg12[%c0_39, %c0_40, %c0_41], %88 {strides = array<i32>} : memref<1x16x128xf32, #tpu.memory_space<vmem>>, vector<1x16x128xf32>,
    return
  }
  func.func @transform_0(%arg0: i32) -> (i32, i32, i32) {
    %c0_i32 = arith.constant 0 : i32
    %c0_i32_0 = arith.constant 0 : i32
    %c0_i32_1 = arith.constant 0 : i32
    return %arg0, %c0_i32, %c0_i32_0 : i32, i32, i32
  }
  func.func @transform_1(%arg0: i32) -> (i32, i32) {
    %c0_i32 = arith.constant 0 : i32
    %c0_i32_0 = arith.constant 0 : i32
    %c0_i32_1 = arith.constant 0 : i32
    return %c0_i32, %c0_i32_0 : i32, i32
  }
  func.func @transform_2(%arg0: i32) -> (i32, i32) {
    %c0_i32 = arith.constant 0 : i32
    %c0_i32_0 = arith.constant 0 : i32
    %c0_i32_1 = arith.constant 0 : i32
    return %c0_i32, %c0_i32_0 : i32, i32
  }
  func.func @transform_3(%arg0: i32) -> (i32, i32) {
    %c0_i32 = arith.constant 0 : i32
    %c0_i32_0 = arith.constant 0 : i32
    %c0_i32_1 = arith.constant 0 : i32
    return %c0_i32, %c0_i32_0 : i32, i32
  }
  func.func @transform_4(%arg0: i32) -> (i32, i32) {
    %c0_i32 = arith.constant 0 : i32
    %c0_i32_0 = arith.constant 0 : i32
    %c0_i32_1 = arith.constant 0 : i32
    return %c0_i32, %c0_i32_0 : i32, i32
  }
  func.func @transform_5(%arg0: i32) -> (i32, i32) {
    %c0_i32 = arith.constant 0 : i32
    %c0_i32_0 = arith.constant 0 : i32
    %c0_i32_1 = arith.constant 0 : i32
    return %c0_i32, %c0_i32_0 : i32, i32
  }
  func.func @transform_6(%arg0: i32) -> (i32, i32) {
    %c0_i32 = arith.constant 0 : i32
    %c0_i32_0 = arith.constant 0 : i32
    %c0_i32_1 = arith.constant 0 : i32
    return %c0_i32, %c0_i32_0 : i32, i32
  }
  func.func @transform_7(%arg0: i32) -> (i32, i32) {
    %c0_i32 = arith.constant 0 : i32
    %c0_i32_0 = arith.constant 0 : i32
    %c0_i32_1 = arith.constant 0 : i32
    return %c0_i32, %c0_i32_0 : i32, i32
  }
  func.func @transform_8(%arg0: i32) -> (i32, i32) {
    %c0_i32 = arith.constant 0 : i32
    %c0_i32_0 = arith.constant 0 : i32
    %c0_i32_1 = arith.constant 0 : i32
    return %c0_i32, %c0_i32_0 : i32, i32
  }
  func.func @transform_9(%arg0: i32) -> (i32, i32) {
    %c0_i32 = arith.constant 0 : i32
    %c0_i32_0 = arith.constant 0 : i32
    %c0_i32_1 = arith.constant 0 : i32
    return %c0_i32, %c0_i32_0 : i32, i32
  }
  func.func @transform_10(%arg0: i32) -> (i32, i32) {
    %c0_i32 = arith.constant 0 : i32
    %c0_i32_0 = arith.constant 0 : i32
    %c0_i32_1 = arith.constant 0 : i32
    return %c0_i32, %c0_i32_0 : i32, i32
  }
  func.func @transform_11(%arg0: i32) -> (i32, i32, i32) {
    %c0_i32 = arith.constant 0 : i32
    %c0_i32_0 = arith.constant 0 : i32
    %c0_i32_1 = arith.constant 0 : i32
    return %arg0, %c0_i32, %c0_i32_0 : i32, i32, i32
  }
}

module attributes {stable_mosaic.version = 11 : i64} {
  func.func @_conv_ln_ffn_kernel(%arg0: i32, %arg1: memref<1x16x128xf32, #tpu.memory_space<vmem>>, %arg2: memref<128x256xf32, #tpu.memory_space<vmem>>, %arg3: memref<1x256xf32, #tpu.memory_space<vmem>>, %arg4: memref<1280x128xf32, #tpu.memory_space<vmem>>, %arg5: memref<1x128xf32, #tpu.memory_space<vmem>>, %arg6: memref<1x128xf32, #tpu.memory_space<vmem>>, %arg7: memref<1x128xf32, #tpu.memory_space<vmem>>, %arg8: memref<128x512xf32, #tpu.memory_space<vmem>>, %arg9: memref<1x512xf32, #tpu.memory_space<vmem>>, %arg10: memref<512x128xf32, #tpu.memory_space<vmem>>, %arg11: memref<1x128xf32, #tpu.memory_space<vmem>>, %arg12: memref<1x16x128xf32, #tpu.memory_space<vmem>>) attributes {dimension_semantics = [#tpu.dimension_semantics<parallel>], iteration_bounds = array<i64: 2>, scalar_prefetch = 0 : i64, scratch_operands = 0 : i64, tpu.core_type = #tpu.core_type<tc>, window_params = [{transform_indices = @transform_0, window_bounds = array<i64: 1, 16, 128>}, {pipeline_mode = #tpu.pipeline_mode<synchronous>, transform_indices = @transform_1, window_bounds = array<i64: 128, 256>}, {pipeline_mode = #tpu.pipeline_mode<synchronous>, transform_indices = @transform_2, window_bounds = array<i64: 1, 256>}, {pipeline_mode = #tpu.pipeline_mode<synchronous>, transform_indices = @transform_3, window_bounds = array<i64: 1280, 128>}, {pipeline_mode = #tpu.pipeline_mode<synchronous>, transform_indices = @transform_4, window_bounds = array<i64: 1, 128>}, {pipeline_mode = #tpu.pipeline_mode<synchronous>, transform_indices = @transform_5, window_bounds = array<i64: 1, 128>}, {pipeline_mode = #tpu.pipeline_mode<synchronous>, transform_indices = @transform_6, window_bounds = array<i64: 1, 128>}, {pipeline_mode = #tpu.pipeline_mode<synchronous>, transform_indices = @transform_7, window_bounds = array<i64: 128, 512>}, {pipeline_mode = #tpu.pipeline_mode<synchronous>, transform_indices = @transform_8, window_bounds = array<i64: 1, 512>}, {pipeline_mode = #tpu.pipeline_mode<synchronous>, transform_indices = @transform_9, window_bounds = array<i64: 512, 128>}, {pipeline_mode = #tpu.pipeline_mode<synchronous>, transform_indices = @transform_10, window_bounds = array<i64: 1, 128>}, {transform_indices = @transform_11, window_bounds = array<i64: 1, 16, 128>}]} {
    %c0 = arith.constant 0 : index
    %c0_0 = arith.constant 0 : index
    %c0_1 = arith.constant 0 : index
    %0 = vector.load %arg1[%c0, %c0_0, %c0_1] : memref<1x16x128xf32, #tpu.memory_space<vmem>>, vector<1x16x128xf32>
    %1 = vector.shape_cast %0 : vector<1x16x128xf32> to vector<16x128xf32>
    %2 = arith.truncf %1 : vector<16x128xf32> to vector<16x128xbf16>
    %c0_2 = arith.constant 0 : index
    %c0_3 = arith.constant 0 : index
    %3 = vector.load %arg2[%c0_2, %c0_3] : memref<128x256xf32, #tpu.memory_space<vmem>>, vector<128x256xf32>
    %4 = arith.truncf %3 : vector<128x256xf32> to vector<128x256xbf16>
    %cst = arith.constant dense<0.000000e+00> : vector<16x256xf32>
    %5 = tpu.matmul %2, %4, %cst {dimension_numbers = #tpu.dot_dimension_numbers<[1], [0], [0], [1], [0, 0, 1, 1], [], []>} : vector<16x128xbf16>, vector<128x256xbf16>, vector<16x256xf32> -> vector<16x256xf32>
    %c0_4 = arith.constant 0 : index
    %c0_5 = arith.constant 0 : index
    %6 = vector.load %arg3[%c0_4, %c0_5] : memref<1x256xf32, #tpu.memory_space<vmem>>, vector<1x256xf32>
    %7 = vector.broadcast %6 : vector<1x256xf32> to vector<16x256xf32>
    %8 = arith.addf %5, %7 : vector<16x256xf32>
    %cst_6 = arith.constant 0.000000e+00 : f32
    %9 = vector.broadcast %cst_6 : f32 to vector<16x256xf32>
    %10 = arith.maximumf %8, %9 : vector<16x256xf32>
    %cst_7 = arith.constant 0.000000e+00 : f32
    %11 = vector.broadcast %cst_7 : f32 to vector<2x256xf32>
    %12 = tpu.concatenate %11, %10, %11 in 0 : vector<2x256xf32>, vector<16x256xf32>, vector<2x256xf32> -> vector<20x256xf32>
    %c0_8 = arith.constant 0 : index
    %c0_9 = arith.constant 0 : index
    %13 = vector.load %arg4[%c0_8, %c0_9] : memref<1280x128xf32, #tpu.memory_space<vmem>>, vector<1280x128xf32>
    %14 = arith.truncf %13 : vector<1280x128xf32> to vector<1280x128xbf16>
    %cst_10 = arith.constant 0.000000e+00 : f32
    %15 = vector.broadcast %cst_10 : f32 to vector<16x128xf32>
    %16 = vector.extract_strided_slice %12 {offsets = [0, 0], sizes = [16, 256], strides = [1, 1]} : vector<20x256xf32> to vector<16x256xf32>
    %17 = arith.truncf %16 : vector<16x256xf32> to vector<16x256xbf16>
    %18 = vector.extract_strided_slice %14 {offsets = [0, 0], sizes = [256, 128], strides = [1, 1]} : vector<1280x128xbf16> to vector<256x128xbf16>
    %cst_11 = arith.constant dense<0.000000e+00> : vector<16x128xf32>
    %19 = tpu.matmul %17, %18, %cst_11 {dimension_numbers = #tpu.dot_dimension_numbers<[1], [0], [0], [1], [0, 0, 1, 1], [], []>} : vector<16x256xbf16>, vector<256x128xbf16>, vector<16x128xf32> -> vector<16x128xf32>
    %20 = arith.addf %15, %19 : vector<16x128xf32>
    %21 = vector.extract_strided_slice %12 {offsets = [1, 0], sizes = [16, 256], strides = [1, 1]} : vector<20x256xf32> to vector<16x256xf32>
    %22 = arith.truncf %21 : vector<16x256xf32> to vector<16x256xbf16>
    %23 = vector.extract_strided_slice %14 {offsets = [256, 0], sizes = [256, 128], strides = [1, 1]} : vector<1280x128xbf16> to vector<256x128xbf16>
    %cst_12 = arith.constant dense<0.000000e+00> : vector<16x128xf32>
    %24 = tpu.matmul %22, %23, %cst_12 {dimension_numbers = #tpu.dot_dimension_numbers<[1], [0], [0], [1], [0, 0, 1, 1], [], []>} : vector<16x256xbf16>, vector<256x128xbf16>, vector<16x128xf32> -> vector<16x128xf32>
    %25 = arith.addf %20, %24 : vector<16x128xf32>
    %26 = vector.extract_strided_slice %12 {offsets = [2, 0], sizes = [16, 256], strides = [1, 1]} : vector<20x256xf32> to vector<16x256xf32>
    %27 = arith.truncf %26 : vector<16x256xf32> to vector<16x256xbf16>
    %28 = vector.extract_strided_slice %14 {offsets = [512, 0], sizes = [256, 128], strides = [1, 1]} : vector<1280x128xbf16> to vector<256x128xbf16>
    %cst_13 = arith.constant dense<0.000000e+00> : vector<16x128xf32>
    %29 = tpu.matmul %27, %28, %cst_13 {dimension_numbers = #tpu.dot_dimension_numbers<[1], [0], [0], [1], [0, 0, 1, 1], [], []>} : vector<16x256xbf16>, vector<256x128xbf16>, vector<16x128xf32> -> vector<16x128xf32>
    %30 = arith.addf %25, %29 : vector<16x128xf32>
    %31 = vector.extract_strided_slice %12 {offsets = [3, 0], sizes = [16, 256], strides = [1, 1]} : vector<20x256xf32> to vector<16x256xf32>
    %32 = arith.truncf %31 : vector<16x256xf32> to vector<16x256xbf16>
    %33 = vector.extract_strided_slice %14 {offsets = [768, 0], sizes = [256, 128], strides = [1, 1]} : vector<1280x128xbf16> to vector<256x128xbf16>
    %cst_14 = arith.constant dense<0.000000e+00> : vector<16x128xf32>
    %34 = tpu.matmul %32, %33, %cst_14 {dimension_numbers = #tpu.dot_dimension_numbers<[1], [0], [0], [1], [0, 0, 1, 1], [], []>} : vector<16x256xbf16>, vector<256x128xbf16>, vector<16x128xf32> -> vector<16x128xf32>
    %35 = arith.addf %30, %34 : vector<16x128xf32>
    %36 = vector.extract_strided_slice %12 {offsets = [4, 0], sizes = [16, 256], strides = [1, 1]} : vector<20x256xf32> to vector<16x256xf32>
    %37 = arith.truncf %36 : vector<16x256xf32> to vector<16x256xbf16>
    %38 = vector.extract_strided_slice %14 {offsets = [1024, 0], sizes = [256, 128], strides = [1, 1]} : vector<1280x128xbf16> to vector<256x128xbf16>
    %cst_15 = arith.constant dense<0.000000e+00> : vector<16x128xf32>
    %39 = tpu.matmul %37, %38, %cst_15 {dimension_numbers = #tpu.dot_dimension_numbers<[1], [0], [0], [1], [0, 0, 1, 1], [], []>} : vector<16x256xbf16>, vector<256x128xbf16>, vector<16x128xf32> -> vector<16x128xf32>
    %40 = arith.addf %35, %39 : vector<16x128xf32>
    %c0_16 = arith.constant 0 : index
    %c0_17 = arith.constant 0 : index
    %41 = vector.load %arg5[%c0_16, %c0_17] : memref<1x128xf32, #tpu.memory_space<vmem>>, vector<1x128xf32>
    %42 = vector.broadcast %41 : vector<1x128xf32> to vector<16x128xf32>
    %43 = arith.addf %40, %42 : vector<16x128xf32>
    %cst_18 = arith.constant 0.000000e+00 : f32
    %44 = vector.broadcast %cst_18 : f32 to vector<16x128xf32>
    %45 = arith.maximumf %43, %44 : vector<16x128xf32>
    %46 = arith.addf %1, %45 : vector<16x128xf32>
    %c0_19 = arith.constant 0 : index
    %c0_20 = arith.constant 0 : index
    %47 = vector.load %arg6[%c0_19, %c0_20] : memref<1x128xf32, #tpu.memory_space<vmem>>, vector<1x128xf32>
    %c0_21 = arith.constant 0 : index
    %c0_22 = arith.constant 0 : index
    %48 = vector.load %arg7[%c0_21, %c0_22] : memref<1x128xf32, #tpu.memory_space<vmem>>, vector<1x128xf32>
    %cst_23 = arith.constant dense<0.000000e+00> : vector<16xf32>
    %49 = vector.multi_reduction <add>, %46, %cst_23 [1] : vector<16x128xf32> to vector<16xf32>
    %50 = vector.shape_cast %49 : vector<16xf32> to vector<16x1xf32>
    %cst_24 = arith.constant 1.280000e+02 : f32
    %51 = vector.broadcast %cst_24 : f32 to vector<16x1xf32>
    %52 = arith.divf %50, %51 : vector<16x1xf32>
    %53 = vector.broadcast %52 : vector<16x1xf32> to vector<16x128xf32>
    %54 = arith.subf %46, %53 : vector<16x128xf32>
    %55 = arith.mulf %54, %54 : vector<16x128xf32>
    %cst_25 = arith.constant dense<0.000000e+00> : vector<16xf32>
    %56 = vector.multi_reduction <add>, %55, %cst_25 [1] : vector<16x128xf32> to vector<16xf32>
    %57 = vector.shape_cast %56 : vector<16xf32> to vector<16x1xf32>
    %cst_26 = arith.constant 1.280000e+02 : f32
    %58 = vector.broadcast %cst_26 : f32 to vector<16x1xf32>
    %59 = arith.divf %57, %58 : vector<16x1xf32>
    %cst_27 = arith.constant 9.99999974E-6 : f32
    %60 = vector.broadcast %cst_27 : f32 to vector<16x1xf32>
    %61 = arith.addf %59, %60 : vector<16x1xf32>
    %62 = math.rsqrt %61 : vector<16x1xf32>
    %63 = vector.broadcast %62 : vector<16x1xf32> to vector<16x128xf32>
    %64 = arith.mulf %54, %63 : vector<16x128xf32>
    %65 = vector.broadcast %47 : vector<1x128xf32> to vector<16x128xf32>
    %66 = arith.mulf %64, %65 : vector<16x128xf32>
    %67 = vector.broadcast %48 : vector<1x128xf32> to vector<16x128xf32>
    %68 = arith.addf %66, %67 : vector<16x128xf32>
    %69 = arith.truncf %68 : vector<16x128xf32> to vector<16x128xbf16>
    %c0_28 = arith.constant 0 : index
    %c0_29 = arith.constant 0 : index
    %70 = vector.load %arg8[%c0_28, %c0_29] : memref<128x512xf32, #tpu.memory_space<vmem>>, vector<128x512xf32>
    %71 = arith.truncf %70 : vector<128x512xf32> to vector<128x512xbf16>
    %cst_30 = arith.constant dense<0.000000e+00> : vector<16x512xf32>
    %72 = tpu.matmul %69, %71, %cst_30 {dimension_numbers = #tpu.dot_dimension_numbers<[1], [0], [0], [1], [0, 0, 1, 1], [], []>} : vector<16x128xbf16>, vector<128x512xbf16>, vector<16x512xf32> -> vector<16x512xf32>
    %c0_31 = arith.constant 0 : index
    %c0_32 = arith.constant 0 : index
    %73 = vector.load %arg9[%c0_31, %c0_32] : memref<1x512xf32, #tpu.memory_space<vmem>>, vector<1x512xf32>
    %74 = vector.broadcast %73 : vector<1x512xf32> to vector<16x512xf32>
    %75 = arith.addf %72, %74 : vector<16x512xf32>
    %cst_33 = arith.constant 0.000000e+00 : f32
    %76 = vector.broadcast %cst_33 : f32 to vector<16x512xf32>
    %77 = arith.maximumf %75, %76 : vector<16x512xf32>
    %78 = arith.truncf %77 : vector<16x512xf32> to vector<16x512xbf16>
    %c0_34 = arith.constant 0 : index
    %c0_35 = arith.constant 0 : index
    %79 = vector.load %arg10[%c0_34, %c0_35] : memref<512x128xf32, #tpu.memory_space<vmem>>, vector<512x128xf32>
    %80 = arith.truncf %79 : vector<512x128xf32> to vector<512x128xbf16>
    %cst_36 = arith.constant dense<0.000000e+00> : vector<16x128xf32>
    %81 = tpu.matmul %78, %80, %cst_36 {dimension_numbers = #tpu.dot_dimension_numbers<[1], [0], [0], [1], [0, 0, 1, 1], [], []>} : vector<16x512xbf16>, vector<512x128xbf16>, vector<16x128xf32> -> vector<16x128xf32>
    %82 = arith.addf %68, %81 : vector<16x128xf32>
    %c0_37 = arith.constant 0 : index
    %c0_38 = arith.constant 0 : index
    %83 = vector.load %arg11[%c0_37, %c0_38] : memref<1x128xf32, #tpu.memory_space<vmem>>, vector<1x128xf32>
    %84 = vector.broadcast %83 : vector<1x128xf32> to vector<16x128xf32>
    %85 = arith.addf %82, %84 : vector<16x128xf32>
    %c0_39 = arith.constant 0 : index
    %c0_40 = arith.constant 0 : index
    %c0_41 = arith.constant 0 : index
    %86 = vector.load %arg12[%c0_39, %c0_40, %c0_41] : memref<1x16x128xf32, #tpu.memory_space<vmem>>, vector<1x16x128xf32>
    %87 = vector.shape_cast %86 : vector<1x16x128xf32> to vector<16x128xf32>
    %88 = vector.shape_cast %85 : vector<16x128xf32> to vector<1x16x128xf32>
    tpu.vector_store %arg12[%c0_39, %c0_40, %c0_41], %88 {strides = array<i32>} : memref<1x16x128xf32, #tpu.memory_space<vmem>>, vector<1x16x128xf32>,
    return
  }
  func.func @transform_0(%arg0: i32) -> (i32, i32, i32) {
    %c0_i32 = arith.constant 0 : i32
    %c0_i32_0 = arith.constant 0 : i32
    %c0_i32_1 = arith.constant 0 : i32
    return %arg0, %c0_i32, %c0_i32_0 : i32, i32, i32
  }
  func.func @transform_1(%arg0: i32) -> (i32, i32) {
    %c0_i32 = arith.constant 0 : i32
    %c0_i32_0 = arith.constant 0 : i32
    %c0_i32_1 = arith.constant 0 : i32
    return %c0_i32, %c0_i32_0 : i32, i32
  }
  func.func @transform_2(%arg0: i32) -> (i32, i32) {
    %c0_i32 = arith.constant 0 : i32
    %c0_i32_0 = arith.constant 0 : i32
    %c0_i32_1 = arith.constant 0 : i32
    return %c0_i32, %c0_i32_0 : i32, i32
  }
  func.func @transform_3(%arg0: i32) -> (i32, i32) {
    %c0_i32 = arith.constant 0 : i32
    %c0_i32_0 = arith.constant 0 : i32
    %c0_i32_1 = arith.constant 0 : i32
    return %c0_i32, %c0_i32_0 : i32, i32
  }
  func.func @transform_4(%arg0: i32) -> (i32, i32) {
    %c0_i32 = arith.constant 0 : i32
    %c0_i32_0 = arith.constant 0 : i32
    %c0_i32_1 = arith.constant 0 : i32
    return %c0_i32, %c0_i32_0 : i32, i32
  }
  func.func @transform_5(%arg0: i32) -> (i32, i32) {
    %c0_i32 = arith.constant 0 : i32
    %c0_i32_0 = arith.constant 0 : i32
    %c0_i32_1 = arith.constant 0 : i32
    return %c0_i32, %c0_i32_0 : i32, i32
  }
  func.func @transform_6(%arg0: i32) -> (i32, i32) {
    %c0_i32 = arith.constant 0 : i32
    %c0_i32_0 = arith.constant 0 : i32
    %c0_i32_1 = arith.constant 0 : i32
    return %c0_i32, %c0_i32_0 : i32, i32
  }
  func.func @transform_7(%arg0: i32) -> (i32, i32) {
    %c0_i32 = arith.constant 0 : i32
    %c0_i32_0 = arith.constant 0 : i32
    %c0_i32_1 = arith.constant 0 : i32
    return %c0_i32, %c0_i32_0 : i32, i32
  }
  func.func @transform_8(%arg0: i32) -> (i32, i32) {
    %c0_i32 = arith.constant 0 : i32
    %c0_i32_0 = arith.constant 0 : i32
    %c0_i32_1 = arith.constant 0 : i32
    return %c0_i32, %c0_i32_0 : i32, i32
  }
  func.func @transform_9(%arg0: i32) -> (i32, i32) {
    %c0_i32 = arith.constant 0 : i32
    %c0_i32_0 = arith.constant 0 : i32
    %c0_i32_1 = arith.constant 0 : i32
    return %c0_i32, %c0_i32_0 : i32, i32
  }
  func.func @transform_10(%arg0: i32) -> (i32, i32) {
    %c0_i32 = arith.constant 0 : i32
    %c0_i32_0 = arith.constant 0 : i32
    %c0_i32_1 = arith.constant 0 : i32
    return %c0_i32, %c0_i32_0 : i32, i32
  }
  func.func @transform_11(%arg0: i32) -> (i32, i32, i32) {
    %c0_i32 = arith.constant 0 : i32
    %c0_i32_0 = arith.constant 0 : i32
    %c0_i32_1 = arith.constant 0 : i32
    return %arg0, %c0_i32, %c0_i32_0 : i32, i32, i32
  }
}

module attributes {stable_mosaic.version = 11 : i64} {
  func.func @_ln_linear_kernel(%arg0: i32, %arg1: memref<32x128xf32, #tpu.memory_space<vmem>>, %arg2: memref<1x128xf32, #tpu.memory_space<vmem>>, %arg3: memref<1x128xf32, #tpu.memory_space<vmem>>, %arg4: memref<128x128xf32, #tpu.memory_space<vmem>>, %arg5: memref<1x128xf32, #tpu.memory_space<vmem>>, %arg6: memref<32x128xf32, #tpu.memory_space<vmem>>) attributes {dimension_semantics = [#tpu.dimension_semantics<parallel>], iteration_bounds = array<i64: 1>, scalar_prefetch = 0 : i64, scratch_operands = 0 : i64, tpu.core_type = #tpu.core_type<tc>, window_params = [{transform_indices = @transform_0, window_bounds = array<i64: 32, 128>}, {pipeline_mode = #tpu.pipeline_mode<synchronous>, transform_indices = @transform_1, window_bounds = array<i64: 1, 128>}, {pipeline_mode = #tpu.pipeline_mode<synchronous>, transform_indices = @transform_2, window_bounds = array<i64: 1, 128>}, {pipeline_mode = #tpu.pipeline_mode<synchronous>, transform_indices = @transform_3, window_bounds = array<i64: 128, 128>}, {pipeline_mode = #tpu.pipeline_mode<synchronous>, transform_indices = @transform_4, window_bounds = array<i64: 1, 128>}, {transform_indices = @transform_5, window_bounds = array<i64: 32, 128>}]} {
    %c0 = arith.constant 0 : index
    %c0_0 = arith.constant 0 : index
    %0 = vector.load %arg1[%c0, %c0_0] : memref<32x128xf32, #tpu.memory_space<vmem>>, vector<32x128xf32>
    %c0_1 = arith.constant 0 : index
    %c0_2 = arith.constant 0 : index
    %1 = vector.load %arg2[%c0_1, %c0_2] : memref<1x128xf32, #tpu.memory_space<vmem>>, vector<1x128xf32>
    %c0_3 = arith.constant 0 : index
    %c0_4 = arith.constant 0 : index
    %2 = vector.load %arg3[%c0_3, %c0_4] : memref<1x128xf32, #tpu.memory_space<vmem>>, vector<1x128xf32>
    %cst = arith.constant dense<0.000000e+00> : vector<32xf32>
    %3 = vector.multi_reduction <add>, %0, %cst [1] : vector<32x128xf32> to vector<32xf32>
    %4 = vector.shape_cast %3 : vector<32xf32> to vector<32x1xf32>
    %cst_5 = arith.constant 1.280000e+02 : f32
    %5 = vector.broadcast %cst_5 : f32 to vector<32x1xf32>
    %6 = arith.divf %4, %5 : vector<32x1xf32>
    %7 = vector.broadcast %6 : vector<32x1xf32> to vector<32x128xf32>
    %8 = arith.subf %0, %7 : vector<32x128xf32>
    %9 = arith.mulf %8, %8 : vector<32x128xf32>
    %cst_6 = arith.constant dense<0.000000e+00> : vector<32xf32>
    %10 = vector.multi_reduction <add>, %9, %cst_6 [1] : vector<32x128xf32> to vector<32xf32>
    %11 = vector.shape_cast %10 : vector<32xf32> to vector<32x1xf32>
    %cst_7 = arith.constant 1.280000e+02 : f32
    %12 = vector.broadcast %cst_7 : f32 to vector<32x1xf32>
    %13 = arith.divf %11, %12 : vector<32x1xf32>
    %cst_8 = arith.constant 9.99999974E-6 : f32
    %14 = vector.broadcast %cst_8 : f32 to vector<32x1xf32>
    %15 = arith.addf %13, %14 : vector<32x1xf32>
    %16 = math.rsqrt %15 : vector<32x1xf32>
    %17 = vector.broadcast %16 : vector<32x1xf32> to vector<32x128xf32>
    %18 = arith.mulf %8, %17 : vector<32x128xf32>
    %19 = vector.broadcast %1 : vector<1x128xf32> to vector<32x128xf32>
    %20 = arith.mulf %18, %19 : vector<32x128xf32>
    %21 = vector.broadcast %2 : vector<1x128xf32> to vector<32x128xf32>
    %22 = arith.addf %20, %21 : vector<32x128xf32>
    %23 = arith.truncf %22 : vector<32x128xf32> to vector<32x128xbf16>
    %c0_9 = arith.constant 0 : index
    %c0_10 = arith.constant 0 : index
    %24 = vector.load %arg4[%c0_9, %c0_10] : memref<128x128xf32, #tpu.memory_space<vmem>>, vector<128x128xf32>
    %25 = arith.truncf %24 : vector<128x128xf32> to vector<128x128xbf16>
    %cst_11 = arith.constant dense<0.000000e+00> : vector<32x128xf32>
    %26 = tpu.matmul %23, %25, %cst_11 {dimension_numbers = #tpu.dot_dimension_numbers<[1], [0], [0], [1], [0, 0, 1, 1], [], []>} : vector<32x128xbf16>, vector<128x128xbf16>, vector<32x128xf32> -> vector<32x128xf32>
    %c0_12 = arith.constant 0 : index
    %c0_13 = arith.constant 0 : index
    %27 = vector.load %arg5[%c0_12, %c0_13] : memref<1x128xf32, #tpu.memory_space<vmem>>, vector<1x128xf32>
    %28 = vector.broadcast %27 : vector<1x128xf32> to vector<32x128xf32>
    %29 = arith.addf %26, %28 : vector<32x128xf32>
    %c0_14 = arith.constant 0 : index
    %c0_15 = arith.constant 0 : index
    %30 = vector.load %arg6[%c0_14, %c0_15] : memref<32x128xf32, #tpu.memory_space<vmem>>, vector<32x128xf32>
    tpu.vector_store %arg6[%c0_14, %c0_15], %29 {strides = array<i32>} : memref<32x128xf32, #tpu.memory_space<vmem>>, vector<32x128xf32>,
    return
  }
  func.func @transform_0(%arg0: i32) -> (i32, i32) {
    %c0_i32 = arith.constant 0 : i32
    %c0_i32_0 = arith.constant 0 : i32
    return %arg0, %c0_i32 : i32, i32
  }
  func.func @transform_1(%arg0: i32) -> (i32, i32) {
    %c0_i32 = arith.constant 0 : i32
    %c0_i32_0 = arith.constant 0 : i32
    %c0_i32_1 = arith.constant 0 : i32
    return %c0_i32, %c0_i32_0 : i32, i32
  }
  func.func @transform_2(%arg0: i32) -> (i32, i32) {
    %c0_i32 = arith.constant 0 : i32
    %c0_i32_0 = arith.constant 0 : i32
    %c0_i32_1 = arith.constant 0 : i32
    return %c0_i32, %c0_i32_0 : i32, i32
  }
  func.func @transform_3(%arg0: i32) -> (i32, i32) {
    %c0_i32 = arith.constant 0 : i32
    %c0_i32_0 = arith.constant 0 : i32
    %c0_i32_1 = arith.constant 0 : i32
    return %c0_i32, %c0_i32_0 : i32, i32
  }
  func.func @transform_4(%arg0: i32) -> (i32, i32) {
    %c0_i32 = arith.constant 0 : i32
    %c0_i32_0 = arith.constant 0 : i32
    %c0_i32_1 = arith.constant 0 : i32
    return %c0_i32, %c0_i32_0 : i32, i32
  }
  func.func @transform_5(%arg0: i32) -> (i32, i32) {
    %c0_i32 = arith.constant 0 : i32
    %c0_i32_0 = arith.constant 0 : i32
    return %arg0, %c0_i32 : i32, i32
  }
}

</mosaic_0001>

<llo_original>
// kernel: tpu_custom_call.1
$region0: #{tpu_custom_call.1}
  #allocation0 [shape = 'u32[]', space=smem, size = 0x4, offset = 0x4, fixed_abs, tag = 'smem constant byte address 0x4 - core index']
  #allocation1 [shape = 'u32[144,128]{1,0:T(1,128)}', space=vmem, size = 0x12000, scoped, tag = 'internal scratch']
  %s0 = inlined_call_operand.hbm [shape: f32[16,128], index: 0, kind: input, shape index: {}]
  %s1 = inlined_call_operand.hbm [shape: f32[8,128], index: 1, kind: input, shape index: {}]
  %s2 = inlined_call_operand.hbm [shape: f32[16,128], index: 2, kind: output, shape index: {}]
  %s3 = sld [smem:[#allocation0]]
  $region49: #{tpu_custom_call.1} parent=0
    _
  %s5 = ssub.s32 1, %s3
  %s6 = scalar_select 0, %s5, %s3
  $region1: #{tpu_custom_call.1} parent=0
    #allocation2 [shape = 'u8[8192]{0}', space=vmem, size = 0x2000, scoped, tag = 'input window, operand 0']
    #allocation3 [shape = 's32[2]{0}', space=sflag, size = 0x8, scoped, tag = 'scoped memory for tpu_custom_call.1']
    #allocation4 [shape = 's32[2]{0}', space=sflag, size = 0x8, scoped, tag = 'scoped memory for tpu_custom_call.1']
    #allocation5 [shape = 'u8[4096]{0}', space=vmem, size = 0x1000, scoped, tag = 'input window, operand 1, single buffered']
    #allocation6 [shape = 's32[1]{0}', space=sflag, size = 0x4, scoped, tag = 'scoped memory for tpu_custom_call.1']
    #allocation7 [shape = 'u8[8192]{0}', space=vmem, size = 0x2000, scoped, tag = 'output window, operand 0']
    %7 = vsyncpa [#allocation3], 0
    %s8 = scalar_lea.sflag [#allocation3], 1
    %9 = vsyncpa %s8, 0
    %10 = vsyncpa [#allocation6], 0
    %11 = vsyncpa [#allocation4], 0
    %s12 = scalar_lea.sflag [#allocation4], 1
    %13 = vsyncpa %s12, 0
    loop: start=0, step=1, limit=4
    $region2: #{tpu_custom_call.1} parent=1 // loop_pre_header
      _
    $region3: #{tpu_custom_call.1} parent=1 // loop_header
      %s15 = sphi 0, %s19
      %p16 = scmp.ge.s32.totalorder %s15, 4
      %s25 = sphi 0, %s27
      %s28 = sphi 0, %s25
      %s29 = sphi 0, %s28
      %s45 = sphi 0, %s29
      %s49 = sphi 0, %s49
      %s51 = sphi 0, %s49
      %s52 = sphi 0, %s51
      %s66 = sphi 0, %s52
      %s72 = sphi 0, %s74
      %s75 = sphi 0, %s72
      %s76 = sphi 0, %s75
      %s92 = sphi 0, %s76
    $region4: #{tpu_custom_call.1} parent=1 // loop_header_branch
      %18 = sbr.rel (%p16) target = $region8
    $region5: #{tpu_custom_call.1} parent=1 // loop_body
      %s20 = ssub.s32 %s15, 1
      %s21 = ssub.s32 %s15, 2
      %s22 = sadd.s32 %s15, 1
      %s23 = ssub.s32 %s15, %s22
      %p24 = scmp.eq.s32.totalorder %s23, 0
      %s26 = sadd.s32 %s25, 1
      %s27 = scalar_select %p24, %s25, %s26
      %p30 = pneg %p24
      %p31 = scmp.eq.s32.totalorder %s15, 1
      %p32 = por %p30, %p31
      %p33 = scmp.ne.s32.totalorder %s25, %s28
      %p34 = scmp.eq.s32.totalorder %s15, 0
      %p35 = por %p33, %p34
      %p36 = scmp.ne.s32.totalorder %s25, %s28
      %p37 = scmp.eq.s32.totalorder %s20, 1
      %p38 = por %p36, %p37
      %p39 = scmp.ne.s32.totalorder %s28, %s29
      %p40 = scmp.eq.s32.totalorder %s20, 0
      %p41 = por %p39, %p40
      %p42 = scmp.ne.s32.totalorder %s28, %s29
      %p43 = scmp.eq.s32.totalorder %s21, 1
      %p44 = por %p42, %p43
      %p46 = scmp.ne.s32.totalorder %s29, %s45
      %p47 = scmp.eq.s32.totalorder %s21, 0
      %p48 = por %p46, %p47
      %s50 = sadd.s32 %s49, 1
      %p53 = scmp.eq.s32.totalorder %s15, 1
      %p54 = scmp.ne.s32.totalorder %s49, %s51
      %p55 = scmp.eq.s32.totalorder %s15, 0
      %p56 = por %p54, %p55
      %p57 = scmp.ne.s32.totalorder %s49, %s51
      %p58 = scmp.eq.s32.totalorder %s20, 1
      %p59 = por %p57, %p58
      %p60 = scmp.ne.s32.totalorder %s51, %s52
      %p61 = scmp.eq.s32.totalorder %s20, 0
      %p62 = por %p60, %p61
      %p63 = scmp.ne.s32.totalorder %s51, %s52
      %p64 = scmp.eq.s32.totalorder %s21, 1
      %p65 = por %p63, %p64
      %p67 = scmp.ne.s32.totalorder %s52, %s66
      %p68 = scmp.eq.s32.totalorder %s21, 0
      %p69 = por %p67, %p68
      %s70 = ssub.s32 %s15, %s22
      %p71 = scmp.eq.s32.totalorder %s70, 0
      %s73 = sadd.s32 %s72, 1
      %s74 = scalar_select %p71, %s72, %s73
      %p77 = pneg %p71
      %p78 = scmp.eq.s32.totalorder %s15, 1
      %p79 = por %p77, %p78
      %p80 = scmp.ne.s32.totalorder %s72, %s75
      %p81 = scmp.eq.s32.totalorder %s15, 0
      %p82 = por %p80, %p81
      %p83 = scmp.ne.s32.totalorder %s72, %s75
      %p84 = scmp.eq.s32.totalorder %s20, 1
      %p85 = por %p83, %p84
      %p86 = scmp.ne.s32.totalorder %s75, %s76
      %p87 = scmp.eq.s32.totalorder %s20, 0
      %p88 = por %p86, %p87
      %p89 = scmp.ne.s32.totalorder %s75, %s76
      %p90 = scmp.eq.s32.totalorder %s21, 1
      %p91 = por %p89, %p90
      %p93 = scmp.ne.s32.totalorder %s76, %s92
      %p94 = scmp.eq.s32.totalorder %s21, 0
      %p95 = por %p93, %p94
      %p96 = scmp.le.s32.totalorder 1, %s15
      %p97 = scmp.lt.s32.totalorder %s15, 3
      %p98 = pnand %p96, %p97
      %p99 = pneg %p98
      // Predicated region
      $region9: #{tpu_custom_call.1} parent=5 // pred_check
        _
      $region10: #{tpu_custom_call.1} parent=5 // pred_check_branch
        %101 = sbr.rel (%p98) target = $region12
      $region11: #{tpu_custom_call.1} parent=5 // pred_region
        %s102 = ssub.s32 %s15, 1
        // Predicated region
        $region13: #{tpu_custom_call.1} parent=11 // pred_check
          %p103 = pneg %p62
        $region14: #{tpu_custom_call.1} parent=11 // pred_check_branch
          %105 = sbr.rel (%p103) target = $region16
        $region15: #{tpu_custom_call.1} parent=11 // pred_region
          %s107 = ssub.s32 128, 128
          %108 = vsyncadd [#allocation6], %s107
          %s110 = sshll.u32 [#allocation5], 4
          %s111 = int_to_ptr.vmem [resolvable:$true] %s110
          %113 = dma.hbm_to_vmem [thread:$0]  %s1, 128, %s111, [#allocation6]
        $region16: #{tpu_custom_call.1} parent=11 // pred_fallthru
          _
      $region12: #{tpu_custom_call.1} parent=5 // pred_fallthru
        _
      %p114 = scmp.lt.s32.totalorder %s15, 2
      // Predicated region
      $region17: #{tpu_custom_call.1} parent=5 // pred_check
        %p115 = pneg %p114
      $region18: #{tpu_custom_call.1} parent=5 // pred_check_branch
        %117 = sbr.rel (%p115) target = $region20
      $region19: #{tpu_custom_call.1} parent=5 // pred_region
        // Predicated region
        $region21: #{tpu_custom_call.1} parent=19 // pred_check
          %p118 = pneg %p35
        $region22: #{tpu_custom_call.1} parent=19 // pred_check_branch
          %120 = sbr.rel (%p118) target = $region24
        $region23: #{tpu_custom_call.1} parent=19 // pred_region
          %s121 = sand.u32 %s25, 1
          %s122 = scalar_lea.sflag [#allocation3], %s121
          %s123 = sand.u32 %s25, 1
          %s124 = smul.addr %s123, 8
          %s125 = scalar_lea.vmem [#allocation2], %s124
          %s127 = ssub.s32 128, 128
          %128 = vsyncadd %s122, %s127
          %s129 = smul.addr %s15, 128
          %s130 = scalar_lea.hbm %s0, %s129
          %s132 = sshll.u32 %s125, 4
          %s133 = int_to_ptr.vmem [resolvable:$true] %s132
          %135 = dma.hbm_to_vmem [thread:$0]  %s130, 128, %s133, %s122
        $region24: #{tpu_custom_call.1} parent=19 // pred_fallthru
          _
      $region20: #{tpu_custom_call.1} parent=5 // pred_fallthru
        _
      %p136 = scmp.le.s32.totalorder 1, %s15
      %p137 = scmp.lt.s32.totalorder %s15, 3
      %p138 = pnand %p136, %p137
      %p139 = pneg %p138
      // Predicated region
      $region25: #{tpu_custom_call.1} parent=5 // pred_check
        _
      $region26: #{tpu_custom_call.1} parent=5 // pred_check_branch
        %141 = sbr.rel (%p138) target = $region28
      $region27: #{tpu_custom_call.1} parent=5 // pred_region
        %s142 = ssub.s32 %s15, 1
        %s143 = sand.u32 %s28, 1
        %s144 = scalar_lea.sflag [#allocation3], %s143
        %s145 = sand.u32 %s28, 1
        %s146 = smul.addr %s145, 8
        %s147 = scalar_lea.vmem [#allocation2], %s146
        // Predicated region
        $region29: #{tpu_custom_call.1} parent=27 // pred_check
          %p148 = pneg %p41
        $region30: #{tpu_custom_call.1} parent=27 // pred_check_branch
          %150 = sbr.rel (%p148) target = $region32
        $region31: #{tpu_custom_call.1} parent=27 // pred_region
          %151 = dma.done %s144, 128
        $region32: #{tpu_custom_call.1} parent=27 // pred_fallthru
          _
        // Predicated region
        $region33: #{tpu_custom_call.1} parent=27 // pred_check
          %p152 = pneg %p62
        $region34: #{tpu_custom_call.1} parent=27 // pred_check_branch
          %154 = sbr.rel (%p152) target = $region36
        $region35: #{tpu_custom_call.1} parent=27 // pred_region
          %155 = dma.done [#allocation6], 128
        $region36: #{tpu_custom_call.1} parent=27 // pred_fallthru
          _
        %s156 = sand.u32 %s28, 1
        %s157 = scalar_lea.sflag [#allocation3], %s156
        %s158 = sand.u32 %s28, 1
        %s159 = smul.addr %s158, 8
        %s160 = scalar_lea.vmem [#allocation2], %s159
        %p161 = pneg %p41
        %p162 = pneg %p38
        %p163 = pneg %p62
        %p164 = pneg %p59
        %p165 = pneg %p88
        %p166 = pneg %p85
        %s167 = sand.u32 %s75, 1
        %s168 = scalar_lea.sflag [#allocation4], %s167
        %s169 = sand.u32 %s75, 1
        %s170 = smul.addr %s169, 8
        %s171 = scalar_lea.vmem [#allocation7], %s170
        %v172 = vld [vmem:[%s147] sm:$0xff]
        %v173 = vld [vmem:[#allocation5] sm:$0xff]
        %v174 = vadd.f32 %v172, %v173
        %175 = vst [vmem:[%s171] sm:$0xff] %v174
        %s176 = sand.u32 %s75, 1
        %s177 = scalar_lea.sflag [#allocation4], %s176
        %s178 = sand.u32 %s75, 1
        %s179 = smul.addr %s178, 8
        %s180 = scalar_lea.vmem [#allocation7], %s179
        // Predicated region
        $region37: #{tpu_custom_call.1} parent=27 // pred_check
          %p181 = pneg %p85
        $region38: #{tpu_custom_call.1} parent=27 // pred_check_branch
          %183 = sbr.rel (%p181) target = $region40
        $region39: #{tpu_custom_call.1} parent=27 // pred_region
          %s185 = ssub.s32 128, 128
          %186 = vsyncadd %s177, %s185
          %s187 = smul.addr %s20, 128
          %s188 = scalar_lea.hbm %s2, %s187
          %s190 = sshll.u32 %s180, 4
          %s191 = int_to_ptr.vmem [resolvable:$true] %s190
          %193 = dma.vmem_to_hbm [thread:$0]  %s191, 128, %s188, %s177
        $region40: #{tpu_custom_call.1} parent=27 // pred_fallthru
          _
      $region28: #{tpu_custom_call.1} parent=5 // pred_fallthru
        _
      %p194 = scmp.le.s32.totalorder 2, %s15
      // Predicated region
      $region41: #{tpu_custom_call.1} parent=5 // pred_check
        %p195 = pneg %p194
      $region42: #{tpu_custom_call.1} parent=5 // pred_check_branch
        %197 = sbr.rel (%p195) target = $region44
      $region43: #{tpu_custom_call.1} parent=5 // pred_region
        %s198 = ssub.s32 %s15, 2
        // Predicated region
        $region45: #{tpu_custom_call.1} parent=43 // pred_check
          %p199 = pneg %p91
        $region46: #{tpu_custom_call.1} parent=43 // pred_check_branch
          %201 = sbr.rel (%p199) target = $region48
        $region47: #{tpu_custom_call.1} parent=43 // pred_region
          %s202 = sand.u32 %s76, 1
          %s203 = scalar_lea.sflag [#allocation4], %s202
          %s204 = sand.u32 %s76, 1
          %s205 = smul.addr %s204, 8
          %s206 = scalar_lea.vmem [#allocation7], %s205
          %207 = dma.done %s203, 128
        $region48: #{tpu_custom_call.1} parent=43 // pred_fallthru
          _
      $region44: #{tpu_custom_call.1} parent=5 // pred_fallthru
        _
    $region6: #{tpu_custom_call.1} parent=1 // loop_footer
      %s19 = sadd.s32 1, %s15
    $region7: #{tpu_custom_call.1} parent=1 // loop_footer_branch
      %14 = sbr.rel target = $region3
    $region8: #{tpu_custom_call.1} parent=1 // loop_exit
      _
    %208 = vsyncpa [#allocation3], 1
    %s209 = scalar_lea.sflag [#allocation3], 1
    %210 = vsyncpa %s209, 1
    %211 = vsyncpa [#allocation6], 1
    %212 = vsyncpa [#allocation4], 1
    %s213 = scalar_lea.sflag [#allocation4], 1
    %214 = vsyncpa %s213, 1

// kernel: _lambda_.12
$region0: #{_lambda_.12}
  #allocation0 [shape = 'u32[]', space=smem, size = 0x4, offset = 0x4, fixed_abs, tag = 'smem constant byte address 0x4 - core index']
  #allocation1 [shape = 'u32[144,128]{1,0:T(1,128)}', space=vmem, size = 0x12000, scoped, tag = 'internal scratch']
  %s0 = inlined_call_operand.vmem [shape: f32[32,8], index: 0, kind: input, shape index: {}]
  %s1 = inlined_call_operand.vmem [shape: f32[8,128], index: 1, kind: input, shape index: {}]
  %s2 = inlined_call_operand.vmem [shape: f32[1,128], index: 2, kind: input, shape index: {}]
  %s3 = inlined_call_operand.vmem [shape: f32[1,128], index: 3, kind: input, shape index: {}]
  %s4 = inlined_call_operand.vmem [shape: f32[1,128], index: 4, kind: input, shape index: {}]
  %s5 = inlined_call_operand.vmem [shape: f32[32,128], index: 5, kind: output, shape index: {}]
  %s6 = sld [smem:[#allocation0]]
  $region30: #{_lambda_.12} parent=0
    _
  %s8 = ssub.s32 1, %s6
  %s9 = scalar_select 0, %s8, %s6
  // Predicated region
  $region2: #{_lambda_.12} parent=0 // pred_check
    _
  $region3: #{_lambda_.12} parent=0 // pred_check_branch
    %11 = sbr.rel (0) target = $region5
  $region4: #{_lambda_.12} parent=0 // pred_region
    _
  $region5: #{_lambda_.12} parent=0 // pred_fallthru
    _
  // Predicated region
  $region6: #{_lambda_.12} parent=0 // pred_check
    _
  $region7: #{_lambda_.12} parent=0 // pred_check_branch
    %13 = sbr.rel (0) target = $region9
  $region8: #{_lambda_.12} parent=0 // pred_region
    _
  $region9: #{_lambda_.12} parent=0 // pred_fallthru
    _
  // Predicated region
  $region10: #{_lambda_.12} parent=0 // pred_check
    _
  $region11: #{_lambda_.12} parent=0 // pred_check_branch
    %15 = sbr.rel (0) target = $region13
  $region12: #{_lambda_.12} parent=0 // pred_region
    _
  $region13: #{_lambda_.12} parent=0 // pred_fallthru
    _
  // Predicated region
  $region14: #{_lambda_.12} parent=0 // pred_check
    _
  $region15: #{_lambda_.12} parent=0 // pred_check_branch
    %17 = sbr.rel (0) target = $region17
  $region16: #{_lambda_.12} parent=0 // pred_region
    _
  $region17: #{_lambda_.12} parent=0 // pred_fallthru
    _
  // Predicated region
  $region18: #{_lambda_.12} parent=0 // pred_check
    _
  $region19: #{_lambda_.12} parent=0 // pred_check_branch
    %19 = sbr.rel (0) target = $region21
  $region20: #{_lambda_.12} parent=0 // pred_region
    _
  $region21: #{_lambda_.12} parent=0 // pred_fallthru
    _
  %v21 = vld [vmem:[%s0] sm:$0xff]
  %v22 = vld [vmem:[%s0 + $0x8] sm:$0xff]
  %v23 = vld [vmem:[%s0 + $0x10] sm:$0xff]
  %v24 = vld [vmem:[%s0 + $0x18] sm:$0xff]
  %v25 = vpack.c.bf16 %v22, %v21
  %v26 = vpack.c.bf16 %v24, %v23
  %v27 = vld [vmem:[%s1] sm:$0xff]
  %v28 = vpack.c.bf16 %v27, %v27
  %v29 = vld [vmem:[%s2] sm:$0x1]
  %v31 = vlaneseq
  %v32 = vshrl.u32 %v31, 7
  %v33 = vsub.s32 0, %v32
  %v34 = vrot.slane %v29, %v33
  %vm36 = vcmask 64512
  %v38 = vsel %vm36, %v25, 0
  %v41 = vsel %vm36, %v26, 0
  %vm43 = vcmask 1043456
  %v45 = vsel %vm43, %v28, 0
  %47 = vmatprep.subr.bf16.mxu0 0
  %48 = vmatpush1.bf16.msra.mxu0 %v45
  %49 = vmatprep.subr.bf16.mxu0 0
  %50 = vmatpush1.bf16.msra.mxu0 0
  %51 = vmatprep.subr.bf16.mxu0 0
  %52 = vmatpush1.bf16.msra.mxu0 0
  %53 = vmatprep.subr.bf16.mxu0 0
  %54 = vmatpush1.bf16.msra.mxu0 0
  %55 = vmatprep.subr.bf16.mxu0 0
  %56 = vmatpush1.bf16.msra.mxu0 0
  %57 = vmatprep.subr.bf16.mxu0 0
  %58 = vmatpush1.bf16.msra.mxu0 0
  %59 = vmatprep.subr.bf16.mxu0 0
  %60 = vmatpush1.bf16.msra.mxu0 0
  %61 = vmatprep.subr.bf16.mxu0 0
  %62 = vmatpush1.bf16.msra.mxu0 0
  %63 = vmatprep.subr.bf16.mxu0 0
  %64 = vmatpush1.bf16.msra.mxu0 0
  %65 = vmatprep.subr.bf16.mxu0 0
  %66 = vmatpush1.bf16.msra.mxu0 0
  %67 = vmatprep.subr.bf16.mxu0 0
  %68 = vmatpush1.bf16.msra.mxu0 0
  %69 = vmatprep.subr.bf16.mxu0 0
  %70 = vmatpush1.bf16.msra.mxu0 0
  %71 = vmatprep.subr.bf16.mxu0 0
  %72 = vmatpush1.bf16.msra.mxu0 0
  %73 = vmatprep.subr.bf16.mxu0 0
  %74 = vmatpush1.bf16.msra.mxu0 0
  %75 = vmatprep.subr.bf16.mxu0 0
  %76 = vmatpush1.bf16.msra.mxu0 0
  %77 = vmatprep.subr.bf16.mxu0 0
  %78 = vmatpush1.bf16.msra.mxu0 0
  %79 = vmatprep.mubr.bf16.mxu0 0
  %80 = vmatmul.mubr.bf16.gmra.mrb[0].mxu0 %v38
  %v81 = vpop.f32.mrb[0].mxu0
  %v82 = vadd.f32 %v34, %v81
  %v83 = vpop.f32.mrb[0].mxu0
  %v84 = vpop.f32.mrb[0].mxu0
  %v85 = vadd.f32 %v34, %v84
  %v86 = vpop.f32.mrb[0].mxu0
  %87 = vmatprep.mubr.bf16.mxu0 0
  %88 = vmatmul.mubr.bf16.gmra.mrb[0].mxu0 %v41
  %v89 = vpop.f32.mrb[0].mxu0
  %v90 = vadd.f32 %v34, %v89
  %v91 = vpop.f32.mrb[0].mxu0
  %v92 = vpop.f32.mrb[0].mxu0
  %v93 = vadd.f32 %v34, %v92
  %v94 = vpop.f32.mrb[0].mxu0
  %95 = vdwg.mxu0
  %v96 = vld [vmem:[%s3] sm:$0x1]
  %v97 = vld [vmem:[%s4] sm:$0x1]
  %98 = vadd.xlane.f32.xlu0 %v82
  %v99 = vpop.xlane.xlu0 %98
  %100 = vadd.xlane.f32.xlu0 %v85
  %v101 = vpop.xlane.xlu0 %100
  %102 = vadd.xlane.f32.xlu0 %v90
  %v103 = vpop.xlane.xlu0 %102
  %104 = vadd.xlane.f32.xlu0 %v93
  %v105 = vpop.xlane.xlu0 %104
  %v106 = vrcp.pop 128.0
  %v107 = vmul.f32 %v99, %v106
  %v108 = vmul.f32 %v101, %v106
  %v109 = vmul.f32 %v103, %v106
  %v110 = vmul.f32 %v105, %v106
  %v111 = vsub.f32 %v82, %v107
  %v112 = vsub.f32 %v85, %v108
  %v113 = vsub.f32 %v90, %v109
  %v114 = vsub.f32 %v93, %v110
  %v115 = vmul.f32 %v111, %v111
  %v116 = vmul.f32 %v112, %v112
  %v117 = vmul.f32 %v113, %v113
  %v118 = vmul.f32 %v114, %v114
  %119 = vadd.xlane.f32.xlu0 %v115
  %v120 = vpop.xlane.xlu0 %119
  %121 = vadd.xlane.f32.xlu0 %v116
  %v122 = vpop.xlane.xlu0 %121
  %123 = vadd.xlane.f32.xlu0 %v117
  %v124 = vpop.xlane.xlu0 %123
  %125 = vadd.xlane.f32.xlu0 %v118
  %v126 = vpop.xlane.xlu0 %125
  %v127 = vmul.f32 %v120, %v106
  %v128 = vmul.f32 %v122, %v106
  %v129 = vmul.f32 %v124, %v106
  %v130 = vmul.f32 %v126, %v106
  %v131 = vadd.f32 %v127, 1e-05
  %v132 = vadd.f32 %v128, 1e-05
  %v133 = vadd.f32 %v129, 1e-05
  %v134 = vadd.f32 %v130, 1e-05
  %v135 = vrsqrt.pop %v131
  %v136 = vrsqrt.pop %v132
  %v137 = vrsqrt.pop %v133
  %v138 = vrsqrt.pop %v134
  %v139 = vmul.f32 %v111, %v135
  %v140 = vmul.f32 %v112, %v136
  %v141 = vmul.f32 %v113, %v137
  %v142 = vmul.f32 %v114, %v138
  %v144 = vlaneseq
  %v145 = vshrl.u32 %v144, 7
  %v146 = vsub.s32 0, %v145
  %v147 = vrot.slane %v96, %v146
  %v149 = vmul.f32 %v139, %v147
  %v150 = vmul.f32 %v140, %v147
  %v151 = vmul.f32 %v141, %v147
  %v152 = vmul.f32 %v142, %v147
  %v154 = vlaneseq
  %v155 = vshrl.u32 %v154, 7
  %v156 = vsub.s32 0, %v155
  %v157 = vrot.slane %v97, %v156
  %v159 = vadd.f32 %v149, %v157
  %v160 = vadd.f32 %v150, %v157
  %v161 = vadd.f32 %v151, %v157
  %v162 = vadd.f32 %v152, %v157
  %163 = vst [vmem:[%s5] sm:$0xff] %v159
  %164 = vst [vmem:[%s5 + $0x8] sm:$0xff] %v160
  %165 = vst [vmem:[%s5 + $0x10] sm:$0xff] %v161
  %166 = vst [vmem:[%s5 + $0x18] sm:$0xff] %v162
  // Predicated region
  $region22: #{_lambda_.12} parent=0 // pred_check
    _
  $region23: #{_lambda_.12} parent=0 // pred_check_branch
    %168 = sbr.rel (0) target = $region25
  $region24: #{_lambda_.12} parent=0 // pred_region
    _
  $region25: #{_lambda_.12} parent=0 // pred_fallthru
    _
  // Predicated region
  $region26: #{_lambda_.12} parent=0 // pred_check
    _
  $region27: #{_lambda_.12} parent=0 // pred_check_branch
    %170 = sbr.rel (0) target = $region29
  $region28: #{_lambda_.12} parent=0 // pred_region
    _
  $region29: #{_lambda_.12} parent=0 // pred_fallthru
    _

// kernel: _lambda_.15
$region0: #{_lambda_.15}
  #allocation0 [shape = 'u32[]', space=smem, size = 0x4, offset = 0x4, fixed_abs, tag = 'smem constant byte address 0x4 - core index']
  #allocation1 [shape = 'u32[144,128]{1,0:T(1,128)}', space=vmem, size = 0x12000, scoped, tag = 'internal scratch']
  %s0 = inlined_call_operand.vmem [shape: f32[2,16,128], index: 0, kind: input, shape index: {}]
  %s1 = inlined_call_operand.vmem [shape: f32[128,384], index: 1, kind: input, shape index: {}]
  %s2 = inlined_call_operand.vmem [shape: f32[1,384], index: 2, kind: input, shape index: {}]
  %s3 = inlined_call_operand.vmem [shape: f32[128,128], index: 3, kind: input, shape index: {}]
  %s4 = inlined_call_operand.vmem [shape: f32[1,128], index: 4, kind: input, shape index: {}]
  %s5 = inlined_call_operand.vmem [shape: f32[128,512], index: 5, kind: input, shape index: {}]
  %s6 = inlined_call_operand.vmem [shape: f32[1,512], index: 6, kind: input, shape index: {}]
  %s7 = inlined_call_operand.vmem [shape: f32[512,128], index: 7, kind: input, shape index: {}]
  %s8 = inlined_call_operand.vmem [shape: f32[1,128], index: 8, kind: input, shape index: {}]
  %s9 = inlined_call_operand.vmem [shape: f32[2,16,128], index: 9, kind: output, shape index: {}]
  %s10 = sld [smem:[#allocation0]]
  $region69: #{_lambda_.15} parent=0
    _
  %s12 = ssub.s32 1, %s10
  %s13 = scalar_select 0, %s12, %s10
  loop: start=0, step=1, limit=4
  $region2: #{_lambda_.15} parent=0 // loop_pre_header
    _
  $region3: #{_lambda_.15} parent=0 // loop_header
    %s15 = sphi 0, %s19
    %p16 = scmp.ge.s32.totalorder %s15, 4
    %s25 = sphi 0, %s27
    %s28 = sphi 0, %s25
    %s29 = sphi 0, %s28
    %s45 = sphi 0, %s29
    %s49 = sphi 0, %s49
    %s51 = sphi 0, %s49
    %s52 = sphi 0, %s51
    %s66 = sphi 0, %s52
    %s70 = sphi 0, %s70
    %s72 = sphi 0, %s70
    %s73 = sphi 0, %s72
    %s87 = sphi 0, %s73
    %s91 = sphi 0, %s91
    %s93 = sphi 0, %s91
    %s94 = sphi 0, %s93
    %s108 = sphi 0, %s94
    %s112 = sphi 0, %s112
    %s114 = sphi 0, %s112
    %s115 = sphi 0, %s114
    %s129 = sphi 0, %s115
    %s133 = sphi 0, %s133
    %s135 = sphi 0, %s133
    %s136 = sphi 0, %s135
    %s150 = sphi 0, %s136
    %s154 = sphi 0, %s154
    %s156 = sphi 0, %s154
    %s157 = sphi 0, %s156
    %s171 = sphi 0, %s157
    %s175 = sphi 0, %s175
    %s177 = sphi 0, %s175
    %s178 = sphi 0, %s177
    %s192 = sphi 0, %s178
    %s196 = sphi 0, %s196
    %s198 = sphi 0, %s196
    %s199 = sphi 0, %s198
    %s213 = sphi 0, %s199
    %s219 = sphi 0, %s221
    %s222 = sphi 0, %s219
    %s223 = sphi 0, %s222
    %s239 = sphi 0, %s223
  $region4: #{_lambda_.15} parent=0 // loop_header_branch
    %18 = sbr.rel (%p16) target = $region8
  $region5: #{_lambda_.15} parent=0 // loop_body
    %s20 = ssub.s32 %s15, 1
    %s21 = ssub.s32 %s15, 2
    %s22 = sadd.s32 %s15, 1
    %s23 = ssub.s32 %s15, %s22
    %p24 = scmp.eq.s32.totalorder %s23, 0
    %s26 = sadd.s32 %s25, 1
    %s27 = scalar_select %p24, %s25, %s26
    %p30 = pneg %p24
    %p31 = scmp.eq.s32.totalorder %s15, 1
    %p32 = por %p30, %p31
    %p33 = scmp.ne.s32.totalorder %s25, %s28
    %p34 = scmp.eq.s32.totalorder %s15, 0
    %p35 = por %p33, %p34
    %p36 = scmp.ne.s32.totalorder %s25, %s28
    %p37 = scmp.eq.s32.totalorder %s20, 1
    %p38 = por %p36, %p37
    %p39 = scmp.ne.s32.totalorder %s28, %s29
    %p40 = scmp.eq.s32.totalorder %s20, 0
    %p41 = por %p39, %p40
    %p42 = scmp.ne.s32.totalorder %s28, %s29
    %p43 = scmp.eq.s32.totalorder %s21, 1
    %p44 = por %p42, %p43
    %p46 = scmp.ne.s32.totalorder %s29, %s45
    %p47 = scmp.eq.s32.totalorder %s21, 0
    %p48 = por %p46, %p47
    %s50 = sadd.s32 %s49, 1
    %p53 = scmp.eq.s32.totalorder %s15, 1
    %p54 = scmp.ne.s32.totalorder %s49, %s51
    %p55 = scmp.eq.s32.totalorder %s15, 0
    %p56 = por %p54, %p55
    %p57 = scmp.ne.s32.totalorder %s49, %s51
    %p58 = scmp.eq.s32.totalorder %s20, 1
    %p59 = por %p57, %p58
    %p60 = scmp.ne.s32.totalorder %s51, %s52
    %p61 = scmp.eq.s32.totalorder %s20, 0
    %p62 = por %p60, %p61
    %p63 = scmp.ne.s32.totalorder %s51, %s52
    %p64 = scmp.eq.s32.totalorder %s21, 1
    %p65 = por %p63, %p64
    %p67 = scmp.ne.s32.totalorder %s52, %s66
    %p68 = scmp.eq.s32.totalorder %s21, 0
    %p69 = por %p67, %p68
    %s71 = sadd.s32 %s70, 1
    %p74 = scmp.eq.s32.totalorder %s15, 1
    %p75 = scmp.ne.s32.totalorder %s70, %s72
    %p76 = scmp.eq.s32.totalorder %s15, 0
    %p77 = por %p75, %p76
    %p78 = scmp.ne.s32.totalorder %s70, %s72
    %p79 = scmp.eq.s32.totalorder %s20, 1
    %p80 = por %p78, %p79
    %p81 = scmp.ne.s32.totalorder %s72, %s73
    %p82 = scmp.eq.s32.totalorder %s20, 0
    %p83 = por %p81, %p82
    %p84 = scmp.ne.s32.totalorder %s72, %s73
    %p85 = scmp.eq.s32.totalorder %s21, 1
    %p86 = por %p84, %p85
    %p88 = scmp.ne.s32.totalorder %s73, %s87
    %p89 = scmp.eq.s32.totalorder %s21, 0
    %p90 = por %p88, %p89
    %s92 = sadd.s32 %s91, 1
    %p95 = scmp.eq.s32.totalorder %s15, 1
    %p96 = scmp.ne.s32.totalorder %s91, %s93
    %p97 = scmp.eq.s32.totalorder %s15, 0
    %p98 = por %p96, %p97
    %p99 = scmp.ne.s32.totalorder %s91, %s93
    %p100 = scmp.eq.s32.totalorder %s20, 1
    %p101 = por %p99, %p100
    %p102 = scmp.ne.s32.totalorder %s93, %s94
    %p103 = scmp.eq.s32.totalorder %s20, 0
    %p104 = por %p102, %p103
    %p105 = scmp.ne.s32.totalorder %s93, %s94
    %p106 = scmp.eq.s32.totalorder %s21, 1
    %p107 = por %p105, %p106
    %p109 = scmp.ne.s32.totalorder %s94, %s108
    %p110 = scmp.eq.s32.totalorder %s21, 0
    %p111 = por %p109, %p110
    %s113 = sadd.s32 %s112, 1
    %p116 = scmp.eq.s32.totalorder %s15, 1
    %p117 = scmp.ne.s32.totalorder %s112, %s114
    %p118 = scmp.eq.s32.totalorder %s15, 0
    %p119 = por %p117, %p118
    %p120 = scmp.ne.s32.totalorder %s112, %s114
    %p121 = scmp.eq.s32.totalorder %s20, 1
    %p122 = por %p120, %p121
    %p123 = scmp.ne.s32.totalorder %s114, %s115
    %p124 = scmp.eq.s32.totalorder %s20, 0
    %p125 = por %p123, %p124
    %p126 = scmp.ne.s32.totalorder %s114, %s115
    %p127 = scmp.eq.s32.totalorder %s21, 1
    %p128 = por %p126, %p127
    %p130 = scmp.ne.s32.totalorder %s115, %s129
    %p131 = scmp.eq.s32.totalorder %s21, 0
    %p132 = por %p130, %p131
    %s134 = sadd.s32 %s133, 1
    %p137 = scmp.eq.s32.totalorder %s15, 1
    %p138 = scmp.ne.s32.totalorder %s133, %s135
    %p139 = scmp.eq.s32.totalorder %s15, 0
    %p140 = por %p138, %p139
    %p141 = scmp.ne.s32.totalorder %s133, %s135
    %p142 = scmp.eq.s32.totalorder %s20, 1
    %p143 = por %p141, %p142
    %p144 = scmp.ne.s32.totalorder %s135, %s136
    %p145 = scmp.eq.s32.totalorder %s20, 0
    %p146 = por %p144, %p145
    %p147 = scmp.ne.s32.totalorder %s135, %s136
    %p148 = scmp.eq.s32.totalorder %s21, 1
    %p149 = por %p147, %p148
    %p151 = scmp.ne.s32.totalorder %s136, %s150
    %p152 = scmp.eq.s32.totalorder %s21, 0
    %p153 = por %p151, %p152
    %s155 = sadd.s32 %s154, 1
    %p158 = scmp.eq.s32.totalorder %s15, 1
    %p159 = scmp.ne.s32.totalorder %s154, %s156
    %p160 = scmp.eq.s32.totalorder %s15, 0
    %p161 = por %p159, %p160
    %p162 = scmp.ne.s32.totalorder %s154, %s156
    %p163 = scmp.eq.s32.totalorder %s20, 1
    %p164 = por %p162, %p163
    %p165 = scmp.ne.s32.totalorder %s156, %s157
    %p166 = scmp.eq.s32.totalorder %s20, 0
    %p167 = por %p165, %p166
    %p168 = scmp.ne.s32.totalorder %s156, %s157
    %p169 = scmp.eq.s32.totalorder %s21, 1
    %p170 = por %p168, %p169
    %p172 = scmp.ne.s32.totalorder %s157, %s171
    %p173 = scmp.eq.s32.totalorder %s21, 0
    %p174 = por %p172, %p173
    %s176 = sadd.s32 %s175, 1
    %p179 = scmp.eq.s32.totalorder %s15, 1
    %p180 = scmp.ne.s32.totalorder %s175, %s177
    %p181 = scmp.eq.s32.totalorder %s15, 0
    %p182 = por %p180, %p181
    %p183 = scmp.ne.s32.totalorder %s175, %s177
    %p184 = scmp.eq.s32.totalorder %s20, 1
    %p185 = por %p183, %p184
    %p186 = scmp.ne.s32.totalorder %s177, %s178
    %p187 = scmp.eq.s32.totalorder %s20, 0
    %p188 = por %p186, %p187
    %p189 = scmp.ne.s32.totalorder %s177, %s178
    %p190 = scmp.eq.s32.totalorder %s21, 1
    %p191 = por %p189, %p190
    %p193 = scmp.ne.s32.totalorder %s178, %s192
    %p194 = scmp.eq.s32.totalorder %s21, 0
    %p195 = por %p193, %p194
    %s197 = sadd.s32 %s196, 1
    %p200 = scmp.eq.s32.totalorder %s15, 1
    %p201 = scmp.ne.s32.totalorder %s196, %s198
    %p202 = scmp.eq.s32.totalorder %s15, 0
    %p203 = por %p201, %p202
    %p204 = scmp.ne.s32.totalorder %s196, %s198
    %p205 = scmp.eq.s32.totalorder %s20, 1
    %p206 = por %p204, %p205
    %p207 = scmp.ne.s32.totalorder %s198, %s199
    %p208 = scmp.eq.s32.totalorder %s20, 0
    %p209 = por %p207, %p208
    %p210 = scmp.ne.s32.totalorder %s198, %s199
    %p211 = scmp.eq.s32.totalorder %s21, 1
    %p212 = por %p210, %p211
    %p214 = scmp.ne.s32.totalorder %s199, %s213
    %p215 = scmp.eq.s32.totalorder %s21, 0
    %p216 = por %p214, %p215
    %s217 = ssub.s32 %s15, %s22
    %p218 = scmp.eq.s32.totalorder %s217, 0
    %s220 = sadd.s32 %s219, 1
    %s221 = scalar_select %p218, %s219, %s220
    %p224 = pneg %p218
    %p225 = scmp.eq.s32.totalorder %s15, 1
    %p226 = por %p224, %p225
    %p227 = scmp.ne.s32.totalorder %s219, %s222
    %p228 = scmp.eq.s32.totalorder %s15, 0
    %p229 = por %p227, %p228
    %p230 = scmp.ne.s32.totalorder %s219, %s222
    %p231 = scmp.eq.s32.totalorder %s20, 1
    %p232 = por %p230, %p231
    %p233 = scmp.ne.s32.totalorder %s222, %s223
    %p234 = scmp.eq.s32.totalorder %s20, 0
    %p235 = por %p233, %p234
    %p236 = scmp.ne.s32.totalorder %s222, %s223
    %p237 = scmp.eq.s32.totalorder %s21, 1
    %p238 = por %p236, %p237
    %p240 = scmp.ne.s32.totalorder %s223, %s239
    %p241 = scmp.eq.s32.totalorder %s21, 0
    %p242 = por %p240, %p241
    %p243 = scmp.le.s32.totalorder 1, %s15
    %p244 = scmp.lt.s32.totalorder %s15, 3
    %p245 = pnand %p243, %p244
    %p246 = pneg %p245
    // Predicated region
    $region9: #{_lambda_.15} parent=5 // pred_check
      _
    $region10: #{_lambda_.15} parent=5 // pred_check_branch
      %248 = sbr.rel (%p245) target = $region12
    $region11: #{_lambda_.15} parent=5 // pred_region
      %s249 = ssub.s32 %s15, 1
      // Predicated region
      $region13: #{_lambda_.15} parent=11 // pred_check
        %p250 = pneg %p62
      $region14: #{_lambda_.15} parent=11 // pred_check_branch
        %252 = sbr.rel (%p250) target = $region16
      $region15: #{_lambda_.15} parent=11 // pred_region
        _
      $region16: #{_lambda_.15} parent=11 // pred_fallthru
        _
      // Predicated region
      $region17: #{_lambda_.15} parent=11 // pred_check
        %p253 = pneg %p83
      $region18: #{_lambda_.15} parent=11 // pred_check_branch
        %255 = sbr.rel (%p253) target = $region20
      $region19: #{_lambda_.15} parent=11 // pred_region
        _
      $region20: #{_lambda_.15} parent=11 // pred_fallthru
        _
      // Predicated region
      $region21: #{_lambda_.15} parent=11 // pred_check
        %p256 = pneg %p104
      $region22: #{_lambda_.15} parent=11 // pred_check_branch
        %258 = sbr.rel (%p256) target = $region24
      $region23: #{_lambda_.15} parent=11 // pred_region
        _
      $region24: #{_lambda_.15} parent=11 // pred_fallthru
        _
      // Predicated region
      $region25: #{_lambda_.15} parent=11 // pred_check
        %p259 = pneg %p125
      $region26: #{_lambda_.15} parent=11 // pred_check_branch
        %261 = sbr.rel (%p259) target = $region28
      $region27: #{_lambda_.15} parent=11 // pred_region
        _
      $region28: #{_lambda_.15} parent=11 // pred_fallthru
        _
      // Predicated region
      $region29: #{_lambda_.15} parent=11 // pred_check
        %p262 = pneg %p146
      $region30: #{_lambda_.15} parent=11 // pred_check_branch
        %264 = sbr.rel (%p262) target = $region32
      $region31: #{_lambda_.15} parent=11 // pred_region
        _
      $region32: #{_lambda_.15} parent=11 // pred_fallthru
        _
      // Predicated region
      $region33: #{_lambda_.15} parent=11 // pred_check
        %p265 = pneg %p167
      $region34: #{_lambda_.15} parent=11 // pred_check_branch
        %267 = sbr.rel (%p265) target = $region36
      $region35: #{_lambda_.15} parent=11 // pred_region
        _
      $region36: #{_lambda_.15} parent=11 // pred_fallthru
        _
      // Predicated region
      $region37: #{_lambda_.15} parent=11 // pred_check
        %p268 = pneg %p188
      $region38: #{_lambda_.15} parent=11 // pred_check_branch
        %270 = sbr.rel (%p268) target = $region40
      $region39: #{_lambda_.15} parent=11 // pred_region
        _
      $region40: #{_lambda_.15} parent=11 // pred_fallthru
        _
      // Predicated region
      $region41: #{_lambda_.15} parent=11 // pred_check
        %p271 = pneg %p209
      $region42: #{_lambda_.15} parent=11 // pred_check_branch
        %273 = sbr.rel (%p271) target = $region44
      $region43: #{_lambda_.15} parent=11 // pred_region
        _
      $region44: #{_lambda_.15} parent=11 // pred_fallthru
        _
    $region12: #{_lambda_.15} parent=5 // pred_fallthru
      _
    %p274 = scmp.lt.s32.totalorder %s15, 2
    // Predicated region
    $region45: #{_lambda_.15} parent=5 // pred_check
      %p275 = pneg %p274
    $region46: #{_lambda_.15} parent=5 // pred_check_branch
      %277 = sbr.rel (%p275) target = $region48
    $region47: #{_lambda_.15} parent=5 // pred_region
      // Predicated region
      $region49: #{_lambda_.15} parent=47 // pred_check
        %p278 = pneg %p35
      $region50: #{_lambda_.15} parent=47 // pred_check_branch
        %280 = sbr.rel (%p278) target = $region52
      $region51: #{_lambda_.15} parent=47 // pred_region
        %p281 = scmp.lt.s32.totalorder %s15, 1
        %s282 = scalar_select %p281, %s15, 1
        %s283 = smul.addr %s282, 2
        %s284 = smul.addr %s283, 8
        %s285 = scalar_lea.vmem %s0, %s284
      $region52: #{_lambda_.15} parent=47 // pred_fallthru
        _
    $region48: #{_lambda_.15} parent=5 // pred_fallthru
      _
    %p286 = scmp.le.s32.totalorder 1, %s15
    %p287 = scmp.lt.s32.totalorder %s15, 3
    %p288 = pnand %p286, %p287
    %p289 = pneg %p288
    // Predicated region
    $region53: #{_lambda_.15} parent=5 // pred_check
      _
    $region54: #{_lambda_.15} parent=5 // pred_check_branch
      %291 = sbr.rel (%p288) target = $region56
    $region55: #{_lambda_.15} parent=5 // pred_region
      %s292 = ssub.s32 %s15, 1
      %p293 = scmp.lt.s32.totalorder %s20, 1
      %s294 = scalar_select %p293, %s20, 1
      %s295 = smul.addr %s294, 2
      %s296 = smul.addr %s295, 8
      %s297 = scalar_lea.vmem %s0, %s296
      %p298 = pneg %p41
      %p299 = pneg %p38
      %p300 = pneg %p62
      %p301 = pneg %p59
      %p302 = pneg %p83
      %p303 = pneg %p80
      %p304 = pneg %p104
      %p305 = pneg %p101
      %p306 = pneg %p125
      %p307 = pneg %p122
      %p308 = pneg %p146
      %p309 = pneg %p143
      %p310 = pneg %p167
      %p311 = pneg %p164
      %p312 = pneg %p188
      %p313 = pneg %p185
      %p314 = pneg %p209
      %p315 = pneg %p206
      %p316 = pneg %p235
      %p317 = pneg %p232
      %p318 = scmp.lt.s32.totalorder %s20, 1
      %s319 = scalar_select %p318, %s20, 1
      %s320 = smul.addr %s319, 2
      %s321 = smul.addr %s320, 8
      %s322 = scalar_lea.vmem %s9, %s321
      %p323 = scmp.lt.s32.totalorder %s20, 1
      %s324 = scalar_select %p323, %s20, 1
      %s325 = smul.addr %s324, 2
      %s326 = smul.addr %s325, 8
      %s327 = scalar_lea.vmem %s0, %s326
      %p328 = scmp.lt.s32.totalorder %s20, 1
      %s329 = scalar_select %p328, %s20, 1
      %s330 = smul.addr %s329, 2
      %s331 = smul.addr %s330, 8
      %s332 = scalar_lea.vmem %s9, %s331
      %v334 = vld [vmem:[%s327] sm:$0xff]
      %v335 = vld [vmem:[%s327 + $0x8] sm:$0xff]
      %v336 = vpack.c.bf16 %v335, %v334
      %v337 = vld [vmem:[%s1] sm:$0xff]
      %v338 = vld [vmem:[%s1 + $0x8] sm:$0xff]
      %v339 = vld [vmem:[%s1 + $0x10] sm:$0xff]
      %v340 = vld [vmem:[%s1 + $0x18] sm:$0xff]
      %v341 = vld [vmem:[%s1 + $0x20] sm:$0xff]
      %v342 = vld [vmem:[%s1 + $0x28] sm:$0xff]
      %v343 = vld [vmem:[%s1 + $0x30] sm:$0xff]
      %v344 = vld [vmem:[%s1 + $0x38] sm:$0xff]
      %v345 = vld [vmem:[%s1 + $0x40] sm:$0xff]
      %v346 = vld [vmem:[%s1 + $0x48] sm:$0xff]
      %v347 = vld [vmem:[%s1 + $0x50] sm:$0xff]
      %v348 = vld [vmem:[%s1 + $0x58] sm:$0xff]
      %v349 = vld [vmem:[%s1 + $0x60] sm:$0xff]
      %v350 = vld [vmem:[%s1 + $0x68] sm:$0xff]
      %v351 = vld [vmem:[%s1 + $0x70] sm:$0xff]
      %v352 = vld [vmem:[%s1 + $0x78] sm:$0xff]
      %v353 = vld [vmem:[%s1 + $0x80] sm:$0xff]
      %v354 = vld [vmem:[%s1 + $0x88] sm:$0xff]
      %v355 = vld [vmem:[%s1 + $0x90] sm:$0xff]
      %v356 = vld [vmem:[%s1 + $0x98] sm:$0xff]
      %v357 = vld [vmem:[%s1 + $0xa0] sm:$0xff]
      %v358 = vld [vmem:[%s1 + $0xa8] sm:$0xff]
      %v359 = vld [vmem:[%s1 + $0xb0] sm:$0xff]
      %v360 = vld [vmem:[%s1 + $0xb8] sm:$0xff]
      %v361 = vld [vmem:[%s1 + $0xc0] sm:$0xff]
      %v362 = vld [vmem:[%s1 + $0xc8] sm:$0xff]
      %v363 = vld [vmem:[%s1 + $0xd0] sm:$0xff]
      %v364 = vld [vmem:[%s1 + $0xd8] sm:$0xff]
      %v365 = vld [vmem:[%s1 + $0xe0] sm:$0xff]
      %v366 = vld [vmem:[%s1 + $0xe8] sm:$0xff]
      %v367 = vld [vmem:[%s1 + $0xf0] sm:$0xff]
      %v368 = vld [vmem:[%s1 + $0xf8] sm:$0xff]
      %v369 = vld [vmem:[%s1 + $0x100] sm:$0xff]
      %v370 = vld [vmem:[%s1 + $0x108] sm:$0xff]
      %v371 = vld [vmem:[%s1 + $0x110] sm:$0xff]
      %v372 = vld [vmem:[%s1 + $0x118] sm:$0xff]
      %v373 = vld [vmem:[%s1 + $0x120] sm:$0xff]
      %v374 = vld [vmem:[%s1 + $0x128] sm:$0xff]
      %v375 = vld [vmem:[%s1 + $0x130] sm:$0xff]
      %v376 = vld [vmem:[%s1 + $0x138] sm:$0xff]
      %v377 = vld [vmem:[%s1 + $0x140] sm:$0xff]
      %v378 = vld [vmem:[%s1 + $0x148] sm:$0xff]
      %v379 = vld [vmem:[%s1 + $0x150] sm:$0xff]
      %v380 = vld [vmem:[%s1 + $0x158] sm:$0xff]
      %v381 = vld [vmem:[%s1 + $0x160] sm:$0xff]
      %v382 = vld [vmem:[%s1 + $0x168] sm:$0xff]
      %v383 = vld [vmem:[%s1 + $0x170] sm:$0xff]
      %v384 = vld [vmem:[%s1 + $0x178] sm:$0xff]
      %v385 = vpack.c.bf16 %v340, %v337
      %v386 = vpack.c.bf16 %v341, %v338
      %v387 = vpack.c.bf16 %v342, %v339
      %v388 = vpack.c.bf16 %v346, %v343
      %v389 = vpack.c.bf16 %v347, %v344
      %v390 = vpack.c.bf16 %v348, %v345
      %v391 = vpack.c.bf16 %v352, %v349
      %v392 = vpack.c.bf16 %v353, %v350
      %v393 = vpack.c.bf16 %v354, %v351
      %v394 = vpack.c.bf16 %v358, %v355
      %v395 = vpack.c.bf16 %v359, %v356
      %v396 = vpack.c.bf16 %v360, %v357
      %v397 = vpack.c.bf16 %v364, %v361
      %v398 = vpack.c.bf16 %v365, %v362
      %v399 = vpack.c.bf16 %v366, %v363
      %v400 = vpack.c.bf16 %v370, %v367
      %v401 = vpack.c.bf16 %v371, %v368
      %v402 = vpack.c.bf16 %v372, %v369
      %v403 = vpack.c.bf16 %v376, %v373
      %v404 = vpack.c.bf16 %v377, %v374
      %v405 = vpack.c.bf16 %v378, %v375
      %v406 = vpack.c.bf16 %v382, %v379
      %v407 = vpack.c.bf16 %v383, %v380
      %v408 = vpack.c.bf16 %v384, %v381
      %v409 = vld [vmem:[%s2] sm:$0x7]
      %v411 = vlaneseq
      %v412 = vshrl.u32 %v411, 7
      %v413 = vsub.s32 0, %v412
      %v414 = vrot.slane %v409, %v413
      %v415 = vlaneseq
      %v416 = vshrl.u32 %v415, 7
      %v417 = vsub.s32 1, %v416
      %v418 = vrot.slane %v409, %v417
      %v419 = vlaneseq
      %v420 = vshrl.u32 %v419, 7
      %v421 = vsub.s32 2, %v420
      %v422 = vrot.slane %v409, %v421
      %426 = vmatprep.subr.bf16.mxu0 %v386
      %427 = vmatpush1.bf16.msra.mxu0 %v385
      %428 = vmatprep.subr.bf16.mxu0 %v389
      %429 = vmatpush1.bf16.msra.mxu0 %v388
      %430 = vmatprep.subr.bf16.mxu0 %v392
      %431 = vmatpush1.bf16.msra.mxu0 %v391
      %432 = vmatprep.subr.bf16.mxu0 %v395
      %433 = vmatpush1.bf16.msra.mxu0 %v394
      %434 = vmatprep.subr.bf16.mxu0 %v398
      %435 = vmatpush1.bf16.msra.mxu0 %v397
      %436 = vmatprep.subr.bf16.mxu0 %v401
      %437 = vmatpush1.bf16.msra.mxu0 %v400
      %438 = vmatprep.subr.bf16.mxu0 %v404
      %439 = vmatpush1.bf16.msra.mxu0 %v403
      %440 = vmatprep.subr.bf16.mxu0 %v407
      %441 = vmatpush1.bf16.msra.mxu0 %v406
      %442 = vmatprep.subr.bf16.mxu0 0
      %443 = vmatpush1.bf16.msra.mxu0 0
      %444 = vmatprep.subr.bf16.mxu0 0
      %445 = vmatpush1.bf16.msra.mxu0 0
      %446 = vmatprep.subr.bf16.mxu0 0
      %447 = vmatpush1.bf16.msra.mxu0 0
      %448 = vmatprep.subr.bf16.mxu0 0
      %449 = vmatpush1.bf16.msra.mxu0 0
      %450 = vmatprep.subr.bf16.mxu0 0
      %451 = vmatpush1.bf16.msra.mxu0 0
      %452 = vmatprep.subr.bf16.mxu0 0
      %453 = vmatpush1.bf16.msra.mxu0 0
      %454 = vmatprep.subr.bf16.mxu0 0
      %455 = vmatpush1.bf16.msra.mxu0 0
      %456 = vmatprep.subr.bf16.mxu0 0
      %457 = vmatpush1.bf16.msra.mxu0 0
      %458 = vmatprep.mubr.bf16.mxu0 0
      %459 = vmatmul.mubr.bf16.gmra.mrb[0].mxu0 %v336
      %v460 = vpop.f32.mrb[0].mxu0
      %v461 = vadd.f32 %v414, %v460
      %v462 = vpop.f32.mrb[0].mxu0
      %v463 = vadd.f32 %v418, %v462
      %v464 = vpop.f32.mrb[0].mxu0
      %v465 = vadd.f32 %v414, %v464
      %v466 = vpop.f32.mrb[0].mxu0
      %v467 = vadd.f32 %v418, %v466
      %468 = vdwg.mxu0
      %469 = vmatprep.subr.bf16.mxu0 0
      %470 = vmatpush1.bf16.msra.mxu0 %v387
      %471 = vmatprep.subr.bf16.mxu0 0
      %472 = vmatpush1.bf16.msra.mxu0 %v390
      %473 = vmatprep.subr.bf16.mxu0 0
      %474 = vmatpush1.bf16.msra.mxu0 %v393
      %475 = vmatprep.subr.bf16.mxu0 0
      %476 = vmatpush1.bf16.msra.mxu0 %v396
      %477 = vmatprep.subr.bf16.mxu0 0
      %478 = vmatpush1.bf16.msra.mxu0 %v399
      %479 = vmatprep.subr.bf16.mxu0 0
      %480 = vmatpush1.bf16.msra.mxu0 %v402
      %481 = vmatprep.subr.bf16.mxu0 0
      %482 = vmatpush1.bf16.msra.mxu0 %v405
      %483 = vmatprep.subr.bf16.mxu0 0
      %484 = vmatpush1.bf16.msra.mxu0 %v408
      %485 = vmatprep.subr.bf16.mxu0 0
      %486 = vmatpush1.bf16.msra.mxu0 0
      %487 = vmatprep.subr.bf16.mxu0 0
      %488 = vmatpush1.bf16.msra.mxu0 0
      %489 = vmatprep.subr.bf16.mxu0 0
      %490 = vmatpush1.bf16.msra.mxu0 0
      %491 = vmatprep.subr.bf16.mxu0 0
      %492 = vmatpush1.bf16.msra.mxu0 0
      %493 = vmatprep.subr.bf16.mxu0 0
      %494 = vmatpush1.bf16.msra.mxu0 0
      %495 = vmatprep.subr.bf16.mxu0 0
      %496 = vmatpush1.bf16.msra.mxu0 0
      %497 = vmatprep.subr.bf16.mxu0 0
      %498 = vmatpush1.bf16.msra.mxu0 0
      %499 = vmatprep.subr.bf16.mxu0 0
      %500 = vmatpush1.bf16.msra.mxu0 0
      %501 = vmatprep.mubr.bf16.mxu0 0
      %502 = vmatmul.mubr.bf16.gmra.mrb[0].mxu0 %v336
      %v503 = vpop.f32.mrb[0].mxu0
      %v504 = vadd.f32 %v422, %v503
      %v505 = vpop.f32.mrb[0].mxu0
      %v506 = vpop.f32.mrb[0].mxu0
      %v507 = vadd.f32 %v422, %v506
      %v508 = vpop.f32.mrb[0].mxu0
      %509 = vdwg.mxu0
      %v510 = vmul.f32 %v461, 0.25
      %v511 = vmul.f32 %v465, 0.25
      %v512 = vpack.c.bf16 %v511, %v510
      %v513 = vpack.c.bf16 %v467, %v463
      %v514 = vpack.c.bf16 %v507, %v504
      %v515 = vld [vmem:[%s3] sm:$0xff]
      %v516 = vld [vmem:[%s3 + $0x8] sm:$0xff]
      %v517 = vld [vmem:[%s3 + $0x10] sm:$0xff]
      %v518 = vld [vmem:[%s3 + $0x18] sm:$0xff]
      %v519 = vld [vmem:[%s3 + $0x20] sm:$0xff]
      %v520 = vld [vmem:[%s3 + $0x28] sm:$0xff]
      %v521 = vld [vmem:[%s3 + $0x30] sm:$0xff]
      %v522 = vld [vmem:[%s3 + $0x38] sm:$0xff]
      %v523 = vld [vmem:[%s3 + $0x40] sm:$0xff]
      %v524 = vld [vmem:[%s3 + $0x48] sm:$0xff]
      %v525 = vld [vmem:[%s3 + $0x50] sm:$0xff]
      %v526 = vld [vmem:[%s3 + $0x58] sm:$0xff]
      %v527 = vld [vmem:[%s3 + $0x60] sm:$0xff]
      %v528 = vld [vmem:[%s3 + $0x68] sm:$0xff]
      %v529 = vld [vmem:[%s3 + $0x70] sm:$0xff]
      %v530 = vld [vmem:[%s3 + $0x78] sm:$0xff]
      %v531 = vpack.c.bf16 %v516, %v515
      %v532 = vpack.c.bf16 %v518, %v517
      %v533 = vpack.c.bf16 %v520, %v519
      %v534 = vpack.c.bf16 %v522, %v521
      %v535 = vpack.c.bf16 %v524, %v523
      %v536 = vpack.c.bf16 %v526, %v525
      %v537 = vpack.c.bf16 %v528, %v527
      %v538 = vpack.c.bf16 %v530, %v529
      %vm539 = vcmask 130048
      %v541 = vsel %vm539, %v512, 0
      %v544 = vsel %vm539, %v513, 0
      %546 = vmatprep.subr.bf16.mxu0 0
      %547 = vmatpush1.bf16.xpose.msra.mxu0 %v544
      %548 = vmatprep.subr.bf16.mxu0 0
      %549 = vmatpush1.bf16.xpose.msra.mxu0 0
      %550 = vmatprep.subr.bf16.mxu0 0
      %551 = vmatpush1.bf16.xpose.msra.mxu0 0
      %552 = vmatprep.subr.bf16.mxu0 0
      %553 = vmatpush1.bf16.xpose.msra.mxu0 0
      %554 = vmatprep.subr.bf16.mxu0 0
      %555 = vmatpush1.bf16.xpose.msra.mxu0 0
      %556 = vmatprep.subr.bf16.mxu0 0
      %557 = vmatpush1.bf16.xpose.msra.mxu0 0
      %558 = vmatprep.subr.bf16.mxu0 0
      %559 = vmatpush1.bf16.xpose.msra.mxu0 0
      %560 = vmatprep.subr.bf16.mxu0 0
      %561 = vmatpush1.bf16.xpose.msra.mxu0 0
      %562 = vmatprep.subr.bf16.mxu0 0
      %563 = vmatpush1.bf16.xpose.msra.mxu0 0
      %564 = vmatprep.subr.bf16.mxu0 0
      %565 = vmatpush1.bf16.xpose.msra.mxu0 0
      %566 = vmatprep.subr.bf16.mxu0 0
      %567 = vmatpush1.bf16.xpose.msra.mxu0 0
      %568 = vmatprep.subr.bf16.mxu0 0
      %569 = vmatpush1.bf16.xpose.msra.mxu0 0
      %570 = vmatprep.subr.bf16.mxu0 0
      %571 = vmatpush1.bf16.xpose.msra.mxu0 0
      %572 = vmatprep.subr.bf16.mxu0 0
      %573 = vmatpush1.bf16.xpose.msra.mxu0 0
      %574 = vmatprep.subr.bf16.mxu0 0
      %575 = vmatpush1.bf16.xpose.msra.mxu0 0
      %576 = vmatprep.subr.bf16.mxu0 0
      %577 = vmatpush1.bf16.xpose.msra.mxu0 0
      %578 = vmatprep.mubr.bf16.mxu0 0
      %579 = vmatmul.mubr.bf16.gmra.mrb[0].mxu0 %v541
      %v580 = vpop.f32.mrb[0].mxu0
      %v581 = vadd.f32 0.0, %v580
      %v582 = vpop.f32.mrb[0].mxu0
      %v583 = vpop.f32.mrb[0].mxu0
      %v584 = vadd.f32 0.0, %v583
      %v585 = vpop.f32.mrb[0].mxu0
      %586 = vdwg.mxu0
      %v587 = vsel %vm539, %v581, -inf
      %588 = vmax.xlane.f32.xlu0 %v587
      %v589 = vpop.xlane.xlu0 %588
      %v590 = vsel %vm539, %v584, -inf
      %591 = vmax.xlane.f32.xlu0 %v590
      %v592 = vpop.xlane.xlu0 %591
      %v593 = vsub.f32 %v581, %v589
      %v594 = vsub.f32 %v584, %v592
      %v595 = vmul.f32 %v593, 1.442695
      %v596 = vpow.pop %v595
      %v597 = vmul.f32 %v594, 1.442695
      %v598 = vpow.pop %v597
      %v599 = vsel %vm539, %v596, 0.0
      %600 = vadd.xlane.f32.xlu0 %v599
      %v601 = vpop.xlane.xlu0 %600
      %v602 = vsel %vm539, %v598, 0.0
      %603 = vadd.xlane.f32.xlu0 %v602
      %v604 = vpop.xlane.xlu0 %603
      %v605 = vrcp.pop %v601
      %v606 = vrcp.pop %v604
      %v607 = vmul.f32 %v596, %v605
      %v608 = vmul.f32 %v598, %v606
      %v609 = vpack.c.bf16 %v608, %v607
      %v611 = vsel %vm539, %v609, 0
      %613 = vmatprep.subr.bf16.mxu0 0
      %614 = vmatpush1.bf16.msra.mxu0 %v514
      %615 = vmatprep.subr.bf16.mxu0 0
      %616 = vmatpush1.bf16.msra.mxu0 0
      %617 = vmatprep.subr.bf16.mxu0 0
      %618 = vmatpush1.bf16.msra.mxu0 0
      %619 = vmatprep.subr.bf16.mxu0 0
      %620 = vmatpush1.bf16.msra.mxu0 0
      %621 = vmatprep.subr.bf16.mxu0 0
      %622 = vmatpush1.bf16.msra.mxu0 0
      %623 = vmatprep.subr.bf16.mxu0 0
      %624 = vmatpush1.bf16.msra.mxu0 0
      %625 = vmatprep.subr.bf16.mxu0 0
      %626 = vmatpush1.bf16.msra.mxu0 0
      %627 = vmatprep.subr.bf16.mxu0 0
      %628 = vmatpush1.bf16.msra.mxu0 0
      %629 = vmatprep.subr.bf16.mxu0 0
      %630 = vmatpush1.bf16.msra.mxu0 0
      %631 = vmatprep.subr.bf16.mxu0 0
      %632 = vmatpush1.bf16.msra.mxu0 0
      %633 = vmatprep.subr.bf16.mxu0 0
      %634 = vmatpush1.bf16.msra.mxu0 0
      %635 = vmatprep.subr.bf16.mxu0 0
      %636 = vmatpush1.bf16.msra.mxu0 0
      %637 = vmatprep.subr.bf16.mxu0 0
      %638 = vmatpush1.bf16.msra.mxu0 0
      %639 = vmatprep.subr.bf16.mxu0 0
      %640 = vmatpush1.bf16.msra.mxu0 0
      %641 = vmatprep.subr.bf16.mxu0 0
      %642 = vmatpush1.bf16.msra.mxu0 0
      %643 = vmatprep.subr.bf16.mxu0 0
      %644 = vmatpush1.bf16.msra.mxu0 0
      %645 = vmatprep.mubr.bf16.mxu0 0
      %646 = vmatmul.mubr.bf16.gmra.mrb[0].mxu0 %v611
      %v647 = vpop.f32.mrb[0].mxu0
      %v648 = vadd.f32 0.0, %v647
      %v649 = vpop.f32.mrb[0].mxu0
      %v650 = vpop.f32.mrb[0].mxu0
      %v651 = vadd.f32 0.0, %v650
      %v652 = vpop.f32.mrb[0].mxu0
      %653 = vdwg.mxu0
      %v654 = vpack.c.bf16 %v651, %v648
      %656 = vrot.lane.b32.xlu0 %v512, 112
      %v657 = vpop.permute.xlu0 %656
      %659 = vrot.lane.b32.xlu0 %v513, 112
      %v660 = vpop.permute.xlu0 %659
      %v662 = vsel %vm539, %v657, 0
      %v665 = vsel %vm539, %v660, 0
      %667 = vmatprep.subr.bf16.mxu0 0
      %668 = vmatpush1.bf16.xpose.msra.mxu0 %v665
      %669 = vmatprep.subr.bf16.mxu0 0
      %670 = vmatpush1.bf16.xpose.msra.mxu0 0
      %671 = vmatprep.subr.bf16.mxu0 0
      %672 = vmatpush1.bf16.xpose.msra.mxu0 0
      %673 = vmatprep.subr.bf16.mxu0 0
      %674 = vmatpush1.bf16.xpose.msra.mxu0 0
      %675 = vmatprep.subr.bf16.mxu0 0
      %676 = vmatpush1.bf16.xpose.msra.mxu0 0
      %677 = vmatprep.subr.bf16.mxu0 0
      %678 = vmatpush1.bf16.xpose.msra.mxu0 0
      %679 = vmatprep.subr.bf16.mxu0 0
      %680 = vmatpush1.bf16.xpose.msra.mxu0 0
      %681 = vmatprep.subr.bf16.mxu0 0
      %682 = vmatpush1.bf16.xpose.msra.mxu0 0
      %683 = vmatprep.subr.bf16.mxu0 0
      %684 = vmatpush1.bf16.xpose.msra.mxu0 0
      %685 = vmatprep.subr.bf16.mxu0 0
      %686 = vmatpush1.bf16.xpose.msra.mxu0 0
      %687 = vmatprep.subr.bf16.mxu0 0
      %688 = vmatpush1.bf16.xpose.msra.mxu0 0
      %689 = vmatprep.subr.bf16.mxu0 0
      %690 = vmatpush1.bf16.xpose.msra.mxu0 0
      %691 = vmatprep.subr.bf16.mxu0 0
      %692 = vmatpush1.bf16.xpose.msra.mxu0 0
      %693 = vmatprep.subr.bf16.mxu0 0
      %694 = vmatpush1.bf16.xpose.msra.mxu0 0
      %695 = vmatprep.subr.bf16.mxu0 0
      %696 = vmatpush1.bf16.xpose.msra.mxu0 0
      %697 = vmatprep.subr.bf16.mxu0 0
      %698 = vmatpush1.bf16.xpose.msra.mxu0 0
      %699 = vmatprep.mubr.bf16.mxu0 0
      %700 = vmatmul.mubr.bf16.gmra.mrb[0].mxu0 %v662
      %v701 = vpop.f32.mrb[0].mxu0
      %v702 = vadd.f32 0.0, %v701
      %v703 = vpop.f32.mrb[0].mxu0
      %v704 = vpop.f32.mrb[0].mxu0
      %v705 = vadd.f32 0.0, %v704
      %v706 = vpop.f32.mrb[0].mxu0
      %707 = vdwg.mxu0
      %v708 = vsel %vm539, %v702, -inf
      %709 = vmax.xlane.f32.xlu0 %v708
      %v710 = vpop.xlane.xlu0 %709
      %v711 = vsel %vm539, %v705, -inf
      %712 = vmax.xlane.f32.xlu0 %v711
      %v713 = vpop.xlane.xlu0 %712
      %v714 = vsub.f32 %v702, %v710
      %v715 = vsub.f32 %v705, %v713
      %v716 = vmul.f32 %v714, 1.442695
      %v717 = vpow.pop %v716
      %v718 = vmul.f32 %v715, 1.442695
      %v719 = vpow.pop %v718
      %v720 = vsel %vm539, %v717, 0.0
      %721 = vadd.xlane.f32.xlu0 %v720
      %v722 = vpop.xlane.xlu0 %721
      %v723 = vsel %vm539, %v719, 0.0
      %724 = vadd.xlane.f32.xlu0 %v723
      %v725 = vpop.xlane.xlu0 %724
      %v726 = vrcp.pop %v722
      %v727 = vrcp.pop %v725
      %v728 = vmul.f32 %v717, %v726
      %v729 = vmul.f32 %v719, %v727
      %v730 = vpack.c.bf16 %v729, %v728
      %732 = vrot.lane.b32.xlu0 %v514, 112
      %v733 = vpop.permute.xlu0 %732
      %v736 = vsel %vm539, %v730, 0
      %738 = vmatprep.subr.bf16.mxu0 0
      %739 = vmatpush1.bf16.msra.mxu0 %v733
      %740 = vmatprep.subr.bf16.mxu0 0
      %741 = vmatpush1.bf16.msra.mxu0 0
      %742 = vmatprep.subr.bf16.mxu0 0
      %743 = vmatpush1.bf16.msra.mxu0 0
      %744 = vmatprep.subr.bf16.mxu0 0
      %745 = vmatpush1.bf16.msra.mxu0 0
      %746 = vmatprep.subr.bf16.mxu0 0
      %747 = vmatpush1.bf16.msra.mxu0 0
      %748 = vmatprep.subr.bf16.mxu0 0
      %749 = vmatpush1.bf16.msra.mxu0 0
      %750 = vmatprep.subr.bf16.mxu0 0
      %751 = vmatpush1.bf16.msra.mxu0 0
      %752 = vmatprep.subr.bf16.mxu0 0
      %753 = vmatpush1.bf16.msra.mxu0 0
      %754 = vmatprep.subr.bf16.mxu0 0
      %755 = vmatpush1.bf16.msra.mxu0 0
      %756 = vmatprep.subr.bf16.mxu0 0
      %757 = vmatpush1.bf16.msra.mxu0 0
      %758 = vmatprep.subr.bf16.mxu0 0
      %759 = vmatpush1.bf16.msra.mxu0 0
      %760 = vmatprep.subr.bf16.mxu0 0
      %761 = vmatpush1.bf16.msra.mxu0 0
      %762 = vmatprep.subr.bf16.mxu0 0
      %763 = vmatpush1.bf16.msra.mxu0 0
      %764 = vmatprep.subr.bf16.mxu0 0
      %765 = vmatpush1.bf16.msra.mxu0 0
      %766 = vmatprep.subr.bf16.mxu0 0
      %767 = vmatpush1.bf16.msra.mxu0 0
      %768 = vmatprep.subr.bf16.mxu0 0
      %769 = vmatpush1.bf16.msra.mxu0 0
      %770 = vmatprep.mubr.bf16.mxu0 0
      %771 = vmatmul.mubr.bf16.gmra.mrb[0].mxu0 %v736
      %v772 = vpop.f32.mrb[0].mxu0
      %v773 = vadd.f32 0.0, %v772
      %v774 = vpop.f32.mrb[0].mxu0
      %v775 = vpop.f32.mrb[0].mxu0
      %v776 = vadd.f32 0.0, %v775
      %v777 = vpop.f32.mrb[0].mxu0
      %778 = vdwg.mxu0
      %v779 = vpack.c.bf16 %v776, %v773
      %v781 = vsel %vm539, %v779, 0
      %783 = vmatprep.subr.bf16.mxu0 0
      %784 = vmatpush1.bf16.msra.mxu0 %v532
      %785 = vmatprep.subr.bf16.mxu0 0
      %786 = vmatpush1.bf16.msra.mxu0 0
      %787 = vmatprep.subr.bf16.mxu0 0
      %788 = vmatpush1.bf16.msra.mxu0 0
      %789 = vmatprep.subr.bf16.mxu0 0
      %790 = vmatpush1.bf16.msra.mxu0 0
      %791 = vmatprep.subr.bf16.mxu0 0
      %792 = vmatpush1.bf16.msra.mxu0 0
      %793 = vmatprep.subr.bf16.mxu0 0
      %794 = vmatpush1.bf16.msra.mxu0 0
      %795 = vmatprep.subr.bf16.mxu0 0
      %796 = vmatpush1.bf16.msra.mxu0 0
      %797 = vmatprep.subr.bf16.mxu0 0
      %798 = vmatpush1.bf16.msra.mxu0 0
      %799 = vmatprep.subr.bf16.mxu0 0
      %800 = vmatpush1.bf16.msra.mxu0 0
      %801 = vmatprep.subr.bf16.mxu0 0
      %802 = vmatpush1.bf16.msra.mxu0 0
      %803 = vmatprep.subr.bf16.mxu0 0
      %804 = vmatpush1.bf16.msra.mxu0 0
      %805 = vmatprep.subr.bf16.mxu0 0
      %806 = vmatpush1.bf16.msra.mxu0 0
      %807 = vmatprep.subr.bf16.mxu0 0
      %808 = vmatpush1.bf16.msra.mxu0 0
      %809 = vmatprep.subr.bf16.mxu0 0
      %810 = vmatpush1.bf16.msra.mxu0 0
      %811 = vmatprep.subr.bf16.mxu0 0
      %812 = vmatpush1.bf16.msra.mxu0 0
      %813 = vmatprep.subr.bf16.mxu0 0
      %814 = vmatpush1.bf16.msra.mxu0 0
      %815 = vmatprep.mubr.bf16.mxu0 0
      %816 = vmatmul.mubr.bf16.gmra.mrb[0].mxu0 %v781
      %v817 = vpop.f32.mrb[0].mxu0
      %v818 = vadd.f32 0.0, %v817
      %v819 = vpop.f32.mrb[0].mxu0
      %v820 = vpop.f32.mrb[0].mxu0
      %v821 = vadd.f32 0.0, %v820
      %v822 = vpop.f32.mrb[0].mxu0
      %823 = vdwg.mxu0
      %v825 = vsel %vm539, %v654, 0
      %827 = vmatprep.subr.bf16.mxu0 0
      %828 = vmatpush1.bf16.msra.mxu0 %v531
      %829 = vmatprep.subr.bf16.mxu0 0
      %830 = vmatpush1.bf16.msra.mxu0 0
      %831 = vmatprep.subr.bf16.mxu0 0
      %832 = vmatpush1.bf16.msra.mxu0 0
      %833 = vmatprep.subr.bf16.mxu0 0
      %834 = vmatpush1.bf16.msra.mxu0 0
      %835 = vmatprep.subr.bf16.mxu0 0
      %836 = vmatpush1.bf16.msra.mxu0 0
      %837 = vmatprep.subr.bf16.mxu0 0
      %838 = vmatpush1.bf16.msra.mxu0 0
      %839 = vmatprep.subr.bf16.mxu0 0
      %840 = vmatpush1.bf16.msra.mxu0 0
      %841 = vmatprep.subr.bf16.mxu0 0
      %842 = vmatpush1.bf16.msra.mxu0 0
      %843 = vmatprep.subr.bf16.mxu0 0
      %844 = vmatpush1.bf16.msra.mxu0 0
      %845 = vmatprep.subr.bf16.mxu0 0
      %846 = vmatpush1.bf16.msra.mxu0 0
      %847 = vmatprep.subr.bf16.mxu0 0
      %848 = vmatpush1.bf16.msra.mxu0 0
      %849 = vmatprep.subr.bf16.mxu0 0
      %850 = vmatpush1.bf16.msra.mxu0 0
      %851 = vmatprep.subr.bf16.mxu0 0
      %852 = vmatpush1.bf16.msra.mxu0 0
      %853 = vmatprep.subr.bf16.mxu0 0
      %854 = vmatpush1.bf16.msra.mxu0 0
      %855 = vmatprep.subr.bf16.mxu0 0
      %856 = vmatpush1.bf16.msra.mxu0 0
      %857 = vmatprep.subr.bf16.mxu0 0
      %858 = vmatpush1.bf16.msra.mxu0 0
      %859 = vmatprep.mubr.bf16.mxu0 0
      %860 = vmatmul.mubr.bf16.gmra.mrb[0].mxu0 %v825
      %v861 = vpop.f32.mrb[0].mxu0
      %v862 = vadd.f32 %v818, %v861
      %v863 = vpop.f32.mrb[0].mxu0
      %v864 = vpop.f32.mrb[0].mxu0
      %v865 = vadd.f32 %v821, %v864
      %v866 = vpop.f32.mrb[0].mxu0
      %867 = vdwg.mxu0
      %868 = vrot.lane.b32.xlu0 %v512, 96
      %v869 = vpop.permute.xlu0 %868
      %870 = vrot.lane.b32.xlu0 %v513, 96
      %v871 = vpop.permute.xlu0 %870
      %v873 = vsel %vm539, %v869, 0
      %v876 = vsel %vm539, %v871, 0
      %878 = vmatprep.subr.bf16.mxu0 0
      %879 = vmatpush1.bf16.xpose.msra.mxu0 %v876
      %880 = vmatprep.subr.bf16.mxu0 0
      %881 = vmatpush1.bf16.xpose.msra.mxu0 0
      %882 = vmatprep.subr.bf16.mxu0 0
      %883 = vmatpush1.bf16.xpose.msra.mxu0 0
      %884 = vmatprep.subr.bf16.mxu0 0
      %885 = vmatpush1.bf16.xpose.msra.mxu0 0
      %886 = vmatprep.subr.bf16.mxu0 0
      %887 = vmatpush1.bf16.xpose.msra.mxu0 0
      %888 = vmatprep.subr.bf16.mxu0 0
      %889 = vmatpush1.bf16.xpose.msra.mxu0 0
      %890 = vmatprep.subr.bf16.mxu0 0
      %891 = vmatpush1.bf16.xpose.msra.mxu0 0
      %892 = vmatprep.subr.bf16.mxu0 0
      %893 = vmatpush1.bf16.xpose.msra.mxu0 0
      %894 = vmatprep.subr.bf16.mxu0 0
      %895 = vmatpush1.bf16.xpose.msra.mxu0 0
      %896 = vmatprep.subr.bf16.mxu0 0
      %897 = vmatpush1.bf16.xpose.msra.mxu0 0
      %898 = vmatprep.subr.bf16.mxu0 0
      %899 = vmatpush1.bf16.xpose.msra.mxu0 0
      %900 = vmatprep.subr.bf16.mxu0 0
      %901 = vmatpush1.bf16.xpose.msra.mxu0 0
      %902 = vmatprep.subr.bf16.mxu0 0
      %903 = vmatpush1.bf16.xpose.msra.mxu0 0
      %904 = vmatprep.subr.bf16.mxu0 0
      %905 = vmatpush1.bf16.xpose.msra.mxu0 0
      %906 = vmatprep.subr.bf16.mxu0 0
      %907 = vmatpush1.bf16.xpose.msra.mxu0 0
      %908 = vmatprep.subr.bf16.mxu0 0
      %909 = vmatpush1.bf16.xpose.msra.mxu0 0
      %910 = vmatprep.mubr.bf16.mxu0 0
      %911 = vmatmul.mubr.bf16.gmra.mrb[0].mxu0 %v873
      %v912 = vpop.f32.mrb[0].mxu0
      %v913 = vadd.f32 0.0, %v912
      %v914 = vpop.f32.mrb[0].mxu0
      %v915 = vpop.f32.mrb[0].mxu0
      %v916 = vadd.f32 0.0, %v915
      %v917 = vpop.f32.mrb[0].mxu0
      %918 = vdwg.mxu0
      %v919 = vsel %vm539, %v913, -inf
      %920 = vmax.xlane.f32.xlu0 %v919
      %v921 = vpop.xlane.xlu0 %920
      %v922 = vsel %vm539, %v916, -inf
      %923 = vmax.xlane.f32.xlu0 %v922
      %v924 = vpop.xlane.xlu0 %923
      %v925 = vsub.f32 %v913, %v921
      %v926 = vsub.f32 %v916, %v924
      %v927 = vmul.f32 %v925, 1.442695
      %v928 = vpow.pop %v927
      %v929 = vmul.f32 %v926, 1.442695
      %v930 = vpow.pop %v929
      %v931 = vsel %vm539, %v928, 0.0
      %932 = vadd.xlane.f32.xlu0 %v931
      %v933 = vpop.xlane.xlu0 %932
      %v934 = vsel %vm539, %v930, 0.0
      %935 = vadd.xlane.f32.xlu0 %v934
      %v936 = vpop.xlane.xlu0 %935
      %v937 = vrcp.pop %v933
      %v938 = vrcp.pop %v936
      %v939 = vmul.f32 %v928, %v937
      %v940 = vmul.f32 %v930, %v938
      %v941 = vpack.c.bf16 %v940, %v939
      %942 = vrot.lane.b32.xlu0 %v514, 96
      %v943 = vpop.permute.xlu0 %942
      %v946 = vsel %vm539, %v941, 0
      %948 = vmatprep.subr.bf16.mxu0 0
      %949 = vmatpush1.bf16.msra.mxu0 %v943
      %950 = vmatprep.subr.bf16.mxu0 0
      %951 = vmatpush1.bf16.msra.mxu0 0
      %952 = vmatprep.subr.bf16.mxu0 0
      %953 = vmatpush1.bf16.msra.mxu0 0
      %954 = vmatprep.subr.bf16.mxu0 0
      %955 = vmatpush1.bf16.msra.mxu0 0
      %956 = vmatprep.subr.bf16.mxu0 0
      %957 = vmatpush1.bf16.msra.mxu0 0
      %958 = vmatprep.subr.bf16.mxu0 0
      %959 = vmatpush1.bf16.msra.mxu0 0
      %960 = vmatprep.subr.bf16.mxu0 0
      %961 = vmatpush1.bf16.msra.mxu0 0
      %962 = vmatprep.subr.bf16.mxu0 0
      %963 = vmatpush1.bf16.msra.mxu0 0
      %964 = vmatprep.subr.bf16.mxu0 0
      %965 = vmatpush1.bf16.msra.mxu0 0
      %966 = vmatprep.subr.bf16.mxu0 0
      %967 = vmatpush1.bf16.msra.mxu0 0
      %968 = vmatprep.subr.bf16.mxu0 0
      %969 = vmatpush1.bf16.msra.mxu0 0
      %970 = vmatprep.subr.bf16.mxu0 0
      %971 = vmatpush1.bf16.msra.mxu0 0
      %972 = vmatprep.subr.bf16.mxu0 0
      %973 = vmatpush1.bf16.msra.mxu0 0
      %974 = vmatprep.subr.bf16.mxu0 0
      %975 = vmatpush1.bf16.msra.mxu0 0
      %976 = vmatprep.subr.bf16.mxu0 0
      %977 = vmatpush1.bf16.msra.mxu0 0
      %978 = vmatprep.subr.bf16.mxu0 0
      %979 = vmatpush1.bf16.msra.mxu0 0
      %980 = vmatprep.mubr.bf16.mxu0 0
      %981 = vmatmul.mubr.bf16.gmra.mrb[0].mxu0 %v946
      %v982 = vpop.f32.mrb[0].mxu0
      %v983 = vadd.f32 0.0, %v982
      %v984 = vpop.f32.mrb[0].mxu0
      %v985 = vpop.f32.mrb[0].mxu0
      %v986 = vadd.f32 0.0, %v985
      %v987 = vpop.f32.mrb[0].mxu0
      %988 = vdwg.mxu0
      %v989 = vpack.c.bf16 %v986, %v983
      %v991 = vsel %vm539, %v989, 0
      %993 = vmatprep.subr.bf16.mxu0 0
      %994 = vmatpush1.bf16.msra.mxu0 %v533
      %995 = vmatprep.subr.bf16.mxu0 0
      %996 = vmatpush1.bf16.msra.mxu0 0
      %997 = vmatprep.subr.bf16.mxu0 0
      %998 = vmatpush1.bf16.msra.mxu0 0
      %999 = vmatprep.subr.bf16.mxu0 0
      %1000 = vmatpush1.bf16.msra.mxu0 0
      %1001 = vmatprep.subr.bf16.mxu0 0
      %1002 = vmatpush1.bf16.msra.mxu0 0
      %1003 = vmatprep.subr.bf16.mxu0 0
      %1004 = vmatpush1.bf16.msra.mxu0 0
      %1005 = vmatprep.subr.bf16.mxu0 0
      %1006 = vmatpush1.bf16.msra.mxu0 0
      %1007 = vmatprep.subr.bf16.mxu0 0
      %1008 = vmatpush1.bf16.msra.mxu0 0
      %1009 = vmatprep.subr.bf16.mxu0 0
      %1010 = vmatpush1.bf16.msra.mxu0 0
      %1011 = vmatprep.subr.bf16.mxu0 0
      %1012 = vmatpush1.bf16.msra.mxu0 0
      %1013 = vmatprep.subr.bf16.mxu0 0
      %1014 = vmatpush1.bf16.msra.mxu0 0
      %1015 = vmatprep.subr.bf16.mxu0 0
      %1016 = vmatpush1.bf16.msra.mxu0 0
      %1017 = vmatprep.subr.bf16.mxu0 0
      %1018 = vmatpush1.bf16.msra.mxu0 0
      %1019 = vmatprep.subr.bf16.mxu0 0
      %1020 = vmatpush1.bf16.msra.mxu0 0
      %1021 = vmatprep.subr.bf16.mxu0 0
      %1022 = vmatpush1.bf16.msra.mxu0 0
      %1023 = vmatprep.subr.bf16.mxu0 0
      %1024 = vmatpush1.bf16.msra.mxu0 0
      %1025 = vmatprep.mubr.bf16.mxu0 0
      %1026 = vmatmul.mubr.bf16.gmra.mrb[0].mxu0 %v991
      %v1027 = vpop.f32.mrb[0].mxu0
      %v1028 = vadd.f32 0.0, %v1027
      %v1029 = vpop.f32.mrb[0].mxu0
      %v1030 = vpop.f32.mrb[0].mxu0
      %v1031 = vadd.f32 0.0, %v1030
      %v1032 = vpop.f32.mrb[0].mxu0
      %1033 = vdwg.mxu0
      %v1034 = vadd.f32 %v862, %v1028
      %v1035 = vadd.f32 %v865, %v1031
      %1036 = vrot.lane.b32.xlu0 %v512, 80
      %v1037 = vpop.permute.xlu0 %1036
      %1038 = vrot.lane.b32.xlu0 %v513, 80
      %v1039 = vpop.permute.xlu0 %1038
      %v1041 = vsel %vm539, %v1037, 0
      %v1044 = vsel %vm539, %v1039, 0
      %1046 = vmatprep.subr.bf16.mxu0 0
      %1047 = vmatpush1.bf16.xpose.msra.mxu0 %v1044
      %1048 = vmatprep.subr.bf16.mxu0 0
      %1049 = vmatpush1.bf16.xpose.msra.mxu0 0
      %1050 = vmatprep.subr.bf16.mxu0 0
      %1051 = vmatpush1.bf16.xpose.msra.mxu0 0
      %1052 = vmatprep.subr.bf16.mxu0 0
      %1053 = vmatpush1.bf16.xpose.msra.mxu0 0
      %1054 = vmatprep.subr.bf16.mxu0 0
      %1055 = vmatpush1.bf16.xpose.msra.mxu0 0
      %1056 = vmatprep.subr.bf16.mxu0 0
      %1057 = vmatpush1.bf16.xpose.msra.mxu0 0
      %1058 = vmatprep.subr.bf16.mxu0 0
      %1059 = vmatpush1.bf16.xpose.msra.mxu0 0
      %1060 = vmatprep.subr.bf16.mxu0 0
      %1061 = vmatpush1.bf16.xpose.msra.mxu0 0
      %1062 = vmatprep.subr.bf16.mxu0 0
      %1063 = vmatpush1.bf16.xpose.msra.mxu0 0
      %1064 = vmatprep.subr.bf16.mxu0 0
      %1065 = vmatpush1.bf16.xpose.msra.mxu0 0
      %1066 = vmatprep.subr.bf16.mxu0 0
      %1067 = vmatpush1.bf16.xpose.msra.mxu0 0
      %1068 = vmatprep.subr.bf16.mxu0 0
      %1069 = vmatpush1.bf16.xpose.msra.mxu0 0
      %1070 = vmatprep.subr.bf16.mxu0 0
      %1071 = vmatpush1.bf16.xpose.msra.mxu0 0
      %1072 = vmatprep.subr.bf16.mxu0 0
      %1073 = vmatpush1.bf16.xpose.msra.mxu0 0
      %1074 = vmatprep.subr.bf16.mxu0 0
      %1075 = vmatpush1.bf16.xpose.msra.mxu0 0
      %1076 = vmatprep.subr.bf16.mxu0 0
      %1077 = vmatpush1.bf16.xpose.msra.mxu0 0
      %1078 = vmatprep.mubr.bf16.mxu0 0
      %1079 = vmatmul.mubr.bf16.gmra.mrb[0].mxu0 %v1041
      %v1080 = vpop.f32.mrb[0].mxu0
      %v1081 = vadd.f32 0.0, %v1080
      %v1082 = vpop.f32.mrb[0].mxu0
      %v1083 = vpop.f32.mrb[0].mxu0
      %v1084 = vadd.f32 0.0, %v1083
      %v1085 = vpop.f32.mrb[0].mxu0
      %1086 = vdwg.mxu0
      %v1087 = vsel %vm539, %v1081, -inf
      %1088 = vmax.xlane.f32.xlu0 %v1087
      %v1089 = vpop.xlane.xlu0 %1088
      %v1090 = vsel %vm539, %v1084, -inf
      %1091 = vmax.xlane.f32.xlu0 %v1090
      %v1092 = vpop.xlane.xlu0 %1091
      %v1093 = vsub.f32 %v1081, %v1089
      %v1094 = vsub.f32 %v1084, %v1092
      %v1095 = vmul.f32 %v1093, 1.442695
      %v1096 = vpow.pop %v1095
      %v1097 = vmul.f32 %v1094, 1.442695
      %v1098 = vpow.pop %v1097
      %v1099 = vsel %vm539, %v1096, 0.0
      %1100 = vadd.xlane.f32.xlu0 %v1099
      %v1101 = vpop.xlane.xlu0 %1100
      %v1102 = vsel %vm539, %v1098, 0.0
      %1103 = vadd.xlane.f32.xlu0 %v1102
      %v1104 = vpop.xlane.xlu0 %1103
      %v1105 = vrcp.pop %v1101
      %v1106 = vrcp.pop %v1104
      %v1107 = vmul.f32 %v1096, %v1105
      %v1108 = vmul.f32 %v1098, %v1106
      %v1109 = vpack.c.bf16 %v1108, %v1107
      %1110 = vrot.lane.b32.xlu0 %v514, 80
      %v1111 = vpop.permute.xlu0 %1110
      %v1114 = vsel %vm539, %v1109, 0
      %1116 = vmatprep.subr.bf16.mxu0 0
      %1117 = vmatpush1.bf16.msra.mxu0 %v1111
      %1118 = vmatprep.subr.bf16.mxu0 0
      %1119 = vmatpush1.bf16.msra.mxu0 0
      %1120 = vmatprep.subr.bf16.mxu0 0
      %1121 = vmatpush1.bf16.msra.mxu0 0
      %1122 = vmatprep.subr.bf16.mxu0 0
      %1123 = vmatpush1.bf16.msra.mxu0 0
      %1124 = vmatprep.subr.bf16.mxu0 0
      %1125 = vmatpush1.bf16.msra.mxu0 0
      %1126 = vmatprep.subr.bf16.mxu0 0
      %1127 = vmatpush1.bf16.msra.mxu0 0
      %1128 = vmatprep.subr.bf16.mxu0 0
      %1129 = vmatpush1.bf16.msra.mxu0 0
      %1130 = vmatprep.subr.bf16.mxu0 0
      %1131 = vmatpush1.bf16.msra.mxu0 0
      %1132 = vmatprep.subr.bf16.mxu0 0
      %1133 = vmatpush1.bf16.msra.mxu0 0
      %1134 = vmatprep.subr.bf16.mxu0 0
      %1135 = vmatpush1.bf16.msra.mxu0 0
      %1136 = vmatprep.subr.bf16.mxu0 0
      %1137 = vmatpush1.bf16.msra.mxu0 0
      %1138 = vmatprep.subr.bf16.mxu0 0
      %1139 = vmatpush1.bf16.msra.mxu0 0
      %1140 = vmatprep.subr.bf16.mxu0 0
      %1141 = vmatpush1.bf16.msra.mxu0 0
      %1142 = vmatprep.subr.bf16.mxu0 0
      %1143 = vmatpush1.bf16.msra.mxu0 0
      %1144 = vmatprep.subr.bf16.mxu0 0
      %1145 = vmatpush1.bf16.msra.mxu0 0
      %1146 = vmatprep.subr.bf16.mxu0 0
      %1147 = vmatpush1.bf16.msra.mxu0 0
      %1148 = vmatprep.mubr.bf16.mxu0 0
      %1149 = vmatmul.mubr.bf16.gmra.mrb[0].mxu0 %v1114
      %v1150 = vpop.f32.mrb[0].mxu0
      %v1151 = vadd.f32 0.0, %v1150
      %v1152 = vpop.f32.mrb[0].mxu0
      %v1153 = vpop.f32.mrb[0].mxu0
      %v1154 = vadd.f32 0.0, %v1153
      %v1155 = vpop.f32.mrb[0].mxu0
      %1156 = vdwg.mxu0
      %v1157 = vpack.c.bf16 %v1154, %v1151
      %v1159 = vsel %vm539, %v1157, 0
      %1161 = vmatprep.subr.bf16.mxu0 0
      %1162 = vmatpush1.bf16.msra.mxu0 %v534
      %1163 = vmatprep.subr.bf16.mxu0 0
      %1164 = vmatpush1.bf16.msra.mxu0 0
      %1165 = vmatprep.subr.bf16.mxu0 0
      %1166 = vmatpush1.bf16.msra.mxu0 0
      %1167 = vmatprep.subr.bf16.mxu0 0
      %1168 = vmatpush1.bf16.msra.mxu0 0
      %1169 = vmatprep.subr.bf16.mxu0 0
      %1170 = vmatpush1.bf16.msra.mxu0 0
      %1171 = vmatprep.subr.bf16.mxu0 0
      %1172 = vmatpush1.bf16.msra.mxu0 0
      %1173 = vmatprep.subr.bf16.mxu0 0
      %1174 = vmatpush1.bf16.msra.mxu0 0
      %1175 = vmatprep.subr.bf16.mxu0 0
      %1176 = vmatpush1.bf16.msra.mxu0 0
      %1177 = vmatprep.subr.bf16.mxu0 0
      %1178 = vmatpush1.bf16.msra.mxu0 0
      %1179 = vmatprep.subr.bf16.mxu0 0
      %1180 = vmatpush1.bf16.msra.mxu0 0
      %1181 = vmatprep.subr.bf16.mxu0 0
      %1182 = vmatpush1.bf16.msra.mxu0 0
      %1183 = vmatprep.subr.bf16.mxu0 0
      %1184 = vmatpush1.bf16.msra.mxu0 0
      %1185 = vmatprep.subr.bf16.mxu0 0
      %1186 = vmatpush1.bf16.msra.mxu0 0
      %1187 = vmatprep.subr.bf16.mxu0 0
      %1188 = vmatpush1.bf16.msra.mxu0 0
      %1189 = vmatprep.subr.bf16.mxu0 0
      %1190 = vmatpush1.bf16.msra.mxu0 0
      %1191 = vmatprep.subr.bf16.mxu0 0
      %1192 = vmatpush1.bf16.msra.mxu0 0
      %1193 = vmatprep.mubr.bf16.mxu0 0
      %1194 = vmatmul.mubr.bf16.gmra.mrb[0].mxu0 %v1159
      %v1195 = vpop.f32.mrb[0].mxu0
      %v1196 = vadd.f32 0.0, %v1195
      %v1197 = vpop.f32.mrb[0].mxu0
      %v1198 = vpop.f32.mrb[0].mxu0
      %v1199 = vadd.f32 0.0, %v1198
      %v1200 = vpop.f32.mrb[0].mxu0
      %1201 = vdwg.mxu0
      %v1202 = vadd.f32 %v1034, %v1196
      %v1203 = vadd.f32 %v1035, %v1199
      %1204 = vrot.lane.b32.xlu0 %v512, 64
      %v1205 = vpop.permute.xlu0 %1204
      %1206 = vrot.lane.b32.xlu0 %v513, 64
      %v1207 = vpop.permute.xlu0 %1206
      %v1209 = vsel %vm539, %v1205, 0
      %v1212 = vsel %vm539, %v1207, 0
      %1214 = vmatprep.subr.bf16.mxu0 0
      %1215 = vmatpush1.bf16.xpose.msra.mxu0 %v1212
      %1216 = vmatprep.subr.bf16.mxu0 0
      %1217 = vmatpush1.bf16.xpose.msra.mxu0 0
      %1218 = vmatprep.subr.bf16.mxu0 0
      %1219 = vmatpush1.bf16.xpose.msra.mxu0 0
      %1220 = vmatprep.subr.bf16.mxu0 0
      %1221 = vmatpush1.bf16.xpose.msra.mxu0 0
      %1222 = vmatprep.subr.bf16.mxu0 0
      %1223 = vmatpush1.bf16.xpose.msra.mxu0 0
      %1224 = vmatprep.subr.bf16.mxu0 0
      %1225 = vmatpush1.bf16.xpose.msra.mxu0 0
      %1226 = vmatprep.subr.bf16.mxu0 0
      %1227 = vmatpush1.bf16.xpose.msra.mxu0 0
      %1228 = vmatprep.subr.bf16.mxu0 0
      %1229 = vmatpush1.bf16.xpose.msra.mxu0 0
      %1230 = vmatprep.subr.bf16.mxu0 0
      %1231 = vmatpush1.bf16.xpose.msra.mxu0 0
      %1232 = vmatprep.subr.bf16.mxu0 0
      %1233 = vmatpush1.bf16.xpose.msra.mxu0 0
      %1234 = vmatprep.subr.bf16.mxu0 0
      %1235 = vmatpush1.bf16.xpose.msra.mxu0 0
      %1236 = vmatprep.subr.bf16.mxu0 0
      %1237 = vmatpush1.bf16.xpose.msra.mxu0 0
      %1238 = vmatprep.subr.bf16.mxu0 0
      %1239 = vmatpush1.bf16.xpose.msra.mxu0 0
      %1240 = vmatprep.subr.bf16.mxu0 0
      %1241 = vmatpush1.bf16.xpose.msra.mxu0 0
      %1242 = vmatprep.subr.bf16.mxu0 0
      %1243 = vmatpush1.bf16.xpose.msra.mxu0 0
      %1244 = vmatprep.subr.bf16.mxu0 0
      %1245 = vmatpush1.bf16.xpose.msra.mxu0 0
      %1246 = vmatprep.mubr.bf16.mxu0 0
      %1247 = vmatmul.mubr.bf16.gmra.mrb[0].mxu0 %v1209
      %v1248 = vpop.f32.mrb[0].mxu0
      %v1249 = vadd.f32 0.0, %v1248
      %v1250 = vpop.f32.mrb[0].mxu0
      %v1251 = vpop.f32.mrb[0].mxu0
      %v1252 = vadd.f32 0.0, %v1251
      %v1253 = vpop.f32.mrb[0].mxu0
      %1254 = vdwg.mxu0
      %v1255 = vsel %vm539, %v1249, -inf
      %1256 = vmax.xlane.f32.xlu0 %v1255
      %v1257 = vpop.xlane.xlu0 %1256
      %v1258 = vsel %vm539, %v1252, -inf
      %1259 = vmax.xlane.f32.xlu0 %v1258
      %v1260 = vpop.xlane.xlu0 %1259
      %v1261 = vsub.f32 %v1249, %v1257
      %v1262 = vsub.f32 %v1252, %v1260
      %v1263 = vmul.f32 %v1261, 1.442695
      %v1264 = vpow.pop %v1263
      %v1265 = vmul.f32 %v1262, 1.442695
      %v1266 = vpow.pop %v1265
      %v1267 = vsel %vm539, %v1264, 0.0
      %1268 = vadd.xlane.f32.xlu0 %v1267
      %v1269 = vpop.xlane.xlu0 %1268
      %v1270 = vsel %vm539, %v1266, 0.0
      %1271 = vadd.xlane.f32.xlu0 %v1270
      %v1272 = vpop.xlane.xlu0 %1271
      %v1273 = vrcp.pop %v1269
      %v1274 = vrcp.pop %v1272
      %v1275 = vmul.f32 %v1264, %v1273
      %v1276 = vmul.f32 %v1266, %v1274
      %v1277 = vpack.c.bf16 %v1276, %v1275
      %1278 = vrot.lane.b32.xlu0 %v514, 64
      %v1279 = vpop.permute.xlu0 %1278
      %v1282 = vsel %vm539, %v1277, 0
      %1284 = vmatprep.subr.bf16.mxu0 0
      %1285 = vmatpush1.bf16.msra.mxu0 %v1279
      %1286 = vmatprep.subr.bf16.mxu0 0
      %1287 = vmatpush1.bf16.msra.mxu0 0
      %1288 = vmatprep.subr.bf16.mxu0 0
      %1289 = vmatpush1.bf16.msra.mxu0 0
      %1290 = vmatprep.subr.bf16.mxu0 0
      %1291 = vmatpush1.bf16.msra.mxu0 0
      %1292 = vmatprep.subr.bf16.mxu0 0
      %1293 = vmatpush1.bf16.msra.mxu0 0
      %1294 = vmatprep.subr.bf16.mxu0 0
      %1295 = vmatpush1.bf16.msra.mxu0 0
      %1296 = vmatprep.subr.bf16.mxu0 0
      %1297 = vmatpush1.bf16.msra.mxu0 0
      %1298 = vmatprep.subr.bf16.mxu0 0
      %1299 = vmatpush1.bf16.msra.mxu0 0
      %1300 = vmatprep.subr.bf16.mxu0 0
      %1301 = vmatpush1.bf16.msra.mxu0 0
      %1302 = vmatprep.subr.bf16.mxu0 0
      %1303 = vmatpush1.bf16.msra.mxu0 0
      %1304 = vmatprep.subr.bf16.mxu0 0
      %1305 = vmatpush1.bf16.msra.mxu0 0
      %1306 = vmatprep.subr.bf16.mxu0 0
      %1307 = vmatpush1.bf16.msra.mxu0 0
      %1308 = vmatprep.subr.bf16.mxu0 0
      %1309 = vmatpush1.bf16.msra.mxu0 0
      %1310 = vmatprep.subr.bf16.mxu0 0
      %1311 = vmatpush1.bf16.msra.mxu0 0
      %1312 = vmatprep.subr.bf16.mxu0 0
      %1313 = vmatpush1.bf16.msra.mxu0 0
      %1314 = vmatprep.subr.bf16.mxu0 0
      %1315 = vmatpush1.bf16.msra.mxu0 0
      %1316 = vmatprep.mubr.bf16.mxu0 0
      %1317 = vmatmul.mubr.bf16.gmra.mrb[0].mxu0 %v1282
      %v1318 = vpop.f32.mrb[0].mxu0
      %v1319 = vadd.f32 0.0, %v1318
      %v1320 = vpop.f32.mrb[0].mxu0
      %v1321 = vpop.f32.mrb[0].mxu0
      %v1322 = vadd.f32 0.0, %v1321
      %v1323 = vpop.f32.mrb[0].mxu0
      %1324 = vdwg.mxu0
      %v1325 = vpack.c.bf16 %v1322, %v1319
      %v1327 = vsel %vm539, %v1325, 0
      %1329 = vmatprep.subr.bf16.mxu0 0
      %1330 = vmatpush1.bf16.msra.mxu0 %v535
      %1331 = vmatprep.subr.bf16.mxu0 0
      %1332 = vmatpush1.bf16.msra.mxu0 0
      %1333 = vmatprep.subr.bf16.mxu0 0
      %1334 = vmatpush1.bf16.msra.mxu0 0
      %1335 = vmatprep.subr.bf16.mxu0 0
      %1336 = vmatpush1.bf16.msra.mxu0 0
      %1337 = vmatprep.subr.bf16.mxu0 0
      %1338 = vmatpush1.bf16.msra.mxu0 0
      %1339 = vmatprep.subr.bf16.mxu0 0
      %1340 = vmatpush1.bf16.msra.mxu0 0
      %1341 = vmatprep.subr.bf16.mxu0 0
      %1342 = vmatpush1.bf16.msra.mxu0 0
      %1343 = vmatprep.subr.bf16.mxu0 0
      %1344 = vmatpush1.bf16.msra.mxu0 0
      %1345 = vmatprep.subr.bf16.mxu0 0
      %1346 = vmatpush1.bf16.msra.mxu0 0
      %1347 = vmatprep.subr.bf16.mxu0 0
      %1348 = vmatpush1.bf16.msra.mxu0 0
      %1349 = vmatprep.subr.bf16.mxu0 0
      %1350 = vmatpush1.bf16.msra.mxu0 0
      %1351 = vmatprep.subr.bf16.mxu0 0
      %1352 = vmatpush1.bf16.msra.mxu0 0
      %1353 = vmatprep.subr.bf16.mxu0 0
      %1354 = vmatpush1.bf16.msra.mxu0 0
      %1355 = vmatprep.subr.bf16.mxu0 0
      %1356 = vmatpush1.bf16.msra.mxu0 0
      %1357 = vmatprep.subr.bf16.mxu0 0
      %1358 = vmatpush1.bf16.msra.mxu0 0
      %1359 = vmatprep.subr.bf16.mxu0 0
      %1360 = vmatpush1.bf16.msra.mxu0 0
      %1361 = vmatprep.mubr.bf16.mxu0 0
      %1362 = vmatmul.mubr.bf16.gmra.mrb[0].mxu0 %v1327
      %v1363 = vpop.f32.mrb[0].mxu0
      %v1364 = vadd.f32 0.0, %v1363
      %v1365 = vpop.f32.mrb[0].mxu0
      %v1366 = vpop.f32.mrb[0].mxu0
      %v1367 = vadd.f32 0.0, %v1366
      %v1368 = vpop.f32.mrb[0].mxu0
      %1369 = vdwg.mxu0
      %v1370 = vadd.f32 %v1202, %v1364
      %v1371 = vadd.f32 %v1203, %v1367
      %1372 = vrot.lane.b32.xlu0 %v512, 48
      %v1373 = vpop.permute.xlu0 %1372
      %1374 = vrot.lane.b32.xlu0 %v513, 48
      %v1375 = vpop.permute.xlu0 %1374
      %v1377 = vsel %vm539, %v1373, 0
      %v1380 = vsel %vm539, %v1375, 0
      %1382 = vmatprep.subr.bf16.mxu0 0
      %1383 = vmatpush1.bf16.xpose.msra.mxu0 %v1380
      %1384 = vmatprep.subr.bf16.mxu0 0
      %1385 = vmatpush1.bf16.xpose.msra.mxu0 0
      %1386 = vmatprep.subr.bf16.mxu0 0
      %1387 = vmatpush1.bf16.xpose.msra.mxu0 0
      %1388 = vmatprep.subr.bf16.mxu0 0
      %1389 = vmatpush1.bf16.xpose.msra.mxu0 0
      %1390 = vmatprep.subr.bf16.mxu0 0
      %1391 = vmatpush1.bf16.xpose.msra.mxu0 0
      %1392 = vmatprep.subr.bf16.mxu0 0
      %1393 = vmatpush1.bf16.xpose.msra.mxu0 0
      %1394 = vmatprep.subr.bf16.mxu0 0
      %1395 = vmatpush1.bf16.xpose.msra.mxu0 0
      %1396 = vmatprep.subr.bf16.mxu0 0
      %1397 = vmatpush1.bf16.xpose.msra.mxu0 0
      %1398 = vmatprep.subr.bf16.mxu0 0
      %1399 = vmatpush1.bf16.xpose.msra.mxu0 0
      %1400 = vmatprep.subr.bf16.mxu0 0
      %1401 = vmatpush1.bf16.xpose.msra.mxu0 0
      %1402 = vmatprep.subr.bf16.mxu0 0
      %1403 = vmatpush1.bf16.xpose.msra.mxu0 0
      %1404 = vmatprep.subr.bf16.mxu0 0
      %1405 = vmatpush1.bf16.xpose.msra.mxu0 0
      %1406 = vmatprep.subr.bf16.mxu0 0
      %1407 = vmatpush1.bf16.xpose.msra.mxu0 0
      %1408 = vmatprep.subr.bf16.mxu0 0
      %1409 = vmatpush1.bf16.xpose.msra.mxu0 0
      %1410 = vmatprep.subr.bf16.mxu0 0
      %1411 = vmatpush1.bf16.xpose.msra.mxu0 0
      %1412 = vmatprep.subr.bf16.mxu0 0
      %1413 = vmatpush1.bf16.xpose.msra.mxu0 0
      %1414 = vmatprep.mubr.bf16.mxu0 0
      %1415 = vmatmul.mubr.bf16.gmra.mrb[0].mxu0 %v1377
      %v1416 = vpop.f32.mrb[0].mxu0
      %v1417 = vadd.f32 0.0, %v1416
      %v1418 = vpop.f32.mrb[0].mxu0
      %v1419 = vpop.f32.mrb[0].mxu0
      %v1420 = vadd.f32 0.0, %v1419
      %v1421 = vpop.f32.mrb[0].mxu0
      %1422 = vdwg.mxu0
      %v1423 = vsel %vm539, %v1417, -inf
      %1424 = vmax.xlane.f32.xlu0 %v1423
      %v1425 = vpop.xlane.xlu0 %1424
      %v1426 = vsel %vm539, %v1420, -inf
      %1427 = vmax.xlane.f32.xlu0 %v1426
      %v1428 = vpop.xlane.xlu0 %1427
      %v1429 = vsub.f32 %v1417, %v1425
      %v1430 = vsub.f32 %v1420, %v1428
      %v1431 = vmul.f32 %v1429, 1.442695
      %v1432 = vpow.pop %v1431
      %v1433 = vmul.f32 %v1430, 1.442695
      %v1434 = vpow.pop %v1433
      %v1435 = vsel %vm539, %v1432, 0.0
      %1436 = vadd.xlane.f32.xlu0 %v1435
      %v1437 = vpop.xlane.xlu0 %1436
      %v1438 = vsel %vm539, %v1434, 0.0
      %1439 = vadd.xlane.f32.xlu0 %v1438
      %v1440 = vpop.xlane.xlu0 %1439
      %v1441 = vrcp.pop %v1437
      %v1442 = vrcp.pop %v1440
      %v1443 = vmul.f32 %v1432, %v1441
      %v1444 = vmul.f32 %v1434, %v1442
      %v1445 = vpack.c.bf16 %v1444, %v1443
      %1446 = vrot.lane.b32.xlu0 %v514, 48
      %v1447 = vpop.permute.xlu0 %1446
      %v1450 = vsel %vm539, %v1445, 0
      %1452 = vmatprep.subr.bf16.mxu0 0
      %1453 = vmatpush1.bf16.msra.mxu0 %v1447
      %1454 = vmatprep.subr.bf16.mxu0 0
      %1455 = vmatpush1.bf16.msra.mxu0 0
      %1456 = vmatprep.subr.bf16.mxu0 0
      %1457 = vmatpush1.bf16.msra.mxu0 0
      %1458 = vmatprep.subr.bf16.mxu0 0
      %1459 = vmatpush1.bf16.msra.mxu0 0
      %1460 = vmatprep.subr.bf16.mxu0 0
      %1461 = vmatpush1.bf16.msra.mxu0 0
      %1462 = vmatprep.subr.bf16.mxu0 0
      %1463 = vmatpush1.bf16.msra.mxu0 0
      %1464 = vmatprep.subr.bf16.mxu0 0
      %1465 = vmatpush1.bf16.msra.mxu0 0
      %1466 = vmatprep.subr.bf16.mxu0 0
      %1467 = vmatpush1.bf16.msra.mxu0 0
      %1468 = vmatprep.subr.bf16.mxu0 0
      %1469 = vmatpush1.bf16.msra.mxu0 0
      %1470 = vmatprep.subr.bf16.mxu0 0
      %1471 = vmatpush1.bf16.msra.mxu0 0
      %1472 = vmatprep.subr.bf16.mxu0 0
      %1473 = vmatpush1.bf16.msra.mxu0 0
      %1474 = vmatprep.subr.bf16.mxu0 0
      %1475 = vmatpush1.bf16.msra.mxu0 0
      %1476 = vmatprep.subr.bf16.mxu0 0
      %1477 = vmatpush1.bf16.msra.mxu0 0
      %1478 = vmatprep.subr.bf16.mxu0 0
      %1479 = vmatpush1.bf16.msra.mxu0 0
      %1480 = vmatprep.subr.bf16.mxu0 0
      %1481 = vmatpush1.bf16.msra.mxu0 0
      %1482 = vmatprep.subr.bf16.mxu0 0
      %1483 = vmatpush1.bf16.msra.mxu0 0
      %1484 = vmatprep.mubr.bf16.mxu0 0
      %1485 = vmatmul.mubr.bf16.gmra.mrb[0].mxu0 %v1450
      %v1486 = vpop.f32.mrb[0].mxu0
      %v1487 = vadd.f32 0.0, %v1486
      %v1488 = vpop.f32.mrb[0].mxu0
      %v1489 = vpop.f32.mrb[0].mxu0
      %v1490 = vadd.f32 0.0, %v1489
      %v1491 = vpop.f32.mrb[0].mxu0
      %1492 = vdwg.mxu0
      %v1493 = vpack.c.bf16 %v1490, %v1487
      %v1495 = vsel %vm539, %v1493, 0
      %1497 = vmatprep.subr.bf16.mxu0 0
      %1498 = vmatpush1.bf16.msra.mxu0 %v536
      %1499 = vmatprep.subr.bf16.mxu0 0
      %1500 = vmatpush1.bf16.msra.mxu0 0
      %1501 = vmatprep.subr.bf16.mxu0 0
      %1502 = vmatpush1.bf16.msra.mxu0 0
      %1503 = vmatprep.subr.bf16.mxu0 0
      %1504 = vmatpush1.bf16.msra.mxu0 0
      %1505 = vmatprep.subr.bf16.mxu0 0
      %1506 = vmatpush1.bf16.msra.mxu0 0
      %1507 = vmatprep.subr.bf16.mxu0 0
      %1508 = vmatpush1.bf16.msra.mxu0 0
      %1509 = vmatprep.subr.bf16.mxu0 0
      %1510 = vmatpush1.bf16.msra.mxu0 0
      %1511 = vmatprep.subr.bf16.mxu0 0
      %1512 = vmatpush1.bf16.msra.mxu0 0
      %1513 = vmatprep.subr.bf16.mxu0 0
      %1514 = vmatpush1.bf16.msra.mxu0 0
      %1515 = vmatprep.subr.bf16.mxu0 0
      %1516 = vmatpush1.bf16.msra.mxu0 0
      %1517 = vmatprep.subr.bf16.mxu0 0
      %1518 = vmatpush1.bf16.msra.mxu0 0
      %1519 = vmatprep.subr.bf16.mxu0 0
      %1520 = vmatpush1.bf16.msra.mxu0 0
      %1521 = vmatprep.subr.bf16.mxu0 0
      %1522 = vmatpush1.bf16.msra.mxu0 0
      %1523 = vmatprep.subr.bf16.mxu0 0
      %1524 = vmatpush1.bf16.msra.mxu0 0
      %1525 = vmatprep.subr.bf16.mxu0 0
      %1526 = vmatpush1.bf16.msra.mxu0 0
      %1527 = vmatprep.subr.bf16.mxu0 0
      %1528 = vmatpush1.bf16.msra.mxu0 0
      %1529 = vmatprep.mubr.bf16.mxu0 0
      %1530 = vmatmul.mubr.bf16.gmra.mrb[0].mxu0 %v1495
      %v1531 = vpop.f32.mrb[0].mxu0
      %v1532 = vadd.f32 0.0, %v1531
      %v1533 = vpop.f32.mrb[0].mxu0
      %v1534 = vpop.f32.mrb[0].mxu0
      %v1535 = vadd.f32 0.0, %v1534
      %v1536 = vpop.f32.mrb[0].mxu0
      %1537 = vdwg.mxu0
      %v1538 = vadd.f32 %v1370, %v1532
      %v1539 = vadd.f32 %v1371, %v1535
      %1540 = vrot.lane.b32.xlu0 %v512, 32
      %v1541 = vpop.permute.xlu0 %1540
      %1542 = vrot.lane.b32.xlu0 %v513, 32
      %v1543 = vpop.permute.xlu0 %1542
      %v1545 = vsel %vm539, %v1541, 0
      %v1548 = vsel %vm539, %v1543, 0
      %1550 = vmatprep.subr.bf16.mxu0 0
      %1551 = vmatpush1.bf16.xpose.msra.mxu0 %v1548
      %1552 = vmatprep.subr.bf16.mxu0 0
      %1553 = vmatpush1.bf16.xpose.msra.mxu0 0
      %1554 = vmatprep.subr.bf16.mxu0 0
      %1555 = vmatpush1.bf16.xpose.msra.mxu0 0
      %1556 = vmatprep.subr.bf16.mxu0 0
      %1557 = vmatpush1.bf16.xpose.msra.mxu0 0
      %1558 = vmatprep.subr.bf16.mxu0 0
      %1559 = vmatpush1.bf16.xpose.msra.mxu0 0
      %1560 = vmatprep.subr.bf16.mxu0 0
      %1561 = vmatpush1.bf16.xpose.msra.mxu0 0
      %1562 = vmatprep.subr.bf16.mxu0 0
      %1563 = vmatpush1.bf16.xpose.msra.mxu0 0
      %1564 = vmatprep.subr.bf16.mxu0 0
      %1565 = vmatpush1.bf16.xpose.msra.mxu0 0
      %1566 = vmatprep.subr.bf16.mxu0 0
      %1567 = vmatpush1.bf16.xpose.msra.mxu0 0
      %1568 = vmatprep.subr.bf16.mxu0 0
      %1569 = vmatpush1.bf16.xpose.msra.mxu0 0
      %1570 = vmatprep.subr.bf16.mxu0 0
      %1571 = vmatpush1.bf16.xpose.msra.mxu0 0
      %1572 = vmatprep.subr.bf16.mxu0 0
      %1573 = vmatpush1.bf16.xpose.msra.mxu0 0
      %1574 = vmatprep.subr.bf16.mxu0 0
      %1575 = vmatpush1.bf16.xpose.msra.mxu0 0
      %1576 = vmatprep.subr.bf16.mxu0 0
      %1577 = vmatpush1.bf16.xpose.msra.mxu0 0
      %1578 = vmatprep.subr.bf16.mxu0 0
      %1579 = vmatpush1.bf16.xpose.msra.mxu0 0
      %1580 = vmatprep.subr.bf16.mxu0 0
      %1581 = vmatpush1.bf16.xpose.msra.mxu0 0
      %1582 = vmatprep.mubr.bf16.mxu0 0
      %1583 = vmatmul.mubr.bf16.gmra.mrb[0].mxu0 %v1545
      %v1584 = vpop.f32.mrb[0].mxu0
      %v1585 = vadd.f32 0.0, %v1584
      %v1586 = vpop.f32.mrb[0].mxu0
      %v1587 = vpop.f32.mrb[0].mxu0
      %v1588 = vadd.f32 0.0, %v1587
      %v1589 = vpop.f32.mrb[0].mxu0
      %1590 = vdwg.mxu0
      %v1591 = vsel %vm539, %v1585, -inf
      %1592 = vmax.xlane.f32.xlu0 %v1591
      %v1593 = vpop.xlane.xlu0 %1592
      %v1594 = vsel %vm539, %v1588, -inf
      %1595 = vmax.xlane.f32.xlu0 %v1594
      %v1596 = vpop.xlane.xlu0 %1595
      %v1597 = vsub.f32 %v1585, %v1593
      %v1598 = vsub.f32 %v1588, %v1596
      %v1599 = vmul.f32 %v1597, 1.442695
      %v1600 = vpow.pop %v1599
      %v1601 = vmul.f32 %v1598, 1.442695
      %v1602 = vpow.pop %v1601
      %v1603 = vsel %vm539, %v1600, 0.0
      %1604 = vadd.xlane.f32.xlu0 %v1603
      %v1605 = vpop.xlane.xlu0 %1604
      %v1606 = vsel %vm539, %v1602, 0.0
      %1607 = vadd.xlane.f32.xlu0 %v1606
      %v1608 = vpop.xlane.xlu0 %1607
      %v1609 = vrcp.pop %v1605
      %v1610 = vrcp.pop %v1608
      %v1611 = vmul.f32 %v1600, %v1609
      %v1612 = vmul.f32 %v1602, %v1610
      %v1613 = vpack.c.bf16 %v1612, %v1611
      %1614 = vrot.lane.b32.xlu0 %v514, 32
      %v1615 = vpop.permute.xlu0 %1614
      %v1618 = vsel %vm539, %v1613, 0
      %1620 = vmatprep.subr.bf16.mxu0 0
      %1621 = vmatpush1.bf16.msra.mxu0 %v1615
      %1622 = vmatprep.subr.bf16.mxu0 0
      %1623 = vmatpush1.bf16.msra.mxu0 0
      %1624 = vmatprep.subr.bf16.mxu0 0
      %1625 = vmatpush1.bf16.msra.mxu0 0
      %1626 = vmatprep.subr.bf16.mxu0 0
      %1627 = vmatpush1.bf16.msra.mxu0 0
      %1628 = vmatprep.subr.bf16.mxu0 0
      %1629 = vmatpush1.bf16.msra.mxu0 0
      %1630 = vmatprep.subr.bf16.mxu0 0
      %1631 = vmatpush1.bf16.msra.mxu0 0
      %1632 = vmatprep.subr.bf16.mxu0 0
      %1633 = vmatpush1.bf16.msra.mxu0 0
      %1634 = vmatprep.subr.bf16.mxu0 0
      %1635 = vmatpush1.bf16.msra.mxu0 0
      %1636 = vmatprep.subr.bf16.mxu0 0
      %1637 = vmatpush1.bf16.msra.mxu0 0
      %1638 = vmatprep.subr.bf16.mxu0 0
      %1639 = vmatpush1.bf16.msra.mxu0 0
      %1640 = vmatprep.subr.bf16.mxu0 0
      %1641 = vmatpush1.bf16.msra.mxu0 0
      %1642 = vmatprep.subr.bf16.mxu0 0
      %1643 = vmatpush1.bf16.msra.mxu0 0
      %1644 = vmatprep.subr.bf16.mxu0 0
      %1645 = vmatpush1.bf16.msra.mxu0 0
      %1646 = vmatprep.subr.bf16.mxu0 0
      %1647 = vmatpush1.bf16.msra.mxu0 0
      %1648 = vmatprep.subr.bf16.mxu0 0
      %1649 = vmatpush1.bf16.msra.mxu0 0
      %1650 = vmatprep.subr.bf16.mxu0 0
      %1651 = vmatpush1.bf16.msra.mxu0 0
      %1652 = vmatprep.mubr.bf16.mxu0 0
      %1653 = vmatmul.mubr.bf16.gmra.mrb[0].mxu0 %v1618
      %v1654 = vpop.f32.mrb[0].mxu0
      %v1655 = vadd.f32 0.0, %v1654
      %v1656 = vpop.f32.mrb[0].mxu0
      %v1657 = vpop.f32.mrb[0].mxu0
      %v1658 = vadd.f32 0.0, %v1657
      %v1659 = vpop.f32.mrb[0].mxu0
      %1660 = vdwg.mxu0
      %v1661 = vpack.c.bf16 %v1658, %v1655
      %v1663 = vsel %vm539, %v1661, 0
      %1665 = vmatprep.subr.bf16.mxu0 0
      %1666 = vmatpush1.bf16.msra.mxu0 %v537
      %1667 = vmatprep.subr.bf16.mxu0 0
      %1668 = vmatpush1.bf16.msra.mxu0 0
      %1669 = vmatprep.subr.bf16.mxu0 0
      %1670 = vmatpush1.bf16.msra.mxu0 0
      %1671 = vmatprep.subr.bf16.mxu0 0
      %1672 = vmatpush1.bf16.msra.mxu0 0
      %1673 = vmatprep.subr.bf16.mxu0 0
      %1674 = vmatpush1.bf16.msra.mxu0 0
      %1675 = vmatprep.subr.bf16.mxu0 0
      %1676 = vmatpush1.bf16.msra.mxu0 0
      %1677 = vmatprep.subr.bf16.mxu0 0
      %1678 = vmatpush1.bf16.msra.mxu0 0
      %1679 = vmatprep.subr.bf16.mxu0 0
      %1680 = vmatpush1.bf16.msra.mxu0 0
      %1681 = vmatprep.subr.bf16.mxu0 0
      %1682 = vmatpush1.bf16.msra.mxu0 0
      %1683 = vmatprep.subr.bf16.mxu0 0
      %1684 = vmatpush1.bf16.msra.mxu0 0
      %1685 = vmatprep.subr.bf16.mxu0 0
      %1686 = vmatpush1.bf16.msra.mxu0 0
      %1687 = vmatprep.subr.bf16.mxu0 0
      %1688 = vmatpush1.bf16.msra.mxu0 0
      %1689 = vmatprep.subr.bf16.mxu0 0
      %1690 = vmatpush1.bf16.msra.mxu0 0
      %1691 = vmatprep.subr.bf16.mxu0 0
      %1692 = vmatpush1.bf16.msra.mxu0 0
      %1693 = vmatprep.subr.bf16.mxu0 0
      %1694 = vmatpush1.bf16.msra.mxu0 0
      %1695 = vmatprep.subr.bf16.mxu0 0
      %1696 = vmatpush1.bf16.msra.mxu0 0
      %1697 = vmatprep.mubr.bf16.mxu0 0
      %1698 = vmatmul.mubr.bf16.gmra.mrb[0].mxu0 %v1663
      %v1699 = vpop.f32.mrb[0].mxu0
      %v1700 = vadd.f32 0.0, %v1699
      %v1701 = vpop.f32.mrb[0].mxu0
      %v1702 = vpop.f32.mrb[0].mxu0
      %v1703 = vadd.f32 0.0, %v1702
      %v1704 = vpop.f32.mrb[0].mxu0
      %1705 = vdwg.mxu0
      %v1706 = vadd.f32 %v1538, %v1700
      %v1707 = vadd.f32 %v1539, %v1703
      %1708 = vrot.lane.b32.xlu0 %v512, 16
      %v1709 = vpop.permute.xlu0 %1708
      %1710 = vrot.lane.b32.xlu0 %v513, 16
      %v1711 = vpop.permute.xlu0 %1710
      %v1713 = vsel %vm539, %v1709, 0
      %v1716 = vsel %vm539, %v1711, 0
      %1718 = vmatprep.subr.bf16.mxu0 0
      %1719 = vmatpush1.bf16.xpose.msra.mxu0 %v1716
      %1720 = vmatprep.subr.bf16.mxu0 0
      %1721 = vmatpush1.bf16.xpose.msra.mxu0 0
      %1722 = vmatprep.subr.bf16.mxu0 0
      %1723 = vmatpush1.bf16.xpose.msra.mxu0 0
      %1724 = vmatprep.subr.bf16.mxu0 0
      %1725 = vmatpush1.bf16.xpose.msra.mxu0 0
      %1726 = vmatprep.subr.bf16.mxu0 0
      %1727 = vmatpush1.bf16.xpose.msra.mxu0 0
      %1728 = vmatprep.subr.bf16.mxu0 0
      %1729 = vmatpush1.bf16.xpose.msra.mxu0 0
      %1730 = vmatprep.subr.bf16.mxu0 0
      %1731 = vmatpush1.bf16.xpose.msra.mxu0 0
      %1732 = vmatprep.subr.bf16.mxu0 0
      %1733 = vmatpush1.bf16.xpose.msra.mxu0 0
      %1734 = vmatprep.subr.bf16.mxu0 0
      %1735 = vmatpush1.bf16.xpose.msra.mxu0 0
      %1736 = vmatprep.subr.bf16.mxu0 0
      %1737 = vmatpush1.bf16.xpose.msra.mxu0 0
      %1738 = vmatprep.subr.bf16.mxu0 0
      %1739 = vmatpush1.bf16.xpose.msra.mxu0 0
      %1740 = vmatprep.subr.bf16.mxu0 0
      %1741 = vmatpush1.bf16.xpose.msra.mxu0 0
      %1742 = vmatprep.subr.bf16.mxu0 0
      %1743 = vmatpush1.bf16.xpose.msra.mxu0 0
      %1744 = vmatprep.subr.bf16.mxu0 0
      %1745 = vmatpush1.bf16.xpose.msra.mxu0 0
      %1746 = vmatprep.subr.bf16.mxu0 0
      %1747 = vmatpush1.bf16.xpose.msra.mxu0 0
      %1748 = vmatprep.subr.bf16.mxu0 0
      %1749 = vmatpush1.bf16.xpose.msra.mxu0 0
      %1750 = vmatprep.mubr.bf16.mxu0 0
      %1751 = vmatmul.mubr.bf16.gmra.mrb[0].mxu0 %v1713
      %v1752 = vpop.f32.mrb[0].mxu0
      %v1753 = vadd.f32 0.0, %v1752
      %v1754 = vpop.f32.mrb[0].mxu0
      %v1755 = vpop.f32.mrb[0].mxu0
      %v1756 = vadd.f32 0.0, %v1755
      %v1757 = vpop.f32.mrb[0].mxu0
      %1758 = vdwg.mxu0
      %v1759 = vsel %vm539, %v1753, -inf
      %1760 = vmax.xlane.f32.xlu0 %v1759
      %v1761 = vpop.xlane.xlu0 %1760
      %v1762 = vsel %vm539, %v1756, -inf
      %1763 = vmax.xlane.f32.xlu0 %v1762
      %v1764 = vpop.xlane.xlu0 %1763
      %v1765 = vsub.f32 %v1753, %v1761
      %v1766 = vsub.f32 %v1756, %v1764
      %v1767 = vmul.f32 %v1765, 1.442695
      %v1768 = vpow.pop %v1767
      %v1769 = vmul.f32 %v1766, 1.442695
      %v1770 = vpow.pop %v1769
      %v1771 = vsel %vm539, %v1768, 0.0
      %1772 = vadd.xlane.f32.xlu0 %v1771
      %v1773 = vpop.xlane.xlu0 %1772
      %v1774 = vsel %vm539, %v1770, 0.0
      %1775 = vadd.xlane.f32.xlu0 %v1774
      %v1776 = vpop.xlane.xlu0 %1775
      %v1777 = vrcp.pop %v1773
      %v1778 = vrcp.pop %v1776
      %v1779 = vmul.f32 %v1768, %v1777
      %v1780 = vmul.f32 %v1770, %v1778
      %v1781 = vpack.c.bf16 %v1780, %v1779
      %1782 = vrot.lane.b32.xlu0 %v514, 16
      %v1783 = vpop.permute.xlu0 %1782
      %v1786 = vsel %vm539, %v1781, 0
      %1788 = vmatprep.subr.bf16.mxu0 0
      %1789 = vmatpush1.bf16.msra.mxu0 %v1783
      %1790 = vmatprep.subr.bf16.mxu0 0
      %1791 = vmatpush1.bf16.msra.mxu0 0
      %1792 = vmatprep.subr.bf16.mxu0 0
      %1793 = vmatpush1.bf16.msra.mxu0 0
      %1794 = vmatprep.subr.bf16.mxu0 0
      %1795 = vmatpush1.bf16.msra.mxu0 0
      %1796 = vmatprep.subr.bf16.mxu0 0
      %1797 = vmatpush1.bf16.msra.mxu0 0
      %1798 = vmatprep.subr.bf16.mxu0 0
      %1799 = vmatpush1.bf16.msra.mxu0 0
      %1800 = vmatprep.subr.bf16.mxu0 0
      %1801 = vmatpush1.bf16.msra.mxu0 0
      %1802 = vmatprep.subr.bf16.mxu0 0
      %1803 = vmatpush1.bf16.msra.mxu0 0
      %1804 = vmatprep.subr.bf16.mxu0 0
      %1805 = vmatpush1.bf16.msra.mxu0 0
      %1806 = vmatprep.subr.bf16.mxu0 0
      %1807 = vmatpush1.bf16.msra.mxu0 0
      %1808 = vmatprep.subr.bf16.mxu0 0
      %1809 = vmatpush1.bf16.msra.mxu0 0
      %1810 = vmatprep.subr.bf16.mxu0 0
      %1811 = vmatpush1.bf16.msra.mxu0 0
      %1812 = vmatprep.subr.bf16.mxu0 0
      %1813 = vmatpush1.bf16.msra.mxu0 0
      %1814 = vmatprep.subr.bf16.mxu0 0
      %1815 = vmatpush1.bf16.msra.mxu0 0
      %1816 = vmatprep.subr.bf16.mxu0 0
      %1817 = vmatpush1.bf16.msra.mxu0 0
      %1818 = vmatprep.subr.bf16.mxu0 0
      %1819 = vmatpush1.bf16.msra.mxu0 0
      %1820 = vmatprep.mubr.bf16.mxu0 0
      %1821 = vmatmul.mubr.bf16.gmra.mrb[0].mxu0 %v1786
      %v1822 = vpop.f32.mrb[0].mxu0
      %v1823 = vadd.f32 0.0, %v1822
      %v1824 = vpop.f32.mrb[0].mxu0
      %v1825 = vpop.f32.mrb[0].mxu0
      %v1826 = vadd.f32 0.0, %v1825
      %v1827 = vpop.f32.mrb[0].mxu0
      %1828 = vdwg.mxu0
      %v1829 = vpack.c.bf16 %v1826, %v1823
      %v1831 = vsel %vm539, %v1829, 0
      %1833 = vmatprep.subr.bf16.mxu0 0
      %1834 = vmatpush1.bf16.msra.mxu0 %v538
      %1835 = vmatprep.subr.bf16.mxu0 0
      %1836 = vmatpush1.bf16.msra.mxu0 0
      %1837 = vmatprep.subr.bf16.mxu0 0
      %1838 = vmatpush1.bf16.msra.mxu0 0
      %1839 = vmatprep.subr.bf16.mxu0 0
      %1840 = vmatpush1.bf16.msra.mxu0 0
      %1841 = vmatprep.subr.bf16.mxu0 0
      %1842 = vmatpush1.bf16.msra.mxu0 0
      %1843 = vmatprep.subr.bf16.mxu0 0
      %1844 = vmatpush1.bf16.msra.mxu0 0
      %1845 = vmatprep.subr.bf16.mxu0 0
      %1846 = vmatpush1.bf16.msra.mxu0 0
      %1847 = vmatprep.subr.bf16.mxu0 0
      %1848 = vmatpush1.bf16.msra.mxu0 0
      %1849 = vmatprep.subr.bf16.mxu0 0
      %1850 = vmatpush1.bf16.msra.mxu0 0
      %1851 = vmatprep.subr.bf16.mxu0 0
      %1852 = vmatpush1.bf16.msra.mxu0 0
      %1853 = vmatprep.subr.bf16.mxu0 0
      %1854 = vmatpush1.bf16.msra.mxu0 0
      %1855 = vmatprep.subr.bf16.mxu0 0
      %1856 = vmatpush1.bf16.msra.mxu0 0
      %1857 = vmatprep.subr.bf16.mxu0 0
      %1858 = vmatpush1.bf16.msra.mxu0 0
      %1859 = vmatprep.subr.bf16.mxu0 0
      %1860 = vmatpush1.bf16.msra.mxu0 0
      %1861 = vmatprep.subr.bf16.mxu0 0
      %1862 = vmatpush1.bf16.msra.mxu0 0
      %1863 = vmatprep.subr.bf16.mxu0 0
      %1864 = vmatpush1.bf16.msra.mxu0 0
      %1865 = vmatprep.mubr.bf16.mxu0 0
      %1866 = vmatmul.mubr.bf16.gmra.mrb[0].mxu0 %v1831
      %v1867 = vpop.f32.mrb[0].mxu0
      %v1868 = vadd.f32 0.0, %v1867
      %v1869 = vpop.f32.mrb[0].mxu0
      %v1870 = vpop.f32.mrb[0].mxu0
      %v1871 = vadd.f32 0.0, %v1870
      %v1872 = vpop.f32.mrb[0].mxu0
      %1873 = vdwg.mxu0
      %v1874 = vadd.f32 %v1706, %v1868
      %v1875 = vadd.f32 %v1707, %v1871
      %v1876 = vadd.f32 %v334, %v1874
      %v1877 = vadd.f32 %v335, %v1875
      %v1878 = vld [vmem:[%s4] sm:$0x1]
      %v1880 = vlaneseq
      %v1881 = vshrl.u32 %v1880, 7
      %v1882 = vsub.s32 0, %v1881
      %v1883 = vrot.slane %v1878, %v1882
      %v1885 = vadd.f32 %v1876, %v1883
      %v1886 = vadd.f32 %v1877, %v1883
      %v1887 = vpack.c.bf16 %v1886, %v1885
      %v1888 = vld [vmem:[%s5] sm:$0xff]
      %v1889 = vld [vmem:[%s5 + $0x8] sm:$0xff]
      %v1890 = vld [vmem:[%s5 + $0x10] sm:$0xff]
      %v1891 = vld [vmem:[%s5 + $0x18] sm:$0xff]
      %v1892 = vld [vmem:[%s5 + $0x20] sm:$0xff]
      %v1893 = vld [vmem:[%s5 + $0x28] sm:$0xff]
      %v1894 = vld [vmem:[%s5 + $0x30] sm:$0xff]
      %v1895 = vld [vmem:[%s5 + $0x38] sm:$0xff]
      %v1896 = vld [vmem:[%s5 + $0x40] sm:$0xff]
      %v1897 = vld [vmem:[%s5 + $0x48] sm:$0xff]
      %v1898 = vld [vmem:[%s5 + $0x50] sm:$0xff]
      %v1899 = vld [vmem:[%s5 + $0x58] sm:$0xff]
      %v1900 = vld [vmem:[%s5 + $0x60] sm:$0xff]
      %v1901 = vld [vmem:[%s5 + $0x68] sm:$0xff]
      %v1902 = vld [vmem:[%s5 + $0x70] sm:$0xff]
      %v1903 = vld [vmem:[%s5 + $0x78] sm:$0xff]
      %v1904 = vld [vmem:[%s5 + $0x80] sm:$0xff]
      %v1905 = vld [vmem:[%s5 + $0x88] sm:$0xff]
      %v1906 = vld [vmem:[%s5 + $0x90] sm:$0xff]
      %v1907 = vld [vmem:[%s5 + $0x98] sm:$0xff]
      %v1908 = vld [vmem:[%s5 + $0xa0] sm:$0xff]
      %v1909 = vld [vmem:[%s5 + $0xa8] sm:$0xff]
      %v1910 = vld [vmem:[%s5 + $0xb0] sm:$0xff]
      %v1911 = vld [vmem:[%s5 + $0xb8] sm:$0xff]
      %v1912 = vld [vmem:[%s5 + $0xc0] sm:$0xff]
      %v1913 = vld [vmem:[%s5 + $0xc8] sm:$0xff]
      %v1914 = vld [vmem:[%s5 + $0xd0] sm:$0xff]
      %v1915 = vld [vmem:[%s5 + $0xd8] sm:$0xff]
      %v1916 = vld [vmem:[%s5 + $0xe0] sm:$0xff]
      %v1917 = vld [vmem:[%s5 + $0xe8] sm:$0xff]
      %v1918 = vld [vmem:[%s5 + $0xf0] sm:$0xff]
      %v1919 = vld [vmem:[%s5 + $0xf8] sm:$0xff]
      %v1920 = vld [vmem:[%s5 + $0x100] sm:$0xff]
      %v1921 = vld [vmem:[%s5 + $0x108] sm:$0xff]
      %v1922 = vld [vmem:[%s5 + $0x110] sm:$0xff]
      %v1923 = vld [vmem:[%s5 + $0x118] sm:$0xff]
      %v1924 = vld [vmem:[%s5 + $0x120] sm:$0xff]
      %v1925 = vld [vmem:[%s5 + $0x128] sm:$0xff]
      %v1926 = vld [vmem:[%s5 + $0x130] sm:$0xff]
      %v1927 = vld [vmem:[%s5 + $0x138] sm:$0xff]
      %v1928 = vld [vmem:[%s5 + $0x140] sm:$0xff]
      %v1929 = vld [vmem:[%s5 + $0x148] sm:$0xff]
      %v1930 = vld [vmem:[%s5 + $0x150] sm:$0xff]
      %v1931 = vld [vmem:[%s5 + $0x158] sm:$0xff]
      %v1932 = vld [vmem:[%s5 + $0x160] sm:$0xff]
      %v1933 = vld [vmem:[%s5 + $0x168] sm:$0xff]
      %v1934 = vld [vmem:[%s5 + $0x170] sm:$0xff]
      %v1935 = vld [vmem:[%s5 + $0x178] sm:$0xff]
      %v1936 = vld [vmem:[%s5 + $0x180] sm:$0xff]
      %v1937 = vld [vmem:[%s5 + $0x188] sm:$0xff]
      %v1938 = vld [vmem:[%s5 + $0x190] sm:$0xff]
      %v1939 = vld [vmem:[%s5 + $0x198] sm:$0xff]
      %v1940 = vld [vmem:[%s5 + $0x1a0] sm:$0xff]
      %v1941 = vld [vmem:[%s5 + $0x1a8] sm:$0xff]
      %v1942 = vld [vmem:[%s5 + $0x1b0] sm:$0xff]
      %v1943 = vld [vmem:[%s5 + $0x1b8] sm:$0xff]
      %v1944 = vld [vmem:[%s5 + $0x1c0] sm:$0xff]
      %v1945 = vld [vmem:[%s5 + $0x1c8] sm:$0xff]
      %v1946 = vld [vmem:[%s5 + $0x1d0] sm:$0xff]
      %v1947 = vld [vmem:[%s5 + $0x1d8] sm:$0xff]
      %v1948 = vld [vmem:[%s5 + $0x1e0] sm:$0xff]
      %v1949 = vld [vmem:[%s5 + $0x1e8] sm:$0xff]
      %v1950 = vld [vmem:[%s5 + $0x1f0] sm:$0xff]
      %v1951 = vld [vmem:[%s5 + $0x1f8] sm:$0xff]
      %v1952 = vpack.c.bf16 %v1892, %v1888
      %v1953 = vpack.c.bf16 %v1893, %v1889
      %v1954 = vpack.c.bf16 %v1894, %v1890
      %v1955 = vpack.c.bf16 %v1895, %v1891
      %v1956 = vpack.c.bf16 %v1900, %v1896
      %v1957 = vpack.c.bf16 %v1901, %v1897
      %v1958 = vpack.c.bf16 %v1902, %v1898
      %v1959 = vpack.c.bf16 %v1903, %v1899
      %v1960 = vpack.c.bf16 %v1908, %v1904
      %v1961 = vpack.c.bf16 %v1909, %v1905
      %v1962 = vpack.c.bf16 %v1910, %v1906
      %v1963 = vpack.c.bf16 %v1911, %v1907
      %v1964 = vpack.c.bf16 %v1916, %v1912
      %v1965 = vpack.c.bf16 %v1917, %v1913
      %v1966 = vpack.c.bf16 %v1918, %v1914
      %v1967 = vpack.c.bf16 %v1919, %v1915
      %v1968 = vpack.c.bf16 %v1924, %v1920
      %v1969 = vpack.c.bf16 %v1925, %v1921
      %v1970 = vpack.c.bf16 %v1926, %v1922
      %v1971 = vpack.c.bf16 %v1927, %v1923
      %v1972 = vpack.c.bf16 %v1932, %v1928
      %v1973 = vpack.c.bf16 %v1933, %v1929
      %v1974 = vpack.c.bf16 %v1934, %v1930
      %v1975 = vpack.c.bf16 %v1935, %v1931
      %v1976 = vpack.c.bf16 %v1940, %v1936
      %v1977 = vpack.c.bf16 %v1941, %v1937
      %v1978 = vpack.c.bf16 %v1942, %v1938
      %v1979 = vpack.c.bf16 %v1943, %v1939
      %v1980 = vpack.c.bf16 %v1948, %v1944
      %v1981 = vpack.c.bf16 %v1949, %v1945
      %v1982 = vpack.c.bf16 %v1950, %v1946
      %v1983 = vpack.c.bf16 %v1951, %v1947
      %v1984 = vld [vmem:[%s6] sm:$0xf]
      %v1986 = vlaneseq
      %v1987 = vshrl.u32 %v1986, 7
      %v1988 = vsub.s32 0, %v1987
      %v1989 = vrot.slane %v1984, %v1988
      %v1990 = vlaneseq
      %v1991 = vshrl.u32 %v1990, 7
      %v1992 = vsub.s32 1, %v1991
      %v1993 = vrot.slane %v1984, %v1992
      %v1994 = vlaneseq
      %v1995 = vshrl.u32 %v1994, 7
      %v1996 = vsub.s32 2, %v1995
      %v1997 = vrot.slane %v1984, %v1996
      %v1998 = vlaneseq
      %v1999 = vshrl.u32 %v1998, 7
      %v2000 = vsub.s32 3, %v1999
      %v2001 = vrot.slane %v1984, %v2000
      %2006 = vmatprep.subr.bf16.mxu0 %v1953
      %2007 = vmatpush1.bf16.msra.mxu0 %v1952
      %2008 = vmatprep.subr.bf16.mxu0 %v1957
      %2009 = vmatpush1.bf16.msra.mxu0 %v1956
      %2010 = vmatprep.subr.bf16.mxu0 %v1961
      %2011 = vmatpush1.bf16.msra.mxu0 %v1960
      %2012 = vmatprep.subr.bf16.mxu0 %v1965
      %2013 = vmatpush1.bf16.msra.mxu0 %v1964
      %2014 = vmatprep.subr.bf16.mxu0 %v1969
      %2015 = vmatpush1.bf16.msra.mxu0 %v1968
      %2016 = vmatprep.subr.bf16.mxu0 %v1973
      %2017 = vmatpush1.bf16.msra.mxu0 %v1972
      %2018 = vmatprep.subr.bf16.mxu0 %v1977
      %2019 = vmatpush1.bf16.msra.mxu0 %v1976
      %2020 = vmatprep.subr.bf16.mxu0 %v1981
      %2021 = vmatpush1.bf16.msra.mxu0 %v1980
      %2022 = vmatprep.subr.bf16.mxu0 0
      %2023 = vmatpush1.bf16.msra.mxu0 0
      %2024 = vmatprep.subr.bf16.mxu0 0
      %2025 = vmatpush1.bf16.msra.mxu0 0
      %2026 = vmatprep.subr.bf16.mxu0 0
      %2027 = vmatpush1.bf16.msra.mxu0 0
      %2028 = vmatprep.subr.bf16.mxu0 0
      %2029 = vmatpush1.bf16.msra.mxu0 0
      %2030 = vmatprep.subr.bf16.mxu0 0
      %2031 = vmatpush1.bf16.msra.mxu0 0
      %2032 = vmatprep.subr.bf16.mxu0 0
      %2033 = vmatpush1.bf16.msra.mxu0 0
      %2034 = vmatprep.subr.bf16.mxu0 0
      %2035 = vmatpush1.bf16.msra.mxu0 0
      %2036 = vmatprep.subr.bf16.mxu0 0
      %2037 = vmatpush1.bf16.msra.mxu0 0
      %2038 = vmatprep.mubr.bf16.mxu0 0
      %2039 = vmatmul.mubr.bf16.gmra.mrb[0].mxu0 %v1887
      %v2040 = vpop.f32.mrb[0].mxu0
      %v2041 = vadd.f32 %v1989, %v2040
      %v2042 = vpop.f32.mrb[0].mxu0
      %v2043 = vadd.f32 %v1993, %v2042
      %v2044 = vpop.f32.mrb[0].mxu0
      %v2045 = vadd.f32 %v1989, %v2044
      %v2046 = vpop.f32.mrb[0].mxu0
      %v2047 = vadd.f32 %v1993, %v2046
      %2048 = vdwg.mxu0
      %2049 = vmatprep.subr.bf16.mxu0 %v1955
      %2050 = vmatpush1.bf16.msra.mxu0 %v1954
      %2051 = vmatprep.subr.bf16.mxu0 %v1959
      %2052 = vmatpush1.bf16.msra.mxu0 %v1958
      %2053 = vmatprep.subr.bf16.mxu0 %v1963
      %2054 = vmatpush1.bf16.msra.mxu0 %v1962
      %2055 = vmatprep.subr.bf16.mxu0 %v1967
      %2056 = vmatpush1.bf16.msra.mxu0 %v1966
      %2057 = vmatprep.subr.bf16.mxu0 %v1971
      %2058 = vmatpush1.bf16.msra.mxu0 %v1970
      %2059 = vmatprep.subr.bf16.mxu0 %v1975
      %2060 = vmatpush1.bf16.msra.mxu0 %v1974
      %2061 = vmatprep.subr.bf16.mxu0 %v1979
      %2062 = vmatpush1.bf16.msra.mxu0 %v1978
      %2063 = vmatprep.subr.bf16.mxu0 %v1983
      %2064 = vmatpush1.bf16.msra.mxu0 %v1982
      %2065 = vmatprep.subr.bf16.mxu0 0
      %2066 = vmatpush1.bf16.msra.mxu0 0
      %2067 = vmatprep.subr.bf16.mxu0 0
      %2068 = vmatpush1.bf16.msra.mxu0 0
      %2069 = vmatprep.subr.bf16.mxu0 0
      %2070 = vmatpush1.bf16.msra.mxu0 0
      %2071 = vmatprep.subr.bf16.mxu0 0
      %2072 = vmatpush1.bf16.msra.mxu0 0
      %2073 = vmatprep.subr.bf16.mxu0 0
      %2074 = vmatpush1.bf16.msra.mxu0 0
      %2075 = vmatprep.subr.bf16.mxu0 0
      %2076 = vmatpush1.bf16.msra.mxu0 0
      %2077 = vmatprep.subr.bf16.mxu0 0
      %2078 = vmatpush1.bf16.msra.mxu0 0
      %2079 = vmatprep.subr.bf16.mxu0 0
      %2080 = vmatpush1.bf16.msra.mxu0 0
      %2081 = vmatprep.mubr.bf16.mxu0 0
      %2082 = vmatmul.mubr.bf16.gmra.mrb[0].mxu0 %v1887
      %v2083 = vpop.f32.mrb[0].mxu0
      %v2084 = vadd.f32 %v1997, %v2083
      %v2085 = vpop.f32.mrb[0].mxu0
      %v2086 = vadd.f32 %v2001, %v2085
      %v2087 = vpop.f32.mrb[0].mxu0
      %v2088 = vadd.f32 %v1997, %v2087
      %v2089 = vpop.f32.mrb[0].mxu0
      %v2090 = vadd.f32 %v2001, %v2089
      %2091 = vdwg.mxu0
      %v2092 = vmax.f32 %v2041, 0.0
      %v2093 = vmax.f32 %v2043, 0.0
      %v2094 = vmax.f32 %v2084, 0.0
      %v2095 = vmax.f32 %v2086, 0.0
      %v2096 = vmax.f32 %v2045, 0.0
      %v2097 = vmax.f32 %v2047, 0.0
      %v2098 = vmax.f32 %v2088, 0.0
      %v2099 = vmax.f32 %v2090, 0.0
      %v2100 = vpack.c.bf16 %v2096, %v2092
      %v2101 = vpack.c.bf16 %v2097, %v2093
      %v2102 = vpack.c.bf16 %v2098, %v2094
      %v2103 = vpack.c.bf16 %v2099, %v2095
      %v2104 = vld [vmem:[%s7] sm:$0xff]
      %v2105 = vld [vmem:[%s7 + $0x8] sm:$0xff]
      %v2106 = vld [vmem:[%s7 + $0x10] sm:$0xff]
      %v2107 = vld [vmem:[%s7 + $0x18] sm:$0xff]
      %v2108 = vld [vmem:[%s7 + $0x20] sm:$0xff]
      %v2109 = vld [vmem:[%s7 + $0x28] sm:$0xff]
      %v2110 = vld [vmem:[%s7 + $0x30] sm:$0xff]
      %v2111 = vld [vmem:[%s7 + $0x38] sm:$0xff]
      %v2112 = vld [vmem:[%s7 + $0x40] sm:$0xff]
      %v2113 = vld [vmem:[%s7 + $0x48] sm:$0xff]
      %v2114 = vld [vmem:[%s7 + $0x50] sm:$0xff]
      %v2115 = vld [vmem:[%s7 + $0x58] sm:$0xff]
      %v2116 = vld [vmem:[%s7 + $0x60] sm:$0xff]
      %v2117 = vld [vmem:[%s7 + $0x68] sm:$0xff]
      %v2118 = vld [vmem:[%s7 + $0x70] sm:$0xff]
      %v2119 = vld [vmem:[%s7 + $0x78] sm:$0xff]
      %v2120 = vld [vmem:[%s7 + $0x80] sm:$0xff]
      %v2121 = vld [vmem:[%s7 + $0x88] sm:$0xff]
      %v2122 = vld [vmem:[%s7 + $0x90] sm:$0xff]
      %v2123 = vld [vmem:[%s7 + $0x98] sm:$0xff]
      %v2124 = vld [vmem:[%s7 + $0xa0] sm:$0xff]
      %v2125 = vld [vmem:[%s7 + $0xa8] sm:$0xff]
      %v2126 = vld [vmem:[%s7 + $0xb0] sm:$0xff]
      %v2127 = vld [vmem:[%s7 + $0xb8] sm:$0xff]
      %v2128 = vld [vmem:[%s7 + $0xc0] sm:$0xff]
      %v2129 = vld [vmem:[%s7 + $0xc8] sm:$0xff]
      %v2130 = vld [vmem:[%s7 + $0xd0] sm:$0xff]
      %v2131 = vld [vmem:[%s7 + $0xd8] sm:$0xff]
      %v2132 = vld [vmem:[%s7 + $0xe0] sm:$0xff]
      %v2133 = vld [vmem:[%s7 + $0xe8] sm:$0xff]
      %v2134 = vld [vmem:[%s7 + $0xf0] sm:$0xff]
      %v2135 = vld [vmem:[%s7 + $0xf8] sm:$0xff]
      %v2136 = vld [vmem:[%s7 + $0x100] sm:$0xff]
      %v2137 = vld [vmem:[%s7 + $0x108] sm:$0xff]
      %v2138 = vld [vmem:[%s7 + $0x110] sm:$0xff]
      %v2139 = vld [vmem:[%s7 + $0x118] sm:$0xff]
      %v2140 = vld [vmem:[%s7 + $0x120] sm:$0xff]
      %v2141 = vld [vmem:[%s7 + $0x128] sm:$0xff]
      %v2142 = vld [vmem:[%s7 + $0x130] sm:$0xff]
      %v2143 = vld [vmem:[%s7 + $0x138] sm:$0xff]
      %v2144 = vld [vmem:[%s7 + $0x140] sm:$0xff]
      %v2145 = vld [vmem:[%s7 + $0x148] sm:$0xff]
      %v2146 = vld [vmem:[%s7 + $0x150] sm:$0xff]
      %v2147 = vld [vmem:[%s7 + $0x158] sm:$0xff]
      %v2148 = vld [vmem:[%s7 + $0x160] sm:$0xff]
      %v2149 = vld [vmem:[%s7 + $0x168] sm:$0xff]
      %v2150 = vld [vmem:[%s7 + $0x170] sm:$0xff]
      %v2151 = vld [vmem:[%s7 + $0x178] sm:$0xff]
      %v2152 = vld [vmem:[%s7 + $0x180] sm:$0xff]
      %v2153 = vld [vmem:[%s7 + $0x188] sm:$0xff]
      %v2154 = vld [vmem:[%s7 + $0x190] sm:$0xff]
      %v2155 = vld [vmem:[%s7 + $0x198] sm:$0xff]
      %v2156 = vld [vmem:[%s7 + $0x1a0] sm:$0xff]
      %v2157 = vld [vmem:[%s7 + $0x1a8] sm:$0xff]
      %v2158 = vld [vmem:[%s7 + $0x1b0] sm:$0xff]
      %v2159 = vld [vmem:[%s7 + $0x1b8] sm:$0xff]
      %v2160 = vld [vmem:[%s7 + $0x1c0] sm:$0xff]
      %v2161 = vld [vmem:[%s7 + $0x1c8] sm:$0xff]
      %v2162 = vld [vmem:[%s7 + $0x1d0] sm:$0xff]
      %v2163 = vld [vmem:[%s7 + $0x1d8] sm:$0xff]
      %v2164 = vld [vmem:[%s7 + $0x1e0] sm:$0xff]
      %v2165 = vld [vmem:[%s7 + $0x1e8] sm:$0xff]
      %v2166 = vld [vmem:[%s7 + $0x1f0] sm:$0xff]
      %v2167 = vld [vmem:[%s7 + $0x1f8] sm:$0xff]
      %v2168 = vpack.c.bf16 %v2105, %v2104
      %v2169 = vpack.c.bf16 %v2107, %v2106
      %v2170 = vpack.c.bf16 %v2109, %v2108
      %v2171 = vpack.c.bf16 %v2111, %v2110
      %v2172 = vpack.c.bf16 %v2113, %v2112
      %v2173 = vpack.c.bf16 %v2115, %v2114
      %v2174 = vpack.c.bf16 %v2117, %v2116
      %v2175 = vpack.c.bf16 %v2119, %v2118
      %v2176 = vpack.c.bf16 %v2121, %v2120
      %v2177 = vpack.c.bf16 %v2123, %v2122
      %v2178 = vpack.c.bf16 %v2125, %v2124
      %v2179 = vpack.c.bf16 %v2127, %v2126
      %v2180 = vpack.c.bf16 %v2129, %v2128
      %v2181 = vpack.c.bf16 %v2131, %v2130
      %v2182 = vpack.c.bf16 %v2133, %v2132
      %v2183 = vpack.c.bf16 %v2135, %v2134
      %v2184 = vpack.c.bf16 %v2137, %v2136
      %v2185 = vpack.c.bf16 %v2139, %v2138
      %v2186 = vpack.c.bf16 %v2141, %v2140
      %v2187 = vpack.c.bf16 %v2143, %v2142
      %v2188 = vpack.c.bf16 %v2145, %v2144
      %v2189 = vpack.c.bf16 %v2147, %v2146
      %v2190 = vpack.c.bf16 %v2149, %v2148
      %v2191 = vpack.c.bf16 %v2151, %v2150
      %v2192 = vpack.c.bf16 %v2153, %v2152
      %v2193 = vpack.c.bf16 %v2155, %v2154
      %v2194 = vpack.c.bf16 %v2157, %v2156
      %v2195 = vpack.c.bf16 %v2159, %v2158
      %v2196 = vpack.c.bf16 %v2161, %v2160
      %v2197 = vpack.c.bf16 %v2163, %v2162
      %v2198 = vpack.c.bf16 %v2165, %v2164
      %v2199 = vpack.c.bf16 %v2167, %v2166
      %2200 = vmatprep.subr.bf16.mxu0 0
      %2201 = vmatpush1.bf16.msra.mxu0 %v2168
      %2202 = vmatprep.subr.bf16.mxu0 0
      %2203 = vmatpush1.bf16.msra.mxu0 %v2169
      %2204 = vmatprep.subr.bf16.mxu0 0
      %2205 = vmatpush1.bf16.msra.mxu0 %v2170
      %2206 = vmatprep.subr.bf16.mxu0 0
      %2207 = vmatpush1.bf16.msra.mxu0 %v2171
      %2208 = vmatprep.subr.bf16.mxu0 0
      %2209 = vmatpush1.bf16.msra.mxu0 %v2172
      %2210 = vmatprep.subr.bf16.mxu0 0
      %2211 = vmatpush1.bf16.msra.mxu0 %v2173
      %2212 = vmatprep.subr.bf16.mxu0 0
      %2213 = vmatpush1.bf16.msra.mxu0 %v2174
      %2214 = vmatprep.subr.bf16.mxu0 0
      %2215 = vmatpush1.bf16.msra.mxu0 %v2175
      %2216 = vmatprep.subr.bf16.mxu0 0
      %2217 = vmatpush1.bf16.msra.mxu0 %v2176
      %2218 = vmatprep.subr.bf16.mxu0 0
      %2219 = vmatpush1.bf16.msra.mxu0 %v2177
      %2220 = vmatprep.subr.bf16.mxu0 0
      %2221 = vmatpush1.bf16.msra.mxu0 %v2178
      %2222 = vmatprep.subr.bf16.mxu0 0
      %2223 = vmatpush1.bf16.msra.mxu0 %v2179
      %2224 = vmatprep.subr.bf16.mxu0 0
      %2225 = vmatpush1.bf16.msra.mxu0 %v2180
      %2226 = vmatprep.subr.bf16.mxu0 0
      %2227 = vmatpush1.bf16.msra.mxu0 %v2181
      %2228 = vmatprep.subr.bf16.mxu0 0
      %2229 = vmatpush1.bf16.msra.mxu0 %v2182
      %2230 = vmatprep.subr.bf16.mxu0 0
      %2231 = vmatpush1.bf16.msra.mxu0 %v2183
      %2232 = vmatprep.mubr.bf16.mxu0 %v2101
      %2233 = vmatmul.mubr.bf16.gmra.mrb[0].mxu0 %v2100
      %v2234 = vpop.f32.mrb[0].mxu0
      %v2235 = vadd.f32 0.0, %v2234
      %v2236 = vpop.f32.mrb[0].mxu0
      %v2237 = vpop.f32.mrb[0].mxu0
      %v2238 = vadd.f32 0.0, %v2237
      %v2239 = vpop.f32.mrb[0].mxu0
      %2240 = vdwg.mxu0
      %2241 = vmatprep.subr.bf16.mxu0 0
      %2242 = vmatpush1.bf16.msra.mxu0 %v2184
      %2243 = vmatprep.subr.bf16.mxu0 0
      %2244 = vmatpush1.bf16.msra.mxu0 %v2185
      %2245 = vmatprep.subr.bf16.mxu0 0
      %2246 = vmatpush1.bf16.msra.mxu0 %v2186
      %2247 = vmatprep.subr.bf16.mxu0 0
      %2248 = vmatpush1.bf16.msra.mxu0 %v2187
      %2249 = vmatprep.subr.bf16.mxu0 0
      %2250 = vmatpush1.bf16.msra.mxu0 %v2188
      %2251 = vmatprep.subr.bf16.mxu0 0
      %2252 = vmatpush1.bf16.msra.mxu0 %v2189
      %2253 = vmatprep.subr.bf16.mxu0 0
      %2254 = vmatpush1.bf16.msra.mxu0 %v2190
      %2255 = vmatprep.subr.bf16.mxu0 0
      %2256 = vmatpush1.bf16.msra.mxu0 %v2191
      %2257 = vmatprep.subr.bf16.mxu0 0
      %2258 = vmatpush1.bf16.msra.mxu0 %v2192
      %2259 = vmatprep.subr.bf16.mxu0 0
      %2260 = vmatpush1.bf16.msra.mxu0 %v2193
      %2261 = vmatprep.subr.bf16.mxu0 0
      %2262 = vmatpush1.bf16.msra.mxu0 %v2194
      %2263 = vmatprep.subr.bf16.mxu0 0
      %2264 = vmatpush1.bf16.msra.mxu0 %v2195
      %2265 = vmatprep.subr.bf16.mxu0 0
      %2266 = vmatpush1.bf16.msra.mxu0 %v2196
      %2267 = vmatprep.subr.bf16.mxu0 0
      %2268 = vmatpush1.bf16.msra.mxu0 %v2197
      %2269 = vmatprep.subr.bf16.mxu0 0
      %2270 = vmatpush1.bf16.msra.mxu0 %v2198
      %2271 = vmatprep.subr.bf16.mxu0 0
      %2272 = vmatpush1.bf16.msra.mxu0 %v2199
      %2273 = vmatprep.mubr.bf16.mxu0 %v2103
      %2274 = vmatmul.mubr.bf16.gmra.mrb[0].mxu0 %v2102
      %v2275 = vpop.f32.mrb[0].mxu0
      %v2276 = vadd.f32 %v2235, %v2275
      %v2277 = vpop.f32.mrb[0].mxu0
      %v2278 = vpop.f32.mrb[0].mxu0
      %v2279 = vadd.f32 %v2238, %v2278
      %v2280 = vpop.f32.mrb[0].mxu0
      %2281 = vdwg.mxu0
      %v2282 = vadd.f32 %v1885, %v2276
      %v2283 = vadd.f32 %v1886, %v2279
      %v2284 = vld [vmem:[%s8] sm:$0x1]
      %v2286 = vlaneseq
      %v2287 = vshrl.u32 %v2286, 7
      %v2288 = vsub.s32 0, %v2287
      %v2289 = vrot.slane %v2284, %v2288
      %v2291 = vadd.f32 %v2282, %v2289
      %v2292 = vadd.f32 %v2283, %v2289
      %2293 = vst [vmem:[%s332] sm:$0xff] %v2291
      %2294 = vst [vmem:[%s332 + $0x8] sm:$0xff] %v2292
      %p2295 = scmp.lt.s32.totalorder %s20, 1
      %s2296 = scalar_select %p2295, %s20, 1
      %s2297 = smul.addr %s2296, 2
      %s2298 = smul.addr %s2297, 8
      %s2299 = scalar_lea.vmem %s9, %s2298
      // Predicated region
      $region57: #{_lambda_.15} parent=55 // pred_check
        %p2300 = pneg %p232
      $region58: #{_lambda_.15} parent=55 // pred_check_branch
        %2302 = sbr.rel (%p2300) target = $region60
      $region59: #{_lambda_.15} parent=55 // pred_region
        _
      $region60: #{_lambda_.15} parent=55 // pred_fallthru
        _
    $region56: #{_lambda_.15} parent=5 // pred_fallthru
      _
    %p2303 = scmp.le.s32.totalorder 2, %s15
    // Predicated region
    $region61: #{_lambda_.15} parent=5 // pred_check
      %p2304 = pneg %p2303
    $region62: #{_lambda_.15} parent=5 // pred_check_branch
      %2306 = sbr.rel (%p2304) target = $region64
    $region63: #{_lambda_.15} parent=5 // pred_region
      %s2307 = ssub.s32 %s15, 2
      // Predicated region
      $region65: #{_lambda_.15} parent=63 // pred_check
        %p2308 = pneg %p238
      $region66: #{_lambda_.15} parent=63 // pred_check_branch
        %2310 = sbr.rel (%p2308) target = $region68
      $region67: #{_lambda_.15} parent=63 // pred_region
        %p2311 = scmp.lt.s32.totalorder %s21, 1
        %s2312 = scalar_select %p2311, %s21, 1
        %s2313 = smul.addr %s2312, 2
        %s2314 = smul.addr %s2313, 8
        %s2315 = scalar_lea.vmem %s9, %s2314
      $region68: #{_lambda_.15} parent=63 // pred_fallthru
        _
    $region64: #{_lambda_.15} parent=5 // pred_fallthru
      _
  $region6: #{_lambda_.15} parent=0 // loop_footer
    %s19 = sadd.s32 1, %s15
  $region7: #{_lambda_.15} parent=0 // loop_footer_branch
    %14 = sbr.rel target = $region3
  $region8: #{_lambda_.15} parent=0 // loop_exit
    _

// kernel: _lambda_.13
$region0: #{_lambda_.13}
  #allocation0 [shape = 'u32[]', space=smem, size = 0x4, offset = 0x4, fixed_abs, tag = 'smem constant byte address 0x4 - core index']
  #allocation1 [shape = 'u32[144,128]{1,0:T(1,128)}', space=vmem, size = 0x12000, scoped, tag = 'internal scratch']
  %s0 = inlined_call_operand.vmem [shape: f32[2,16,128], index: 0, kind: input, shape index: {}]
  %s1 = inlined_call_operand.hbm [shape: f32[128,384], index: 1, kind: input, shape index: {}]
  %s2 = inlined_call_operand.vmem [shape: f32[1,384], index: 2, kind: input, shape index: {}]
  %s3 = inlined_call_operand.vmem [shape: f32[128,128], index: 3, kind: input, shape index: {}]
  %s4 = inlined_call_operand.vmem [shape: f32[1,128], index: 4, kind: input, shape index: {}]
  %s5 = inlined_call_operand.hbm [shape: f32[128,512], index: 5, kind: input, shape index: {}]
  %s6 = inlined_call_operand.vmem [shape: f32[1,512], index: 6, kind: input, shape index: {}]
  %s7 = inlined_call_operand.hbm [shape: f32[512,128], index: 7, kind: input, shape index: {}]
  %s8 = inlined_call_operand.vmem [shape: f32[1,128], index: 8, kind: input, shape index: {}]
  %s9 = inlined_call_operand.vmem [shape: f32[2,16,128], index: 9, kind: output, shape index: {}]
  %s10 = sld [smem:[#allocation0]]
  $region81: #{_lambda_.13} parent=0
    _
  %s12 = ssub.s32 1, %s10
  %s13 = scalar_select 0, %s12, %s10
  $region1: #{_lambda_.13} parent=0
    #allocation2 [shape = 'u8[196608]{0}', space=vmem, size = 0x30000, scoped, tag = 'input window, operand 1, single buffered']
    #allocation3 [shape = 's32[2]{0}', space=sflag, size = 0x8, scoped, tag = 'scoped memory for _lambda_.13']
    #allocation4 [shape = 'u8[262144]{0}', space=vmem, size = 0x40000, scoped, tag = 'input window, operand 5, single buffered']
    #allocation5 [shape = 's32[1]{0}', space=sflag, size = 0x4, scoped, tag = 'scoped memory for _lambda_.13']
    #allocation6 [shape = 'u8[262144]{0}', space=vmem, size = 0x40000, scoped, tag = 'input window, operand 7, single buffered']
    %14 = vsyncpa [#allocation3], 0
    %15 = vsyncpa [#allocation5], 0
    loop: start=0, step=1, limit=4
    $region2: #{_lambda_.13} parent=1 // loop_pre_header
      _
    $region3: #{_lambda_.13} parent=1 // loop_header
      %s17 = sphi 0, %s21
      %p18 = scmp.ge.s32.totalorder %s17, 4
      %s27 = sphi 0, %s29
      %s30 = sphi 0, %s27
      %s31 = sphi 0, %s30
      %s47 = sphi 0, %s31
      %s51 = sphi 0, %s51
      %s53 = sphi 0, %s51
      %s54 = sphi 0, %s53
      %s68 = sphi 0, %s54
      %s72 = sphi 0, %s72
      %s74 = sphi 0, %s72
      %s75 = sphi 0, %s74
      %s89 = sphi 0, %s75
      %s93 = sphi 0, %s93
      %s95 = sphi 0, %s93
      %s96 = sphi 0, %s95
      %s110 = sphi 0, %s96
      %s114 = sphi 0, %s114
      %s116 = sphi 0, %s114
      %s117 = sphi 0, %s116
      %s131 = sphi 0, %s117
      %s135 = sphi 0, %s135
      %s137 = sphi 0, %s135
      %s138 = sphi 0, %s137
      %s152 = sphi 0, %s138
      %s156 = sphi 0, %s156
      %s158 = sphi 0, %s156
      %s159 = sphi 0, %s158
      %s173 = sphi 0, %s159
      %s177 = sphi 0, %s177
      %s179 = sphi 0, %s177
      %s180 = sphi 0, %s179
      %s194 = sphi 0, %s180
      %s198 = sphi 0, %s198
      %s200 = sphi 0, %s198
      %s201 = sphi 0, %s200
      %s215 = sphi 0, %s201
      %s221 = sphi 0, %s223
      %s224 = sphi 0, %s221
      %s225 = sphi 0, %s224
      %s241 = sphi 0, %s225
    $region4: #{_lambda_.13} parent=1 // loop_header_branch
      %20 = sbr.rel (%p18) target = $region8
    $region5: #{_lambda_.13} parent=1 // loop_body
      %s22 = ssub.s32 %s17, 1
      %s23 = ssub.s32 %s17, 2
      %s24 = sadd.s32 %s17, 1
      %s25 = ssub.s32 %s17, %s24
      %p26 = scmp.eq.s32.totalorder %s25, 0
      %s28 = sadd.s32 %s27, 1
      %s29 = scalar_select %p26, %s27, %s28
      %p32 = pneg %p26
      %p33 = scmp.eq.s32.totalorder %s17, 1
      %p34 = por %p32, %p33
      %p35 = scmp.ne.s32.totalorder %s27, %s30
      %p36 = scmp.eq.s32.totalorder %s17, 0
      %p37 = por %p35, %p36
      %p38 = scmp.ne.s32.totalorder %s27, %s30
      %p39 = scmp.eq.s32.totalorder %s22, 1
      %p40 = por %p38, %p39
      %p41 = scmp.ne.s32.totalorder %s30, %s31
      %p42 = scmp.eq.s32.totalorder %s22, 0
      %p43 = por %p41, %p42
      %p44 = scmp.ne.s32.totalorder %s30, %s31
      %p45 = scmp.eq.s32.totalorder %s23, 1
      %p46 = por %p44, %p45
      %p48 = scmp.ne.s32.totalorder %s31, %s47
      %p49 = scmp.eq.s32.totalorder %s23, 0
      %p50 = por %p48, %p49
      %s52 = sadd.s32 %s51, 1
      %p55 = scmp.eq.s32.totalorder %s17, 1
      %p56 = scmp.ne.s32.totalorder %s51, %s53
      %p57 = scmp.eq.s32.totalorder %s17, 0
      %p58 = por %p56, %p57
      %p59 = scmp.ne.s32.totalorder %s51, %s53
      %p60 = scmp.eq.s32.totalorder %s22, 1
      %p61 = por %p59, %p60
      %p62 = scmp.ne.s32.totalorder %s53, %s54
      %p63 = scmp.eq.s32.totalorder %s22, 0
      %p64 = por %p62, %p63
      %p65 = scmp.ne.s32.totalorder %s53, %s54
      %p66 = scmp.eq.s32.totalorder %s23, 1
      %p67 = por %p65, %p66
      %p69 = scmp.ne.s32.totalorder %s54, %s68
      %p70 = scmp.eq.s32.totalorder %s23, 0
      %p71 = por %p69, %p70
      %s73 = sadd.s32 %s72, 1
      %p76 = scmp.eq.s32.totalorder %s17, 1
      %p77 = scmp.ne.s32.totalorder %s72, %s74
      %p78 = scmp.eq.s32.totalorder %s17, 0
      %p79 = por %p77, %p78
      %p80 = scmp.ne.s32.totalorder %s72, %s74
      %p81 = scmp.eq.s32.totalorder %s22, 1
      %p82 = por %p80, %p81
      %p83 = scmp.ne.s32.totalorder %s74, %s75
      %p84 = scmp.eq.s32.totalorder %s22, 0
      %p85 = por %p83, %p84
      %p86 = scmp.ne.s32.totalorder %s74, %s75
      %p87 = scmp.eq.s32.totalorder %s23, 1
      %p88 = por %p86, %p87
      %p90 = scmp.ne.s32.totalorder %s75, %s89
      %p91 = scmp.eq.s32.totalorder %s23, 0
      %p92 = por %p90, %p91
      %s94 = sadd.s32 %s93, 1
      %p97 = scmp.eq.s32.totalorder %s17, 1
      %p98 = scmp.ne.s32.totalorder %s93, %s95
      %p99 = scmp.eq.s32.totalorder %s17, 0
      %p100 = por %p98, %p99
      %p101 = scmp.ne.s32.totalorder %s93, %s95
      %p102 = scmp.eq.s32.totalorder %s22, 1
      %p103 = por %p101, %p102
      %p104 = scmp.ne.s32.totalorder %s95, %s96
      %p105 = scmp.eq.s32.totalorder %s22, 0
      %p106 = por %p104, %p105
      %p107 = scmp.ne.s32.totalorder %s95, %s96
      %p108 = scmp.eq.s32.totalorder %s23, 1
      %p109 = por %p107, %p108
      %p111 = scmp.ne.s32.totalorder %s96, %s110
      %p112 = scmp.eq.s32.totalorder %s23, 0
      %p113 = por %p111, %p112
      %s115 = sadd.s32 %s114, 1
      %p118 = scmp.eq.s32.totalorder %s17, 1
      %p119 = scmp.ne.s32.totalorder %s114, %s116
      %p120 = scmp.eq.s32.totalorder %s17, 0
      %p121 = por %p119, %p120
      %p122 = scmp.ne.s32.totalorder %s114, %s116
      %p123 = scmp.eq.s32.totalorder %s22, 1
      %p124 = por %p122, %p123
      %p125 = scmp.ne.s32.totalorder %s116, %s117
      %p126 = scmp.eq.s32.totalorder %s22, 0
      %p127 = por %p125, %p126
      %p128 = scmp.ne.s32.totalorder %s116, %s117
      %p129 = scmp.eq.s32.totalorder %s23, 1
      %p130 = por %p128, %p129
      %p132 = scmp.ne.s32.totalorder %s117, %s131
      %p133 = scmp.eq.s32.totalorder %s23, 0
      %p134 = por %p132, %p133
      %s136 = sadd.s32 %s135, 1
      %p139 = scmp.eq.s32.totalorder %s17, 1
      %p140 = scmp.ne.s32.totalorder %s135, %s137
      %p141 = scmp.eq.s32.totalorder %s17, 0
      %p142 = por %p140, %p141
      %p143 = scmp.ne.s32.totalorder %s135, %s137
      %p144 = scmp.eq.s32.totalorder %s22, 1
      %p145 = por %p143, %p144
      %p146 = scmp.ne.s32.totalorder %s137, %s138
      %p147 = scmp.eq.s32.totalorder %s22, 0
      %p148 = por %p146, %p147
      %p149 = scmp.ne.s32.totalorder %s137, %s138
      %p150 = scmp.eq.s32.totalorder %s23, 1
      %p151 = por %p149, %p150
      %p153 = scmp.ne.s32.totalorder %s138, %s152
      %p154 = scmp.eq.s32.totalorder %s23, 0
      %p155 = por %p153, %p154
      %s157 = sadd.s32 %s156, 1
      %p160 = scmp.eq.s32.totalorder %s17, 1
      %p161 = scmp.ne.s32.totalorder %s156, %s158
      %p162 = scmp.eq.s32.totalorder %s17, 0
      %p163 = por %p161, %p162
      %p164 = scmp.ne.s32.totalorder %s156, %s158
      %p165 = scmp.eq.s32.totalorder %s22, 1
      %p166 = por %p164, %p165
      %p167 = scmp.ne.s32.totalorder %s158, %s159
      %p168 = scmp.eq.s32.totalorder %s22, 0
      %p169 = por %p167, %p168
      %p170 = scmp.ne.s32.totalorder %s158, %s159
      %p171 = scmp.eq.s32.totalorder %s23, 1
      %p172 = por %p170, %p171
      %p174 = scmp.ne.s32.totalorder %s159, %s173
      %p175 = scmp.eq.s32.totalorder %s23, 0
      %p176 = por %p174, %p175
      %s178 = sadd.s32 %s177, 1
      %p181 = scmp.eq.s32.totalorder %s17, 1
      %p182 = scmp.ne.s32.totalorder %s177, %s179
      %p183 = scmp.eq.s32.totalorder %s17, 0
      %p184 = por %p182, %p183
      %p185 = scmp.ne.s32.totalorder %s177, %s179
      %p186 = scmp.eq.s32.totalorder %s22, 1
      %p187 = por %p185, %p186
      %p188 = scmp.ne.s32.totalorder %s179, %s180
      %p189 = scmp.eq.s32.totalorder %s22, 0
      %p190 = por %p188, %p189
      %p191 = scmp.ne.s32.totalorder %s179, %s180
      %p192 = scmp.eq.s32.totalorder %s23, 1
      %p193 = por %p191, %p192
      %p195 = scmp.ne.s32.totalorder %s180, %s194
      %p196 = scmp.eq.s32.totalorder %s23, 0
      %p197 = por %p195, %p196
      %s199 = sadd.s32 %s198, 1
      %p202 = scmp.eq.s32.totalorder %s17, 1
      %p203 = scmp.ne.s32.totalorder %s198, %s200
      %p204 = scmp.eq.s32.totalorder %s17, 0
      %p205 = por %p203, %p204
      %p206 = scmp.ne.s32.totalorder %s198, %s200
      %p207 = scmp.eq.s32.totalorder %s22, 1
      %p208 = por %p206, %p207
      %p209 = scmp.ne.s32.totalorder %s200, %s201
      %p210 = scmp.eq.s32.totalorder %s22, 0
      %p211 = por %p209, %p210
      %p212 = scmp.ne.s32.totalorder %s200, %s201
      %p213 = scmp.eq.s32.totalorder %s23, 1
      %p214 = por %p212, %p213
      %p216 = scmp.ne.s32.totalorder %s201, %s215
      %p217 = scmp.eq.s32.totalorder %s23, 0
      %p218 = por %p216, %p217
      %s219 = ssub.s32 %s17, %s24
      %p220 = scmp.eq.s32.totalorder %s219, 0
      %s222 = sadd.s32 %s221, 1
      %s223 = scalar_select %p220, %s221, %s222
      %p226 = pneg %p220
      %p227 = scmp.eq.s32.totalorder %s17, 1
      %p228 = por %p226, %p227
      %p229 = scmp.ne.s32.totalorder %s221, %s224
      %p230 = scmp.eq.s32.totalorder %s17, 0
      %p231 = por %p229, %p230
      %p232 = scmp.ne.s32.totalorder %s221, %s224
      %p233 = scmp.eq.s32.totalorder %s22, 1
      %p234 = por %p232, %p233
      %p235 = scmp.ne.s32.totalorder %s224, %s225
      %p236 = scmp.eq.s32.totalorder %s22, 0
      %p237 = por %p235, %p236
      %p238 = scmp.ne.s32.totalorder %s224, %s225
      %p239 = scmp.eq.s32.totalorder %s23, 1
      %p240 = por %p238, %p239
      %p242 = scmp.ne.s32.totalorder %s225, %s241
      %p243 = scmp.eq.s32.totalorder %s23, 0
      %p244 = por %p242, %p243
      %p245 = scmp.le.s32.totalorder 1, %s17
      %p246 = scmp.lt.s32.totalorder %s17, 3
      %p247 = pnand %p245, %p246
      %p248 = pneg %p247
      // Predicated region
      $region9: #{_lambda_.13} parent=5 // pred_check
        _
      $region10: #{_lambda_.13} parent=5 // pred_check_branch
        %250 = sbr.rel (%p247) target = $region12
      $region11: #{_lambda_.13} parent=5 // pred_region
        %s251 = ssub.s32 %s17, 1
        // Predicated region
        $region13: #{_lambda_.13} parent=11 // pred_check
          %p252 = pneg %p64
        $region14: #{_lambda_.13} parent=11 // pred_check_branch
          %254 = sbr.rel (%p252) target = $region16
        $region15: #{_lambda_.13} parent=11 // pred_region
          %s256 = ssub.s32 6144, 6144
          %257 = vsyncadd [#allocation3], %s256
          %s258 = sshll.u32 [#allocation2], 4
          %s259 = int_to_ptr.vmem [resolvable:$true] %s258
          %264 = dma.hbm_to_vmem [thread:$0]  %s1, 6144, %s259, [#allocation3], 384, 384, 24
        $region16: #{_lambda_.13} parent=11 // pred_fallthru
          _
        // Predicated region
        $region17: #{_lambda_.13} parent=11 // pred_check
          %p265 = pneg %p85
        $region18: #{_lambda_.13} parent=11 // pred_check_branch
          %267 = sbr.rel (%p265) target = $region20
        $region19: #{_lambda_.13} parent=11 // pred_region
          _
        $region20: #{_lambda_.13} parent=11 // pred_fallthru
          _
        // Predicated region
        $region21: #{_lambda_.13} parent=11 // pred_check
          %p268 = pneg %p106
        $region22: #{_lambda_.13} parent=11 // pred_check_branch
          %270 = sbr.rel (%p268) target = $region24
        $region23: #{_lambda_.13} parent=11 // pred_region
          _
        $region24: #{_lambda_.13} parent=11 // pred_fallthru
          _
        // Predicated region
        $region25: #{_lambda_.13} parent=11 // pred_check
          %p271 = pneg %p127
        $region26: #{_lambda_.13} parent=11 // pred_check_branch
          %273 = sbr.rel (%p271) target = $region28
        $region27: #{_lambda_.13} parent=11 // pred_region
          _
        $region28: #{_lambda_.13} parent=11 // pred_fallthru
          _
        // Predicated region
        $region29: #{_lambda_.13} parent=11 // pred_check
          %p274 = pneg %p148
        $region30: #{_lambda_.13} parent=11 // pred_check_branch
          %276 = sbr.rel (%p274) target = $region32
        $region31: #{_lambda_.13} parent=11 // pred_region
          %s278 = ssub.s32 8192, 8192
          %279 = vsyncadd [#allocation5], %s278
          %s280 = sshll.u32 [#allocation4], 4
          %s281 = int_to_ptr.vmem [resolvable:$true] %s280
          %286 = dma.hbm_to_vmem [thread:$0]  %s5, 8192, %s281, [#allocation5], 512, 512, 32
        $region32: #{_lambda_.13} parent=11 // pred_fallthru
          _
        // Predicated region
        $region33: #{_lambda_.13} parent=11 // pred_check
          %p287 = pneg %p169
        $region34: #{_lambda_.13} parent=11 // pred_check_branch
          %289 = sbr.rel (%p287) target = $region36
        $region35: #{_lambda_.13} parent=11 // pred_region
          _
        $region36: #{_lambda_.13} parent=11 // pred_fallthru
          _
        // Predicated region
        $region37: #{_lambda_.13} parent=11 // pred_check
          %p290 = pneg %p190
        $region38: #{_lambda_.13} parent=11 // pred_check_branch
          %292 = sbr.rel (%p290) target = $region40
        $region39: #{_lambda_.13} parent=11 // pred_region
          %s294 = ssub.s32 8192, 8192
          %295 = vsyncadd [#allocation5], %s294
          %s296 = sshll.u32 [#allocation6], 4
          %s297 = int_to_ptr.vmem [resolvable:$true] %s296
          %302 = dma.hbm_to_vmem [thread:$0]  %s7, 8192, %s297, [#allocation5], 128, 128, 8
        $region40: #{_lambda_.13} parent=11 // pred_fallthru
          _
        // Predicated region
        $region41: #{_lambda_.13} parent=11 // pred_check
          %p303 = pneg %p211
        $region42: #{_lambda_.13} parent=11 // pred_check_branch
          %305 = sbr.rel (%p303) target = $region44
        $region43: #{_lambda_.13} parent=11 // pred_region
          _
        $region44: #{_lambda_.13} parent=11 // pred_fallthru
          _
      $region12: #{_lambda_.13} parent=5 // pred_fallthru
        _
      %p306 = scmp.lt.s32.totalorder %s17, 2
      // Predicated region
      $region45: #{_lambda_.13} parent=5 // pred_check
        %p307 = pneg %p306
      $region46: #{_lambda_.13} parent=5 // pred_check_branch
        %309 = sbr.rel (%p307) target = $region48
      $region47: #{_lambda_.13} parent=5 // pred_region
        // Predicated region
        $region49: #{_lambda_.13} parent=47 // pred_check
          %p310 = pneg %p37
        $region50: #{_lambda_.13} parent=47 // pred_check_branch
          %312 = sbr.rel (%p310) target = $region52
        $region51: #{_lambda_.13} parent=47 // pred_region
          %p313 = scmp.lt.s32.totalorder %s17, 1
          %s314 = scalar_select %p313, %s17, 1
          %s315 = smul.addr %s314, 2
          %s316 = smul.addr %s315, 8
          %s317 = scalar_lea.vmem %s0, %s316
        $region52: #{_lambda_.13} parent=47 // pred_fallthru
          _
      $region48: #{_lambda_.13} parent=5 // pred_fallthru
        _
      %p318 = scmp.le.s32.totalorder 1, %s17
      %p319 = scmp.lt.s32.totalorder %s17, 3
      %p320 = pnand %p318, %p319
      %p321 = pneg %p320
      // Predicated region
      $region53: #{_lambda_.13} parent=5 // pred_check
        _
      $region54: #{_lambda_.13} parent=5 // pred_check_branch
        %323 = sbr.rel (%p320) target = $region56
      $region55: #{_lambda_.13} parent=5 // pred_region
        %s324 = ssub.s32 %s17, 1
        // Predicated region
        $region57: #{_lambda_.13} parent=55 // pred_check
          %p325 = pneg %p64
        $region58: #{_lambda_.13} parent=55 // pred_check_branch
          %327 = sbr.rel (%p325) target = $region60
        $region59: #{_lambda_.13} parent=55 // pred_region
          %328 = dma.done [#allocation3], 6144
        $region60: #{_lambda_.13} parent=55 // pred_fallthru
          _
        // Predicated region
        $region61: #{_lambda_.13} parent=55 // pred_check
          %p329 = pneg %p148
        $region62: #{_lambda_.13} parent=55 // pred_check_branch
          %331 = sbr.rel (%p329) target = $region64
        $region63: #{_lambda_.13} parent=55 // pred_region
          %332 = dma.done [#allocation5], 8192
        $region64: #{_lambda_.13} parent=55 // pred_fallthru
          _
        // Predicated region
        $region65: #{_lambda_.13} parent=55 // pred_check
          %p333 = pneg %p190
        $region66: #{_lambda_.13} parent=55 // pred_check_branch
          %335 = sbr.rel (%p333) target = $region68
        $region67: #{_lambda_.13} parent=55 // pred_region
          %336 = dma.done [#allocation5], 8192
        $region68: #{_lambda_.13} parent=55 // pred_fallthru
          _
        %p337 = scmp.lt.s32.totalorder %s22, 1
        %s338 = scalar_select %p337, %s22, 1
        %s339 = smul.addr %s338, 2
        %s340 = smul.addr %s339, 8
        %s341 = scalar_lea.vmem %s0, %s340
        %p342 = pneg %p43
        %p343 = pneg %p40
        %p344 = pneg %p64
        %p345 = pneg %p61
        %p346 = pneg %p85
        %p347 = pneg %p82
        %p348 = pneg %p106
        %p349 = pneg %p103
        %p350 = pneg %p127
        %p351 = pneg %p124
        %p352 = pneg %p148
        %p353 = pneg %p145
        %p354 = pneg %p169
        %p355 = pneg %p166
        %p356 = pneg %p190
        %p357 = pneg %p187
        %p358 = pneg %p211
        %p359 = pneg %p208
        %p360 = pneg %p237
        %p361 = pneg %p234
        %p362 = scmp.lt.s32.totalorder %s22, 1
        %s363 = scalar_select %p362, %s22, 1
        %s364 = smul.addr %s363, 2
        %s365 = smul.addr %s364, 8
        %s366 = scalar_lea.vmem %s9, %s365
        %p367 = scmp.lt.s32.totalorder %s22, 1
        %s368 = scalar_select %p367, %s22, 1
        %s369 = smul.addr %s368, 2
        %s370 = smul.addr %s369, 8
        %s371 = scalar_lea.vmem %s0, %s370
        %p372 = scmp.lt.s32.totalorder %s22, 1
        %s373 = scalar_select %p372, %s22, 1
        %s374 = smul.addr %s373, 2
        %s375 = smul.addr %s374, 8
        %s376 = scalar_lea.vmem %s9, %s375
        %v378 = vld [vmem:[%s371] sm:$0xff]
        %v379 = vld [vmem:[%s371 + $0x8] sm:$0xff]
        %v380 = vpack.c.bf16 %v379, %v378
        %v381 = vld [vmem:[#allocation2] sm:$0xff]
        %v382 = vld [vmem:[#allocation2 + $0x8] sm:$0xff]
        %v383 = vld [vmem:[#allocation2 + $0x10] sm:$0xff]
        %v384 = vld [vmem:[#allocation2 + $0x18] sm:$0xff]
        %v385 = vld [vmem:[#allocation2 + $0x20] sm:$0xff]
        %v386 = vld [vmem:[#allocation2 + $0x28] sm:$0xff]
        %v387 = vld [vmem:[#allocation2 + $0x30] sm:$0xff]
        %v388 = vld [vmem:[#allocation2 + $0x38] sm:$0xff]
        %v389 = vld [vmem:[#allocation2 + $0x40] sm:$0xff]
        %v390 = vld [vmem:[#allocation2 + $0x48] sm:$0xff]
        %v391 = vld [vmem:[#allocation2 + $0x50] sm:$0xff]
        %v392 = vld [vmem:[#allocation2 + $0x58] sm:$0xff]
        %v393 = vld [vmem:[#allocation2 + $0x60] sm:$0xff]
        %v394 = vld [vmem:[#allocation2 + $0x68] sm:$0xff]
        %v395 = vld [vmem:[#allocation2 + $0x70] sm:$0xff]
        %v396 = vld [vmem:[#allocation2 + $0x78] sm:$0xff]
        %v397 = vld [vmem:[#allocation2 + $0x80] sm:$0xff]
        %v398 = vld [vmem:[#allocation2 + $0x88] sm:$0xff]
        %v399 = vld [vmem:[#allocation2 + $0x90] sm:$0xff]
        %v400 = vld [vmem:[#allocation2 + $0x98] sm:$0xff]
        %v401 = vld [vmem:[#allocation2 + $0xa0] sm:$0xff]
        %v402 = vld [vmem:[#allocation2 + $0xa8] sm:$0xff]
        %v403 = vld [vmem:[#allocation2 + $0xb0] sm:$0xff]
        %v404 = vld [vmem:[#allocation2 + $0xb8] sm:$0xff]
        %v405 = vld [vmem:[#allocation2 + $0xc0] sm:$0xff]
        %v406 = vld [vmem:[#allocation2 + $0xc8] sm:$0xff]
        %v407 = vld [vmem:[#allocation2 + $0xd0] sm:$0xff]
        %v408 = vld [vmem:[#allocation2 + $0xd8] sm:$0xff]
        %v409 = vld [vmem:[#allocation2 + $0xe0] sm:$0xff]
        %v410 = vld [vmem:[#allocation2 + $0xe8] sm:$0xff]
        %v411 = vld [vmem:[#allocation2 + $0xf0] sm:$0xff]
        %v412 = vld [vmem:[#allocation2 + $0xf8] sm:$0xff]
        %v413 = vld [vmem:[#allocation2 + $0x100] sm:$0xff]
        %v414 = vld [vmem:[#allocation2 + $0x108] sm:$0xff]
        %v415 = vld [vmem:[#allocation2 + $0x110] sm:$0xff]
        %v416 = vld [vmem:[#allocation2 + $0x118] sm:$0xff]
        %v417 = vld [vmem:[#allocation2 + $0x120] sm:$0xff]
        %v418 = vld [vmem:[#allocation2 + $0x128] sm:$0xff]
        %v419 = vld [vmem:[#allocation2 + $0x130] sm:$0xff]
        %v420 = vld [vmem:[#allocation2 + $0x138] sm:$0xff]
        %v421 = vld [vmem:[#allocation2 + $0x140] sm:$0xff]
        %v422 = vld [vmem:[#allocation2 + $0x148] sm:$0xff]
        %v423 = vld [vmem:[#allocation2 + $0x150] sm:$0xff]
        %v424 = vld [vmem:[#allocation2 + $0x158] sm:$0xff]
        %v425 = vld [vmem:[#allocation2 + $0x160] sm:$0xff]
        %v426 = vld [vmem:[#allocation2 + $0x168] sm:$0xff]
        %v427 = vld [vmem:[#allocation2 + $0x170] sm:$0xff]
        %v428 = vld [vmem:[#allocation2 + $0x178] sm:$0xff]
        %v429 = vpack.c.bf16 %v384, %v381
        %v430 = vpack.c.bf16 %v385, %v382
        %v431 = vpack.c.bf16 %v386, %v383
        %v432 = vpack.c.bf16 %v390, %v387
        %v433 = vpack.c.bf16 %v391, %v388
        %v434 = vpack.c.bf16 %v392, %v389
        %v435 = vpack.c.bf16 %v396, %v393
        %v436 = vpack.c.bf16 %v397, %v394
        %v437 = vpack.c.bf16 %v398, %v395
        %v438 = vpack.c.bf16 %v402, %v399
        %v439 = vpack.c.bf16 %v403, %v400
        %v440 = vpack.c.bf16 %v404, %v401
        %v441 = vpack.c.bf16 %v408, %v405
        %v442 = vpack.c.bf16 %v409, %v406
        %v443 = vpack.c.bf16 %v410, %v407
        %v444 = vpack.c.bf16 %v414, %v411
        %v445 = vpack.c.bf16 %v415, %v412
        %v446 = vpack.c.bf16 %v416, %v413
        %v447 = vpack.c.bf16 %v420, %v417
        %v448 = vpack.c.bf16 %v421, %v418
        %v449 = vpack.c.bf16 %v422, %v419
        %v450 = vpack.c.bf16 %v426, %v423
        %v451 = vpack.c.bf16 %v427, %v424
        %v452 = vpack.c.bf16 %v428, %v425
        %v453 = vld [vmem:[%s2] sm:$0x7]
        %v455 = vlaneseq
        %v456 = vshrl.u32 %v455, 7
        %v457 = vsub.s32 0, %v456
        %v458 = vrot.slane %v453, %v457
        %v459 = vlaneseq
        %v460 = vshrl.u32 %v459, 7
        %v461 = vsub.s32 1, %v460
        %v462 = vrot.slane %v453, %v461
        %v463 = vlaneseq
        %v464 = vshrl.u32 %v463, 7
        %v465 = vsub.s32 2, %v464
        %v466 = vrot.slane %v453, %v465
        %470 = vmatprep.subr.bf16.mxu0 %v430
        %471 = vmatpush1.bf16.msra.mxu0 %v429
        %472 = vmatprep.subr.bf16.mxu0 %v433
        %473 = vmatpush1.bf16.msra.mxu0 %v432
        %474 = vmatprep.subr.bf16.mxu0 %v436
        %475 = vmatpush1.bf16.msra.mxu0 %v435
        %476 = vmatprep.subr.bf16.mxu0 %v439
        %477 = vmatpush1.bf16.msra.mxu0 %v438
        %478 = vmatprep.subr.bf16.mxu0 %v442
        %479 = vmatpush1.bf16.msra.mxu0 %v441
        %480 = vmatprep.subr.bf16.mxu0 %v445
        %481 = vmatpush1.bf16.msra.mxu0 %v444
        %482 = vmatprep.subr.bf16.mxu0 %v448
        %483 = vmatpush1.bf16.msra.mxu0 %v447
        %484 = vmatprep.subr.bf16.mxu0 %v451
        %485 = vmatpush1.bf16.msra.mxu0 %v450
        %486 = vmatprep.subr.bf16.mxu0 0
        %487 = vmatpush1.bf16.msra.mxu0 0
        %488 = vmatprep.subr.bf16.mxu0 0
        %489 = vmatpush1.bf16.msra.mxu0 0
        %490 = vmatprep.subr.bf16.mxu0 0
        %491 = vmatpush1.bf16.msra.mxu0 0
        %492 = vmatprep.subr.bf16.mxu0 0
        %493 = vmatpush1.bf16.msra.mxu0 0
        %494 = vmatprep.subr.bf16.mxu0 0
        %495 = vmatpush1.bf16.msra.mxu0 0
        %496 = vmatprep.subr.bf16.mxu0 0
        %497 = vmatpush1.bf16.msra.mxu0 0
        %498 = vmatprep.subr.bf16.mxu0 0
        %499 = vmatpush1.bf16.msra.mxu0 0
        %500 = vmatprep.subr.bf16.mxu0 0
        %501 = vmatpush1.bf16.msra.mxu0 0
        %502 = vmatprep.mubr.bf16.mxu0 0
        %503 = vmatmul.mubr.bf16.gmra.mrb[0].mxu0 %v380
        %v504 = vpop.f32.mrb[0].mxu0
        %v505 = vadd.f32 %v458, %v504
        %v506 = vpop.f32.mrb[0].mxu0
        %v507 = vadd.f32 %v462, %v506
        %v508 = vpop.f32.mrb[0].mxu0
        %v509 = vadd.f32 %v458, %v508
        %v510 = vpop.f32.mrb[0].mxu0
        %v511 = vadd.f32 %v462, %v510
        %512 = vdwg.mxu0
        %513 = vmatprep.subr.bf16.mxu0 0
        %514 = vmatpush1.bf16.msra.mxu0 %v431
        %515 = vmatprep.subr.bf16.mxu0 0
        %516 = vmatpush1.bf16.msra.mxu0 %v434
        %517 = vmatprep.subr.bf16.mxu0 0
        %518 = vmatpush1.bf16.msra.mxu0 %v437
        %519 = vmatprep.subr.bf16.mxu0 0
        %520 = vmatpush1.bf16.msra.mxu0 %v440
        %521 = vmatprep.subr.bf16.mxu0 0
        %522 = vmatpush1.bf16.msra.mxu0 %v443
        %523 = vmatprep.subr.bf16.mxu0 0
        %524 = vmatpush1.bf16.msra.mxu0 %v446
        %525 = vmatprep.subr.bf16.mxu0 0
        %526 = vmatpush1.bf16.msra.mxu0 %v449
        %527 = vmatprep.subr.bf16.mxu0 0
        %528 = vmatpush1.bf16.msra.mxu0 %v452
        %529 = vmatprep.subr.bf16.mxu0 0
        %530 = vmatpush1.bf16.msra.mxu0 0
        %531 = vmatprep.subr.bf16.mxu0 0
        %532 = vmatpush1.bf16.msra.mxu0 0
        %533 = vmatprep.subr.bf16.mxu0 0
        %534 = vmatpush1.bf16.msra.mxu0 0
        %535 = vmatprep.subr.bf16.mxu0 0
        %536 = vmatpush1.bf16.msra.mxu0 0
        %537 = vmatprep.subr.bf16.mxu0 0
        %538 = vmatpush1.bf16.msra.mxu0 0
        %539 = vmatprep.subr.bf16.mxu0 0
        %540 = vmatpush1.bf16.msra.mxu0 0
        %541 = vmatprep.subr.bf16.mxu0 0
        %542 = vmatpush1.bf16.msra.mxu0 0
        %543 = vmatprep.subr.bf16.mxu0 0
        %544 = vmatpush1.bf16.msra.mxu0 0
        %545 = vmatprep.mubr.bf16.mxu0 0
        %546 = vmatmul.mubr.bf16.gmra.mrb[0].mxu0 %v380
        %v547 = vpop.f32.mrb[0].mxu0
        %v548 = vadd.f32 %v466, %v547
        %v549 = vpop.f32.mrb[0].mxu0
        %v550 = vpop.f32.mrb[0].mxu0
        %v551 = vadd.f32 %v466, %v550
        %v552 = vpop.f32.mrb[0].mxu0
        %553 = vdwg.mxu0
        %v554 = vmul.f32 %v505, 0.25
        %v555 = vmul.f32 %v509, 0.25
        %v556 = vpack.c.bf16 %v555, %v554
        %v557 = vpack.c.bf16 %v511, %v507
        %v558 = vpack.c.bf16 %v551, %v548
        %v559 = vld [vmem:[%s3] sm:$0xff]
        %v560 = vld [vmem:[%s3 + $0x8] sm:$0xff]
        %v561 = vld [vmem:[%s3 + $0x10] sm:$0xff]
        %v562 = vld [vmem:[%s3 + $0x18] sm:$0xff]
        %v563 = vld [vmem:[%s3 + $0x20] sm:$0xff]
        %v564 = vld [vmem:[%s3 + $0x28] sm:$0xff]
        %v565 = vld [vmem:[%s3 + $0x30] sm:$0xff]
        %v566 = vld [vmem:[%s3 + $0x38] sm:$0xff]
        %v567 = vld [vmem:[%s3 + $0x40] sm:$0xff]
        %v568 = vld [vmem:[%s3 + $0x48] sm:$0xff]
        %v569 = vld [vmem:[%s3 + $0x50] sm:$0xff]
        %v570 = vld [vmem:[%s3 + $0x58] sm:$0xff]
        %v571 = vld [vmem:[%s3 + $0x60] sm:$0xff]
        %v572 = vld [vmem:[%s3 + $0x68] sm:$0xff]
        %v573 = vld [vmem:[%s3 + $0x70] sm:$0xff]
        %v574 = vld [vmem:[%s3 + $0x78] sm:$0xff]
        %v575 = vpack.c.bf16 %v560, %v559
        %v576 = vpack.c.bf16 %v562, %v561
        %v577 = vpack.c.bf16 %v564, %v563
        %v578 = vpack.c.bf16 %v566, %v565
        %v579 = vpack.c.bf16 %v568, %v567
        %v580 = vpack.c.bf16 %v570, %v569
        %v581 = vpack.c.bf16 %v572, %v571
        %v582 = vpack.c.bf16 %v574, %v573
        %vm583 = vcmask 130048
        %v585 = vsel %vm583, %v556, 0
        %v588 = vsel %vm583, %v557, 0
        %590 = vmatprep.subr.bf16.mxu0 0
        %591 = vmatpush1.bf16.xpose.msra.mxu0 %v588
        %592 = vmatprep.subr.bf16.mxu0 0
        %593 = vmatpush1.bf16.xpose.msra.mxu0 0
        %594 = vmatprep.subr.bf16.mxu0 0
        %595 = vmatpush1.bf16.xpose.msra.mxu0 0
        %596 = vmatprep.subr.bf16.mxu0 0
        %597 = vmatpush1.bf16.xpose.msra.mxu0 0
        %598 = vmatprep.subr.bf16.mxu0 0
        %599 = vmatpush1.bf16.xpose.msra.mxu0 0
        %600 = vmatprep.subr.bf16.mxu0 0
        %601 = vmatpush1.bf16.xpose.msra.mxu0 0
        %602 = vmatprep.subr.bf16.mxu0 0
        %603 = vmatpush1.bf16.xpose.msra.mxu0 0
        %604 = vmatprep.subr.bf16.mxu0 0
        %605 = vmatpush1.bf16.xpose.msra.mxu0 0
        %606 = vmatprep.subr.bf16.mxu0 0
        %607 = vmatpush1.bf16.xpose.msra.mxu0 0
        %608 = vmatprep.subr.bf16.mxu0 0
        %609 = vmatpush1.bf16.xpose.msra.mxu0 0
        %610 = vmatprep.subr.bf16.mxu0 0
        %611 = vmatpush1.bf16.xpose.msra.mxu0 0
        %612 = vmatprep.subr.bf16.mxu0 0
        %613 = vmatpush1.bf16.xpose.msra.mxu0 0
        %614 = vmatprep.subr.bf16.mxu0 0
        %615 = vmatpush1.bf16.xpose.msra.mxu0 0
        %616 = vmatprep.subr.bf16.mxu0 0
        %617 = vmatpush1.bf16.xpose.msra.mxu0 0
        %618 = vmatprep.subr.bf16.mxu0 0
        %619 = vmatpush1.bf16.xpose.msra.mxu0 0
        %620 = vmatprep.subr.bf16.mxu0 0
        %621 = vmatpush1.bf16.xpose.msra.mxu0 0
        %622 = vmatprep.mubr.bf16.mxu0 0
        %623 = vmatmul.mubr.bf16.gmra.mrb[0].mxu0 %v585
        %v624 = vpop.f32.mrb[0].mxu0
        %v625 = vadd.f32 0.0, %v624
        %v626 = vpop.f32.mrb[0].mxu0
        %v627 = vpop.f32.mrb[0].mxu0
        %v628 = vadd.f32 0.0, %v627
        %v629 = vpop.f32.mrb[0].mxu0
        %630 = vdwg.mxu0
        %v631 = vsel %vm583, %v625, -inf
        %632 = vmax.xlane.f32.xlu0 %v631
        %v633 = vpop.xlane.xlu0 %632
        %v634 = vsel %vm583, %v628, -inf
        %635 = vmax.xlane.f32.xlu0 %v634
        %v636 = vpop.xlane.xlu0 %635
        %v637 = vsub.f32 %v625, %v633
        %v638 = vsub.f32 %v628, %v636
        %v639 = vmul.f32 %v637, 1.442695
        %v640 = vpow.pop %v639
        %v641 = vmul.f32 %v638, 1.442695
        %v642 = vpow.pop %v641
        %v643 = vsel %vm583, %v640, 0.0
        %644 = vadd.xlane.f32.xlu0 %v643
        %v645 = vpop.xlane.xlu0 %644
        %v646 = vsel %vm583, %v642, 0.0
        %647 = vadd.xlane.f32.xlu0 %v646
        %v648 = vpop.xlane.xlu0 %647
        %v649 = vrcp.pop %v645
        %v650 = vrcp.pop %v648
        %v651 = vmul.f32 %v640, %v649
        %v652 = vmul.f32 %v642, %v650
        %v653 = vpack.c.bf16 %v652, %v651
        %v655 = vsel %vm583, %v653, 0
        %657 = vmatprep.subr.bf16.mxu0 0
        %658 = vmatpush1.bf16.msra.mxu0 %v558
        %659 = vmatprep.subr.bf16.mxu0 0
        %660 = vmatpush1.bf16.msra.mxu0 0
        %661 = vmatprep.subr.bf16.mxu0 0
        %662 = vmatpush1.bf16.msra.mxu0 0
        %663 = vmatprep.subr.bf16.mxu0 0
        %664 = vmatpush1.bf16.msra.mxu0 0
        %665 = vmatprep.subr.bf16.mxu0 0
        %666 = vmatpush1.bf16.msra.mxu0 0
        %667 = vmatprep.subr.bf16.mxu0 0
        %668 = vmatpush1.bf16.msra.mxu0 0
        %669 = vmatprep.subr.bf16.mxu0 0
        %670 = vmatpush1.bf16.msra.mxu0 0
        %671 = vmatprep.subr.bf16.mxu0 0
        %672 = vmatpush1.bf16.msra.mxu0 0
        %673 = vmatprep.subr.bf16.mxu0 0
        %674 = vmatpush1.bf16.msra.mxu0 0
        %675 = vmatprep.subr.bf16.mxu0 0
        %676 = vmatpush1.bf16.msra.mxu0 0
        %677 = vmatprep.subr.bf16.mxu0 0
        %678 = vmatpush1.bf16.msra.mxu0 0
        %679 = vmatprep.subr.bf16.mxu0 0
        %680 = vmatpush1.bf16.msra.mxu0 0
        %681 = vmatprep.subr.bf16.mxu0 0
        %682 = vmatpush1.bf16.msra.mxu0 0
        %683 = vmatprep.subr.bf16.mxu0 0
        %684 = vmatpush1.bf16.msra.mxu0 0
        %685 = vmatprep.subr.bf16.mxu0 0
        %686 = vmatpush1.bf16.msra.mxu0 0
        %687 = vmatprep.subr.bf16.mxu0 0
        %688 = vmatpush1.bf16.msra.mxu0 0
        %689 = vmatprep.mubr.bf16.mxu0 0
        %690 = vmatmul.mubr.bf16.gmra.mrb[0].mxu0 %v655
        %v691 = vpop.f32.mrb[0].mxu0
        %v692 = vadd.f32 0.0, %v691
        %v693 = vpop.f32.mrb[0].mxu0
        %v694 = vpop.f32.mrb[0].mxu0
        %v695 = vadd.f32 0.0, %v694
        %v696 = vpop.f32.mrb[0].mxu0
        %697 = vdwg.mxu0
        %v698 = vpack.c.bf16 %v695, %v692
        %700 = vrot.lane.b32.xlu0 %v556, 112
        %v701 = vpop.permute.xlu0 %700
        %703 = vrot.lane.b32.xlu0 %v557, 112
        %v704 = vpop.permute.xlu0 %703
        %v706 = vsel %vm583, %v701, 0
        %v709 = vsel %vm583, %v704, 0
        %711 = vmatprep.subr.bf16.mxu0 0
        %712 = vmatpush1.bf16.xpose.msra.mxu0 %v709
        %713 = vmatprep.subr.bf16.mxu0 0
        %714 = vmatpush1.bf16.xpose.msra.mxu0 0
        %715 = vmatprep.subr.bf16.mxu0 0
        %716 = vmatpush1.bf16.xpose.msra.mxu0 0
        %717 = vmatprep.subr.bf16.mxu0 0
        %718 = vmatpush1.bf16.xpose.msra.mxu0 0
        %719 = vmatprep.subr.bf16.mxu0 0
        %720 = vmatpush1.bf16.xpose.msra.mxu0 0
        %721 = vmatprep.subr.bf16.mxu0 0
        %722 = vmatpush1.bf16.xpose.msra.mxu0 0
        %723 = vmatprep.subr.bf16.mxu0 0
        %724 = vmatpush1.bf16.xpose.msra.mxu0 0
        %725 = vmatprep.subr.bf16.mxu0 0
        %726 = vmatpush1.bf16.xpose.msra.mxu0 0
        %727 = vmatprep.subr.bf16.mxu0 0
        %728 = vmatpush1.bf16.xpose.msra.mxu0 0
        %729 = vmatprep.subr.bf16.mxu0 0
        %730 = vmatpush1.bf16.xpose.msra.mxu0 0
        %731 = vmatprep.subr.bf16.mxu0 0
        %732 = vmatpush1.bf16.xpose.msra.mxu0 0
        %733 = vmatprep.subr.bf16.mxu0 0
        %734 = vmatpush1.bf16.xpose.msra.mxu0 0
        %735 = vmatprep.subr.bf16.mxu0 0
        %736 = vmatpush1.bf16.xpose.msra.mxu0 0
        %737 = vmatprep.subr.bf16.mxu0 0
        %738 = vmatpush1.bf16.xpose.msra.mxu0 0
        %739 = vmatprep.subr.bf16.mxu0 0
        %740 = vmatpush1.bf16.xpose.msra.mxu0 0
        %741 = vmatprep.subr.bf16.mxu0 0
        %742 = vmatpush1.bf16.xpose.msra.mxu0 0
        %743 = vmatprep.mubr.bf16.mxu0 0
        %744 = vmatmul.mubr.bf16.gmra.mrb[0].mxu0 %v706
        %v745 = vpop.f32.mrb[0].mxu0
        %v746 = vadd.f32 0.0, %v745
        %v747 = vpop.f32.mrb[0].mxu0
        %v748 = vpop.f32.mrb[0].mxu0
        %v749 = vadd.f32 0.0, %v748
        %v750 = vpop.f32.mrb[0].mxu0
        %751 = vdwg.mxu0
        %v752 = vsel %vm583, %v746, -inf
        %753 = vmax.xlane.f32.xlu0 %v752
        %v754 = vpop.xlane.xlu0 %753
        %v755 = vsel %vm583, %v749, -inf
        %756 = vmax.xlane.f32.xlu0 %v755
        %v757 = vpop.xlane.xlu0 %756
        %v758 = vsub.f32 %v746, %v754
        %v759 = vsub.f32 %v749, %v757
        %v760 = vmul.f32 %v758, 1.442695
        %v761 = vpow.pop %v760
        %v762 = vmul.f32 %v759, 1.442695
        %v763 = vpow.pop %v762
        %v764 = vsel %vm583, %v761, 0.0
        %765 = vadd.xlane.f32.xlu0 %v764
        %v766 = vpop.xlane.xlu0 %765
        %v767 = vsel %vm583, %v763, 0.0
        %768 = vadd.xlane.f32.xlu0 %v767
        %v769 = vpop.xlane.xlu0 %768
        %v770 = vrcp.pop %v766
        %v771 = vrcp.pop %v769
        %v772 = vmul.f32 %v761, %v770
        %v773 = vmul.f32 %v763, %v771
        %v774 = vpack.c.bf16 %v773, %v772
        %776 = vrot.lane.b32.xlu0 %v558, 112
        %v777 = vpop.permute.xlu0 %776
        %v780 = vsel %vm583, %v774, 0
        %782 = vmatprep.subr.bf16.mxu0 0
        %783 = vmatpush1.bf16.msra.mxu0 %v777
        %784 = vmatprep.subr.bf16.mxu0 0
        %785 = vmatpush1.bf16.msra.mxu0 0
        %786 = vmatprep.subr.bf16.mxu0 0
        %787 = vmatpush1.bf16.msra.mxu0 0
        %788 = vmatprep.subr.bf16.mxu0 0
        %789 = vmatpush1.bf16.msra.mxu0 0
        %790 = vmatprep.subr.bf16.mxu0 0
        %791 = vmatpush1.bf16.msra.mxu0 0
        %792 = vmatprep.subr.bf16.mxu0 0
        %793 = vmatpush1.bf16.msra.mxu0 0
        %794 = vmatprep.subr.bf16.mxu0 0
        %795 = vmatpush1.bf16.msra.mxu0 0
        %796 = vmatprep.subr.bf16.mxu0 0
        %797 = vmatpush1.bf16.msra.mxu0 0
        %798 = vmatprep.subr.bf16.mxu0 0
        %799 = vmatpush1.bf16.msra.mxu0 0
        %800 = vmatprep.subr.bf16.mxu0 0
        %801 = vmatpush1.bf16.msra.mxu0 0
        %802 = vmatprep.subr.bf16.mxu0 0
        %803 = vmatpush1.bf16.msra.mxu0 0
        %804 = vmatprep.subr.bf16.mxu0 0
        %805 = vmatpush1.bf16.msra.mxu0 0
        %806 = vmatprep.subr.bf16.mxu0 0
        %807 = vmatpush1.bf16.msra.mxu0 0
        %808 = vmatprep.subr.bf16.mxu0 0
        %809 = vmatpush1.bf16.msra.mxu0 0
        %810 = vmatprep.subr.bf16.mxu0 0
        %811 = vmatpush1.bf16.msra.mxu0 0
        %812 = vmatprep.subr.bf16.mxu0 0
        %813 = vmatpush1.bf16.msra.mxu0 0
        %814 = vmatprep.mubr.bf16.mxu0 0
        %815 = vmatmul.mubr.bf16.gmra.mrb[0].mxu0 %v780
        %v816 = vpop.f32.mrb[0].mxu0
        %v817 = vadd.f32 0.0, %v816
        %v818 = vpop.f32.mrb[0].mxu0
        %v819 = vpop.f32.mrb[0].mxu0
        %v820 = vadd.f32 0.0, %v819
        %v821 = vpop.f32.mrb[0].mxu0
        %822 = vdwg.mxu0
        %v823 = vpack.c.bf16 %v820, %v817
        %v825 = vsel %vm583, %v823, 0
        %827 = vmatprep.subr.bf16.mxu0 0
        %828 = vmatpush1.bf16.msra.mxu0 %v576
        %829 = vmatprep.subr.bf16.mxu0 0
        %830 = vmatpush1.bf16.msra.mxu0 0
        %831 = vmatprep.subr.bf16.mxu0 0
        %832 = vmatpush1.bf16.msra.mxu0 0
        %833 = vmatprep.subr.bf16.mxu0 0
        %834 = vmatpush1.bf16.msra.mxu0 0
        %835 = vmatprep.subr.bf16.mxu0 0
        %836 = vmatpush1.bf16.msra.mxu0 0
        %837 = vmatprep.subr.bf16.mxu0 0
        %838 = vmatpush1.bf16.msra.mxu0 0
        %839 = vmatprep.subr.bf16.mxu0 0
        %840 = vmatpush1.bf16.msra.mxu0 0
        %841 = vmatprep.subr.bf16.mxu0 0
        %842 = vmatpush1.bf16.msra.mxu0 0
        %843 = vmatprep.subr.bf16.mxu0 0
        %844 = vmatpush1.bf16.msra.mxu0 0
        %845 = vmatprep.subr.bf16.mxu0 0
        %846 = vmatpush1.bf16.msra.mxu0 0
        %847 = vmatprep.subr.bf16.mxu0 0
        %848 = vmatpush1.bf16.msra.mxu0 0
        %849 = vmatprep.subr.bf16.mxu0 0
        %850 = vmatpush1.bf16.msra.mxu0 0
        %851 = vmatprep.subr.bf16.mxu0 0
        %852 = vmatpush1.bf16.msra.mxu0 0
        %853 = vmatprep.subr.bf16.mxu0 0
        %854 = vmatpush1.bf16.msra.mxu0 0
        %855 = vmatprep.subr.bf16.mxu0 0
        %856 = vmatpush1.bf16.msra.mxu0 0
        %857 = vmatprep.subr.bf16.mxu0 0
        %858 = vmatpush1.bf16.msra.mxu0 0
        %859 = vmatprep.mubr.bf16.mxu0 0
        %860 = vmatmul.mubr.bf16.gmra.mrb[0].mxu0 %v825
        %v861 = vpop.f32.mrb[0].mxu0
        %v862 = vadd.f32 0.0, %v861
        %v863 = vpop.f32.mrb[0].mxu0
        %v864 = vpop.f32.mrb[0].mxu0
        %v865 = vadd.f32 0.0, %v864
        %v866 = vpop.f32.mrb[0].mxu0
        %867 = vdwg.mxu0
        %v869 = vsel %vm583, %v698, 0
        %871 = vmatprep.subr.bf16.mxu0 0
        %872 = vmatpush1.bf16.msra.mxu0 %v575
        %873 = vmatprep.subr.bf16.mxu0 0
        %874 = vmatpush1.bf16.msra.mxu0 0
        %875 = vmatprep.subr.bf16.mxu0 0
        %876 = vmatpush1.bf16.msra.mxu0 0
        %877 = vmatprep.subr.bf16.mxu0 0
        %878 = vmatpush1.bf16.msra.mxu0 0
        %879 = vmatprep.subr.bf16.mxu0 0
        %880 = vmatpush1.bf16.msra.mxu0 0
        %881 = vmatprep.subr.bf16.mxu0 0
        %882 = vmatpush1.bf16.msra.mxu0 0
        %883 = vmatprep.subr.bf16.mxu0 0
        %884 = vmatpush1.bf16.msra.mxu0 0
        %885 = vmatprep.subr.bf16.mxu0 0
        %886 = vmatpush1.bf16.msra.mxu0 0
        %887 = vmatprep.subr.bf16.mxu0 0
        %888 = vmatpush1.bf16.msra.mxu0 0
        %889 = vmatprep.subr.bf16.mxu0 0
        %890 = vmatpush1.bf16.msra.mxu0 0
        %891 = vmatprep.subr.bf16.mxu0 0
        %892 = vmatpush1.bf16.msra.mxu0 0
        %893 = vmatprep.subr.bf16.mxu0 0
        %894 = vmatpush1.bf16.msra.mxu0 0
        %895 = vmatprep.subr.bf16.mxu0 0
        %896 = vmatpush1.bf16.msra.mxu0 0
        %897 = vmatprep.subr.bf16.mxu0 0
        %898 = vmatpush1.bf16.msra.mxu0 0
        %899 = vmatprep.subr.bf16.mxu0 0
        %900 = vmatpush1.bf16.msra.mxu0 0
        %901 = vmatprep.subr.bf16.mxu0 0
        %902 = vmatpush1.bf16.msra.mxu0 0
        %903 = vmatprep.mubr.bf16.mxu0 0
        %904 = vmatmul.mubr.bf16.gmra.mrb[0].mxu0 %v869
        %v905 = vpop.f32.mrb[0].mxu0
        %v906 = vadd.f32 %v862, %v905
        %v907 = vpop.f32.mrb[0].mxu0
        %v908 = vpop.f32.mrb[0].mxu0
        %v909 = vadd.f32 %v865, %v908
        %v910 = vpop.f32.mrb[0].mxu0
        %911 = vdwg.mxu0
        %912 = vrot.lane.b32.xlu0 %v556, 96
        %v913 = vpop.permute.xlu0 %912
        %914 = vrot.lane.b32.xlu0 %v557, 96
        %v915 = vpop.permute.xlu0 %914
        %v917 = vsel %vm583, %v913, 0
        %v920 = vsel %vm583, %v915, 0
        %922 = vmatprep.subr.bf16.mxu0 0
        %923 = vmatpush1.bf16.xpose.msra.mxu0 %v920
        %924 = vmatprep.subr.bf16.mxu0 0
        %925 = vmatpush1.bf16.xpose.msra.mxu0 0
        %926 = vmatprep.subr.bf16.mxu0 0
        %927 = vmatpush1.bf16.xpose.msra.mxu0 0
        %928 = vmatprep.subr.bf16.mxu0 0
        %929 = vmatpush1.bf16.xpose.msra.mxu0 0
        %930 = vmatprep.subr.bf16.mxu0 0
        %931 = vmatpush1.bf16.xpose.msra.mxu0 0
        %932 = vmatprep.subr.bf16.mxu0 0
        %933 = vmatpush1.bf16.xpose.msra.mxu0 0
        %934 = vmatprep.subr.bf16.mxu0 0
        %935 = vmatpush1.bf16.xpose.msra.mxu0 0
        %936 = vmatprep.subr.bf16.mxu0 0
        %937 = vmatpush1.bf16.xpose.msra.mxu0 0
        %938 = vmatprep.subr.bf16.mxu0 0
        %939 = vmatpush1.bf16.xpose.msra.mxu0 0
        %940 = vmatprep.subr.bf16.mxu0 0
        %941 = vmatpush1.bf16.xpose.msra.mxu0 0
        %942 = vmatprep.subr.bf16.mxu0 0
        %943 = vmatpush1.bf16.xpose.msra.mxu0 0
        %944 = vmatprep.subr.bf16.mxu0 0
        %945 = vmatpush1.bf16.xpose.msra.mxu0 0
        %946 = vmatprep.subr.bf16.mxu0 0
        %947 = vmatpush1.bf16.xpose.msra.mxu0 0
        %948 = vmatprep.subr.bf16.mxu0 0
        %949 = vmatpush1.bf16.xpose.msra.mxu0 0
        %950 = vmatprep.subr.bf16.mxu0 0
        %951 = vmatpush1.bf16.xpose.msra.mxu0 0
        %952 = vmatprep.subr.bf16.mxu0 0
        %953 = vmatpush1.bf16.xpose.msra.mxu0 0
        %954 = vmatprep.mubr.bf16.mxu0 0
        %955 = vmatmul.mubr.bf16.gmra.mrb[0].mxu0 %v917
        %v956 = vpop.f32.mrb[0].mxu0
        %v957 = vadd.f32 0.0, %v956
        %v958 = vpop.f32.mrb[0].mxu0
        %v959 = vpop.f32.mrb[0].mxu0
        %v960 = vadd.f32 0.0, %v959
        %v961 = vpop.f32.mrb[0].mxu0
        %962 = vdwg.mxu0
        %v963 = vsel %vm583, %v957, -inf
        %964 = vmax.xlane.f32.xlu0 %v963
        %v965 = vpop.xlane.xlu0 %964
        %v966 = vsel %vm583, %v960, -inf
        %967 = vmax.xlane.f32.xlu0 %v966
        %v968 = vpop.xlane.xlu0 %967
        %v969 = vsub.f32 %v957, %v965
        %v970 = vsub.f32 %v960, %v968
        %v971 = vmul.f32 %v969, 1.442695
        %v972 = vpow.pop %v971
        %v973 = vmul.f32 %v970, 1.442695
        %v974 = vpow.pop %v973
        %v975 = vsel %vm583, %v972, 0.0
        %976 = vadd.xlane.f32.xlu0 %v975
        %v977 = vpop.xlane.xlu0 %976
        %v978 = vsel %vm583, %v974, 0.0
        %979 = vadd.xlane.f32.xlu0 %v978
        %v980 = vpop.xlane.xlu0 %979
        %v981 = vrcp.pop %v977
        %v982 = vrcp.pop %v980
        %v983 = vmul.f32 %v972, %v981
        %v984 = vmul.f32 %v974, %v982
        %v985 = vpack.c.bf16 %v984, %v983
        %986 = vrot.lane.b32.xlu0 %v558, 96
        %v987 = vpop.permute.xlu0 %986
        %v990 = vsel %vm583, %v985, 0
        %992 = vmatprep.subr.bf16.mxu0 0
        %993 = vmatpush1.bf16.msra.mxu0 %v987
        %994 = vmatprep.subr.bf16.mxu0 0
        %995 = vmatpush1.bf16.msra.mxu0 0
        %996 = vmatprep.subr.bf16.mxu0 0
        %997 = vmatpush1.bf16.msra.mxu0 0
        %998 = vmatprep.subr.bf16.mxu0 0
        %999 = vmatpush1.bf16.msra.mxu0 0
        %1000 = vmatprep.subr.bf16.mxu0 0
        %1001 = vmatpush1.bf16.msra.mxu0 0
        %1002 = vmatprep.subr.bf16.mxu0 0
        %1003 = vmatpush1.bf16.msra.mxu0 0
        %1004 = vmatprep.subr.bf16.mxu0 0
        %1005 = vmatpush1.bf16.msra.mxu0 0
        %1006 = vmatprep.subr.bf16.mxu0 0
        %1007 = vmatpush1.bf16.msra.mxu0 0
        %1008 = vmatprep.subr.bf16.mxu0 0
        %1009 = vmatpush1.bf16.msra.mxu0 0
        %1010 = vmatprep.subr.bf16.mxu0 0
        %1011 = vmatpush1.bf16.msra.mxu0 0
        %1012 = vmatprep.subr.bf16.mxu0 0
        %1013 = vmatpush1.bf16.msra.mxu0 0
        %1014 = vmatprep.subr.bf16.mxu0 0
        %1015 = vmatpush1.bf16.msra.mxu0 0
        %1016 = vmatprep.subr.bf16.mxu0 0
        %1017 = vmatpush1.bf16.msra.mxu0 0
        %1018 = vmatprep.subr.bf16.mxu0 0
        %1019 = vmatpush1.bf16.msra.mxu0 0
        %1020 = vmatprep.subr.bf16.mxu0 0
        %1021 = vmatpush1.bf16.msra.mxu0 0
        %1022 = vmatprep.subr.bf16.mxu0 0
        %1023 = vmatpush1.bf16.msra.mxu0 0
        %1024 = vmatprep.mubr.bf16.mxu0 0
        %1025 = vmatmul.mubr.bf16.gmra.mrb[0].mxu0 %v990
        %v1026 = vpop.f32.mrb[0].mxu0
        %v1027 = vadd.f32 0.0, %v1026
        %v1028 = vpop.f32.mrb[0].mxu0
        %v1029 = vpop.f32.mrb[0].mxu0
        %v1030 = vadd.f32 0.0, %v1029
        %v1031 = vpop.f32.mrb[0].mxu0
        %1032 = vdwg.mxu0
        %v1033 = vpack.c.bf16 %v1030, %v1027
        %v1035 = vsel %vm583, %v1033, 0
        %1037 = vmatprep.subr.bf16.mxu0 0
        %1038 = vmatpush1.bf16.msra.mxu0 %v577
        %1039 = vmatprep.subr.bf16.mxu0 0
        %1040 = vmatpush1.bf16.msra.mxu0 0
        %1041 = vmatprep.subr.bf16.mxu0 0
        %1042 = vmatpush1.bf16.msra.mxu0 0
        %1043 = vmatprep.subr.bf16.mxu0 0
        %1044 = vmatpush1.bf16.msra.mxu0 0
        %1045 = vmatprep.subr.bf16.mxu0 0
        %1046 = vmatpush1.bf16.msra.mxu0 0
        %1047 = vmatprep.subr.bf16.mxu0 0
        %1048 = vmatpush1.bf16.msra.mxu0 0
        %1049 = vmatprep.subr.bf16.mxu0 0
        %1050 = vmatpush1.bf16.msra.mxu0 0
        %1051 = vmatprep.subr.bf16.mxu0 0
        %1052 = vmatpush1.bf16.msra.mxu0 0
        %1053 = vmatprep.subr.bf16.mxu0 0
        %1054 = vmatpush1.bf16.msra.mxu0 0
        %1055 = vmatprep.subr.bf16.mxu0 0
        %1056 = vmatpush1.bf16.msra.mxu0 0
        %1057 = vmatprep.subr.bf16.mxu0 0
        %1058 = vmatpush1.bf16.msra.mxu0 0
        %1059 = vmatprep.subr.bf16.mxu0 0
        %1060 = vmatpush1.bf16.msra.mxu0 0
        %1061 = vmatprep.subr.bf16.mxu0 0
        %1062 = vmatpush1.bf16.msra.mxu0 0
        %1063 = vmatprep.subr.bf16.mxu0 0
        %1064 = vmatpush1.bf16.msra.mxu0 0
        %1065 = vmatprep.subr.bf16.mxu0 0
        %1066 = vmatpush1.bf16.msra.mxu0 0
        %1067 = vmatprep.subr.bf16.mxu0 0
        %1068 = vmatpush1.bf16.msra.mxu0 0
        %1069 = vmatprep.mubr.bf16.mxu0 0
        %1070 = vmatmul.mubr.bf16.gmra.mrb[0].mxu0 %v1035
        %v1071 = vpop.f32.mrb[0].mxu0
        %v1072 = vadd.f32 0.0, %v1071
        %v1073 = vpop.f32.mrb[0].mxu0
        %v1074 = vpop.f32.mrb[0].mxu0
        %v1075 = vadd.f32 0.0, %v1074
        %v1076 = vpop.f32.mrb[0].mxu0
        %1077 = vdwg.mxu0
        %v1078 = vadd.f32 %v906, %v1072
        %v1079 = vadd.f32 %v909, %v1075
        %1080 = vrot.lane.b32.xlu0 %v556, 80
        %v1081 = vpop.permute.xlu0 %1080
        %1082 = vrot.lane.b32.xlu0 %v557, 80
        %v1083 = vpop.permute.xlu0 %1082
        %v1085 = vsel %vm583, %v1081, 0
        %v1088 = vsel %vm583, %v1083, 0
        %1090 = vmatprep.subr.bf16.mxu0 0
        %1091 = vmatpush1.bf16.xpose.msra.mxu0 %v1088
        %1092 = vmatprep.subr.bf16.mxu0 0
        %1093 = vmatpush1.bf16.xpose.msra.mxu0 0
        %1094 = vmatprep.subr.bf16.mxu0 0
        %1095 = vmatpush1.bf16.xpose.msra.mxu0 0
        %1096 = vmatprep.subr.bf16.mxu0 0
        %1097 = vmatpush1.bf16.xpose.msra.mxu0 0
        %1098 = vmatprep.subr.bf16.mxu0 0
        %1099 = vmatpush1.bf16.xpose.msra.mxu0 0
        %1100 = vmatprep.subr.bf16.mxu0 0
        %1101 = vmatpush1.bf16.xpose.msra.mxu0 0
        %1102 = vmatprep.subr.bf16.mxu0 0
        %1103 = vmatpush1.bf16.xpose.msra.mxu0 0
        %1104 = vmatprep.subr.bf16.mxu0 0
        %1105 = vmatpush1.bf16.xpose.msra.mxu0 0
        %1106 = vmatprep.subr.bf16.mxu0 0
        %1107 = vmatpush1.bf16.xpose.msra.mxu0 0
        %1108 = vmatprep.subr.bf16.mxu0 0
        %1109 = vmatpush1.bf16.xpose.msra.mxu0 0
        %1110 = vmatprep.subr.bf16.mxu0 0
        %1111 = vmatpush1.bf16.xpose.msra.mxu0 0
        %1112 = vmatprep.subr.bf16.mxu0 0
        %1113 = vmatpush1.bf16.xpose.msra.mxu0 0
        %1114 = vmatprep.subr.bf16.mxu0 0
        %1115 = vmatpush1.bf16.xpose.msra.mxu0 0
        %1116 = vmatprep.subr.bf16.mxu0 0
        %1117 = vmatpush1.bf16.xpose.msra.mxu0 0
        %1118 = vmatprep.subr.bf16.mxu0 0
        %1119 = vmatpush1.bf16.xpose.msra.mxu0 0
        %1120 = vmatprep.subr.bf16.mxu0 0
        %1121 = vmatpush1.bf16.xpose.msra.mxu0 0
        %1122 = vmatprep.mubr.bf16.mxu0 0
        %1123 = vmatmul.mubr.bf16.gmra.mrb[0].mxu0 %v1085
        %v1124 = vpop.f32.mrb[0].mxu0
        %v1125 = vadd.f32 0.0, %v1124
        %v1126 = vpop.f32.mrb[0].mxu0
        %v1127 = vpop.f32.mrb[0].mxu0
        %v1128 = vadd.f32 0.0, %v1127
        %v1129 = vpop.f32.mrb[0].mxu0
        %1130 = vdwg.mxu0
        %v1131 = vsel %vm583, %v1125, -inf
        %1132 = vmax.xlane.f32.xlu0 %v1131
        %v1133 = vpop.xlane.xlu0 %1132
        %v1134 = vsel %vm583, %v1128, -inf
        %1135 = vmax.xlane.f32.xlu0 %v1134
        %v1136 = vpop.xlane.xlu0 %1135
        %v1137 = vsub.f32 %v1125, %v1133
        %v1138 = vsub.f32 %v1128, %v1136
        %v1139 = vmul.f32 %v1137, 1.442695
        %v1140 = vpow.pop %v1139
        %v1141 = vmul.f32 %v1138, 1.442695
        %v1142 = vpow.pop %v1141
        %v1143 = vsel %vm583, %v1140, 0.0
        %1144 = vadd.xlane.f32.xlu0 %v1143
        %v1145 = vpop.xlane.xlu0 %1144
        %v1146 = vsel %vm583, %v1142, 0.0
        %1147 = vadd.xlane.f32.xlu0 %v1146
        %v1148 = vpop.xlane.xlu0 %1147
        %v1149 = vrcp.pop %v1145
        %v1150 = vrcp.pop %v1148
        %v1151 = vmul.f32 %v1140, %v1149
        %v1152 = vmul.f32 %v1142, %v1150
        %v1153 = vpack.c.bf16 %v1152, %v1151
        %1154 = vrot.lane.b32.xlu0 %v558, 80
        %v1155 = vpop.permute.xlu0 %1154
        %v1158 = vsel %vm583, %v1153, 0
        %1160 = vmatprep.subr.bf16.mxu0 0
        %1161 = vmatpush1.bf16.msra.mxu0 %v1155
        %1162 = vmatprep.subr.bf16.mxu0 0
        %1163 = vmatpush1.bf16.msra.mxu0 0
        %1164 = vmatprep.subr.bf16.mxu0 0
        %1165 = vmatpush1.bf16.msra.mxu0 0
        %1166 = vmatprep.subr.bf16.mxu0 0
        %1167 = vmatpush1.bf16.msra.mxu0 0
        %1168 = vmatprep.subr.bf16.mxu0 0
        %1169 = vmatpush1.bf16.msra.mxu0 0
        %1170 = vmatprep.subr.bf16.mxu0 0
        %1171 = vmatpush1.bf16.msra.mxu0 0
        %1172 = vmatprep.subr.bf16.mxu0 0
        %1173 = vmatpush1.bf16.msra.mxu0 0
        %1174 = vmatprep.subr.bf16.mxu0 0
        %1175 = vmatpush1.bf16.msra.mxu0 0
        %1176 = vmatprep.subr.bf16.mxu0 0
        %1177 = vmatpush1.bf16.msra.mxu0 0
        %1178 = vmatprep.subr.bf16.mxu0 0
        %1179 = vmatpush1.bf16.msra.mxu0 0
        %1180 = vmatprep.subr.bf16.mxu0 0
        %1181 = vmatpush1.bf16.msra.mxu0 0
        %1182 = vmatprep.subr.bf16.mxu0 0
        %1183 = vmatpush1.bf16.msra.mxu0 0
        %1184 = vmatprep.subr.bf16.mxu0 0
        %1185 = vmatpush1.bf16.msra.mxu0 0
        %1186 = vmatprep.subr.bf16.mxu0 0
        %1187 = vmatpush1.bf16.msra.mxu0 0
        %1188 = vmatprep.subr.bf16.mxu0 0
        %1189 = vmatpush1.bf16.msra.mxu0 0
        %1190 = vmatprep.subr.bf16.mxu0 0
        %1191 = vmatpush1.bf16.msra.mxu0 0
        %1192 = vmatprep.mubr.bf16.mxu0 0
        %1193 = vmatmul.mubr.bf16.gmra.mrb[0].mxu0 %v1158
        %v1194 = vpop.f32.mrb[0].mxu0
        %v1195 = vadd.f32 0.0, %v1194
        %v1196 = vpop.f32.mrb[0].mxu0
        %v1197 = vpop.f32.mrb[0].mxu0
        %v1198 = vadd.f32 0.0, %v1197
        %v1199 = vpop.f32.mrb[0].mxu0
        %1200 = vdwg.mxu0
        %v1201 = vpack.c.bf16 %v1198, %v1195
        %v1203 = vsel %vm583, %v1201, 0
        %1205 = vmatprep.subr.bf16.mxu0 0
        %1206 = vmatpush1.bf16.msra.mxu0 %v578
        %1207 = vmatprep.subr.bf16.mxu0 0
        %1208 = vmatpush1.bf16.msra.mxu0 0
        %1209 = vmatprep.subr.bf16.mxu0 0
        %1210 = vmatpush1.bf16.msra.mxu0 0
        %1211 = vmatprep.subr.bf16.mxu0 0
        %1212 = vmatpush1.bf16.msra.mxu0 0
        %1213 = vmatprep.subr.bf16.mxu0 0
        %1214 = vmatpush1.bf16.msra.mxu0 0
        %1215 = vmatprep.subr.bf16.mxu0 0
        %1216 = vmatpush1.bf16.msra.mxu0 0
        %1217 = vmatprep.subr.bf16.mxu0 0
        %1218 = vmatpush1.bf16.msra.mxu0 0
        %1219 = vmatprep.subr.bf16.mxu0 0
        %1220 = vmatpush1.bf16.msra.mxu0 0
        %1221 = vmatprep.subr.bf16.mxu0 0
        %1222 = vmatpush1.bf16.msra.mxu0 0
        %1223 = vmatprep.subr.bf16.mxu0 0
        %1224 = vmatpush1.bf16.msra.mxu0 0
        %1225 = vmatprep.subr.bf16.mxu0 0
        %1226 = vmatpush1.bf16.msra.mxu0 0
        %1227 = vmatprep.subr.bf16.mxu0 0
        %1228 = vmatpush1.bf16.msra.mxu0 0
        %1229 = vmatprep.subr.bf16.mxu0 0
        %1230 = vmatpush1.bf16.msra.mxu0 0
        %1231 = vmatprep.subr.bf16.mxu0 0
        %1232 = vmatpush1.bf16.msra.mxu0 0
        %1233 = vmatprep.subr.bf16.mxu0 0
        %1234 = vmatpush1.bf16.msra.mxu0 0
        %1235 = vmatprep.subr.bf16.mxu0 0
        %1236 = vmatpush1.bf16.msra.mxu0 0
        %1237 = vmatprep.mubr.bf16.mxu0 0
        %1238 = vmatmul.mubr.bf16.gmra.mrb[0].mxu0 %v1203
        %v1239 = vpop.f32.mrb[0].mxu0
        %v1240 = vadd.f32 0.0, %v1239
        %v1241 = vpop.f32.mrb[0].mxu0
        %v1242 = vpop.f32.mrb[0].mxu0
        %v1243 = vadd.f32 0.0, %v1242
        %v1244 = vpop.f32.mrb[0].mxu0
        %1245 = vdwg.mxu0
        %v1246 = vadd.f32 %v1078, %v1240
        %v1247 = vadd.f32 %v1079, %v1243
        %1248 = vrot.lane.b32.xlu0 %v556, 64
        %v1249 = vpop.permute.xlu0 %1248
        %1250 = vrot.lane.b32.xlu0 %v557, 64
        %v1251 = vpop.permute.xlu0 %1250
        %v1253 = vsel %vm583, %v1249, 0
        %v1256 = vsel %vm583, %v1251, 0
        %1258 = vmatprep.subr.bf16.mxu0 0
        %1259 = vmatpush1.bf16.xpose.msra.mxu0 %v1256
        %1260 = vmatprep.subr.bf16.mxu0 0
        %1261 = vmatpush1.bf16.xpose.msra.mxu0 0
        %1262 = vmatprep.subr.bf16.mxu0 0
        %1263 = vmatpush1.bf16.xpose.msra.mxu0 0
        %1264 = vmatprep.subr.bf16.mxu0 0
        %1265 = vmatpush1.bf16.xpose.msra.mxu0 0
        %1266 = vmatprep.subr.bf16.mxu0 0
        %1267 = vmatpush1.bf16.xpose.msra.mxu0 0
        %1268 = vmatprep.subr.bf16.mxu0 0
        %1269 = vmatpush1.bf16.xpose.msra.mxu0 0
        %1270 = vmatprep.subr.bf16.mxu0 0
        %1271 = vmatpush1.bf16.xpose.msra.mxu0 0
        %1272 = vmatprep.subr.bf16.mxu0 0
        %1273 = vmatpush1.bf16.xpose.msra.mxu0 0
        %1274 = vmatprep.subr.bf16.mxu0 0
        %1275 = vmatpush1.bf16.xpose.msra.mxu0 0
        %1276 = vmatprep.subr.bf16.mxu0 0
        %1277 = vmatpush1.bf16.xpose.msra.mxu0 0
        %1278 = vmatprep.subr.bf16.mxu0 0
        %1279 = vmatpush1.bf16.xpose.msra.mxu0 0
        %1280 = vmatprep.subr.bf16.mxu0 0
        %1281 = vmatpush1.bf16.xpose.msra.mxu0 0
        %1282 = vmatprep.subr.bf16.mxu0 0
        %1283 = vmatpush1.bf16.xpose.msra.mxu0 0
        %1284 = vmatprep.subr.bf16.mxu0 0
        %1285 = vmatpush1.bf16.xpose.msra.mxu0 0
        %1286 = vmatprep.subr.bf16.mxu0 0
        %1287 = vmatpush1.bf16.xpose.msra.mxu0 0
        %1288 = vmatprep.subr.bf16.mxu0 0
        %1289 = vmatpush1.bf16.xpose.msra.mxu0 0
        %1290 = vmatprep.mubr.bf16.mxu0 0
        %1291 = vmatmul.mubr.bf16.gmra.mrb[0].mxu0 %v1253
        %v1292 = vpop.f32.mrb[0].mxu0
        %v1293 = vadd.f32 0.0, %v1292
        %v1294 = vpop.f32.mrb[0].mxu0
        %v1295 = vpop.f32.mrb[0].mxu0
        %v1296 = vadd.f32 0.0, %v1295
        %v1297 = vpop.f32.mrb[0].mxu0
        %1298 = vdwg.mxu0
        %v1299 = vsel %vm583, %v1293, -inf
        %1300 = vmax.xlane.f32.xlu0 %v1299
        %v1301 = vpop.xlane.xlu0 %1300
        %v1302 = vsel %vm583, %v1296, -inf
        %1303 = vmax.xlane.f32.xlu0 %v1302
        %v1304 = vpop.xlane.xlu0 %1303
        %v1305 = vsub.f32 %v1293, %v1301
        %v1306 = vsub.f32 %v1296, %v1304
        %v1307 = vmul.f32 %v1305, 1.442695
        %v1308 = vpow.pop %v1307
        %v1309 = vmul.f32 %v1306, 1.442695
        %v1310 = vpow.pop %v1309
        %v1311 = vsel %vm583, %v1308, 0.0
        %1312 = vadd.xlane.f32.xlu0 %v1311
        %v1313 = vpop.xlane.xlu0 %1312
        %v1314 = vsel %vm583, %v1310, 0.0
        %1315 = vadd.xlane.f32.xlu0 %v1314
        %v1316 = vpop.xlane.xlu0 %1315
        %v1317 = vrcp.pop %v1313
        %v1318 = vrcp.pop %v1316
        %v1319 = vmul.f32 %v1308, %v1317
        %v1320 = vmul.f32 %v1310, %v1318
        %v1321 = vpack.c.bf16 %v1320, %v1319
        %1322 = vrot.lane.b32.xlu0 %v558, 64
        %v1323 = vpop.permute.xlu0 %1322
        %v1326 = vsel %vm583, %v1321, 0
        %1328 = vmatprep.subr.bf16.mxu0 0
        %1329 = vmatpush1.bf16.msra.mxu0 %v1323
        %1330 = vmatprep.subr.bf16.mxu0 0
        %1331 = vmatpush1.bf16.msra.mxu0 0
        %1332 = vmatprep.subr.bf16.mxu0 0
        %1333 = vmatpush1.bf16.msra.mxu0 0
        %1334 = vmatprep.subr.bf16.mxu0 0
        %1335 = vmatpush1.bf16.msra.mxu0 0
        %1336 = vmatprep.subr.bf16.mxu0 0
        %1337 = vmatpush1.bf16.msra.mxu0 0
        %1338 = vmatprep.subr.bf16.mxu0 0
        %1339 = vmatpush1.bf16.msra.mxu0 0
        %1340 = vmatprep.subr.bf16.mxu0 0
        %1341 = vmatpush1.bf16.msra.mxu0 0
        %1342 = vmatprep.subr.bf16.mxu0 0
        %1343 = vmatpush1.bf16.msra.mxu0 0
        %1344 = vmatprep.subr.bf16.mxu0 0
        %1345 = vmatpush1.bf16.msra.mxu0 0
        %1346 = vmatprep.subr.bf16.mxu0 0
        %1347 = vmatpush1.bf16.msra.mxu0 0
        %1348 = vmatprep.subr.bf16.mxu0 0
        %1349 = vmatpush1.bf16.msra.mxu0 0
        %1350 = vmatprep.subr.bf16.mxu0 0
        %1351 = vmatpush1.bf16.msra.mxu0 0
        %1352 = vmatprep.subr.bf16.mxu0 0
        %1353 = vmatpush1.bf16.msra.mxu0 0
        %1354 = vmatprep.subr.bf16.mxu0 0
        %1355 = vmatpush1.bf16.msra.mxu0 0
        %1356 = vmatprep.subr.bf16.mxu0 0
        %1357 = vmatpush1.bf16.msra.mxu0 0
        %1358 = vmatprep.subr.bf16.mxu0 0
        %1359 = vmatpush1.bf16.msra.mxu0 0
        %1360 = vmatprep.mubr.bf16.mxu0 0
        %1361 = vmatmul.mubr.bf16.gmra.mrb[0].mxu0 %v1326
        %v1362 = vpop.f32.mrb[0].mxu0
        %v1363 = vadd.f32 0.0, %v1362
        %v1364 = vpop.f32.mrb[0].mxu0
        %v1365 = vpop.f32.mrb[0].mxu0
        %v1366 = vadd.f32 0.0, %v1365
        %v1367 = vpop.f32.mrb[0].mxu0
        %1368 = vdwg.mxu0
        %v1369 = vpack.c.bf16 %v1366, %v1363
        %v1371 = vsel %vm583, %v1369, 0
        %1373 = vmatprep.subr.bf16.mxu0 0
        %1374 = vmatpush1.bf16.msra.mxu0 %v579
        %1375 = vmatprep.subr.bf16.mxu0 0
        %1376 = vmatpush1.bf16.msra.mxu0 0
        %1377 = vmatprep.subr.bf16.mxu0 0
        %1378 = vmatpush1.bf16.msra.mxu0 0
        %1379 = vmatprep.subr.bf16.mxu0 0
        %1380 = vmatpush1.bf16.msra.mxu0 0
        %1381 = vmatprep.subr.bf16.mxu0 0
        %1382 = vmatpush1.bf16.msra.mxu0 0
        %1383 = vmatprep.subr.bf16.mxu0 0
        %1384 = vmatpush1.bf16.msra.mxu0 0
        %1385 = vmatprep.subr.bf16.mxu0 0
        %1386 = vmatpush1.bf16.msra.mxu0 0
        %1387 = vmatprep.subr.bf16.mxu0 0
        %1388 = vmatpush1.bf16.msra.mxu0 0
        %1389 = vmatprep.subr.bf16.mxu0 0
        %1390 = vmatpush1.bf16.msra.mxu0 0
        %1391 = vmatprep.subr.bf16.mxu0 0
        %1392 = vmatpush1.bf16.msra.mxu0 0
        %1393 = vmatprep.subr.bf16.mxu0 0
        %1394 = vmatpush1.bf16.msra.mxu0 0
        %1395 = vmatprep.subr.bf16.mxu0 0
        %1396 = vmatpush1.bf16.msra.mxu0 0
        %1397 = vmatprep.subr.bf16.mxu0 0
        %1398 = vmatpush1.bf16.msra.mxu0 0
        %1399 = vmatprep.subr.bf16.mxu0 0
        %1400 = vmatpush1.bf16.msra.mxu0 0
        %1401 = vmatprep.subr.bf16.mxu0 0
        %1402 = vmatpush1.bf16.msra.mxu0 0
        %1403 = vmatprep.subr.bf16.mxu0 0
        %1404 = vmatpush1.bf16.msra.mxu0 0
        %1405 = vmatprep.mubr.bf16.mxu0 0
        %1406 = vmatmul.mubr.bf16.gmra.mrb[0].mxu0 %v1371
        %v1407 = vpop.f32.mrb[0].mxu0
        %v1408 = vadd.f32 0.0, %v1407
        %v1409 = vpop.f32.mrb[0].mxu0
        %v1410 = vpop.f32.mrb[0].mxu0
        %v1411 = vadd.f32 0.0, %v1410
        %v1412 = vpop.f32.mrb[0].mxu0
        %1413 = vdwg.mxu0
        %v1414 = vadd.f32 %v1246, %v1408
        %v1415 = vadd.f32 %v1247, %v1411
        %1416 = vrot.lane.b32.xlu0 %v556, 48
        %v1417 = vpop.permute.xlu0 %1416
        %1418 = vrot.lane.b32.xlu0 %v557, 48
        %v1419 = vpop.permute.xlu0 %1418
        %v1421 = vsel %vm583, %v1417, 0
        %v1424 = vsel %vm583, %v1419, 0
        %1426 = vmatprep.subr.bf16.mxu0 0
        %1427 = vmatpush1.bf16.xpose.msra.mxu0 %v1424
        %1428 = vmatprep.subr.bf16.mxu0 0
        %1429 = vmatpush1.bf16.xpose.msra.mxu0 0
        %1430 = vmatprep.subr.bf16.mxu0 0
        %1431 = vmatpush1.bf16.xpose.msra.mxu0 0
        %1432 = vmatprep.subr.bf16.mxu0 0
        %1433 = vmatpush1.bf16.xpose.msra.mxu0 0
        %1434 = vmatprep.subr.bf16.mxu0 0
        %1435 = vmatpush1.bf16.xpose.msra.mxu0 0
        %1436 = vmatprep.subr.bf16.mxu0 0
        %1437 = vmatpush1.bf16.xpose.msra.mxu0 0
        %1438 = vmatprep.subr.bf16.mxu0 0
        %1439 = vmatpush1.bf16.xpose.msra.mxu0 0
        %1440 = vmatprep.subr.bf16.mxu0 0
        %1441 = vmatpush1.bf16.xpose.msra.mxu0 0
        %1442 = vmatprep.subr.bf16.mxu0 0
        %1443 = vmatpush1.bf16.xpose.msra.mxu0 0
        %1444 = vmatprep.subr.bf16.mxu0 0
        %1445 = vmatpush1.bf16.xpose.msra.mxu0 0
        %1446 = vmatprep.subr.bf16.mxu0 0
        %1447 = vmatpush1.bf16.xpose.msra.mxu0 0
        %1448 = vmatprep.subr.bf16.mxu0 0
        %1449 = vmatpush1.bf16.xpose.msra.mxu0 0
        %1450 = vmatprep.subr.bf16.mxu0 0
        %1451 = vmatpush1.bf16.xpose.msra.mxu0 0
        %1452 = vmatprep.subr.bf16.mxu0 0
        %1453 = vmatpush1.bf16.xpose.msra.mxu0 0
        %1454 = vmatprep.subr.bf16.mxu0 0
        %1455 = vmatpush1.bf16.xpose.msra.mxu0 0
        %1456 = vmatprep.subr.bf16.mxu0 0
        %1457 = vmatpush1.bf16.xpose.msra.mxu0 0
        %1458 = vmatprep.mubr.bf16.mxu0 0
        %1459 = vmatmul.mubr.bf16.gmra.mrb[0].mxu0 %v1421
        %v1460 = vpop.f32.mrb[0].mxu0
        %v1461 = vadd.f32 0.0, %v1460
        %v1462 = vpop.f32.mrb[0].mxu0
        %v1463 = vpop.f32.mrb[0].mxu0
        %v1464 = vadd.f32 0.0, %v1463
        %v1465 = vpop.f32.mrb[0].mxu0
        %1466 = vdwg.mxu0
        %v1467 = vsel %vm583, %v1461, -inf
        %1468 = vmax.xlane.f32.xlu0 %v1467
        %v1469 = vpop.xlane.xlu0 %1468
        %v1470 = vsel %vm583, %v1464, -inf
        %1471 = vmax.xlane.f32.xlu0 %v1470
        %v1472 = vpop.xlane.xlu0 %1471
        %v1473 = vsub.f32 %v1461, %v1469
        %v1474 = vsub.f32 %v1464, %v1472
        %v1475 = vmul.f32 %v1473, 1.442695
        %v1476 = vpow.pop %v1475
        %v1477 = vmul.f32 %v1474, 1.442695
        %v1478 = vpow.pop %v1477
        %v1479 = vsel %vm583, %v1476, 0.0
        %1480 = vadd.xlane.f32.xlu0 %v1479
        %v1481 = vpop.xlane.xlu0 %1480
        %v1482 = vsel %vm583, %v1478, 0.0
        %1483 = vadd.xlane.f32.xlu0 %v1482
        %v1484 = vpop.xlane.xlu0 %1483
        %v1485 = vrcp.pop %v1481
        %v1486 = vrcp.pop %v1484
        %v1487 = vmul.f32 %v1476, %v1485
        %v1488 = vmul.f32 %v1478, %v1486
        %v1489 = vpack.c.bf16 %v1488, %v1487
        %1490 = vrot.lane.b32.xlu0 %v558, 48
        %v1491 = vpop.permute.xlu0 %1490
        %v1494 = vsel %vm583, %v1489, 0
        %1496 = vmatprep.subr.bf16.mxu0 0
        %1497 = vmatpush1.bf16.msra.mxu0 %v1491
        %1498 = vmatprep.subr.bf16.mxu0 0
        %1499 = vmatpush1.bf16.msra.mxu0 0
        %1500 = vmatprep.subr.bf16.mxu0 0
        %1501 = vmatpush1.bf16.msra.mxu0 0
        %1502 = vmatprep.subr.bf16.mxu0 0
        %1503 = vmatpush1.bf16.msra.mxu0 0
        %1504 = vmatprep.subr.bf16.mxu0 0
        %1505 = vmatpush1.bf16.msra.mxu0 0
        %1506 = vmatprep.subr.bf16.mxu0 0
        %1507 = vmatpush1.bf16.msra.mxu0 0
        %1508 = vmatprep.subr.bf16.mxu0 0
        %1509 = vmatpush1.bf16.msra.mxu0 0
        %1510 = vmatprep.subr.bf16.mxu0 0
        %1511 = vmatpush1.bf16.msra.mxu0 0
        %1512 = vmatprep.subr.bf16.mxu0 0
        %1513 = vmatpush1.bf16.msra.mxu0 0
        %1514 = vmatprep.subr.bf16.mxu0 0
        %1515 = vmatpush1.bf16.msra.mxu0 0
        %1516 = vmatprep.subr.bf16.mxu0 0
        %1517 = vmatpush1.bf16.msra.mxu0 0
        %1518 = vmatprep.subr.bf16.mxu0 0
        %1519 = vmatpush1.bf16.msra.mxu0 0
        %1520 = vmatprep.subr.bf16.mxu0 0
        %1521 = vmatpush1.bf16.msra.mxu0 0
        %1522 = vmatprep.subr.bf16.mxu0 0
        %1523 = vmatpush1.bf16.msra.mxu0 0
        %1524 = vmatprep.subr.bf16.mxu0 0
        %1525 = vmatpush1.bf16.msra.mxu0 0
        %1526 = vmatprep.subr.bf16.mxu0 0
        %1527 = vmatpush1.bf16.msra.mxu0 0
        %1528 = vmatprep.mubr.bf16.mxu0 0
        %1529 = vmatmul.mubr.bf16.gmra.mrb[0].mxu0 %v1494
        %v1530 = vpop.f32.mrb[0].mxu0
        %v1531 = vadd.f32 0.0, %v1530
        %v1532 = vpop.f32.mrb[0].mxu0
        %v1533 = vpop.f32.mrb[0].mxu0
        %v1534 = vadd.f32 0.0, %v1533
        %v1535 = vpop.f32.mrb[0].mxu0
        %1536 = vdwg.mxu0
        %v1537 = vpack.c.bf16 %v1534, %v1531
        %v1539 = vsel %vm583, %v1537, 0
        %1541 = vmatprep.subr.bf16.mxu0 0
        %1542 = vmatpush1.bf16.msra.mxu0 %v580
        %1543 = vmatprep.subr.bf16.mxu0 0
        %1544 = vmatpush1.bf16.msra.mxu0 0
        %1545 = vmatprep.subr.bf16.mxu0 0
        %1546 = vmatpush1.bf16.msra.mxu0 0
        %1547 = vmatprep.subr.bf16.mxu0 0
        %1548 = vmatpush1.bf16.msra.mxu0 0
        %1549 = vmatprep.subr.bf16.mxu0 0
        %1550 = vmatpush1.bf16.msra.mxu0 0
        %1551 = vmatprep.subr.bf16.mxu0 0
        %1552 = vmatpush1.bf16.msra.mxu0 0
        %1553 = vmatprep.subr.bf16.mxu0 0
        %1554 = vmatpush1.bf16.msra.mxu0 0
        %1555 = vmatprep.subr.bf16.mxu0 0
        %1556 = vmatpush1.bf16.msra.mxu0 0
        %1557 = vmatprep.subr.bf16.mxu0 0
        %1558 = vmatpush1.bf16.msra.mxu0 0
        %1559 = vmatprep.subr.bf16.mxu0 0
        %1560 = vmatpush1.bf16.msra.mxu0 0
        %1561 = vmatprep.subr.bf16.mxu0 0
        %1562 = vmatpush1.bf16.msra.mxu0 0
        %1563 = vmatprep.subr.bf16.mxu0 0
        %1564 = vmatpush1.bf16.msra.mxu0 0
        %1565 = vmatprep.subr.bf16.mxu0 0
        %1566 = vmatpush1.bf16.msra.mxu0 0
        %1567 = vmatprep.subr.bf16.mxu0 0
        %1568 = vmatpush1.bf16.msra.mxu0 0
        %1569 = vmatprep.subr.bf16.mxu0 0
        %1570 = vmatpush1.bf16.msra.mxu0 0
        %1571 = vmatprep.subr.bf16.mxu0 0
        %1572 = vmatpush1.bf16.msra.mxu0 0
        %1573 = vmatprep.mubr.bf16.mxu0 0
        %1574 = vmatmul.mubr.bf16.gmra.mrb[0].mxu0 %v1539
        %v1575 = vpop.f32.mrb[0].mxu0
        %v1576 = vadd.f32 0.0, %v1575
        %v1577 = vpop.f32.mrb[0].mxu0
        %v1578 = vpop.f32.mrb[0].mxu0
        %v1579 = vadd.f32 0.0, %v1578
        %v1580 = vpop.f32.mrb[0].mxu0
        %1581 = vdwg.mxu0
        %v1582 = vadd.f32 %v1414, %v1576
        %v1583 = vadd.f32 %v1415, %v1579
        %1584 = vrot.lane.b32.xlu0 %v556, 32
        %v1585 = vpop.permute.xlu0 %1584
        %1586 = vrot.lane.b32.xlu0 %v557, 32
        %v1587 = vpop.permute.xlu0 %1586
        %v1589 = vsel %vm583, %v1585, 0
        %v1592 = vsel %vm583, %v1587, 0
        %1594 = vmatprep.subr.bf16.mxu0 0
        %1595 = vmatpush1.bf16.xpose.msra.mxu0 %v1592
        %1596 = vmatprep.subr.bf16.mxu0 0
        %1597 = vmatpush1.bf16.xpose.msra.mxu0 0
        %1598 = vmatprep.subr.bf16.mxu0 0
        %1599 = vmatpush1.bf16.xpose.msra.mxu0 0
        %1600 = vmatprep.subr.bf16.mxu0 0
        %1601 = vmatpush1.bf16.xpose.msra.mxu0 0
        %1602 = vmatprep.subr.bf16.mxu0 0
        %1603 = vmatpush1.bf16.xpose.msra.mxu0 0
        %1604 = vmatprep.subr.bf16.mxu0 0
        %1605 = vmatpush1.bf16.xpose.msra.mxu0 0
        %1606 = vmatprep.subr.bf16.mxu0 0
        %1607 = vmatpush1.bf16.xpose.msra.mxu0 0
        %1608 = vmatprep.subr.bf16.mxu0 0
        %1609 = vmatpush1.bf16.xpose.msra.mxu0 0
        %1610 = vmatprep.subr.bf16.mxu0 0
        %1611 = vmatpush1.bf16.xpose.msra.mxu0 0
        %1612 = vmatprep.subr.bf16.mxu0 0
        %1613 = vmatpush1.bf16.xpose.msra.mxu0 0
        %1614 = vmatprep.subr.bf16.mxu0 0
        %1615 = vmatpush1.bf16.xpose.msra.mxu0 0
        %1616 = vmatprep.subr.bf16.mxu0 0
        %1617 = vmatpush1.bf16.xpose.msra.mxu0 0
        %1618 = vmatprep.subr.bf16.mxu0 0
        %1619 = vmatpush1.bf16.xpose.msra.mxu0 0
        %1620 = vmatprep.subr.bf16.mxu0 0
        %1621 = vmatpush1.bf16.xpose.msra.mxu0 0
        %1622 = vmatprep.subr.bf16.mxu0 0
        %1623 = vmatpush1.bf16.xpose.msra.mxu0 0
        %1624 = vmatprep.subr.bf16.mxu0 0
        %1625 = vmatpush1.bf16.xpose.msra.mxu0 0
        %1626 = vmatprep.mubr.bf16.mxu0 0
        %1627 = vmatmul.mubr.bf16.gmra.mrb[0].mxu0 %v1589
        %v1628 = vpop.f32.mrb[0].mxu0
        %v1629 = vadd.f32 0.0, %v1628
        %v1630 = vpop.f32.mrb[0].mxu0
        %v1631 = vpop.f32.mrb[0].mxu0
        %v1632 = vadd.f32 0.0, %v1631
        %v1633 = vpop.f32.mrb[0].mxu0
        %1634 = vdwg.mxu0
        %v1635 = vsel %vm583, %v1629, -inf
        %1636 = vmax.xlane.f32.xlu0 %v1635
        %v1637 = vpop.xlane.xlu0 %1636
        %v1638 = vsel %vm583, %v1632, -inf
        %1639 = vmax.xlane.f32.xlu0 %v1638
        %v1640 = vpop.xlane.xlu0 %1639
        %v1641 = vsub.f32 %v1629, %v1637
        %v1642 = vsub.f32 %v1632, %v1640
        %v1643 = vmul.f32 %v1641, 1.442695
        %v1644 = vpow.pop %v1643
        %v1645 = vmul.f32 %v1642, 1.442695
        %v1646 = vpow.pop %v1645
        %v1647 = vsel %vm583, %v1644, 0.0
        %1648 = vadd.xlane.f32.xlu0 %v1647
        %v1649 = vpop.xlane.xlu0 %1648
        %v1650 = vsel %vm583, %v1646, 0.0
        %1651 = vadd.xlane.f32.xlu0 %v1650
        %v1652 = vpop.xlane.xlu0 %1651
        %v1653 = vrcp.pop %v1649
        %v1654 = vrcp.pop %v1652
        %v1655 = vmul.f32 %v1644, %v1653
        %v1656 = vmul.f32 %v1646, %v1654
        %v1657 = vpack.c.bf16 %v1656, %v1655
        %1658 = vrot.lane.b32.xlu0 %v558, 32
        %v1659 = vpop.permute.xlu0 %1658
        %v1662 = vsel %vm583, %v1657, 0
        %1664 = vmatprep.subr.bf16.mxu0 0
        %1665 = vmatpush1.bf16.msra.mxu0 %v1659
        %1666 = vmatprep.subr.bf16.mxu0 0
        %1667 = vmatpush1.bf16.msra.mxu0 0
        %1668 = vmatprep.subr.bf16.mxu0 0
        %1669 = vmatpush1.bf16.msra.mxu0 0
        %1670 = vmatprep.subr.bf16.mxu0 0
        %1671 = vmatpush1.bf16.msra.mxu0 0
        %1672 = vmatprep.subr.bf16.mxu0 0
        %1673 = vmatpush1.bf16.msra.mxu0 0
        %1674 = vmatprep.subr.bf16.mxu0 0
        %1675 = vmatpush1.bf16.msra.mxu0 0
        %1676 = vmatprep.subr.bf16.mxu0 0
        %1677 = vmatpush1.bf16.msra.mxu0 0
        %1678 = vmatprep.subr.bf16.mxu0 0
        %1679 = vmatpush1.bf16.msra.mxu0 0
        %1680 = vmatprep.subr.bf16.mxu0 0
        %1681 = vmatpush1.bf16.msra.mxu0 0
        %1682 = vmatprep.subr.bf16.mxu0 0
        %1683 = vmatpush1.bf16.msra.mxu0 0
        %1684 = vmatprep.subr.bf16.mxu0 0
        %1685 = vmatpush1.bf16.msra.mxu0 0
        %1686 = vmatprep.subr.bf16.mxu0 0
        %1687 = vmatpush1.bf16.msra.mxu0 0
        %1688 = vmatprep.subr.bf16.mxu0 0
        %1689 = vmatpush1.bf16.msra.mxu0 0
        %1690 = vmatprep.subr.bf16.mxu0 0
        %1691 = vmatpush1.bf16.msra.mxu0 0
        %1692 = vmatprep.subr.bf16.mxu0 0
        %1693 = vmatpush1.bf16.msra.mxu0 0
        %1694 = vmatprep.subr.bf16.mxu0 0
        %1695 = vmatpush1.bf16.msra.mxu0 0
        %1696 = vmatprep.mubr.bf16.mxu0 0
        %1697 = vmatmul.mubr.bf16.gmra.mrb[0].mxu0 %v1662
        %v1698 = vpop.f32.mrb[0].mxu0
        %v1699 = vadd.f32 0.0, %v1698
        %v1700 = vpop.f32.mrb[0].mxu0
        %v1701 = vpop.f32.mrb[0].mxu0
        %v1702 = vadd.f32 0.0, %v1701
        %v1703 = vpop.f32.mrb[0].mxu0
        %1704 = vdwg.mxu0
        %v1705 = vpack.c.bf16 %v1702, %v1699
        %v1707 = vsel %vm583, %v1705, 0
        %1709 = vmatprep.subr.bf16.mxu0 0
        %1710 = vmatpush1.bf16.msra.mxu0 %v581
        %1711 = vmatprep.subr.bf16.mxu0 0
        %1712 = vmatpush1.bf16.msra.mxu0 0
        %1713 = vmatprep.subr.bf16.mxu0 0
        %1714 = vmatpush1.bf16.msra.mxu0 0
        %1715 = vmatprep.subr.bf16.mxu0 0
        %1716 = vmatpush1.bf16.msra.mxu0 0
        %1717 = vmatprep.subr.bf16.mxu0 0
        %1718 = vmatpush1.bf16.msra.mxu0 0
        %1719 = vmatprep.subr.bf16.mxu0 0
        %1720 = vmatpush1.bf16.msra.mxu0 0
        %1721 = vmatprep.subr.bf16.mxu0 0
        %1722 = vmatpush1.bf16.msra.mxu0 0
        %1723 = vmatprep.subr.bf16.mxu0 0
        %1724 = vmatpush1.bf16.msra.mxu0 0
        %1725 = vmatprep.subr.bf16.mxu0 0
        %1726 = vmatpush1.bf16.msra.mxu0 0
        %1727 = vmatprep.subr.bf16.mxu0 0
        %1728 = vmatpush1.bf16.msra.mxu0 0
        %1729 = vmatprep.subr.bf16.mxu0 0
        %1730 = vmatpush1.bf16.msra.mxu0 0
        %1731 = vmatprep.subr.bf16.mxu0 0
        %1732 = vmatpush1.bf16.msra.mxu0 0
        %1733 = vmatprep.subr.bf16.mxu0 0
        %1734 = vmatpush1.bf16.msra.mxu0 0
        %1735 = vmatprep.subr.bf16.mxu0 0
        %1736 = vmatpush1.bf16.msra.mxu0 0
        %1737 = vmatprep.subr.bf16.mxu0 0
        %1738 = vmatpush1.bf16.msra.mxu0 0
        %1739 = vmatprep.subr.bf16.mxu0 0
        %1740 = vmatpush1.bf16.msra.mxu0 0
        %1741 = vmatprep.mubr.bf16.mxu0 0
        %1742 = vmatmul.mubr.bf16.gmra.mrb[0].mxu0 %v1707
        %v1743 = vpop.f32.mrb[0].mxu0
        %v1744 = vadd.f32 0.0, %v1743
        %v1745 = vpop.f32.mrb[0].mxu0
        %v1746 = vpop.f32.mrb[0].mxu0
        %v1747 = vadd.f32 0.0, %v1746
        %v1748 = vpop.f32.mrb[0].mxu0
        %1749 = vdwg.mxu0
        %v1750 = vadd.f32 %v1582, %v1744
        %v1751 = vadd.f32 %v1583, %v1747
        %1752 = vrot.lane.b32.xlu0 %v556, 16
        %v1753 = vpop.permute.xlu0 %1752
        %1754 = vrot.lane.b32.xlu0 %v557, 16
        %v1755 = vpop.permute.xlu0 %1754
        %v1757 = vsel %vm583, %v1753, 0
        %v1760 = vsel %vm583, %v1755, 0
        %1762 = vmatprep.subr.bf16.mxu0 0
        %1763 = vmatpush1.bf16.xpose.msra.mxu0 %v1760
        %1764 = vmatprep.subr.bf16.mxu0 0
        %1765 = vmatpush1.bf16.xpose.msra.mxu0 0
        %1766 = vmatprep.subr.bf16.mxu0 0
        %1767 = vmatpush1.bf16.xpose.msra.mxu0 0
        %1768 = vmatprep.subr.bf16.mxu0 0
        %1769 = vmatpush1.bf16.xpose.msra.mxu0 0
        %1770 = vmatprep.subr.bf16.mxu0 0
        %1771 = vmatpush1.bf16.xpose.msra.mxu0 0
        %1772 = vmatprep.subr.bf16.mxu0 0
        %1773 = vmatpush1.bf16.xpose.msra.mxu0 0
        %1774 = vmatprep.subr.bf16.mxu0 0
        %1775 = vmatpush1.bf16.xpose.msra.mxu0 0
        %1776 = vmatprep.subr.bf16.mxu0 0
        %1777 = vmatpush1.bf16.xpose.msra.mxu0 0
        %1778 = vmatprep.subr.bf16.mxu0 0
        %1779 = vmatpush1.bf16.xpose.msra.mxu0 0
        %1780 = vmatprep.subr.bf16.mxu0 0
        %1781 = vmatpush1.bf16.xpose.msra.mxu0 0
        %1782 = vmatprep.subr.bf16.mxu0 0
        %1783 = vmatpush1.bf16.xpose.msra.mxu0 0
        %1784 = vmatprep.subr.bf16.mxu0 0
        %1785 = vmatpush1.bf16.xpose.msra.mxu0 0
        %1786 = vmatprep.subr.bf16.mxu0 0
        %1787 = vmatpush1.bf16.xpose.msra.mxu0 0
        %1788 = vmatprep.subr.bf16.mxu0 0
        %1789 = vmatpush1.bf16.xpose.msra.mxu0 0
        %1790 = vmatprep.subr.bf16.mxu0 0
        %1791 = vmatpush1.bf16.xpose.msra.mxu0 0
        %1792 = vmatprep.subr.bf16.mxu0 0
        %1793 = vmatpush1.bf16.xpose.msra.mxu0 0
        %1794 = vmatprep.mubr.bf16.mxu0 0
        %1795 = vmatmul.mubr.bf16.gmra.mrb[0].mxu0 %v1757
        %v1796 = vpop.f32.mrb[0].mxu0
        %v1797 = vadd.f32 0.0, %v1796
        %v1798 = vpop.f32.mrb[0].mxu0
        %v1799 = vpop.f32.mrb[0].mxu0
        %v1800 = vadd.f32 0.0, %v1799
        %v1801 = vpop.f32.mrb[0].mxu0
        %1802 = vdwg.mxu0
        %v1803 = vsel %vm583, %v1797, -inf
        %1804 = vmax.xlane.f32.xlu0 %v1803
        %v1805 = vpop.xlane.xlu0 %1804
        %v1806 = vsel %vm583, %v1800, -inf
        %1807 = vmax.xlane.f32.xlu0 %v1806
        %v1808 = vpop.xlane.xlu0 %1807
        %v1809 = vsub.f32 %v1797, %v1805
        %v1810 = vsub.f32 %v1800, %v1808
        %v1811 = vmul.f32 %v1809, 1.442695
        %v1812 = vpow.pop %v1811
        %v1813 = vmul.f32 %v1810, 1.442695
        %v1814 = vpow.pop %v1813
        %v1815 = vsel %vm583, %v1812, 0.0
        %1816 = vadd.xlane.f32.xlu0 %v1815
        %v1817 = vpop.xlane.xlu0 %1816
        %v1818 = vsel %vm583, %v1814, 0.0
        %1819 = vadd.xlane.f32.xlu0 %v1818
        %v1820 = vpop.xlane.xlu0 %1819
        %v1821 = vrcp.pop %v1817
        %v1822 = vrcp.pop %v1820
        %v1823 = vmul.f32 %v1812, %v1821
        %v1824 = vmul.f32 %v1814, %v1822
        %v1825 = vpack.c.bf16 %v1824, %v1823
        %1826 = vrot.lane.b32.xlu0 %v558, 16
        %v1827 = vpop.permute.xlu0 %1826
        %v1830 = vsel %vm583, %v1825, 0
        %1832 = vmatprep.subr.bf16.mxu0 0
        %1833 = vmatpush1.bf16.msra.mxu0 %v1827
        %1834 = vmatprep.subr.bf16.mxu0 0
        %1835 = vmatpush1.bf16.msra.mxu0 0
        %1836 = vmatprep.subr.bf16.mxu0 0
        %1837 = vmatpush1.bf16.msra.mxu0 0
        %1838 = vmatprep.subr.bf16.mxu0 0
        %1839 = vmatpush1.bf16.msra.mxu0 0
        %1840 = vmatprep.subr.bf16.mxu0 0
        %1841 = vmatpush1.bf16.msra.mxu0 0
        %1842 = vmatprep.subr.bf16.mxu0 0
        %1843 = vmatpush1.bf16.msra.mxu0 0
        %1844 = vmatprep.subr.bf16.mxu0 0
        %1845 = vmatpush1.bf16.msra.mxu0 0
        %1846 = vmatprep.subr.bf16.mxu0 0
        %1847 = vmatpush1.bf16.msra.mxu0 0
        %1848 = vmatprep.subr.bf16.mxu0 0
        %1849 = vmatpush1.bf16.msra.mxu0 0
        %1850 = vmatprep.subr.bf16.mxu0 0
        %1851 = vmatpush1.bf16.msra.mxu0 0
        %1852 = vmatprep.subr.bf16.mxu0 0
        %1853 = vmatpush1.bf16.msra.mxu0 0
        %1854 = vmatprep.subr.bf16.mxu0 0
        %1855 = vmatpush1.bf16.msra.mxu0 0
        %1856 = vmatprep.subr.bf16.mxu0 0
        %1857 = vmatpush1.bf16.msra.mxu0 0
        %1858 = vmatprep.subr.bf16.mxu0 0
        %1859 = vmatpush1.bf16.msra.mxu0 0
        %1860 = vmatprep.subr.bf16.mxu0 0
        %1861 = vmatpush1.bf16.msra.mxu0 0
        %1862 = vmatprep.subr.bf16.mxu0 0
        %1863 = vmatpush1.bf16.msra.mxu0 0
        %1864 = vmatprep.mubr.bf16.mxu0 0
        %1865 = vmatmul.mubr.bf16.gmra.mrb[0].mxu0 %v1830
        %v1866 = vpop.f32.mrb[0].mxu0
        %v1867 = vadd.f32 0.0, %v1866
        %v1868 = vpop.f32.mrb[0].mxu0
        %v1869 = vpop.f32.mrb[0].mxu0
        %v1870 = vadd.f32 0.0, %v1869
        %v1871 = vpop.f32.mrb[0].mxu0
        %1872 = vdwg.mxu0
        %v1873 = vpack.c.bf16 %v1870, %v1867
        %v1875 = vsel %vm583, %v1873, 0
        %1877 = vmatprep.subr.bf16.mxu0 0
        %1878 = vmatpush1.bf16.msra.mxu0 %v582
        %1879 = vmatprep.subr.bf16.mxu0 0
        %1880 = vmatpush1.bf16.msra.mxu0 0
        %1881 = vmatprep.subr.bf16.mxu0 0
        %1882 = vmatpush1.bf16.msra.mxu0 0
        %1883 = vmatprep.subr.bf16.mxu0 0
        %1884 = vmatpush1.bf16.msra.mxu0 0
        %1885 = vmatprep.subr.bf16.mxu0 0
        %1886 = vmatpush1.bf16.msra.mxu0 0
        %1887 = vmatprep.subr.bf16.mxu0 0
        %1888 = vmatpush1.bf16.msra.mxu0 0
        %1889 = vmatprep.subr.bf16.mxu0 0
        %1890 = vmatpush1.bf16.msra.mxu0 0
        %1891 = vmatprep.subr.bf16.mxu0 0
        %1892 = vmatpush1.bf16.msra.mxu0 0
        %1893 = vmatprep.subr.bf16.mxu0 0
        %1894 = vmatpush1.bf16.msra.mxu0 0
        %1895 = vmatprep.subr.bf16.mxu0 0
        %1896 = vmatpush1.bf16.msra.mxu0 0
        %1897 = vmatprep.subr.bf16.mxu0 0
        %1898 = vmatpush1.bf16.msra.mxu0 0
        %1899 = vmatprep.subr.bf16.mxu0 0
        %1900 = vmatpush1.bf16.msra.mxu0 0
        %1901 = vmatprep.subr.bf16.mxu0 0
        %1902 = vmatpush1.bf16.msra.mxu0 0
        %1903 = vmatprep.subr.bf16.mxu0 0
        %1904 = vmatpush1.bf16.msra.mxu0 0
        %1905 = vmatprep.subr.bf16.mxu0 0
        %1906 = vmatpush1.bf16.msra.mxu0 0
        %1907 = vmatprep.subr.bf16.mxu0 0
        %1908 = vmatpush1.bf16.msra.mxu0 0
        %1909 = vmatprep.mubr.bf16.mxu0 0
        %1910 = vmatmul.mubr.bf16.gmra.mrb[0].mxu0 %v1875
        %v1911 = vpop.f32.mrb[0].mxu0
        %v1912 = vadd.f32 0.0, %v1911
        %v1913 = vpop.f32.mrb[0].mxu0
        %v1914 = vpop.f32.mrb[0].mxu0
        %v1915 = vadd.f32 0.0, %v1914
        %v1916 = vpop.f32.mrb[0].mxu0
        %1917 = vdwg.mxu0
        %v1918 = vadd.f32 %v1750, %v1912
        %v1919 = vadd.f32 %v1751, %v1915
        %v1920 = vadd.f32 %v378, %v1918
        %v1921 = vadd.f32 %v379, %v1919
        %v1922 = vld [vmem:[%s4] sm:$0x1]
        %v1924 = vlaneseq
        %v1925 = vshrl.u32 %v1924, 7
        %v1926 = vsub.s32 0, %v1925
        %v1927 = vrot.slane %v1922, %v1926
        %v1929 = vadd.f32 %v1920, %v1927
        %v1930 = vadd.f32 %v1921, %v1927
        %v1931 = vpack.c.bf16 %v1930, %v1929
        %v1932 = vld [vmem:[#allocation4] sm:$0xff]
        %v1933 = vld [vmem:[#allocation4 + $0x8] sm:$0xff]
        %v1934 = vld [vmem:[#allocation4 + $0x10] sm:$0xff]
        %v1935 = vld [vmem:[#allocation4 + $0x18] sm:$0xff]
        %v1936 = vld [vmem:[#allocation4 + $0x20] sm:$0xff]
        %v1937 = vld [vmem:[#allocation4 + $0x28] sm:$0xff]
        %v1938 = vld [vmem:[#allocation4 + $0x30] sm:$0xff]
        %v1939 = vld [vmem:[#allocation4 + $0x38] sm:$0xff]
        %v1940 = vld [vmem:[#allocation4 + $0x40] sm:$0xff]
        %v1941 = vld [vmem:[#allocation4 + $0x48] sm:$0xff]
        %v1942 = vld [vmem:[#allocation4 + $0x50] sm:$0xff]
        %v1943 = vld [vmem:[#allocation4 + $0x58] sm:$0xff]
        %v1944 = vld [vmem:[#allocation4 + $0x60] sm:$0xff]
        %v1945 = vld [vmem:[#allocation4 + $0x68] sm:$0xff]
        %v1946 = vld [vmem:[#allocation4 + $0x70] sm:$0xff]
        %v1947 = vld [vmem:[#allocation4 + $0x78] sm:$0xff]
        %v1948 = vld [vmem:[#allocation4 + $0x80] sm:$0xff]
        %v1949 = vld [vmem:[#allocation4 + $0x88] sm:$0xff]
        %v1950 = vld [vmem:[#allocation4 + $0x90] sm:$0xff]
        %v1951 = vld [vmem:[#allocation4 + $0x98] sm:$0xff]
        %v1952 = vld [vmem:[#allocation4 + $0xa0] sm:$0xff]
        %v1953 = vld [vmem:[#allocation4 + $0xa8] sm:$0xff]
        %v1954 = vld [vmem:[#allocation4 + $0xb0] sm:$0xff]
        %v1955 = vld [vmem:[#allocation4 + $0xb8] sm:$0xff]
        %v1956 = vld [vmem:[#allocation4 + $0xc0] sm:$0xff]
        %v1957 = vld [vmem:[#allocation4 + $0xc8] sm:$0xff]
        %v1958 = vld [vmem:[#allocation4 + $0xd0] sm:$0xff]
        %v1959 = vld [vmem:[#allocation4 + $0xd8] sm:$0xff]
        %v1960 = vld [vmem:[#allocation4 + $0xe0] sm:$0xff]
        %v1961 = vld [vmem:[#allocation4 + $0xe8] sm:$0xff]
        %v1962 = vld [vmem:[#allocation4 + $0xf0] sm:$0xff]
        %v1963 = vld [vmem:[#allocation4 + $0xf8] sm:$0xff]
        %v1964 = vld [vmem:[#allocation4 + $0x100] sm:$0xff]
        %v1965 = vld [vmem:[#allocation4 + $0x108] sm:$0xff]
        %v1966 = vld [vmem:[#allocation4 + $0x110] sm:$0xff]
        %v1967 = vld [vmem:[#allocation4 + $0x118] sm:$0xff]
        %v1968 = vld [vmem:[#allocation4 + $0x120] sm:$0xff]
        %v1969 = vld [vmem:[#allocation4 + $0x128] sm:$0xff]
        %v1970 = vld [vmem:[#allocation4 + $0x130] sm:$0xff]
        %v1971 = vld [vmem:[#allocation4 + $0x138] sm:$0xff]
        %v1972 = vld [vmem:[#allocation4 + $0x140] sm:$0xff]
        %v1973 = vld [vmem:[#allocation4 + $0x148] sm:$0xff]
        %v1974 = vld [vmem:[#allocation4 + $0x150] sm:$0xff]
        %v1975 = vld [vmem:[#allocation4 + $0x158] sm:$0xff]
        %v1976 = vld [vmem:[#allocation4 + $0x160] sm:$0xff]
        %v1977 = vld [vmem:[#allocation4 + $0x168] sm:$0xff]
        %v1978 = vld [vmem:[#allocation4 + $0x170] sm:$0xff]
        %v1979 = vld [vmem:[#allocation4 + $0x178] sm:$0xff]
        %v1980 = vld [vmem:[#allocation4 + $0x180] sm:$0xff]
        %v1981 = vld [vmem:[#allocation4 + $0x188] sm:$0xff]
        %v1982 = vld [vmem:[#allocation4 + $0x190] sm:$0xff]
        %v1983 = vld [vmem:[#allocation4 + $0x198] sm:$0xff]
        %v1984 = vld [vmem:[#allocation4 + $0x1a0] sm:$0xff]
        %v1985 = vld [vmem:[#allocation4 + $0x1a8] sm:$0xff]
        %v1986 = vld [vmem:[#allocation4 + $0x1b0] sm:$0xff]
        %v1987 = vld [vmem:[#allocation4 + $0x1b8] sm:$0xff]
        %v1988 = vld [vmem:[#allocation4 + $0x1c0] sm:$0xff]
        %v1989 = vld [vmem:[#allocation4 + $0x1c8] sm:$0xff]
        %v1990 = vld [vmem:[#allocation4 + $0x1d0] sm:$0xff]
        %v1991 = vld [vmem:[#allocation4 + $0x1d8] sm:$0xff]
        %v1992 = vld [vmem:[#allocation4 + $0x1e0] sm:$0xff]
        %v1993 = vld [vmem:[#allocation4 + $0x1e8] sm:$0xff]
        %v1994 = vld [vmem:[#allocation4 + $0x1f0] sm:$0xff]
        %v1995 = vld [vmem:[#allocation4 + $0x1f8] sm:$0xff]
        %v1996 = vpack.c.bf16 %v1936, %v1932
        %v1997 = vpack.c.bf16 %v1937, %v1933
        %v1998 = vpack.c.bf16 %v1938, %v1934
        %v1999 = vpack.c.bf16 %v1939, %v1935
        %v2000 = vpack.c.bf16 %v1944, %v1940
        %v2001 = vpack.c.bf16 %v1945, %v1941
        %v2002 = vpack.c.bf16 %v1946, %v1942
        %v2003 = vpack.c.bf16 %v1947, %v1943
        %v2004 = vpack.c.bf16 %v1952, %v1948
        %v2005 = vpack.c.bf16 %v1953, %v1949
        %v2006 = vpack.c.bf16 %v1954, %v1950
        %v2007 = vpack.c.bf16 %v1955, %v1951
        %v2008 = vpack.c.bf16 %v1960, %v1956
        %v2009 = vpack.c.bf16 %v1961, %v1957
        %v2010 = vpack.c.bf16 %v1962, %v1958
        %v2011 = vpack.c.bf16 %v1963, %v1959
        %v2012 = vpack.c.bf16 %v1968, %v1964
        %v2013 = vpack.c.bf16 %v1969, %v1965
        %v2014 = vpack.c.bf16 %v1970, %v1966
        %v2015 = vpack.c.bf16 %v1971, %v1967
        %v2016 = vpack.c.bf16 %v1976, %v1972
        %v2017 = vpack.c.bf16 %v1977, %v1973
        %v2018 = vpack.c.bf16 %v1978, %v1974
        %v2019 = vpack.c.bf16 %v1979, %v1975
        %v2020 = vpack.c.bf16 %v1984, %v1980
        %v2021 = vpack.c.bf16 %v1985, %v1981
        %v2022 = vpack.c.bf16 %v1986, %v1982
        %v2023 = vpack.c.bf16 %v1987, %v1983
        %v2024 = vpack.c.bf16 %v1992, %v1988
        %v2025 = vpack.c.bf16 %v1993, %v1989
        %v2026 = vpack.c.bf16 %v1994, %v1990
        %v2027 = vpack.c.bf16 %v1995, %v1991
        %v2028 = vld [vmem:[%s6] sm:$0xf]
        %v2030 = vlaneseq
        %v2031 = vshrl.u32 %v2030, 7
        %v2032 = vsub.s32 0, %v2031
        %v2033 = vrot.slane %v2028, %v2032
        %v2034 = vlaneseq
        %v2035 = vshrl.u32 %v2034, 7
        %v2036 = vsub.s32 1, %v2035
        %v2037 = vrot.slane %v2028, %v2036
        %v2038 = vlaneseq
        %v2039 = vshrl.u32 %v2038, 7
        %v2040 = vsub.s32 2, %v2039
        %v2041 = vrot.slane %v2028, %v2040
        %v2042 = vlaneseq
        %v2043 = vshrl.u32 %v2042, 7
        %v2044 = vsub.s32 3, %v2043
        %v2045 = vrot.slane %v2028, %v2044
        %2050 = vmatprep.subr.bf16.mxu0 %v1997
        %2051 = vmatpush1.bf16.msra.mxu0 %v1996
        %2052 = vmatprep.subr.bf16.mxu0 %v2001
        %2053 = vmatpush1.bf16.msra.mxu0 %v2000
        %2054 = vmatprep.subr.bf16.mxu0 %v2005
        %2055 = vmatpush1.bf16.msra.mxu0 %v2004
        %2056 = vmatprep.subr.bf16.mxu0 %v2009
        %2057 = vmatpush1.bf16.msra.mxu0 %v2008
        %2058 = vmatprep.subr.bf16.mxu0 %v2013
        %2059 = vmatpush1.bf16.msra.mxu0 %v2012
        %2060 = vmatprep.subr.bf16.mxu0 %v2017
        %2061 = vmatpush1.bf16.msra.mxu0 %v2016
        %2062 = vmatprep.subr.bf16.mxu0 %v2021
        %2063 = vmatpush1.bf16.msra.mxu0 %v2020
        %2064 = vmatprep.subr.bf16.mxu0 %v2025
        %2065 = vmatpush1.bf16.msra.mxu0 %v2024
        %2066 = vmatprep.subr.bf16.mxu0 0
        %2067 = vmatpush1.bf16.msra.mxu0 0
        %2068 = vmatprep.subr.bf16.mxu0 0
        %2069 = vmatpush1.bf16.msra.mxu0 0
        %2070 = vmatprep.subr.bf16.mxu0 0
        %2071 = vmatpush1.bf16.msra.mxu0 0
        %2072 = vmatprep.subr.bf16.mxu0 0
        %2073 = vmatpush1.bf16.msra.mxu0 0
        %2074 = vmatprep.subr.bf16.mxu0 0
        %2075 = vmatpush1.bf16.msra.mxu0 0
        %2076 = vmatprep.subr.bf16.mxu0 0
        %2077 = vmatpush1.bf16.msra.mxu0 0
        %2078 = vmatprep.subr.bf16.mxu0 0
        %2079 = vmatpush1.bf16.msra.mxu0 0
        %2080 = vmatprep.subr.bf16.mxu0 0
        %2081 = vmatpush1.bf16.msra.mxu0 0
        %2082 = vmatprep.mubr.bf16.mxu0 0
        %2083 = vmatmul.mubr.bf16.gmra.mrb[0].mxu0 %v1931
        %v2084 = vpop.f32.mrb[0].mxu0
        %v2085 = vadd.f32 %v2033, %v2084
        %v2086 = vpop.f32.mrb[0].mxu0
        %v2087 = vadd.f32 %v2037, %v2086
        %v2088 = vpop.f32.mrb[0].mxu0
        %v2089 = vadd.f32 %v2033, %v2088
        %v2090 = vpop.f32.mrb[0].mxu0
        %v2091 = vadd.f32 %v2037, %v2090
        %2092 = vdwg.mxu0
        %2093 = vmatprep.subr.bf16.mxu0 %v1999
        %2094 = vmatpush1.bf16.msra.mxu0 %v1998
        %2095 = vmatprep.subr.bf16.mxu0 %v2003
        %2096 = vmatpush1.bf16.msra.mxu0 %v2002
        %2097 = vmatprep.subr.bf16.mxu0 %v2007
        %2098 = vmatpush1.bf16.msra.mxu0 %v2006
        %2099 = vmatprep.subr.bf16.mxu0 %v2011
        %2100 = vmatpush1.bf16.msra.mxu0 %v2010
        %2101 = vmatprep.subr.bf16.mxu0 %v2015
        %2102 = vmatpush1.bf16.msra.mxu0 %v2014
        %2103 = vmatprep.subr.bf16.mxu0 %v2019
        %2104 = vmatpush1.bf16.msra.mxu0 %v2018
        %2105 = vmatprep.subr.bf16.mxu0 %v2023
        %2106 = vmatpush1.bf16.msra.mxu0 %v2022
        %2107 = vmatprep.subr.bf16.mxu0 %v2027
        %2108 = vmatpush1.bf16.msra.mxu0 %v2026
        %2109 = vmatprep.subr.bf16.mxu0 0
        %2110 = vmatpush1.bf16.msra.mxu0 0
        %2111 = vmatprep.subr.bf16.mxu0 0
        %2112 = vmatpush1.bf16.msra.mxu0 0
        %2113 = vmatprep.subr.bf16.mxu0 0
        %2114 = vmatpush1.bf16.msra.mxu0 0
        %2115 = vmatprep.subr.bf16.mxu0 0
        %2116 = vmatpush1.bf16.msra.mxu0 0
        %2117 = vmatprep.subr.bf16.mxu0 0
        %2118 = vmatpush1.bf16.msra.mxu0 0
        %2119 = vmatprep.subr.bf16.mxu0 0
        %2120 = vmatpush1.bf16.msra.mxu0 0
        %2121 = vmatprep.subr.bf16.mxu0 0
        %2122 = vmatpush1.bf16.msra.mxu0 0
        %2123 = vmatprep.subr.bf16.mxu0 0
        %2124 = vmatpush1.bf16.msra.mxu0 0
        %2125 = vmatprep.mubr.bf16.mxu0 0
        %2126 = vmatmul.mubr.bf16.gmra.mrb[0].mxu0 %v1931
        %v2127 = vpop.f32.mrb[0].mxu0
        %v2128 = vadd.f32 %v2041, %v2127
        %v2129 = vpop.f32.mrb[0].mxu0
        %v2130 = vadd.f32 %v2045, %v2129
        %v2131 = vpop.f32.mrb[0].mxu0
        %v2132 = vadd.f32 %v2041, %v2131
        %v2133 = vpop.f32.mrb[0].mxu0
        %v2134 = vadd.f32 %v2045, %v2133
        %2135 = vdwg.mxu0
        %v2136 = vmax.f32 %v2085, 0.0
        %v2137 = vmax.f32 %v2087, 0.0
        %v2138 = vmax.f32 %v2128, 0.0
        %v2139 = vmax.f32 %v2130, 0.0
        %v2140 = vmax.f32 %v2089, 0.0
        %v2141 = vmax.f32 %v2091, 0.0
        %v2142 = vmax.f32 %v2132, 0.0
        %v2143 = vmax.f32 %v2134, 0.0
        %v2144 = vpack.c.bf16 %v2140, %v2136
        %v2145 = vpack.c.bf16 %v2141, %v2137
        %v2146 = vpack.c.bf16 %v2142, %v2138
        %v2147 = vpack.c.bf16 %v2143, %v2139
        %v2148 = vld [vmem:[#allocation6] sm:$0xff]
        %v2149 = vld [vmem:[#allocation6 + $0x8] sm:$0xff]
        %v2150 = vld [vmem:[#allocation6 + $0x10] sm:$0xff]
        %v2151 = vld [vmem:[#allocation6 + $0x18] sm:$0xff]
        %v2152 = vld [vmem:[#allocation6 + $0x20] sm:$0xff]
        %v2153 = vld [vmem:[#allocation6 + $0x28] sm:$0xff]
        %v2154 = vld [vmem:[#allocation6 + $0x30] sm:$0xff]
        %v2155 = vld [vmem:[#allocation6 + $0x38] sm:$0xff]
        %v2156 = vld [vmem:[#allocation6 + $0x40] sm:$0xff]
        %v2157 = vld [vmem:[#allocation6 + $0x48] sm:$0xff]
        %v2158 = vld [vmem:[#allocation6 + $0x50] sm:$0xff]
        %v2159 = vld [vmem:[#allocation6 + $0x58] sm:$0xff]
        %v2160 = vld [vmem:[#allocation6 + $0x60] sm:$0xff]
        %v2161 = vld [vmem:[#allocation6 + $0x68] sm:$0xff]
        %v2162 = vld [vmem:[#allocation6 + $0x70] sm:$0xff]
        %v2163 = vld [vmem:[#allocation6 + $0x78] sm:$0xff]
        %v2164 = vld [vmem:[#allocation6 + $0x80] sm:$0xff]
        %v2165 = vld [vmem:[#allocation6 + $0x88] sm:$0xff]
        %v2166 = vld [vmem:[#allocation6 + $0x90] sm:$0xff]
        %v2167 = vld [vmem:[#allocation6 + $0x98] sm:$0xff]
        %v2168 = vld [vmem:[#allocation6 + $0xa0] sm:$0xff]
        %v2169 = vld [vmem:[#allocation6 + $0xa8] sm:$0xff]
        %v2170 = vld [vmem:[#allocation6 + $0xb0] sm:$0xff]
        %v2171 = vld [vmem:[#allocation6 + $0xb8] sm:$0xff]
        %v2172 = vld [vmem:[#allocation6 + $0xc0] sm:$0xff]
        %v2173 = vld [vmem:[#allocation6 + $0xc8] sm:$0xff]
        %v2174 = vld [vmem:[#allocation6 + $0xd0] sm:$0xff]
        %v2175 = vld [vmem:[#allocation6 + $0xd8] sm:$0xff]
        %v2176 = vld [vmem:[#allocation6 + $0xe0] sm:$0xff]
        %v2177 = vld [vmem:[#allocation6 + $0xe8] sm:$0xff]
        %v2178 = vld [vmem:[#allocation6 + $0xf0] sm:$0xff]
        %v2179 = vld [vmem:[#allocation6 + $0xf8] sm:$0xff]
        %v2180 = vld [vmem:[#allocation6 + $0x100] sm:$0xff]
        %v2181 = vld [vmem:[#allocation6 + $0x108] sm:$0xff]
        %v2182 = vld [vmem:[#allocation6 + $0x110] sm:$0xff]
        %v2183 = vld [vmem:[#allocation6 + $0x118] sm:$0xff]
        %v2184 = vld [vmem:[#allocation6 + $0x120] sm:$0xff]
        %v2185 = vld [vmem:[#allocation6 + $0x128] sm:$0xff]
        %v2186 = vld [vmem:[#allocation6 + $0x130] sm:$0xff]
        %v2187 = vld [vmem:[#allocation6 + $0x138] sm:$0xff]
        %v2188 = vld [vmem:[#allocation6 + $0x140] sm:$0xff]
        %v2189 = vld [vmem:[#allocation6 + $0x148] sm:$0xff]
        %v2190 = vld [vmem:[#allocation6 + $0x150] sm:$0xff]
        %v2191 = vld [vmem:[#allocation6 + $0x158] sm:$0xff]
        %v2192 = vld [vmem:[#allocation6 + $0x160] sm:$0xff]
        %v2193 = vld [vmem:[#allocation6 + $0x168] sm:$0xff]
        %v2194 = vld [vmem:[#allocation6 + $0x170] sm:$0xff]
        %v2195 = vld [vmem:[#allocation6 + $0x178] sm:$0xff]
        %v2196 = vld [vmem:[#allocation6 + $0x180] sm:$0xff]
        %v2197 = vld [vmem:[#allocation6 + $0x188] sm:$0xff]
        %v2198 = vld [vmem:[#allocation6 + $0x190] sm:$0xff]
        %v2199 = vld [vmem:[#allocation6 + $0x198] sm:$0xff]
        %v2200 = vld [vmem:[#allocation6 + $0x1a0] sm:$0xff]
        %v2201 = vld [vmem:[#allocation6 + $0x1a8] sm:$0xff]
        %v2202 = vld [vmem:[#allocation6 + $0x1b0] sm:$0xff]
        %v2203 = vld [vmem:[#allocation6 + $0x1b8] sm:$0xff]
        %v2204 = vld [vmem:[#allocation6 + $0x1c0] sm:$0xff]
        %v2205 = vld [vmem:[#allocation6 + $0x1c8] sm:$0xff]
        %v2206 = vld [vmem:[#allocation6 + $0x1d0] sm:$0xff]
        %v2207 = vld [vmem:[#allocation6 + $0x1d8] sm:$0xff]
        %v2208 = vld [vmem:[#allocation6 + $0x1e0] sm:$0xff]
        %v2209 = vld [vmem:[#allocation6 + $0x1e8] sm:$0xff]
        %v2210 = vld [vmem:[#allocation6 + $0x1f0] sm:$0xff]
        %v2211 = vld [vmem:[#allocation6 + $0x1f8] sm:$0xff]
        %v2212 = vpack.c.bf16 %v2149, %v2148
        %v2213 = vpack.c.bf16 %v2151, %v2150
        %v2214 = vpack.c.bf16 %v2153, %v2152
        %v2215 = vpack.c.bf16 %v2155, %v2154
        %v2216 = vpack.c.bf16 %v2157, %v2156
        %v2217 = vpack.c.bf16 %v2159, %v2158
        %v2218 = vpack.c.bf16 %v2161, %v2160
        %v2219 = vpack.c.bf16 %v2163, %v2162
        %v2220 = vpack.c.bf16 %v2165, %v2164
        %v2221 = vpack.c.bf16 %v2167, %v2166
        %v2222 = vpack.c.bf16 %v2169, %v2168
        %v2223 = vpack.c.bf16 %v2171, %v2170
        %v2224 = vpack.c.bf16 %v2173, %v2172
        %v2225 = vpack.c.bf16 %v2175, %v2174
        %v2226 = vpack.c.bf16 %v2177, %v2176
        %v2227 = vpack.c.bf16 %v2179, %v2178
        %v2228 = vpack.c.bf16 %v2181, %v2180
        %v2229 = vpack.c.bf16 %v2183, %v2182
        %v2230 = vpack.c.bf16 %v2185, %v2184
        %v2231 = vpack.c.bf16 %v2187, %v2186
        %v2232 = vpack.c.bf16 %v2189, %v2188
        %v2233 = vpack.c.bf16 %v2191, %v2190
        %v2234 = vpack.c.bf16 %v2193, %v2192
        %v2235 = vpack.c.bf16 %v2195, %v2194
        %v2236 = vpack.c.bf16 %v2197, %v2196
        %v2237 = vpack.c.bf16 %v2199, %v2198
        %v2238 = vpack.c.bf16 %v2201, %v2200
        %v2239 = vpack.c.bf16 %v2203, %v2202
        %v2240 = vpack.c.bf16 %v2205, %v2204
        %v2241 = vpack.c.bf16 %v2207, %v2206
        %v2242 = vpack.c.bf16 %v2209, %v2208
        %v2243 = vpack.c.bf16 %v2211, %v2210
        %2244 = vmatprep.subr.bf16.mxu0 0
        %2245 = vmatpush1.bf16.msra.mxu0 %v2212
        %2246 = vmatprep.subr.bf16.mxu0 0
        %2247 = vmatpush1.bf16.msra.mxu0 %v2213
        %2248 = vmatprep.subr.bf16.mxu0 0
        %2249 = vmatpush1.bf16.msra.mxu0 %v2214
        %2250 = vmatprep.subr.bf16.mxu0 0
        %2251 = vmatpush1.bf16.msra.mxu0 %v2215
        %2252 = vmatprep.subr.bf16.mxu0 0
        %2253 = vmatpush1.bf16.msra.mxu0 %v2216
        %2254 = vmatprep.subr.bf16.mxu0 0
        %2255 = vmatpush1.bf16.msra.mxu0 %v2217
        %2256 = vmatprep.subr.bf16.mxu0 0
        %2257 = vmatpush1.bf16.msra.mxu0 %v2218
        %2258 = vmatprep.subr.bf16.mxu0 0
        %2259 = vmatpush1.bf16.msra.mxu0 %v2219
        %2260 = vmatprep.subr.bf16.mxu0 0
        %2261 = vmatpush1.bf16.msra.mxu0 %v2220
        %2262 = vmatprep.subr.bf16.mxu0 0
        %2263 = vmatpush1.bf16.msra.mxu0 %v2221
        %2264 = vmatprep.subr.bf16.mxu0 0
        %2265 = vmatpush1.bf16.msra.mxu0 %v2222
        %2266 = vmatprep.subr.bf16.mxu0 0
        %2267 = vmatpush1.bf16.msra.mxu0 %v2223
        %2268 = vmatprep.subr.bf16.mxu0 0
        %2269 = vmatpush1.bf16.msra.mxu0 %v2224
        %2270 = vmatprep.subr.bf16.mxu0 0
        %2271 = vmatpush1.bf16.msra.mxu0 %v2225
        %2272 = vmatprep.subr.bf16.mxu0 0
        %2273 = vmatpush1.bf16.msra.mxu0 %v2226
        %2274 = vmatprep.subr.bf16.mxu0 0
        %2275 = vmatpush1.bf16.msra.mxu0 %v2227
        %2276 = vmatprep.mubr.bf16.mxu0 %v2145
        %2277 = vmatmul.mubr.bf16.gmra.mrb[0].mxu0 %v2144
        %v2278 = vpop.f32.mrb[0].mxu0
        %v2279 = vadd.f32 0.0, %v2278
        %v2280 = vpop.f32.mrb[0].mxu0
        %v2281 = vpop.f32.mrb[0].mxu0
        %v2282 = vadd.f32 0.0, %v2281
        %v2283 = vpop.f32.mrb[0].mxu0
        %2284 = vdwg.mxu0
        %2285 = vmatprep.subr.bf16.mxu0 0
        %2286 = vmatpush1.bf16.msra.mxu0 %v2228
        %2287 = vmatprep.subr.bf16.mxu0 0
        %2288 = vmatpush1.bf16.msra.mxu0 %v2229
        %2289 = vmatprep.subr.bf16.mxu0 0
        %2290 = vmatpush1.bf16.msra.mxu0 %v2230
        %2291 = vmatprep.subr.bf16.mxu0 0
        %2292 = vmatpush1.bf16.msra.mxu0 %v2231
        %2293 = vmatprep.subr.bf16.mxu0 0
        %2294 = vmatpush1.bf16.msra.mxu0 %v2232
        %2295 = vmatprep.subr.bf16.mxu0 0
        %2296 = vmatpush1.bf16.msra.mxu0 %v2233
        %2297 = vmatprep.subr.bf16.mxu0 0
        %2298 = vmatpush1.bf16.msra.mxu0 %v2234
        %2299 = vmatprep.subr.bf16.mxu0 0
        %2300 = vmatpush1.bf16.msra.mxu0 %v2235
        %2301 = vmatprep.subr.bf16.mxu0 0
        %2302 = vmatpush1.bf16.msra.mxu0 %v2236
        %2303 = vmatprep.subr.bf16.mxu0 0
        %2304 = vmatpush1.bf16.msra.mxu0 %v2237
        %2305 = vmatprep.subr.bf16.mxu0 0
        %2306 = vmatpush1.bf16.msra.mxu0 %v2238
        %2307 = vmatprep.subr.bf16.mxu0 0
        %2308 = vmatpush1.bf16.msra.mxu0 %v2239
        %2309 = vmatprep.subr.bf16.mxu0 0
        %2310 = vmatpush1.bf16.msra.mxu0 %v2240
        %2311 = vmatprep.subr.bf16.mxu0 0
        %2312 = vmatpush1.bf16.msra.mxu0 %v2241
        %2313 = vmatprep.subr.bf16.mxu0 0
        %2314 = vmatpush1.bf16.msra.mxu0 %v2242
        %2315 = vmatprep.subr.bf16.mxu0 0
        %2316 = vmatpush1.bf16.msra.mxu0 %v2243
        %2317 = vmatprep.mubr.bf16.mxu0 %v2147
        %2318 = vmatmul.mubr.bf16.gmra.mrb[0].mxu0 %v2146
        %v2319 = vpop.f32.mrb[0].mxu0
        %v2320 = vadd.f32 %v2279, %v2319
        %v2321 = vpop.f32.mrb[0].mxu0
        %v2322 = vpop.f32.mrb[0].mxu0
        %v2323 = vadd.f32 %v2282, %v2322
        %v2324 = vpop.f32.mrb[0].mxu0
        %2325 = vdwg.mxu0
        %v2326 = vadd.f32 %v1929, %v2320
        %v2327 = vadd.f32 %v1930, %v2323
        %v2328 = vld [vmem:[%s8] sm:$0x1]
        %v2330 = vlaneseq
        %v2331 = vshrl.u32 %v2330, 7
        %v2332 = vsub.s32 0, %v2331
        %v2333 = vrot.slane %v2328, %v2332
        %v2335 = vadd.f32 %v2326, %v2333
        %v2336 = vadd.f32 %v2327, %v2333
        %2337 = vst [vmem:[%s376] sm:$0xff] %v2335
        %2338 = vst [vmem:[%s376 + $0x8] sm:$0xff] %v2336
        %p2339 = scmp.lt.s32.totalorder %s22, 1
        %s2340 = scalar_select %p2339, %s22, 1
        %s2341 = smul.addr %s2340, 2
        %s2342 = smul.addr %s2341, 8
        %s2343 = scalar_lea.vmem %s9, %s2342
        // Predicated region
        $region69: #{_lambda_.13} parent=55 // pred_check
          %p2344 = pneg %p234
        $region70: #{_lambda_.13} parent=55 // pred_check_branch
          %2346 = sbr.rel (%p2344) target = $region72
        $region71: #{_lambda_.13} parent=55 // pred_region
          _
        $region72: #{_lambda_.13} parent=55 // pred_fallthru
          _
      $region56: #{_lambda_.13} parent=5 // pred_fallthru
        _
      %p2347 = scmp.le.s32.totalorder 2, %s17
      // Predicated region
      $region73: #{_lambda_.13} parent=5 // pred_check
        %p2348 = pneg %p2347
      $region74: #{_lambda_.13} parent=5 // pred_check_branch
        %2350 = sbr.rel (%p2348) target = $region76
      $region75: #{_lambda_.13} parent=5 // pred_region
        %s2351 = ssub.s32 %s17, 2
        // Predicated region
        $region77: #{_lambda_.13} parent=75 // pred_check
          %p2352 = pneg %p240
        $region78: #{_lambda_.13} parent=75 // pred_check_branch
          %2354 = sbr.rel (%p2352) target = $region80
        $region79: #{_lambda_.13} parent=75 // pred_region
          %p2355 = scmp.lt.s32.totalorder %s23, 1
          %s2356 = scalar_select %p2355, %s23, 1
          %s2357 = smul.addr %s2356, 2
          %s2358 = smul.addr %s2357, 8
          %s2359 = scalar_lea.vmem %s9, %s2358
        $region80: #{_lambda_.13} parent=75 // pred_fallthru
          _
      $region76: #{_lambda_.13} parent=5 // pred_fallthru
        _
    $region6: #{_lambda_.13} parent=1 // loop_footer
      %s21 = sadd.s32 1, %s17
    $region7: #{_lambda_.13} parent=1 // loop_footer_branch
      %16 = sbr.rel target = $region3
    $region8: #{_lambda_.13} parent=1 // loop_exit
      _
    %2360 = vsyncpa [#allocation3], 1
    %s2361 = scalar_lea.sflag [#allocation3], 1
    %2362 = vsyncpa %s2361, 1
    %2363 = vsyncpa [#allocation5], 1

// kernel: _lambda_.16
$region0: #{_lambda_.16}
  #allocation0 [shape = 'u32[]', space=smem, size = 0x4, offset = 0x4, fixed_abs, tag = 'smem constant byte address 0x4 - core index']
  #allocation1 [shape = 'u32[144,128]{1,0:T(1,128)}', space=vmem, size = 0x12000, scoped, tag = 'internal scratch']
  %s0 = inlined_call_operand.vmem [shape: f32[2,16,128], index: 0, kind: input, shape index: {}]
  %s1 = inlined_call_operand.vmem [shape: f32[128,256], index: 1, kind: input, shape index: {}]
  %s2 = inlined_call_operand.vmem [shape: f32[1,256], index: 2, kind: input, shape index: {}]
  %s3 = inlined_call_operand.vmem [shape: f32[1280,128], index: 3, kind: input, shape index: {}]
  %s4 = inlined_call_operand.vmem [shape: f32[1,128], index: 4, kind: input, shape index: {}]
  %s5 = inlined_call_operand.vmem [shape: f32[1,128], index: 5, kind: input, shape index: {}]
  %s6 = inlined_call_operand.vmem [shape: f32[1,128], index: 6, kind: input, shape index: {}]
  %s7 = inlined_call_operand.vmem [shape: f32[128,512], index: 7, kind: input, shape index: {}]
  %s8 = inlined_call_operand.vmem [shape: f32[1,512], index: 8, kind: input, shape index: {}]
  %s9 = inlined_call_operand.vmem [shape: f32[512,128], index: 9, kind: input, shape index: {}]
  %s10 = inlined_call_operand.vmem [shape: f32[1,128], index: 10, kind: input, shape index: {}]
  %s11 = inlined_call_operand.vmem [shape: f32[2,16,128], index: 11, kind: output, shape index: {}]
  %s12 = sld [smem:[#allocation0]]
  $region77: #{_lambda_.16} parent=0
    _
  %s14 = ssub.s32 1, %s12
  %s15 = scalar_select 0, %s14, %s12
  loop: start=0, step=1, limit=4
  $region2: #{_lambda_.16} parent=0 // loop_pre_header
    _
  $region3: #{_lambda_.16} parent=0 // loop_header
    %s17 = sphi 0, %s21
    %p18 = scmp.ge.s32.totalorder %s17, 4
    %s27 = sphi 0, %s29
    %s30 = sphi 0, %s27
    %s31 = sphi 0, %s30
    %s47 = sphi 0, %s31
    %s51 = sphi 0, %s51
    %s53 = sphi 0, %s51
    %s54 = sphi 0, %s53
    %s68 = sphi 0, %s54
    %s72 = sphi 0, %s72
    %s74 = sphi 0, %s72
    %s75 = sphi 0, %s74
    %s89 = sphi 0, %s75
    %s93 = sphi 0, %s93
    %s95 = sphi 0, %s93
    %s96 = sphi 0, %s95
    %s110 = sphi 0, %s96
    %s114 = sphi 0, %s114
    %s116 = sphi 0, %s114
    %s117 = sphi 0, %s116
    %s131 = sphi 0, %s117
    %s135 = sphi 0, %s135
    %s137 = sphi 0, %s135
    %s138 = sphi 0, %s137
    %s152 = sphi 0, %s138
    %s156 = sphi 0, %s156
    %s158 = sphi 0, %s156
    %s159 = sphi 0, %s158
    %s173 = sphi 0, %s159
    %s177 = sphi 0, %s177
    %s179 = sphi 0, %s177
    %s180 = sphi 0, %s179
    %s194 = sphi 0, %s180
    %s198 = sphi 0, %s198
    %s200 = sphi 0, %s198
    %s201 = sphi 0, %s200
    %s215 = sphi 0, %s201
    %s219 = sphi 0, %s219
    %s221 = sphi 0, %s219
    %s222 = sphi 0, %s221
    %s236 = sphi 0, %s222
    %s240 = sphi 0, %s240
    %s242 = sphi 0, %s240
    %s243 = sphi 0, %s242
    %s257 = sphi 0, %s243
    %s263 = sphi 0, %s265
    %s266 = sphi 0, %s263
    %s267 = sphi 0, %s266
    %s283 = sphi 0, %s267
  $region4: #{_lambda_.16} parent=0 // loop_header_branch
    %20 = sbr.rel (%p18) target = $region8
  $region5: #{_lambda_.16} parent=0 // loop_body
    %s22 = ssub.s32 %s17, 1
    %s23 = ssub.s32 %s17, 2
    %s24 = sadd.s32 %s17, 1
    %s25 = ssub.s32 %s17, %s24
    %p26 = scmp.eq.s32.totalorder %s25, 0
    %s28 = sadd.s32 %s27, 1
    %s29 = scalar_select %p26, %s27, %s28
    %p32 = pneg %p26
    %p33 = scmp.eq.s32.totalorder %s17, 1
    %p34 = por %p32, %p33
    %p35 = scmp.ne.s32.totalorder %s27, %s30
    %p36 = scmp.eq.s32.totalorder %s17, 0
    %p37 = por %p35, %p36
    %p38 = scmp.ne.s32.totalorder %s27, %s30
    %p39 = scmp.eq.s32.totalorder %s22, 1
    %p40 = por %p38, %p39
    %p41 = scmp.ne.s32.totalorder %s30, %s31
    %p42 = scmp.eq.s32.totalorder %s22, 0
    %p43 = por %p41, %p42
    %p44 = scmp.ne.s32.totalorder %s30, %s31
    %p45 = scmp.eq.s32.totalorder %s23, 1
    %p46 = por %p44, %p45
    %p48 = scmp.ne.s32.totalorder %s31, %s47
    %p49 = scmp.eq.s32.totalorder %s23, 0
    %p50 = por %p48, %p49
    %s52 = sadd.s32 %s51, 1
    %p55 = scmp.eq.s32.totalorder %s17, 1
    %p56 = scmp.ne.s32.totalorder %s51, %s53
    %p57 = scmp.eq.s32.totalorder %s17, 0
    %p58 = por %p56, %p57
    %p59 = scmp.ne.s32.totalorder %s51, %s53
    %p60 = scmp.eq.s32.totalorder %s22, 1
    %p61 = por %p59, %p60
    %p62 = scmp.ne.s32.totalorder %s53, %s54
    %p63 = scmp.eq.s32.totalorder %s22, 0
    %p64 = por %p62, %p63
    %p65 = scmp.ne.s32.totalorder %s53, %s54
    %p66 = scmp.eq.s32.totalorder %s23, 1
    %p67 = por %p65, %p66
    %p69 = scmp.ne.s32.totalorder %s54, %s68
    %p70 = scmp.eq.s32.totalorder %s23, 0
    %p71 = por %p69, %p70
    %s73 = sadd.s32 %s72, 1
    %p76 = scmp.eq.s32.totalorder %s17, 1
    %p77 = scmp.ne.s32.totalorder %s72, %s74
    %p78 = scmp.eq.s32.totalorder %s17, 0
    %p79 = por %p77, %p78
    %p80 = scmp.ne.s32.totalorder %s72, %s74
    %p81 = scmp.eq.s32.totalorder %s22, 1
    %p82 = por %p80, %p81
    %p83 = scmp.ne.s32.totalorder %s74, %s75
    %p84 = scmp.eq.s32.totalorder %s22, 0
    %p85 = por %p83, %p84
    %p86 = scmp.ne.s32.totalorder %s74, %s75
    %p87 = scmp.eq.s32.totalorder %s23, 1
    %p88 = por %p86, %p87
    %p90 = scmp.ne.s32.totalorder %s75, %s89
    %p91 = scmp.eq.s32.totalorder %s23, 0
    %p92 = por %p90, %p91
    %s94 = sadd.s32 %s93, 1
    %p97 = scmp.eq.s32.totalorder %s17, 1
    %p98 = scmp.ne.s32.totalorder %s93, %s95
    %p99 = scmp.eq.s32.totalorder %s17, 0
    %p100 = por %p98, %p99
    %p101 = scmp.ne.s32.totalorder %s93, %s95
    %p102 = scmp.eq.s32.totalorder %s22, 1
    %p103 = por %p101, %p102
    %p104 = scmp.ne.s32.totalorder %s95, %s96
    %p105 = scmp.eq.s32.totalorder %s22, 0
    %p106 = por %p104, %p105
    %p107 = scmp.ne.s32.totalorder %s95, %s96
    %p108 = scmp.eq.s32.totalorder %s23, 1
    %p109 = por %p107, %p108
    %p111 = scmp.ne.s32.totalorder %s96, %s110
    %p112 = scmp.eq.s32.totalorder %s23, 0
    %p113 = por %p111, %p112
    %s115 = sadd.s32 %s114, 1
    %p118 = scmp.eq.s32.totalorder %s17, 1
    %p119 = scmp.ne.s32.totalorder %s114, %s116
    %p120 = scmp.eq.s32.totalorder %s17, 0
    %p121 = por %p119, %p120
    %p122 = scmp.ne.s32.totalorder %s114, %s116
    %p123 = scmp.eq.s32.totalorder %s22, 1
    %p124 = por %p122, %p123
    %p125 = scmp.ne.s32.totalorder %s116, %s117
    %p126 = scmp.eq.s32.totalorder %s22, 0
    %p127 = por %p125, %p126
    %p128 = scmp.ne.s32.totalorder %s116, %s117
    %p129 = scmp.eq.s32.totalorder %s23, 1
    %p130 = por %p128, %p129
    %p132 = scmp.ne.s32.totalorder %s117, %s131
    %p133 = scmp.eq.s32.totalorder %s23, 0
    %p134 = por %p132, %p133
    %s136 = sadd.s32 %s135, 1
    %p139 = scmp.eq.s32.totalorder %s17, 1
    %p140 = scmp.ne.s32.totalorder %s135, %s137
    %p141 = scmp.eq.s32.totalorder %s17, 0
    %p142 = por %p140, %p141
    %p143 = scmp.ne.s32.totalorder %s135, %s137
    %p144 = scmp.eq.s32.totalorder %s22, 1
    %p145 = por %p143, %p144
    %p146 = scmp.ne.s32.totalorder %s137, %s138
    %p147 = scmp.eq.s32.totalorder %s22, 0
    %p148 = por %p146, %p147
    %p149 = scmp.ne.s32.totalorder %s137, %s138
    %p150 = scmp.eq.s32.totalorder %s23, 1
    %p151 = por %p149, %p150
    %p153 = scmp.ne.s32.totalorder %s138, %s152
    %p154 = scmp.eq.s32.totalorder %s23, 0
    %p155 = por %p153, %p154
    %s157 = sadd.s32 %s156, 1
    %p160 = scmp.eq.s32.totalorder %s17, 1
    %p161 = scmp.ne.s32.totalorder %s156, %s158
    %p162 = scmp.eq.s32.totalorder %s17, 0
    %p163 = por %p161, %p162
    %p164 = scmp.ne.s32.totalorder %s156, %s158
    %p165 = scmp.eq.s32.totalorder %s22, 1
    %p166 = por %p164, %p165
    %p167 = scmp.ne.s32.totalorder %s158, %s159
    %p168 = scmp.eq.s32.totalorder %s22, 0
    %p169 = por %p167, %p168
    %p170 = scmp.ne.s32.totalorder %s158, %s159
    %p171 = scmp.eq.s32.totalorder %s23, 1
    %p172 = por %p170, %p171
    %p174 = scmp.ne.s32.totalorder %s159, %s173
    %p175 = scmp.eq.s32.totalorder %s23, 0
    %p176 = por %p174, %p175
    %s178 = sadd.s32 %s177, 1
    %p181 = scmp.eq.s32.totalorder %s17, 1
    %p182 = scmp.ne.s32.totalorder %s177, %s179
    %p183 = scmp.eq.s32.totalorder %s17, 0
    %p184 = por %p182, %p183
    %p185 = scmp.ne.s32.totalorder %s177, %s179
    %p186 = scmp.eq.s32.totalorder %s22, 1
    %p187 = por %p185, %p186
    %p188 = scmp.ne.s32.totalorder %s179, %s180
    %p189 = scmp.eq.s32.totalorder %s22, 0
    %p190 = por %p188, %p189
    %p191 = scmp.ne.s32.totalorder %s179, %s180
    %p192 = scmp.eq.s32.totalorder %s23, 1
    %p193 = por %p191, %p192
    %p195 = scmp.ne.s32.totalorder %s180, %s194
    %p196 = scmp.eq.s32.totalorder %s23, 0
    %p197 = por %p195, %p196
    %s199 = sadd.s32 %s198, 1
    %p202 = scmp.eq.s32.totalorder %s17, 1
    %p203 = scmp.ne.s32.totalorder %s198, %s200
    %p204 = scmp.eq.s32.totalorder %s17, 0
    %p205 = por %p203, %p204
    %p206 = scmp.ne.s32.totalorder %s198, %s200
    %p207 = scmp.eq.s32.totalorder %s22, 1
    %p208 = por %p206, %p207
    %p209 = scmp.ne.s32.totalorder %s200, %s201
    %p210 = scmp.eq.s32.totalorder %s22, 0
    %p211 = por %p209, %p210
    %p212 = scmp.ne.s32.totalorder %s200, %s201
    %p213 = scmp.eq.s32.totalorder %s23, 1
    %p214 = por %p212, %p213
    %p216 = scmp.ne.s32.totalorder %s201, %s215
    %p217 = scmp.eq.s32.totalorder %s23, 0
    %p218 = por %p216, %p217
    %s220 = sadd.s32 %s219, 1
    %p223 = scmp.eq.s32.totalorder %s17, 1
    %p224 = scmp.ne.s32.totalorder %s219, %s221
    %p225 = scmp.eq.s32.totalorder %s17, 0
    %p226 = por %p224, %p225
    %p227 = scmp.ne.s32.totalorder %s219, %s221
    %p228 = scmp.eq.s32.totalorder %s22, 1
    %p229 = por %p227, %p228
    %p230 = scmp.ne.s32.totalorder %s221, %s222
    %p231 = scmp.eq.s32.totalorder %s22, 0
    %p232 = por %p230, %p231
    %p233 = scmp.ne.s32.totalorder %s221, %s222
    %p234 = scmp.eq.s32.totalorder %s23, 1
    %p235 = por %p233, %p234
    %p237 = scmp.ne.s32.totalorder %s222, %s236
    %p238 = scmp.eq.s32.totalorder %s23, 0
    %p239 = por %p237, %p238
    %s241 = sadd.s32 %s240, 1
    %p244 = scmp.eq.s32.totalorder %s17, 1
    %p245 = scmp.ne.s32.totalorder %s240, %s242
    %p246 = scmp.eq.s32.totalorder %s17, 0
    %p247 = por %p245, %p246
    %p248 = scmp.ne.s32.totalorder %s240, %s242
    %p249 = scmp.eq.s32.totalorder %s22, 1
    %p250 = por %p248, %p249
    %p251 = scmp.ne.s32.totalorder %s242, %s243
    %p252 = scmp.eq.s32.totalorder %s22, 0
    %p253 = por %p251, %p252
    %p254 = scmp.ne.s32.totalorder %s242, %s243
    %p255 = scmp.eq.s32.totalorder %s23, 1
    %p256 = por %p254, %p255
    %p258 = scmp.ne.s32.totalorder %s243, %s257
    %p259 = scmp.eq.s32.totalorder %s23, 0
    %p260 = por %p258, %p259
    %s261 = ssub.s32 %s17, %s24
    %p262 = scmp.eq.s32.totalorder %s261, 0
    %s264 = sadd.s32 %s263, 1
    %s265 = scalar_select %p262, %s263, %s264
    %p268 = pneg %p262
    %p269 = scmp.eq.s32.totalorder %s17, 1
    %p270 = por %p268, %p269
    %p271 = scmp.ne.s32.totalorder %s263, %s266
    %p272 = scmp.eq.s32.totalorder %s17, 0
    %p273 = por %p271, %p272
    %p274 = scmp.ne.s32.totalorder %s263, %s266
    %p275 = scmp.eq.s32.totalorder %s22, 1
    %p276 = por %p274, %p275
    %p277 = scmp.ne.s32.totalorder %s266, %s267
    %p278 = scmp.eq.s32.totalorder %s22, 0
    %p279 = por %p277, %p278
    %p280 = scmp.ne.s32.totalorder %s266, %s267
    %p281 = scmp.eq.s32.totalorder %s23, 1
    %p282 = por %p280, %p281
    %p284 = scmp.ne.s32.totalorder %s267, %s283
    %p285 = scmp.eq.s32.totalorder %s23, 0
    %p286 = por %p284, %p285
    %p287 = scmp.le.s32.totalorder 1, %s17
    %p288 = scmp.lt.s32.totalorder %s17, 3
    %p289 = pnand %p287, %p288
    %p290 = pneg %p289
    // Predicated region
    $region9: #{_lambda_.16} parent=5 // pred_check
      _
    $region10: #{_lambda_.16} parent=5 // pred_check_branch
      %292 = sbr.rel (%p289) target = $region12
    $region11: #{_lambda_.16} parent=5 // pred_region
      %s293 = ssub.s32 %s17, 1
      // Predicated region
      $region13: #{_lambda_.16} parent=11 // pred_check
        %p294 = pneg %p64
      $region14: #{_lambda_.16} parent=11 // pred_check_branch
        %296 = sbr.rel (%p294) target = $region16
      $region15: #{_lambda_.16} parent=11 // pred_region
        _
      $region16: #{_lambda_.16} parent=11 // pred_fallthru
        _
      // Predicated region
      $region17: #{_lambda_.16} parent=11 // pred_check
        %p297 = pneg %p85
      $region18: #{_lambda_.16} parent=11 // pred_check_branch
        %299 = sbr.rel (%p297) target = $region20
      $region19: #{_lambda_.16} parent=11 // pred_region
        _
      $region20: #{_lambda_.16} parent=11 // pred_fallthru
        _
      // Predicated region
      $region21: #{_lambda_.16} parent=11 // pred_check
        %p300 = pneg %p106
      $region22: #{_lambda_.16} parent=11 // pred_check_branch
        %302 = sbr.rel (%p300) target = $region24
      $region23: #{_lambda_.16} parent=11 // pred_region
        _
      $region24: #{_lambda_.16} parent=11 // pred_fallthru
        _
      // Predicated region
      $region25: #{_lambda_.16} parent=11 // pred_check
        %p303 = pneg %p127
      $region26: #{_lambda_.16} parent=11 // pred_check_branch
        %305 = sbr.rel (%p303) target = $region28
      $region27: #{_lambda_.16} parent=11 // pred_region
        _
      $region28: #{_lambda_.16} parent=11 // pred_fallthru
        _
      // Predicated region
      $region29: #{_lambda_.16} parent=11 // pred_check
        %p306 = pneg %p148
      $region30: #{_lambda_.16} parent=11 // pred_check_branch
        %308 = sbr.rel (%p306) target = $region32
      $region31: #{_lambda_.16} parent=11 // pred_region
        _
      $region32: #{_lambda_.16} parent=11 // pred_fallthru
        _
      // Predicated region
      $region33: #{_lambda_.16} parent=11 // pred_check
        %p309 = pneg %p169
      $region34: #{_lambda_.16} parent=11 // pred_check_branch
        %311 = sbr.rel (%p309) target = $region36
      $region35: #{_lambda_.16} parent=11 // pred_region
        _
      $region36: #{_lambda_.16} parent=11 // pred_fallthru
        _
      // Predicated region
      $region37: #{_lambda_.16} parent=11 // pred_check
        %p312 = pneg %p190
      $region38: #{_lambda_.16} parent=11 // pred_check_branch
        %314 = sbr.rel (%p312) target = $region40
      $region39: #{_lambda_.16} parent=11 // pred_region
        _
      $region40: #{_lambda_.16} parent=11 // pred_fallthru
        _
      // Predicated region
      $region41: #{_lambda_.16} parent=11 // pred_check
        %p315 = pneg %p211
      $region42: #{_lambda_.16} parent=11 // pred_check_branch
        %317 = sbr.rel (%p315) target = $region44
      $region43: #{_lambda_.16} parent=11 // pred_region
        _
      $region44: #{_lambda_.16} parent=11 // pred_fallthru
        _
      // Predicated region
      $region45: #{_lambda_.16} parent=11 // pred_check
        %p318 = pneg %p232
      $region46: #{_lambda_.16} parent=11 // pred_check_branch
        %320 = sbr.rel (%p318) target = $region48
      $region47: #{_lambda_.16} parent=11 // pred_region
        _
      $region48: #{_lambda_.16} parent=11 // pred_fallthru
        _
      // Predicated region
      $region49: #{_lambda_.16} parent=11 // pred_check
        %p321 = pneg %p253
      $region50: #{_lambda_.16} parent=11 // pred_check_branch
        %323 = sbr.rel (%p321) target = $region52
      $region51: #{_lambda_.16} parent=11 // pred_region
        _
      $region52: #{_lambda_.16} parent=11 // pred_fallthru
        _
    $region12: #{_lambda_.16} parent=5 // pred_fallthru
      _
    %p324 = scmp.lt.s32.totalorder %s17, 2
    // Predicated region
    $region53: #{_lambda_.16} parent=5 // pred_check
      %p325 = pneg %p324
    $region54: #{_lambda_.16} parent=5 // pred_check_branch
      %327 = sbr.rel (%p325) target = $region56
    $region55: #{_lambda_.16} parent=5 // pred_region
      // Predicated region
      $region57: #{_lambda_.16} parent=55 // pred_check
        %p328 = pneg %p37
      $region58: #{_lambda_.16} parent=55 // pred_check_branch
        %330 = sbr.rel (%p328) target = $region60
      $region59: #{_lambda_.16} parent=55 // pred_region
        %p331 = scmp.lt.s32.totalorder %s17, 1
        %s332 = scalar_select %p331, %s17, 1
        %s333 = smul.addr %s332, 2
        %s334 = smul.addr %s333, 8
        %s335 = scalar_lea.vmem %s0, %s334
      $region60: #{_lambda_.16} parent=55 // pred_fallthru
        _
    $region56: #{_lambda_.16} parent=5 // pred_fallthru
      _
    %p336 = scmp.le.s32.totalorder 1, %s17
    %p337 = scmp.lt.s32.totalorder %s17, 3
    %p338 = pnand %p336, %p337
    %p339 = pneg %p338
    // Predicated region
    $region61: #{_lambda_.16} parent=5 // pred_check
      _
    $region62: #{_lambda_.16} parent=5 // pred_check_branch
      %341 = sbr.rel (%p338) target = $region64
    $region63: #{_lambda_.16} parent=5 // pred_region
      %s342 = ssub.s32 %s17, 1
      %p343 = scmp.lt.s32.totalorder %s22, 1
      %s344 = scalar_select %p343, %s22, 1
      %s345 = smul.addr %s344, 2
      %s346 = smul.addr %s345, 8
      %s347 = scalar_lea.vmem %s0, %s346
      %p348 = pneg %p43
      %p349 = pneg %p40
      %p350 = pneg %p64
      %p351 = pneg %p61
      %p352 = pneg %p85
      %p353 = pneg %p82
      %p354 = pneg %p106
      %p355 = pneg %p103
      %p356 = pneg %p127
      %p357 = pneg %p124
      %p358 = pneg %p148
      %p359 = pneg %p145
      %p360 = pneg %p169
      %p361 = pneg %p166
      %p362 = pneg %p190
      %p363 = pneg %p187
      %p364 = pneg %p211
      %p365 = pneg %p208
      %p366 = pneg %p232
      %p367 = pneg %p229
      %p368 = pneg %p253
      %p369 = pneg %p250
      %p370 = pneg %p279
      %p371 = pneg %p276
      %p372 = scmp.lt.s32.totalorder %s22, 1
      %s373 = scalar_select %p372, %s22, 1
      %s374 = smul.addr %s373, 2
      %s375 = smul.addr %s374, 8
      %s376 = scalar_lea.vmem %s11, %s375
      %p377 = scmp.lt.s32.totalorder %s22, 1
      %s378 = scalar_select %p377, %s22, 1
      %s379 = smul.addr %s378, 2
      %s380 = smul.addr %s379, 8
      %s381 = scalar_lea.vmem %s0, %s380
      %p382 = scmp.lt.s32.totalorder %s22, 1
      %s383 = scalar_select %p382, %s22, 1
      %s384 = smul.addr %s383, 2
      %s385 = smul.addr %s384, 8
      %s386 = scalar_lea.vmem %s11, %s385
      %v388 = vld [vmem:[%s381] sm:$0xff]
      %v389 = vld [vmem:[%s381 + $0x8] sm:$0xff]
      %v390 = vpack.c.bf16 %v389, %v388
      %v391 = vld [vmem:[%s1] sm:$0xff]
      %v392 = vld [vmem:[%s1 + $0x8] sm:$0xff]
      %v393 = vld [vmem:[%s1 + $0x10] sm:$0xff]
      %v394 = vld [vmem:[%s1 + $0x18] sm:$0xff]
      %v395 = vld [vmem:[%s1 + $0x20] sm:$0xff]
      %v396 = vld [vmem:[%s1 + $0x28] sm:$0xff]
      %v397 = vld [vmem:[%s1 + $0x30] sm:$0xff]
      %v398 = vld [vmem:[%s1 + $0x38] sm:$0xff]
      %v399 = vld [vmem:[%s1 + $0x40] sm:$0xff]
      %v400 = vld [vmem:[%s1 + $0x48] sm:$0xff]
      %v401 = vld [vmem:[%s1 + $0x50] sm:$0xff]
      %v402 = vld [vmem:[%s1 + $0x58] sm:$0xff]
      %v403 = vld [vmem:[%s1 + $0x60] sm:$0xff]
      %v404 = vld [vmem:[%s1 + $0x68] sm:$0xff]
      %v405 = vld [vmem:[%s1 + $0x70] sm:$0xff]
      %v406 = vld [vmem:[%s1 + $0x78] sm:$0xff]
      %v407 = vld [vmem:[%s1 + $0x80] sm:$0xff]
      %v408 = vld [vmem:[%s1 + $0x88] sm:$0xff]
      %v409 = vld [vmem:[%s1 + $0x90] sm:$0xff]
      %v410 = vld [vmem:[%s1 + $0x98] sm:$0xff]
      %v411 = vld [vmem:[%s1 + $0xa0] sm:$0xff]
      %v412 = vld [vmem:[%s1 + $0xa8] sm:$0xff]
      %v413 = vld [vmem:[%s1 + $0xb0] sm:$0xff]
      %v414 = vld [vmem:[%s1 + $0xb8] sm:$0xff]
      %v415 = vld [vmem:[%s1 + $0xc0] sm:$0xff]
      %v416 = vld [vmem:[%s1 + $0xc8] sm:$0xff]
      %v417 = vld [vmem:[%s1 + $0xd0] sm:$0xff]
      %v418 = vld [vmem:[%s1 + $0xd8] sm:$0xff]
      %v419 = vld [vmem:[%s1 + $0xe0] sm:$0xff]
      %v420 = vld [vmem:[%s1 + $0xe8] sm:$0xff]
      %v421 = vld [vmem:[%s1 + $0xf0] sm:$0xff]
      %v422 = vld [vmem:[%s1 + $0xf8] sm:$0xff]
      %v423 = vpack.c.bf16 %v393, %v391
      %v424 = vpack.c.bf16 %v394, %v392
      %v425 = vpack.c.bf16 %v397, %v395
      %v426 = vpack.c.bf16 %v398, %v396
      %v427 = vpack.c.bf16 %v401, %v399
      %v428 = vpack.c.bf16 %v402, %v400
      %v429 = vpack.c.bf16 %v405, %v403
      %v430 = vpack.c.bf16 %v406, %v404
      %v431 = vpack.c.bf16 %v409, %v407
      %v432 = vpack.c.bf16 %v410, %v408
      %v433 = vpack.c.bf16 %v413, %v411
      %v434 = vpack.c.bf16 %v414, %v412
      %v435 = vpack.c.bf16 %v417, %v415
      %v436 = vpack.c.bf16 %v418, %v416
      %v437 = vpack.c.bf16 %v421, %v419
      %v438 = vpack.c.bf16 %v422, %v420
      %v439 = vld [vmem:[%s2] sm:$0x3]
      %v441 = vlaneseq
      %v442 = vshrl.u32 %v441, 7
      %v443 = vsub.s32 0, %v442
      %v444 = vrot.slane %v439, %v443
      %v445 = vlaneseq
      %v446 = vshrl.u32 %v445, 7
      %v447 = vsub.s32 1, %v446
      %v448 = vrot.slane %v439, %v447
      %451 = vmatprep.subr.bf16.mxu0 %v424
      %452 = vmatpush1.bf16.msra.mxu0 %v423
      %453 = vmatprep.subr.bf16.mxu0 %v426
      %454 = vmatpush1.bf16.msra.mxu0 %v425
      %455 = vmatprep.subr.bf16.mxu0 %v428
      %456 = vmatpush1.bf16.msra.mxu0 %v427
      %457 = vmatprep.subr.bf16.mxu0 %v430
      %458 = vmatpush1.bf16.msra.mxu0 %v429
      %459 = vmatprep.subr.bf16.mxu0 %v432
      %460 = vmatpush1.bf16.msra.mxu0 %v431
      %461 = vmatprep.subr.bf16.mxu0 %v434
      %462 = vmatpush1.bf16.msra.mxu0 %v433
      %463 = vmatprep.subr.bf16.mxu0 %v436
      %464 = vmatpush1.bf16.msra.mxu0 %v435
      %465 = vmatprep.subr.bf16.mxu0 %v438
      %466 = vmatpush1.bf16.msra.mxu0 %v437
      %467 = vmatprep.subr.bf16.mxu0 0
      %468 = vmatpush1.bf16.msra.mxu0 0
      %469 = vmatprep.subr.bf16.mxu0 0
      %470 = vmatpush1.bf16.msra.mxu0 0
      %471 = vmatprep.subr.bf16.mxu0 0
      %472 = vmatpush1.bf16.msra.mxu0 0
      %473 = vmatprep.subr.bf16.mxu0 0
      %474 = vmatpush1.bf16.msra.mxu0 0
      %475 = vmatprep.subr.bf16.mxu0 0
      %476 = vmatpush1.bf16.msra.mxu0 0
      %477 = vmatprep.subr.bf16.mxu0 0
      %478 = vmatpush1.bf16.msra.mxu0 0
      %479 = vmatprep.subr.bf16.mxu0 0
      %480 = vmatpush1.bf16.msra.mxu0 0
      %481 = vmatprep.subr.bf16.mxu0 0
      %482 = vmatpush1.bf16.msra.mxu0 0
      %483 = vmatprep.mubr.bf16.mxu0 0
      %484 = vmatmul.mubr.bf16.gmra.mrb[0].mxu0 %v390
      %v485 = vpop.f32.mrb[0].mxu0
      %v486 = vadd.f32 %v444, %v485
      %v487 = vpop.f32.mrb[0].mxu0
      %v488 = vadd.f32 %v448, %v487
      %v489 = vpop.f32.mrb[0].mxu0
      %v490 = vadd.f32 %v444, %v489
      %v491 = vpop.f32.mrb[0].mxu0
      %v492 = vadd.f32 %v448, %v491
      %493 = vdwg.mxu0
      %v494 = vmax.f32 %v486, 0.0
      %v495 = vmax.f32 %v488, 0.0
      %v496 = vmax.f32 %v490, 0.0
      %v497 = vmax.f32 %v492, 0.0
      %vm502 = vcmask 1041408
      %v503 = vrot.slane %v494, 6
      %v504 = vrot.slane %v495, 6
      %v505 = vrot.slane %v496, 6
      %v506 = vsel %vm502, %v503, %v505
      %v507 = vrot.slane %v497, 6
      %v508 = vsel %vm502, %v504, %v507
      %v515 = vsel %vm502, 0.0, %v503
      %v516 = vsel %vm502, 0.0, %v504
      %v517 = vsel %vm502, %v505, 0.0
      %v518 = vsel %vm502, %v507, 0.0
      %v519 = vld [vmem:[%s3] sm:$0xff]
      %v520 = vld [vmem:[%s3 + $0x8] sm:$0xff]
      %v521 = vld [vmem:[%s3 + $0x10] sm:$0xff]
      %v522 = vld [vmem:[%s3 + $0x18] sm:$0xff]
      %v523 = vld [vmem:[%s3 + $0x20] sm:$0xff]
      %v524 = vld [vmem:[%s3 + $0x28] sm:$0xff]
      %v525 = vld [vmem:[%s3 + $0x30] sm:$0xff]
      %v526 = vld [vmem:[%s3 + $0x38] sm:$0xff]
      %v527 = vld [vmem:[%s3 + $0x40] sm:$0xff]
      %v528 = vld [vmem:[%s3 + $0x48] sm:$0xff]
      %v529 = vld [vmem:[%s3 + $0x50] sm:$0xff]
      %v530 = vld [vmem:[%s3 + $0x58] sm:$0xff]
      %v531 = vld [vmem:[%s3 + $0x60] sm:$0xff]
      %v532 = vld [vmem:[%s3 + $0x68] sm:$0xff]
      %v533 = vld [vmem:[%s3 + $0x70] sm:$0xff]
      %v534 = vld [vmem:[%s3 + $0x78] sm:$0xff]
      %v535 = vld [vmem:[%s3 + $0x80] sm:$0xff]
      %v536 = vld [vmem:[%s3 + $0x88] sm:$0xff]
      %v537 = vld [vmem:[%s3 + $0x90] sm:$0xff]
      %v538 = vld [vmem:[%s3 + $0x98] sm:$0xff]
      %v539 = vld [vmem:[%s3 + $0xa0] sm:$0xff]
      %v540 = vld [vmem:[%s3 + $0xa8] sm:$0xff]
      %v541 = vld [vmem:[%s3 + $0xb0] sm:$0xff]
      %v542 = vld [vmem:[%s3 + $0xb8] sm:$0xff]
      %v543 = vld [vmem:[%s3 + $0xc0] sm:$0xff]
      %v544 = vld [vmem:[%s3 + $0xc8] sm:$0xff]
      %v545 = vld [vmem:[%s3 + $0xd0] sm:$0xff]
      %v546 = vld [vmem:[%s3 + $0xd8] sm:$0xff]
      %v547 = vld [vmem:[%s3 + $0xe0] sm:$0xff]
      %v548 = vld [vmem:[%s3 + $0xe8] sm:$0xff]
      %v549 = vld [vmem:[%s3 + $0xf0] sm:$0xff]
      %v550 = vld [vmem:[%s3 + $0xf8] sm:$0xff]
      %v551 = vld [vmem:[%s3 + $0x100] sm:$0xff]
      %v552 = vld [vmem:[%s3 + $0x108] sm:$0xff]
      %v553 = vld [vmem:[%s3 + $0x110] sm:$0xff]
      %v554 = vld [vmem:[%s3 + $0x118] sm:$0xff]
      %v555 = vld [vmem:[%s3 + $0x120] sm:$0xff]
      %v556 = vld [vmem:[%s3 + $0x128] sm:$0xff]
      %v557 = vld [vmem:[%s3 + $0x130] sm:$0xff]
      %v558 = vld [vmem:[%s3 + $0x138] sm:$0xff]
      %v559 = vld [vmem:[%s3 + $0x140] sm:$0xff]
      %v560 = vld [vmem:[%s3 + $0x148] sm:$0xff]
      %v561 = vld [vmem:[%s3 + $0x150] sm:$0xff]
      %v562 = vld [vmem:[%s3 + $0x158] sm:$0xff]
      %v563 = vld [vmem:[%s3 + $0x160] sm:$0xff]
      %v564 = vld [vmem:[%s3 + $0x168] sm:$0xff]
      %v565 = vld [vmem:[%s3 + $0x170] sm:$0xff]
      %v566 = vld [vmem:[%s3 + $0x178] sm:$0xff]
      %v567 = vld [vmem:[%s3 + $0x180] sm:$0xff]
      %v568 = vld [vmem:[%s3 + $0x188] sm:$0xff]
      %v569 = vld [vmem:[%s3 + $0x190] sm:$0xff]
      %v570 = vld [vmem:[%s3 + $0x198] sm:$0xff]
      %v571 = vld [vmem:[%s3 + $0x1a0] sm:$0xff]
      %v572 = vld [vmem:[%s3 + $0x1a8] sm:$0xff]
      %v573 = vld [vmem:[%s3 + $0x1b0] sm:$0xff]
      %v574 = vld [vmem:[%s3 + $0x1b8] sm:$0xff]
      %v575 = vld [vmem:[%s3 + $0x1c0] sm:$0xff]
      %v576 = vld [vmem:[%s3 + $0x1c8] sm:$0xff]
      %v577 = vld [vmem:[%s3 + $0x1d0] sm:$0xff]
      %v578 = vld [vmem:[%s3 + $0x1d8] sm:$0xff]
      %v579 = vld [vmem:[%s3 + $0x1e0] sm:$0xff]
      %v580 = vld [vmem:[%s3 + $0x1e8] sm:$0xff]
      %v581 = vld [vmem:[%s3 + $0x1f0] sm:$0xff]
      %v582 = vld [vmem:[%s3 + $0x1f8] sm:$0xff]
      %v583 = vld [vmem:[%s3 + $0x200] sm:$0xff]
      %v584 = vld [vmem:[%s3 + $0x208] sm:$0xff]
      %v585 = vld [vmem:[%s3 + $0x210] sm:$0xff]
      %v586 = vld [vmem:[%s3 + $0x218] sm:$0xff]
      %v587 = vld [vmem:[%s3 + $0x220] sm:$0xff]
      %v588 = vld [vmem:[%s3 + $0x228] sm:$0xff]
      %v589 = vld [vmem:[%s3 + $0x230] sm:$0xff]
      %v590 = vld [vmem:[%s3 + $0x238] sm:$0xff]
      %v591 = vld [vmem:[%s3 + $0x240] sm:$0xff]
      %v592 = vld [vmem:[%s3 + $0x248] sm:$0xff]
      %v593 = vld [vmem:[%s3 + $0x250] sm:$0xff]
      %v594 = vld [vmem:[%s3 + $0x258] sm:$0xff]
      %v595 = vld [vmem:[%s3 + $0x260] sm:$0xff]
      %v596 = vld [vmem:[%s3 + $0x268] sm:$0xff]
      %v597 = vld [vmem:[%s3 + $0x270] sm:$0xff]
      %v598 = vld [vmem:[%s3 + $0x278] sm:$0xff]
      %v599 = vld [vmem:[%s3 + $0x280] sm:$0xff]
      %v600 = vld [vmem:[%s3 + $0x288] sm:$0xff]
      %v601 = vld [vmem:[%s3 + $0x290] sm:$0xff]
      %v602 = vld [vmem:[%s3 + $0x298] sm:$0xff]
      %v603 = vld [vmem:[%s3 + $0x2a0] sm:$0xff]
      %v604 = vld [vmem:[%s3 + $0x2a8] sm:$0xff]
      %v605 = vld [vmem:[%s3 + $0x2b0] sm:$0xff]
      %v606 = vld [vmem:[%s3 + $0x2b8] sm:$0xff]
      %v607 = vld [vmem:[%s3 + $0x2c0] sm:$0xff]
      %v608 = vld [vmem:[%s3 + $0x2c8] sm:$0xff]
      %v609 = vld [vmem:[%s3 + $0x2d0] sm:$0xff]
      %v610 = vld [vmem:[%s3 + $0x2d8] sm:$0xff]
      %v611 = vld [vmem:[%s3 + $0x2e0] sm:$0xff]
      %v612 = vld [vmem:[%s3 + $0x2e8] sm:$0xff]
      %v613 = vld [vmem:[%s3 + $0x2f0] sm:$0xff]
      %v614 = vld [vmem:[%s3 + $0x2f8] sm:$0xff]
      %v615 = vld [vmem:[%s3 + $0x300] sm:$0xff]
      %v616 = vld [vmem:[%s3 + $0x308] sm:$0xff]
      %v617 = vld [vmem:[%s3 + $0x310] sm:$0xff]
      %v618 = vld [vmem:[%s3 + $0x318] sm:$0xff]
      %v619 = vld [vmem:[%s3 + $0x320] sm:$0xff]
      %v620 = vld [vmem:[%s3 + $0x328] sm:$0xff]
      %v621 = vld [vmem:[%s3 + $0x330] sm:$0xff]
      %v622 = vld [vmem:[%s3 + $0x338] sm:$0xff]
      %v623 = vld [vmem:[%s3 + $0x340] sm:$0xff]
      %v624 = vld [vmem:[%s3 + $0x348] sm:$0xff]
      %v625 = vld [vmem:[%s3 + $0x350] sm:$0xff]
      %v626 = vld [vmem:[%s3 + $0x358] sm:$0xff]
      %v627 = vld [vmem:[%s3 + $0x360] sm:$0xff]
      %v628 = vld [vmem:[%s3 + $0x368] sm:$0xff]
      %v629 = vld [vmem:[%s3 + $0x370] sm:$0xff]
      %v630 = vld [vmem:[%s3 + $0x378] sm:$0xff]
      %v631 = vld [vmem:[%s3 + $0x380] sm:$0xff]
      %v632 = vld [vmem:[%s3 + $0x388] sm:$0xff]
      %v633 = vld [vmem:[%s3 + $0x390] sm:$0xff]
      %v634 = vld [vmem:[%s3 + $0x398] sm:$0xff]
      %v635 = vld [vmem:[%s3 + $0x3a0] sm:$0xff]
      %v636 = vld [vmem:[%s3 + $0x3a8] sm:$0xff]
      %v637 = vld [vmem:[%s3 + $0x3b0] sm:$0xff]
      %v638 = vld [vmem:[%s3 + $0x3b8] sm:$0xff]
      %v639 = vld [vmem:[%s3 + $0x3c0] sm:$0xff]
      %v640 = vld [vmem:[%s3 + $0x3c8] sm:$0xff]
      %v641 = vld [vmem:[%s3 + $0x3d0] sm:$0xff]
      %v642 = vld [vmem:[%s3 + $0x3d8] sm:$0xff]
      %v643 = vld [vmem:[%s3 + $0x3e0] sm:$0xff]
      %v644 = vld [vmem:[%s3 + $0x3e8] sm:$0xff]
      %v645 = vld [vmem:[%s3 + $0x3f0] sm:$0xff]
      %v646 = vld [vmem:[%s3 + $0x3f8] sm:$0xff]
      %v647 = vld [vmem:[%s3 + $0x400] sm:$0xff]
      %v648 = vld [vmem:[%s3 + $0x408] sm:$0xff]
      %v649 = vld [vmem:[%s3 + $0x410] sm:$0xff]
      %v650 = vld [vmem:[%s3 + $0x418] sm:$0xff]
      %v651 = vld [vmem:[%s3 + $0x420] sm:$0xff]
      %v652 = vld [vmem:[%s3 + $0x428] sm:$0xff]
      %v653 = vld [vmem:[%s3 + $0x430] sm:$0xff]
      %v654 = vld [vmem:[%s3 + $0x438] sm:$0xff]
      %v655 = vld [vmem:[%s3 + $0x440] sm:$0xff]
      %v656 = vld [vmem:[%s3 + $0x448] sm:$0xff]
      %v657 = vld [vmem:[%s3 + $0x450] sm:$0xff]
      %v658 = vld [vmem:[%s3 + $0x458] sm:$0xff]
      %v659 = vld [vmem:[%s3 + $0x460] sm:$0xff]
      %v660 = vld [vmem:[%s3 + $0x468] sm:$0xff]
      %v661 = vld [vmem:[%s3 + $0x470] sm:$0xff]
      %v662 = vld [vmem:[%s3 + $0x478] sm:$0xff]
      %v663 = vld [vmem:[%s3 + $0x480] sm:$0xff]
      %v664 = vld [vmem:[%s3 + $0x488] sm:$0xff]
      %v665 = vld [vmem:[%s3 + $0x490] sm:$0xff]
      %v666 = vld [vmem:[%s3 + $0x498] sm:$0xff]
      %v667 = vld [vmem:[%s3 + $0x4a0] sm:$0xff]
      %v668 = vld [vmem:[%s3 + $0x4a8] sm:$0xff]
      %v669 = vld [vmem:[%s3 + $0x4b0] sm:$0xff]
      %v670 = vld [vmem:[%s3 + $0x4b8] sm:$0xff]
      %v671 = vld [vmem:[%s3 + $0x4c0] sm:$0xff]
      %v672 = vld [vmem:[%s3 + $0x4c8] sm:$0xff]
      %v673 = vld [vmem:[%s3 + $0x4d0] sm:$0xff]
      %v674 = vld [vmem:[%s3 + $0x4d8] sm:$0xff]
      %v675 = vld [vmem:[%s3 + $0x4e0] sm:$0xff]
      %v676 = vld [vmem:[%s3 + $0x4e8] sm:$0xff]
      %v677 = vld [vmem:[%s3 + $0x4f0] sm:$0xff]
      %v678 = vld [vmem:[%s3 + $0x4f8] sm:$0xff]
      %v679 = vpack.c.bf16 %v520, %v519
      %v680 = vpack.c.bf16 %v522, %v521
      %v681 = vpack.c.bf16 %v524, %v523
      %v682 = vpack.c.bf16 %v526, %v525
      %v683 = vpack.c.bf16 %v528, %v527
      %v684 = vpack.c.bf16 %v530, %v529
      %v685 = vpack.c.bf16 %v532, %v531
      %v686 = vpack.c.bf16 %v534, %v533
      %v687 = vpack.c.bf16 %v536, %v535
      %v688 = vpack.c.bf16 %v538, %v537
      %v689 = vpack.c.bf16 %v540, %v539
      %v690 = vpack.c.bf16 %v542, %v541
      %v691 = vpack.c.bf16 %v544, %v543
      %v692 = vpack.c.bf16 %v546, %v545
      %v693 = vpack.c.bf16 %v548, %v547
      %v694 = vpack.c.bf16 %v550, %v549
      %v695 = vpack.c.bf16 %v552, %v551
      %v696 = vpack.c.bf16 %v554, %v553
      %v697 = vpack.c.bf16 %v556, %v555
      %v698 = vpack.c.bf16 %v558, %v557
      %v699 = vpack.c.bf16 %v560, %v559
      %v700 = vpack.c.bf16 %v562, %v561
      %v701 = vpack.c.bf16 %v564, %v563
      %v702 = vpack.c.bf16 %v566, %v565
      %v703 = vpack.c.bf16 %v568, %v567
      %v704 = vpack.c.bf16 %v570, %v569
      %v705 = vpack.c.bf16 %v572, %v571
      %v706 = vpack.c.bf16 %v574, %v573
      %v707 = vpack.c.bf16 %v576, %v575
      %v708 = vpack.c.bf16 %v578, %v577
      %v709 = vpack.c.bf16 %v580, %v579
      %v710 = vpack.c.bf16 %v582, %v581
      %v711 = vpack.c.bf16 %v584, %v583
      %v712 = vpack.c.bf16 %v586, %v585
      %v713 = vpack.c.bf16 %v588, %v587
      %v714 = vpack.c.bf16 %v590, %v589
      %v715 = vpack.c.bf16 %v592, %v591
      %v716 = vpack.c.bf16 %v594, %v593
      %v717 = vpack.c.bf16 %v596, %v595
      %v718 = vpack.c.bf16 %v598, %v597
      %v719 = vpack.c.bf16 %v600, %v599
      %v720 = vpack.c.bf16 %v602, %v601
      %v721 = vpack.c.bf16 %v604, %v603
      %v722 = vpack.c.bf16 %v606, %v605
      %v723 = vpack.c.bf16 %v608, %v607
      %v724 = vpack.c.bf16 %v610, %v609
      %v725 = vpack.c.bf16 %v612, %v611
      %v726 = vpack.c.bf16 %v614, %v613
      %v727 = vpack.c.bf16 %v616, %v615
      %v728 = vpack.c.bf16 %v618, %v617
      %v729 = vpack.c.bf16 %v620, %v619
      %v730 = vpack.c.bf16 %v622, %v621
      %v731 = vpack.c.bf16 %v624, %v623
      %v732 = vpack.c.bf16 %v626, %v625
      %v733 = vpack.c.bf16 %v628, %v627
      %v734 = vpack.c.bf16 %v630, %v629
      %v735 = vpack.c.bf16 %v632, %v631
      %v736 = vpack.c.bf16 %v634, %v633
      %v737 = vpack.c.bf16 %v636, %v635
      %v738 = vpack.c.bf16 %v638, %v637
      %v739 = vpack.c.bf16 %v640, %v639
      %v740 = vpack.c.bf16 %v642, %v641
      %v741 = vpack.c.bf16 %v644, %v643
      %v742 = vpack.c.bf16 %v646, %v645
      %v743 = vpack.c.bf16 %v648, %v647
      %v744 = vpack.c.bf16 %v650, %v649
      %v745 = vpack.c.bf16 %v652, %v651
      %v746 = vpack.c.bf16 %v654, %v653
      %v747 = vpack.c.bf16 %v656, %v655
      %v748 = vpack.c.bf16 %v658, %v657
      %v749 = vpack.c.bf16 %v660, %v659
      %v750 = vpack.c.bf16 %v662, %v661
      %v751 = vpack.c.bf16 %v664, %v663
      %v752 = vpack.c.bf16 %v666, %v665
      %v753 = vpack.c.bf16 %v668, %v667
      %v754 = vpack.c.bf16 %v670, %v669
      %v755 = vpack.c.bf16 %v672, %v671
      %v756 = vpack.c.bf16 %v674, %v673
      %v757 = vpack.c.bf16 %v676, %v675
      %v758 = vpack.c.bf16 %v678, %v677
      %v759 = vpack.c.bf16 %v506, %v515
      %v760 = vpack.c.bf16 %v508, %v516
      %v761 = vpack.c.bf16 %v517, %v517
      %v762 = vpack.c.bf16 %v518, %v518
      %vm763 = vsmask.f32 7424
      %v765 = vshrl.u32 %v759, 16
      %v767 = vshll.u32 %v759, 16
      %v769 = vrot.slane %v767, 1
      %v770 = vor.u32 %v765, %v769
      %v772 = vshll.u32 %v761, 16
      %v774 = vrot.slane %v772, 1
      %v775 = vsel %vm763, %v770, %v774
      %v777 = vshrl.u32 %v760, 16
      %v779 = vshll.u32 %v760, 16
      %v781 = vrot.slane %v779, 1
      %v782 = vor.u32 %v777, %v781
      %v784 = vshll.u32 %v762, 16
      %v786 = vrot.slane %v784, 1
      %v787 = vsel %vm763, %v782, %v786
      %790 = vmatprep.subr.bf16.mxu0 0
      %791 = vmatpush1.bf16.msra.mxu0 %v695
      %792 = vmatprep.subr.bf16.mxu0 0
      %793 = vmatpush1.bf16.msra.mxu0 %v696
      %794 = vmatprep.subr.bf16.mxu0 0
      %795 = vmatpush1.bf16.msra.mxu0 %v697
      %796 = vmatprep.subr.bf16.mxu0 0
      %797 = vmatpush1.bf16.msra.mxu0 %v698
      %798 = vmatprep.subr.bf16.mxu0 0
      %799 = vmatpush1.bf16.msra.mxu0 %v699
      %800 = vmatprep.subr.bf16.mxu0 0
      %801 = vmatpush1.bf16.msra.mxu0 %v700
      %802 = vmatprep.subr.bf16.mxu0 0
      %803 = vmatpush1.bf16.msra.mxu0 %v701
      %804 = vmatprep.subr.bf16.mxu0 0
      %805 = vmatpush1.bf16.msra.mxu0 %v702
      %806 = vmatprep.subr.bf16.mxu0 0
      %807 = vmatpush1.bf16.msra.mxu0 %v703
      %808 = vmatprep.subr.bf16.mxu0 0
      %809 = vmatpush1.bf16.msra.mxu0 %v704
      %810 = vmatprep.subr.bf16.mxu0 0
      %811 = vmatpush1.bf16.msra.mxu0 %v705
      %812 = vmatprep.subr.bf16.mxu0 0
      %813 = vmatpush1.bf16.msra.mxu0 %v706
      %814 = vmatprep.subr.bf16.mxu0 0
      %815 = vmatpush1.bf16.msra.mxu0 %v707
      %816 = vmatprep.subr.bf16.mxu0 0
      %817 = vmatpush1.bf16.msra.mxu0 %v708
      %818 = vmatprep.subr.bf16.mxu0 0
      %819 = vmatpush1.bf16.msra.mxu0 %v709
      %820 = vmatprep.subr.bf16.mxu0 0
      %821 = vmatpush1.bf16.msra.mxu0 %v710
      %822 = vmatprep.mubr.bf16.mxu0 %v787
      %823 = vmatmul.mubr.bf16.gmra.mrb[0].mxu0 %v775
      %v824 = vpop.f32.mrb[0].mxu0
      %v825 = vadd.f32 0.0, %v824
      %v826 = vpop.f32.mrb[0].mxu0
      %v827 = vpop.f32.mrb[0].mxu0
      %v828 = vadd.f32 0.0, %v827
      %v829 = vpop.f32.mrb[0].mxu0
      %830 = vdwg.mxu0
      %831 = vmatprep.subr.bf16.mxu0 0
      %832 = vmatpush1.bf16.msra.mxu0 %v679
      %833 = vmatprep.subr.bf16.mxu0 0
      %834 = vmatpush1.bf16.msra.mxu0 %v680
      %835 = vmatprep.subr.bf16.mxu0 0
      %836 = vmatpush1.bf16.msra.mxu0 %v681
      %837 = vmatprep.subr.bf16.mxu0 0
      %838 = vmatpush1.bf16.msra.mxu0 %v682
      %839 = vmatprep.subr.bf16.mxu0 0
      %840 = vmatpush1.bf16.msra.mxu0 %v683
      %841 = vmatprep.subr.bf16.mxu0 0
      %842 = vmatpush1.bf16.msra.mxu0 %v684
      %843 = vmatprep.subr.bf16.mxu0 0
      %844 = vmatpush1.bf16.msra.mxu0 %v685
      %845 = vmatprep.subr.bf16.mxu0 0
      %846 = vmatpush1.bf16.msra.mxu0 %v686
      %847 = vmatprep.subr.bf16.mxu0 0
      %848 = vmatpush1.bf16.msra.mxu0 %v687
      %849 = vmatprep.subr.bf16.mxu0 0
      %850 = vmatpush1.bf16.msra.mxu0 %v688
      %851 = vmatprep.subr.bf16.mxu0 0
      %852 = vmatpush1.bf16.msra.mxu0 %v689
      %853 = vmatprep.subr.bf16.mxu0 0
      %854 = vmatpush1.bf16.msra.mxu0 %v690
      %855 = vmatprep.subr.bf16.mxu0 0
      %856 = vmatpush1.bf16.msra.mxu0 %v691
      %857 = vmatprep.subr.bf16.mxu0 0
      %858 = vmatpush1.bf16.msra.mxu0 %v692
      %859 = vmatprep.subr.bf16.mxu0 0
      %860 = vmatpush1.bf16.msra.mxu0 %v693
      %861 = vmatprep.subr.bf16.mxu0 0
      %862 = vmatpush1.bf16.msra.mxu0 %v694
      %863 = vmatprep.mubr.bf16.mxu0 %v760
      %864 = vmatmul.mubr.bf16.gmra.mrb[0].mxu0 %v759
      %v865 = vpop.f32.mrb[0].mxu0
      %v866 = vadd.f32 %v825, %v865
      %v867 = vpop.f32.mrb[0].mxu0
      %v868 = vpop.f32.mrb[0].mxu0
      %v869 = vadd.f32 %v828, %v868
      %v870 = vpop.f32.mrb[0].mxu0
      %871 = vdwg.mxu0
      %vm876 = vcmask 1046528
      %v877 = vrot.slane %v759, 1
      %v878 = vrot.slane %v761, 1
      %v879 = vsel %vm876, %v877, %v878
      %v880 = vrot.slane %v760, 1
      %v881 = vrot.slane %v762, 1
      %v882 = vsel %vm876, %v880, %v881
      %885 = vmatprep.subr.bf16.mxu0 0
      %886 = vmatpush1.bf16.msra.mxu0 %v711
      %887 = vmatprep.subr.bf16.mxu0 0
      %888 = vmatpush1.bf16.msra.mxu0 %v712
      %889 = vmatprep.subr.bf16.mxu0 0
      %890 = vmatpush1.bf16.msra.mxu0 %v713
      %891 = vmatprep.subr.bf16.mxu0 0
      %892 = vmatpush1.bf16.msra.mxu0 %v714
      %893 = vmatprep.subr.bf16.mxu0 0
      %894 = vmatpush1.bf16.msra.mxu0 %v715
      %895 = vmatprep.subr.bf16.mxu0 0
      %896 = vmatpush1.bf16.msra.mxu0 %v716
      %897 = vmatprep.subr.bf16.mxu0 0
      %898 = vmatpush1.bf16.msra.mxu0 %v717
      %899 = vmatprep.subr.bf16.mxu0 0
      %900 = vmatpush1.bf16.msra.mxu0 %v718
      %901 = vmatprep.subr.bf16.mxu0 0
      %902 = vmatpush1.bf16.msra.mxu0 %v719
      %903 = vmatprep.subr.bf16.mxu0 0
      %904 = vmatpush1.bf16.msra.mxu0 %v720
      %905 = vmatprep.subr.bf16.mxu0 0
      %906 = vmatpush1.bf16.msra.mxu0 %v721
      %907 = vmatprep.subr.bf16.mxu0 0
      %908 = vmatpush1.bf16.msra.mxu0 %v722
      %909 = vmatprep.subr.bf16.mxu0 0
      %910 = vmatpush1.bf16.msra.mxu0 %v723
      %911 = vmatprep.subr.bf16.mxu0 0
      %912 = vmatpush1.bf16.msra.mxu0 %v724
      %913 = vmatprep.subr.bf16.mxu0 0
      %914 = vmatpush1.bf16.msra.mxu0 %v725
      %915 = vmatprep.subr.bf16.mxu0 0
      %916 = vmatpush1.bf16.msra.mxu0 %v726
      %917 = vmatprep.mubr.bf16.mxu0 %v882
      %918 = vmatmul.mubr.bf16.gmra.mrb[0].mxu0 %v879
      %v919 = vpop.f32.mrb[0].mxu0
      %v920 = vadd.f32 0.0, %v919
      %v921 = vpop.f32.mrb[0].mxu0
      %v922 = vpop.f32.mrb[0].mxu0
      %v923 = vadd.f32 0.0, %v922
      %v924 = vpop.f32.mrb[0].mxu0
      %925 = vdwg.mxu0
      %v926 = vadd.f32 %v866, %v920
      %v927 = vadd.f32 %v869, %v923
      %vm928 = vsmask.f32 6400
      %v929 = vrot.slane %v765, 1
      %v930 = vrot.slane %v767, 2
      %v931 = vor.u32 %v929, %v930
      %v932 = vshrl.u32 %v761, 16
      %v934 = vrot.slane %v932, 1
      %v935 = vrot.slane %v772, 2
      %v936 = vor.u32 %v934, %v935
      %v937 = vsel %vm928, %v931, %v936
      %v938 = vrot.slane %v777, 1
      %v939 = vrot.slane %v779, 2
      %v940 = vor.u32 %v938, %v939
      %v941 = vshrl.u32 %v762, 16
      %v943 = vrot.slane %v941, 1
      %v944 = vrot.slane %v784, 2
      %v945 = vor.u32 %v943, %v944
      %v946 = vsel %vm928, %v940, %v945
      %949 = vmatprep.subr.bf16.mxu0 0
      %950 = vmatpush1.bf16.msra.mxu0 %v727
      %951 = vmatprep.subr.bf16.mxu0 0
      %952 = vmatpush1.bf16.msra.mxu0 %v728
      %953 = vmatprep.subr.bf16.mxu0 0
      %954 = vmatpush1.bf16.msra.mxu0 %v729
      %955 = vmatprep.subr.bf16.mxu0 0
      %956 = vmatpush1.bf16.msra.mxu0 %v730
      %957 = vmatprep.subr.bf16.mxu0 0
      %958 = vmatpush1.bf16.msra.mxu0 %v731
      %959 = vmatprep.subr.bf16.mxu0 0
      %960 = vmatpush1.bf16.msra.mxu0 %v732
      %961 = vmatprep.subr.bf16.mxu0 0
      %962 = vmatpush1.bf16.msra.mxu0 %v733
      %963 = vmatprep.subr.bf16.mxu0 0
      %964 = vmatpush1.bf16.msra.mxu0 %v734
      %965 = vmatprep.subr.bf16.mxu0 0
      %966 = vmatpush1.bf16.msra.mxu0 %v735
      %967 = vmatprep.subr.bf16.mxu0 0
      %968 = vmatpush1.bf16.msra.mxu0 %v736
      %969 = vmatprep.subr.bf16.mxu0 0
      %970 = vmatpush1.bf16.msra.mxu0 %v737
      %971 = vmatprep.subr.bf16.mxu0 0
      %972 = vmatpush1.bf16.msra.mxu0 %v738
      %973 = vmatprep.subr.bf16.mxu0 0
      %974 = vmatpush1.bf16.msra.mxu0 %v739
      %975 = vmatprep.subr.bf16.mxu0 0
      %976 = vmatpush1.bf16.msra.mxu0 %v740
      %977 = vmatprep.subr.bf16.mxu0 0
      %978 = vmatpush1.bf16.msra.mxu0 %v741
      %979 = vmatprep.subr.bf16.mxu0 0
      %980 = vmatpush1.bf16.msra.mxu0 %v742
      %981 = vmatprep.mubr.bf16.mxu0 %v946
      %982 = vmatmul.mubr.bf16.gmra.mrb[0].mxu0 %v937
      %v983 = vpop.f32.mrb[0].mxu0
      %v984 = vadd.f32 0.0, %v983
      %v985 = vpop.f32.mrb[0].mxu0
      %v986 = vpop.f32.mrb[0].mxu0
      %v987 = vadd.f32 0.0, %v986
      %v988 = vpop.f32.mrb[0].mxu0
      %989 = vdwg.mxu0
      %v990 = vadd.f32 %v926, %v984
      %v991 = vadd.f32 %v927, %v987
      %vm992 = vcmask 1045504
      %v993 = vrot.slane %v759, 2
      %v994 = vrot.slane %v761, 2
      %v995 = vsel %vm992, %v993, %v994
      %v996 = vrot.slane %v760, 2
      %v997 = vrot.slane %v762, 2
      %v998 = vsel %vm992, %v996, %v997
      %1001 = vmatprep.subr.bf16.mxu0 0
      %1002 = vmatpush1.bf16.msra.mxu0 %v743
      %1003 = vmatprep.subr.bf16.mxu0 0
      %1004 = vmatpush1.bf16.msra.mxu0 %v744
      %1005 = vmatprep.subr.bf16.mxu0 0
      %1006 = vmatpush1.bf16.msra.mxu0 %v745
      %1007 = vmatprep.subr.bf16.mxu0 0
      %1008 = vmatpush1.bf16.msra.mxu0 %v746
      %1009 = vmatprep.subr.bf16.mxu0 0
      %1010 = vmatpush1.bf16.msra.mxu0 %v747
      %1011 = vmatprep.subr.bf16.mxu0 0
      %1012 = vmatpush1.bf16.msra.mxu0 %v748
      %1013 = vmatprep.subr.bf16.mxu0 0
      %1014 = vmatpush1.bf16.msra.mxu0 %v749
      %1015 = vmatprep.subr.bf16.mxu0 0
      %1016 = vmatpush1.bf16.msra.mxu0 %v750
      %1017 = vmatprep.subr.bf16.mxu0 0
      %1018 = vmatpush1.bf16.msra.mxu0 %v751
      %1019 = vmatprep.subr.bf16.mxu0 0
      %1020 = vmatpush1.bf16.msra.mxu0 %v752
      %1021 = vmatprep.subr.bf16.mxu0 0
      %1022 = vmatpush1.bf16.msra.mxu0 %v753
      %1023 = vmatprep.subr.bf16.mxu0 0
      %1024 = vmatpush1.bf16.msra.mxu0 %v754
      %1025 = vmatprep.subr.bf16.mxu0 0
      %1026 = vmatpush1.bf16.msra.mxu0 %v755
      %1027 = vmatprep.subr.bf16.mxu0 0
      %1028 = vmatpush1.bf16.msra.mxu0 %v756
      %1029 = vmatprep.subr.bf16.mxu0 0
      %1030 = vmatpush1.bf16.msra.mxu0 %v757
      %1031 = vmatprep.subr.bf16.mxu0 0
      %1032 = vmatpush1.bf16.msra.mxu0 %v758
      %1033 = vmatprep.mubr.bf16.mxu0 %v998
      %1034 = vmatmul.mubr.bf16.gmra.mrb[0].mxu0 %v995
      %v1035 = vpop.f32.mrb[0].mxu0
      %v1036 = vadd.f32 0.0, %v1035
      %v1037 = vpop.f32.mrb[0].mxu0
      %v1038 = vpop.f32.mrb[0].mxu0
      %v1039 = vadd.f32 0.0, %v1038
      %v1040 = vpop.f32.mrb[0].mxu0
      %1041 = vdwg.mxu0
      %v1042 = vadd.f32 %v990, %v1036
      %v1043 = vadd.f32 %v991, %v1039
      %v1044 = vld [vmem:[%s4] sm:$0x1]
      %v1046 = vlaneseq
      %v1047 = vshrl.u32 %v1046, 7
      %v1048 = vsub.s32 0, %v1047
      %v1049 = vrot.slane %v1044, %v1048
      %v1051 = vadd.f32 %v1042, %v1049
      %v1052 = vadd.f32 %v1043, %v1049
      %v1053 = vmax.f32 %v1051, 0.0
      %v1054 = vmax.f32 %v1052, 0.0
      %v1055 = vadd.f32 %v388, %v1053
      %v1056 = vadd.f32 %v389, %v1054
      %v1057 = vld [vmem:[%s5] sm:$0x1]
      %v1058 = vld [vmem:[%s6] sm:$0x1]
      %1059 = vadd.xlane.f32.xlu0 %v1055
      %v1060 = vpop.xlane.xlu0 %1059
      %1061 = vadd.xlane.f32.xlu0 %v1056
      %v1062 = vpop.xlane.xlu0 %1061
      %v1063 = vrcp.pop 128.0
      %v1064 = vmul.f32 %v1060, %v1063
      %v1065 = vmul.f32 %v1062, %v1063
      %v1066 = vsub.f32 %v1055, %v1064
      %v1067 = vsub.f32 %v1056, %v1065
      %v1068 = vmul.f32 %v1066, %v1066
      %v1069 = vmul.f32 %v1067, %v1067
      %1070 = vadd.xlane.f32.xlu0 %v1068
      %v1071 = vpop.xlane.xlu0 %1070
      %1072 = vadd.xlane.f32.xlu0 %v1069
      %v1073 = vpop.xlane.xlu0 %1072
      %v1074 = vmul.f32 %v1071, %v1063
      %v1075 = vmul.f32 %v1073, %v1063
      %v1076 = vadd.f32 %v1074, 1e-05
      %v1077 = vadd.f32 %v1075, 1e-05
      %v1078 = vrsqrt.pop %v1076
      %v1079 = vrsqrt.pop %v1077
      %v1080 = vmul.f32 %v1066, %v1078
      %v1081 = vmul.f32 %v1067, %v1079
      %v1083 = vlaneseq
      %v1084 = vshrl.u32 %v1083, 7
      %v1085 = vsub.s32 0, %v1084
      %v1086 = vrot.slane %v1057, %v1085
      %v1088 = vmul.f32 %v1080, %v1086
      %v1089 = vmul.f32 %v1081, %v1086
      %v1091 = vlaneseq
      %v1092 = vshrl.u32 %v1091, 7
      %v1093 = vsub.s32 0, %v1092
      %v1094 = vrot.slane %v1058, %v1093
      %v1096 = vadd.f32 %v1088, %v1094
      %v1097 = vadd.f32 %v1089, %v1094
      %v1098 = vpack.c.bf16 %v1097, %v1096
      %v1099 = vld [vmem:[%s7] sm:$0xff]
      %v1100 = vld [vmem:[%s7 + $0x8] sm:$0xff]
      %v1101 = vld [vmem:[%s7 + $0x10] sm:$0xff]
      %v1102 = vld [vmem:[%s7 + $0x18] sm:$0xff]
      %v1103 = vld [vmem:[%s7 + $0x20] sm:$0xff]
      %v1104 = vld [vmem:[%s7 + $0x28] sm:$0xff]
      %v1105 = vld [vmem:[%s7 + $0x30] sm:$0xff]
      %v1106 = vld [vmem:[%s7 + $0x38] sm:$0xff]
      %v1107 = vld [vmem:[%s7 + $0x40] sm:$0xff]
      %v1108 = vld [vmem:[%s7 + $0x48] sm:$0xff]
      %v1109 = vld [vmem:[%s7 + $0x50] sm:$0xff]
      %v1110 = vld [vmem:[%s7 + $0x58] sm:$0xff]
      %v1111 = vld [vmem:[%s7 + $0x60] sm:$0xff]
      %v1112 = vld [vmem:[%s7 + $0x68] sm:$0xff]
      %v1113 = vld [vmem:[%s7 + $0x70] sm:$0xff]
      %v1114 = vld [vmem:[%s7 + $0x78] sm:$0xff]
      %v1115 = vld [vmem:[%s7 + $0x80] sm:$0xff]
      %v1116 = vld [vmem:[%s7 + $0x88] sm:$0xff]
      %v1117 = vld [vmem:[%s7 + $0x90] sm:$0xff]
      %v1118 = vld [vmem:[%s7 + $0x98] sm:$0xff]
      %v1119 = vld [vmem:[%s7 + $0xa0] sm:$0xff]
      %v1120 = vld [vmem:[%s7 + $0xa8] sm:$0xff]
      %v1121 = vld [vmem:[%s7 + $0xb0] sm:$0xff]
      %v1122 = vld [vmem:[%s7 + $0xb8] sm:$0xff]
      %v1123 = vld [vmem:[%s7 + $0xc0] sm:$0xff]
      %v1124 = vld [vmem:[%s7 + $0xc8] sm:$0xff]
      %v1125 = vld [vmem:[%s7 + $0xd0] sm:$0xff]
      %v1126 = vld [vmem:[%s7 + $0xd8] sm:$0xff]
      %v1127 = vld [vmem:[%s7 + $0xe0] sm:$0xff]
      %v1128 = vld [vmem:[%s7 + $0xe8] sm:$0xff]
      %v1129 = vld [vmem:[%s7 + $0xf0] sm:$0xff]
      %v1130 = vld [vmem:[%s7 + $0xf8] sm:$0xff]
      %v1131 = vld [vmem:[%s7 + $0x100] sm:$0xff]
      %v1132 = vld [vmem:[%s7 + $0x108] sm:$0xff]
      %v1133 = vld [vmem:[%s7 + $0x110] sm:$0xff]
      %v1134 = vld [vmem:[%s7 + $0x118] sm:$0xff]
      %v1135 = vld [vmem:[%s7 + $0x120] sm:$0xff]
      %v1136 = vld [vmem:[%s7 + $0x128] sm:$0xff]
      %v1137 = vld [vmem:[%s7 + $0x130] sm:$0xff]
      %v1138 = vld [vmem:[%s7 + $0x138] sm:$0xff]
      %v1139 = vld [vmem:[%s7 + $0x140] sm:$0xff]
      %v1140 = vld [vmem:[%s7 + $0x148] sm:$0xff]
      %v1141 = vld [vmem:[%s7 + $0x150] sm:$0xff]
      %v1142 = vld [vmem:[%s7 + $0x158] sm:$0xff]
      %v1143 = vld [vmem:[%s7 + $0x160] sm:$0xff]
      %v1144 = vld [vmem:[%s7 + $0x168] sm:$0xff]
      %v1145 = vld [vmem:[%s7 + $0x170] sm:$0xff]
      %v1146 = vld [vmem:[%s7 + $0x178] sm:$0xff]
      %v1147 = vld [vmem:[%s7 + $0x180] sm:$0xff]
      %v1148 = vld [vmem:[%s7 + $0x188] sm:$0xff]
      %v1149 = vld [vmem:[%s7 + $0x190] sm:$0xff]
      %v1150 = vld [vmem:[%s7 + $0x198] sm:$0xff]
      %v1151 = vld [vmem:[%s7 + $0x1a0] sm:$0xff]
      %v1152 = vld [vmem:[%s7 + $0x1a8] sm:$0xff]
      %v1153 = vld [vmem:[%s7 + $0x1b0] sm:$0xff]
      %v1154 = vld [vmem:[%s7 + $0x1b8] sm:$0xff]
      %v1155 = vld [vmem:[%s7 + $0x1c0] sm:$0xff]
      %v1156 = vld [vmem:[%s7 + $0x1c8] sm:$0xff]
      %v1157 = vld [vmem:[%s7 + $0x1d0] sm:$0xff]
      %v1158 = vld [vmem:[%s7 + $0x1d8] sm:$0xff]
      %v1159 = vld [vmem:[%s7 + $0x1e0] sm:$0xff]
      %v1160 = vld [vmem:[%s7 + $0x1e8] sm:$0xff]
      %v1161 = vld [vmem:[%s7 + $0x1f0] sm:$0xff]
      %v1162 = vld [vmem:[%s7 + $0x1f8] sm:$0xff]
      %v1163 = vpack.c.bf16 %v1103, %v1099
      %v1164 = vpack.c.bf16 %v1104, %v1100
      %v1165 = vpack.c.bf16 %v1105, %v1101
      %v1166 = vpack.c.bf16 %v1106, %v1102
      %v1167 = vpack.c.bf16 %v1111, %v1107
      %v1168 = vpack.c.bf16 %v1112, %v1108
      %v1169 = vpack.c.bf16 %v1113, %v1109
      %v1170 = vpack.c.bf16 %v1114, %v1110
      %v1171 = vpack.c.bf16 %v1119, %v1115
      %v1172 = vpack.c.bf16 %v1120, %v1116
      %v1173 = vpack.c.bf16 %v1121, %v1117
      %v1174 = vpack.c.bf16 %v1122, %v1118
      %v1175 = vpack.c.bf16 %v1127, %v1123
      %v1176 = vpack.c.bf16 %v1128, %v1124
      %v1177 = vpack.c.bf16 %v1129, %v1125
      %v1178 = vpack.c.bf16 %v1130, %v1126
      %v1179 = vpack.c.bf16 %v1135, %v1131
      %v1180 = vpack.c.bf16 %v1136, %v1132
      %v1181 = vpack.c.bf16 %v1137, %v1133
      %v1182 = vpack.c.bf16 %v1138, %v1134
      %v1183 = vpack.c.bf16 %v1143, %v1139
      %v1184 = vpack.c.bf16 %v1144, %v1140
      %v1185 = vpack.c.bf16 %v1145, %v1141
      %v1186 = vpack.c.bf16 %v1146, %v1142
      %v1187 = vpack.c.bf16 %v1151, %v1147
      %v1188 = vpack.c.bf16 %v1152, %v1148
      %v1189 = vpack.c.bf16 %v1153, %v1149
      %v1190 = vpack.c.bf16 %v1154, %v1150
      %v1191 = vpack.c.bf16 %v1159, %v1155
      %v1192 = vpack.c.bf16 %v1160, %v1156
      %v1193 = vpack.c.bf16 %v1161, %v1157
      %v1194 = vpack.c.bf16 %v1162, %v1158
      %v1195 = vld [vmem:[%s8] sm:$0xf]
      %v1197 = vlaneseq
      %v1198 = vshrl.u32 %v1197, 7
      %v1199 = vsub.s32 0, %v1198
      %v1200 = vrot.slane %v1195, %v1199
      %v1201 = vlaneseq
      %v1202 = vshrl.u32 %v1201, 7
      %v1203 = vsub.s32 1, %v1202
      %v1204 = vrot.slane %v1195, %v1203
      %v1205 = vlaneseq
      %v1206 = vshrl.u32 %v1205, 7
      %v1207 = vsub.s32 2, %v1206
      %v1208 = vrot.slane %v1195, %v1207
      %v1209 = vlaneseq
      %v1210 = vshrl.u32 %v1209, 7
      %v1211 = vsub.s32 3, %v1210
      %v1212 = vrot.slane %v1195, %v1211
      %1217 = vmatprep.subr.bf16.mxu0 %v1164
      %1218 = vmatpush1.bf16.msra.mxu0 %v1163
      %1219 = vmatprep.subr.bf16.mxu0 %v1168
      %1220 = vmatpush1.bf16.msra.mxu0 %v1167
      %1221 = vmatprep.subr.bf16.mxu0 %v1172
      %1222 = vmatpush1.bf16.msra.mxu0 %v1171
      %1223 = vmatprep.subr.bf16.mxu0 %v1176
      %1224 = vmatpush1.bf16.msra.mxu0 %v1175
      %1225 = vmatprep.subr.bf16.mxu0 %v1180
      %1226 = vmatpush1.bf16.msra.mxu0 %v1179
      %1227 = vmatprep.subr.bf16.mxu0 %v1184
      %1228 = vmatpush1.bf16.msra.mxu0 %v1183
      %1229 = vmatprep.subr.bf16.mxu0 %v1188
      %1230 = vmatpush1.bf16.msra.mxu0 %v1187
      %1231 = vmatprep.subr.bf16.mxu0 %v1192
      %1232 = vmatpush1.bf16.msra.mxu0 %v1191
      %1233 = vmatprep.subr.bf16.mxu0 0
      %1234 = vmatpush1.bf16.msra.mxu0 0
      %1235 = vmatprep.subr.bf16.mxu0 0
      %1236 = vmatpush1.bf16.msra.mxu0 0
      %1237 = vmatprep.subr.bf16.mxu0 0
      %1238 = vmatpush1.bf16.msra.mxu0 0
      %1239 = vmatprep.subr.bf16.mxu0 0
      %1240 = vmatpush1.bf16.msra.mxu0 0
      %1241 = vmatprep.subr.bf16.mxu0 0
      %1242 = vmatpush1.bf16.msra.mxu0 0
      %1243 = vmatprep.subr.bf16.mxu0 0
      %1244 = vmatpush1.bf16.msra.mxu0 0
      %1245 = vmatprep.subr.bf16.mxu0 0
      %1246 = vmatpush1.bf16.msra.mxu0 0
      %1247 = vmatprep.subr.bf16.mxu0 0
      %1248 = vmatpush1.bf16.msra.mxu0 0
      %1249 = vmatprep.mubr.bf16.mxu0 0
      %1250 = vmatmul.mubr.bf16.gmra.mrb[0].mxu0 %v1098
      %v1251 = vpop.f32.mrb[0].mxu0
      %v1252 = vadd.f32 %v1200, %v1251
      %v1253 = vpop.f32.mrb[0].mxu0
      %v1254 = vadd.f32 %v1204, %v1253
      %v1255 = vpop.f32.mrb[0].mxu0
      %v1256 = vadd.f32 %v1200, %v1255
      %v1257 = vpop.f32.mrb[0].mxu0
      %v1258 = vadd.f32 %v1204, %v1257
      %1259 = vdwg.mxu0
      %1260 = vmatprep.subr.bf16.mxu0 %v1166
      %1261 = vmatpush1.bf16.msra.mxu0 %v1165
      %1262 = vmatprep.subr.bf16.mxu0 %v1170
      %1263 = vmatpush1.bf16.msra.mxu0 %v1169
      %1264 = vmatprep.subr.bf16.mxu0 %v1174
      %1265 = vmatpush1.bf16.msra.mxu0 %v1173
      %1266 = vmatprep.subr.bf16.mxu0 %v1178
      %1267 = vmatpush1.bf16.msra.mxu0 %v1177
      %1268 = vmatprep.subr.bf16.mxu0 %v1182
      %1269 = vmatpush1.bf16.msra.mxu0 %v1181
      %1270 = vmatprep.subr.bf16.mxu0 %v1186
      %1271 = vmatpush1.bf16.msra.mxu0 %v1185
      %1272 = vmatprep.subr.bf16.mxu0 %v1190
      %1273 = vmatpush1.bf16.msra.mxu0 %v1189
      %1274 = vmatprep.subr.bf16.mxu0 %v1194
      %1275 = vmatpush1.bf16.msra.mxu0 %v1193
      %1276 = vmatprep.subr.bf16.mxu0 0
      %1277 = vmatpush1.bf16.msra.mxu0 0
      %1278 = vmatprep.subr.bf16.mxu0 0
      %1279 = vmatpush1.bf16.msra.mxu0 0
      %1280 = vmatprep.subr.bf16.mxu0 0
      %1281 = vmatpush1.bf16.msra.mxu0 0
      %1282 = vmatprep.subr.bf16.mxu0 0
      %1283 = vmatpush1.bf16.msra.mxu0 0
      %1284 = vmatprep.subr.bf16.mxu0 0
      %1285 = vmatpush1.bf16.msra.mxu0 0
      %1286 = vmatprep.subr.bf16.mxu0 0
      %1287 = vmatpush1.bf16.msra.mxu0 0
      %1288 = vmatprep.subr.bf16.mxu0 0
      %1289 = vmatpush1.bf16.msra.mxu0 0
      %1290 = vmatprep.subr.bf16.mxu0 0
      %1291 = vmatpush1.bf16.msra.mxu0 0
      %1292 = vmatprep.mubr.bf16.mxu0 0
      %1293 = vmatmul.mubr.bf16.gmra.mrb[0].mxu0 %v1098
      %v1294 = vpop.f32.mrb[0].mxu0
      %v1295 = vadd.f32 %v1208, %v1294
      %v1296 = vpop.f32.mrb[0].mxu0
      %v1297 = vadd.f32 %v1212, %v1296
      %v1298 = vpop.f32.mrb[0].mxu0
      %v1299 = vadd.f32 %v1208, %v1298
      %v1300 = vpop.f32.mrb[0].mxu0
      %v1301 = vadd.f32 %v1212, %v1300
      %1302 = vdwg.mxu0
      %v1303 = vmax.f32 %v1252, 0.0
      %v1304 = vmax.f32 %v1254, 0.0
      %v1305 = vmax.f32 %v1295, 0.0
      %v1306 = vmax.f32 %v1297, 0.0
      %v1307 = vmax.f32 %v1256, 0.0
      %v1308 = vmax.f32 %v1258, 0.0
      %v1309 = vmax.f32 %v1299, 0.0
      %v1310 = vmax.f32 %v1301, 0.0
      %v1311 = vpack.c.bf16 %v1307, %v1303
      %v1312 = vpack.c.bf16 %v1308, %v1304
      %v1313 = vpack.c.bf16 %v1309, %v1305
      %v1314 = vpack.c.bf16 %v1310, %v1306
      %v1315 = vld [vmem:[%s9] sm:$0xff]
      %v1316 = vld [vmem:[%s9 + $0x8] sm:$0xff]
      %v1317 = vld [vmem:[%s9 + $0x10] sm:$0xff]
      %v1318 = vld [vmem:[%s9 + $0x18] sm:$0xff]
      %v1319 = vld [vmem:[%s9 + $0x20] sm:$0xff]
      %v1320 = vld [vmem:[%s9 + $0x28] sm:$0xff]
      %v1321 = vld [vmem:[%s9 + $0x30] sm:$0xff]
      %v1322 = vld [vmem:[%s9 + $0x38] sm:$0xff]
      %v1323 = vld [vmem:[%s9 + $0x40] sm:$0xff]
      %v1324 = vld [vmem:[%s9 + $0x48] sm:$0xff]
      %v1325 = vld [vmem:[%s9 + $0x50] sm:$0xff]
      %v1326 = vld [vmem:[%s9 + $0x58] sm:$0xff]
      %v1327 = vld [vmem:[%s9 + $0x60] sm:$0xff]
      %v1328 = vld [vmem:[%s9 + $0x68] sm:$0xff]
      %v1329 = vld [vmem:[%s9 + $0x70] sm:$0xff]
      %v1330 = vld [vmem:[%s9 + $0x78] sm:$0xff]
      %v1331 = vld [vmem:[%s9 + $0x80] sm:$0xff]
      %v1332 = vld [vmem:[%s9 + $0x88] sm:$0xff]
      %v1333 = vld [vmem:[%s9 + $0x90] sm:$0xff]
      %v1334 = vld [vmem:[%s9 + $0x98] sm:$0xff]
      %v1335 = vld [vmem:[%s9 + $0xa0] sm:$0xff]
      %v1336 = vld [vmem:[%s9 + $0xa8] sm:$0xff]
      %v1337 = vld [vmem:[%s9 + $0xb0] sm:$0xff]
      %v1338 = vld [vmem:[%s9 + $0xb8] sm:$0xff]
      %v1339 = vld [vmem:[%s9 + $0xc0] sm:$0xff]
      %v1340 = vld [vmem:[%s9 + $0xc8] sm:$0xff]
      %v1341 = vld [vmem:[%s9 + $0xd0] sm:$0xff]
      %v1342 = vld [vmem:[%s9 + $0xd8] sm:$0xff]
      %v1343 = vld [vmem:[%s9 + $0xe0] sm:$0xff]
      %v1344 = vld [vmem:[%s9 + $0xe8] sm:$0xff]
      %v1345 = vld [vmem:[%s9 + $0xf0] sm:$0xff]
      %v1346 = vld [vmem:[%s9 + $0xf8] sm:$0xff]
      %v1347 = vld [vmem:[%s9 + $0x100] sm:$0xff]
      %v1348 = vld [vmem:[%s9 + $0x108] sm:$0xff]
      %v1349 = vld [vmem:[%s9 + $0x110] sm:$0xff]
      %v1350 = vld [vmem:[%s9 + $0x118] sm:$0xff]
      %v1351 = vld [vmem:[%s9 + $0x120] sm:$0xff]
      %v1352 = vld [vmem:[%s9 + $0x128] sm:$0xff]
      %v1353 = vld [vmem:[%s9 + $0x130] sm:$0xff]
      %v1354 = vld [vmem:[%s9 + $0x138] sm:$0xff]
      %v1355 = vld [vmem:[%s9 + $0x140] sm:$0xff]
      %v1356 = vld [vmem:[%s9 + $0x148] sm:$0xff]
      %v1357 = vld [vmem:[%s9 + $0x150] sm:$0xff]
      %v1358 = vld [vmem:[%s9 + $0x158] sm:$0xff]
      %v1359 = vld [vmem:[%s9 + $0x160] sm:$0xff]
      %v1360 = vld [vmem:[%s9 + $0x168] sm:$0xff]
      %v1361 = vld [vmem:[%s9 + $0x170] sm:$0xff]
      %v1362 = vld [vmem:[%s9 + $0x178] sm:$0xff]
      %v1363 = vld [vmem:[%s9 + $0x180] sm:$0xff]
      %v1364 = vld [vmem:[%s9 + $0x188] sm:$0xff]
      %v1365 = vld [vmem:[%s9 + $0x190] sm:$0xff]
      %v1366 = vld [vmem:[%s9 + $0x198] sm:$0xff]
      %v1367 = vld [vmem:[%s9 + $0x1a0] sm:$0xff]
      %v1368 = vld [vmem:[%s9 + $0x1a8] sm:$0xff]
      %v1369 = vld [vmem:[%s9 + $0x1b0] sm:$0xff]
      %v1370 = vld [vmem:[%s9 + $0x1b8] sm:$0xff]
      %v1371 = vld [vmem:[%s9 + $0x1c0] sm:$0xff]
      %v1372 = vld [vmem:[%s9 + $0x1c8] sm:$0xff]
      %v1373 = vld [vmem:[%s9 + $0x1d0] sm:$0xff]
      %v1374 = vld [vmem:[%s9 + $0x1d8] sm:$0xff]
      %v1375 = vld [vmem:[%s9 + $0x1e0] sm:$0xff]
      %v1376 = vld [vmem:[%s9 + $0x1e8] sm:$0xff]
      %v1377 = vld [vmem:[%s9 + $0x1f0] sm:$0xff]
      %v1378 = vld [vmem:[%s9 + $0x1f8] sm:$0xff]
      %v1379 = vpack.c.bf16 %v1316, %v1315
      %v1380 = vpack.c.bf16 %v1318, %v1317
      %v1381 = vpack.c.bf16 %v1320, %v1319
      %v1382 = vpack.c.bf16 %v1322, %v1321
      %v1383 = vpack.c.bf16 %v1324, %v1323
      %v1384 = vpack.c.bf16 %v1326, %v1325
      %v1385 = vpack.c.bf16 %v1328, %v1327
      %v1386 = vpack.c.bf16 %v1330, %v1329
      %v1387 = vpack.c.bf16 %v1332, %v1331
      %v1388 = vpack.c.bf16 %v1334, %v1333
      %v1389 = vpack.c.bf16 %v1336, %v1335
      %v1390 = vpack.c.bf16 %v1338, %v1337
      %v1391 = vpack.c.bf16 %v1340, %v1339
      %v1392 = vpack.c.bf16 %v1342, %v1341
      %v1393 = vpack.c.bf16 %v1344, %v1343
      %v1394 = vpack.c.bf16 %v1346, %v1345
      %v1395 = vpack.c.bf16 %v1348, %v1347
      %v1396 = vpack.c.bf16 %v1350, %v1349
      %v1397 = vpack.c.bf16 %v1352, %v1351
      %v1398 = vpack.c.bf16 %v1354, %v1353
      %v1399 = vpack.c.bf16 %v1356, %v1355
      %v1400 = vpack.c.bf16 %v1358, %v1357
      %v1401 = vpack.c.bf16 %v1360, %v1359
      %v1402 = vpack.c.bf16 %v1362, %v1361
      %v1403 = vpack.c.bf16 %v1364, %v1363
      %v1404 = vpack.c.bf16 %v1366, %v1365
      %v1405 = vpack.c.bf16 %v1368, %v1367
      %v1406 = vpack.c.bf16 %v1370, %v1369
      %v1407 = vpack.c.bf16 %v1372, %v1371
      %v1408 = vpack.c.bf16 %v1374, %v1373
      %v1409 = vpack.c.bf16 %v1376, %v1375
      %v1410 = vpack.c.bf16 %v1378, %v1377
      %1411 = vmatprep.subr.bf16.mxu0 0
      %1412 = vmatpush1.bf16.msra.mxu0 %v1379
      %1413 = vmatprep.subr.bf16.mxu0 0
      %1414 = vmatpush1.bf16.msra.mxu0 %v1380
      %1415 = vmatprep.subr.bf16.mxu0 0
      %1416 = vmatpush1.bf16.msra.mxu0 %v1381
      %1417 = vmatprep.subr.bf16.mxu0 0
      %1418 = vmatpush1.bf16.msra.mxu0 %v1382
      %1419 = vmatprep.subr.bf16.mxu0 0
      %1420 = vmatpush1.bf16.msra.mxu0 %v1383
      %1421 = vmatprep.subr.bf16.mxu0 0
      %1422 = vmatpush1.bf16.msra.mxu0 %v1384
      %1423 = vmatprep.subr.bf16.mxu0 0
      %1424 = vmatpush1.bf16.msra.mxu0 %v1385
      %1425 = vmatprep.subr.bf16.mxu0 0
      %1426 = vmatpush1.bf16.msra.mxu0 %v1386
      %1427 = vmatprep.subr.bf16.mxu0 0
      %1428 = vmatpush1.bf16.msra.mxu0 %v1387
      %1429 = vmatprep.subr.bf16.mxu0 0
      %1430 = vmatpush1.bf16.msra.mxu0 %v1388
      %1431 = vmatprep.subr.bf16.mxu0 0
      %1432 = vmatpush1.bf16.msra.mxu0 %v1389
      %1433 = vmatprep.subr.bf16.mxu0 0
      %1434 = vmatpush1.bf16.msra.mxu0 %v1390
      %1435 = vmatprep.subr.bf16.mxu0 0
      %1436 = vmatpush1.bf16.msra.mxu0 %v1391
      %1437 = vmatprep.subr.bf16.mxu0 0
      %1438 = vmatpush1.bf16.msra.mxu0 %v1392
      %1439 = vmatprep.subr.bf16.mxu0 0
      %1440 = vmatpush1.bf16.msra.mxu0 %v1393
      %1441 = vmatprep.subr.bf16.mxu0 0
      %1442 = vmatpush1.bf16.msra.mxu0 %v1394
      %1443 = vmatprep.mubr.bf16.mxu0 %v1312
      %1444 = vmatmul.mubr.bf16.gmra.mrb[0].mxu0 %v1311
      %v1445 = vpop.f32.mrb[0].mxu0
      %v1446 = vadd.f32 0.0, %v1445
      %v1447 = vpop.f32.mrb[0].mxu0
      %v1448 = vpop.f32.mrb[0].mxu0
      %v1449 = vadd.f32 0.0, %v1448
      %v1450 = vpop.f32.mrb[0].mxu0
      %1451 = vdwg.mxu0
      %1452 = vmatprep.subr.bf16.mxu0 0
      %1453 = vmatpush1.bf16.msra.mxu0 %v1395
      %1454 = vmatprep.subr.bf16.mxu0 0
      %1455 = vmatpush1.bf16.msra.mxu0 %v1396
      %1456 = vmatprep.subr.bf16.mxu0 0
      %1457 = vmatpush1.bf16.msra.mxu0 %v1397
      %1458 = vmatprep.subr.bf16.mxu0 0
      %1459 = vmatpush1.bf16.msra.mxu0 %v1398
      %1460 = vmatprep.subr.bf16.mxu0 0
      %1461 = vmatpush1.bf16.msra.mxu0 %v1399
      %1462 = vmatprep.subr.bf16.mxu0 0
      %1463 = vmatpush1.bf16.msra.mxu0 %v1400
      %1464 = vmatprep.subr.bf16.mxu0 0
      %1465 = vmatpush1.bf16.msra.mxu0 %v1401
      %1466 = vmatprep.subr.bf16.mxu0 0
      %1467 = vmatpush1.bf16.msra.mxu0 %v1402
      %1468 = vmatprep.subr.bf16.mxu0 0
      %1469 = vmatpush1.bf16.msra.mxu0 %v1403
      %1470 = vmatprep.subr.bf16.mxu0 0
      %1471 = vmatpush1.bf16.msra.mxu0 %v1404
      %1472 = vmatprep.subr.bf16.mxu0 0
      %1473 = vmatpush1.bf16.msra.mxu0 %v1405
      %1474 = vmatprep.subr.bf16.mxu0 0
      %1475 = vmatpush1.bf16.msra.mxu0 %v1406
      %1476 = vmatprep.subr.bf16.mxu0 0
      %1477 = vmatpush1.bf16.msra.mxu0 %v1407
      %1478 = vmatprep.subr.bf16.mxu0 0
      %1479 = vmatpush1.bf16.msra.mxu0 %v1408
      %1480 = vmatprep.subr.bf16.mxu0 0
      %1481 = vmatpush1.bf16.msra.mxu0 %v1409
      %1482 = vmatprep.subr.bf16.mxu0 0
      %1483 = vmatpush1.bf16.msra.mxu0 %v1410
      %1484 = vmatprep.mubr.bf16.mxu0 %v1314
      %1485 = vmatmul.mubr.bf16.gmra.mrb[0].mxu0 %v1313
      %v1486 = vpop.f32.mrb[0].mxu0
      %v1487 = vadd.f32 %v1446, %v1486
      %v1488 = vpop.f32.mrb[0].mxu0
      %v1489 = vpop.f32.mrb[0].mxu0
      %v1490 = vadd.f32 %v1449, %v1489
      %v1491 = vpop.f32.mrb[0].mxu0
      %1492 = vdwg.mxu0
      %v1493 = vadd.f32 %v1096, %v1487
      %v1494 = vadd.f32 %v1097, %v1490
      %v1495 = vld [vmem:[%s10] sm:$0x1]
      %v1497 = vlaneseq
      %v1498 = vshrl.u32 %v1497, 7
      %v1499 = vsub.s32 0, %v1498
      %v1500 = vrot.slane %v1495, %v1499
      %v1502 = vadd.f32 %v1493, %v1500
      %v1503 = vadd.f32 %v1494, %v1500
      %1504 = vst [vmem:[%s386] sm:$0xff] %v1502
      %1505 = vst [vmem:[%s386 + $0x8] sm:$0xff] %v1503
      %p1506 = scmp.lt.s32.totalorder %s22, 1
      %s1507 = scalar_select %p1506, %s22, 1
      %s1508 = smul.addr %s1507, 2
      %s1509 = smul.addr %s1508, 8
      %s1510 = scalar_lea.vmem %s11, %s1509
      // Predicated region
      $region65: #{_lambda_.16} parent=63 // pred_check
        %p1511 = pneg %p276
      $region66: #{_lambda_.16} parent=63 // pred_check_branch
        %1513 = sbr.rel (%p1511) target = $region68
      $region67: #{_lambda_.16} parent=63 // pred_region
        _
      $region68: #{_lambda_.16} parent=63 // pred_fallthru
        _
    $region64: #{_lambda_.16} parent=5 // pred_fallthru
      _
    %p1514 = scmp.le.s32.totalorder 2, %s17
    // Predicated region
    $region69: #{_lambda_.16} parent=5 // pred_check
      %p1515 = pneg %p1514
    $region70: #{_lambda_.16} parent=5 // pred_check_branch
      %1517 = sbr.rel (%p1515) target = $region72
    $region71: #{_lambda_.16} parent=5 // pred_region
      %s1518 = ssub.s32 %s17, 2
      // Predicated region
      $region73: #{_lambda_.16} parent=71 // pred_check
        %p1519 = pneg %p282
      $region74: #{_lambda_.16} parent=71 // pred_check_branch
        %1521 = sbr.rel (%p1519) target = $region76
      $region75: #{_lambda_.16} parent=71 // pred_region
        %p1522 = scmp.lt.s32.totalorder %s23, 1
        %s1523 = scalar_select %p1522, %s23, 1
        %s1524 = smul.addr %s1523, 2
        %s1525 = smul.addr %s1524, 8
        %s1526 = scalar_lea.vmem %s11, %s1525
      $region76: #{_lambda_.16} parent=71 // pred_fallthru
        _
    $region72: #{_lambda_.16} parent=5 // pred_fallthru
      _
  $region6: #{_lambda_.16} parent=0 // loop_footer
    %s21 = sadd.s32 1, %s17
  $region7: #{_lambda_.16} parent=0 // loop_footer_branch
    %16 = sbr.rel target = $region3
  $region8: #{_lambda_.16} parent=0 // loop_exit
    _

// kernel: _lambda_.14
$region0: #{_lambda_.14}
  #allocation0 [shape = 'u32[]', space=smem, size = 0x4, offset = 0x4, fixed_abs, tag = 'smem constant byte address 0x4 - core index']
  #allocation1 [shape = 'u32[144,128]{1,0:T(1,128)}', space=vmem, size = 0x12000, scoped, tag = 'internal scratch']
  %s0 = inlined_call_operand.vmem [shape: f32[2,16,128], index: 0, kind: input, shape index: {}]
  %s1 = inlined_call_operand.hbm [shape: f32[128,256], index: 1, kind: input, shape index: {}]
  %s2 = inlined_call_operand.vmem [shape: f32[1,256], index: 2, kind: input, shape index: {}]
  %s3 = inlined_call_operand.vmem [shape: f32[1280,128], index: 3, kind: input, shape index: {}]
  %s4 = inlined_call_operand.vmem [shape: f32[1,128], index: 4, kind: input, shape index: {}]
  %s5 = inlined_call_operand.vmem [shape: f32[1,128], index: 5, kind: input, shape index: {}]
  %s6 = inlined_call_operand.vmem [shape: f32[1,128], index: 6, kind: input, shape index: {}]
  %s7 = inlined_call_operand.hbm [shape: f32[128,512], index: 7, kind: input, shape index: {}]
  %s8 = inlined_call_operand.vmem [shape: f32[1,512], index: 8, kind: input, shape index: {}]
  %s9 = inlined_call_operand.vmem [shape: f32[512,128], index: 9, kind: input, shape index: {}]
  %s10 = inlined_call_operand.vmem [shape: f32[1,128], index: 10, kind: input, shape index: {}]
  %s11 = inlined_call_operand.vmem [shape: f32[2,16,128], index: 11, kind: output, shape index: {}]
  %s12 = sld [smem:[#allocation0]]
  $region85: #{_lambda_.14} parent=0
    _
  %s14 = ssub.s32 1, %s12
  %s15 = scalar_select 0, %s14, %s12
  $region1: #{_lambda_.14} parent=0
    #allocation2 [shape = 'u8[131072]{0}', space=vmem, size = 0x20000, scoped, tag = 'input window, operand 1, single buffered']
    #allocation3 [shape = 's32[2]{0}', space=sflag, size = 0x8, scoped, tag = 'scoped memory for _lambda_.14']
    #allocation4 [shape = 'u8[262144]{0}', space=vmem, size = 0x40000, scoped, tag = 'input window, operand 7, single buffered']
    #allocation5 [shape = 's32[1]{0}', space=sflag, size = 0x4, scoped, tag = 'scoped memory for _lambda_.14']
    %16 = vsyncpa [#allocation3], 0
    %17 = vsyncpa [#allocation5], 0
    loop: start=0, step=1, limit=4
    $region2: #{_lambda_.14} parent=1 // loop_pre_header
      _
    $region3: #{_lambda_.14} parent=1 // loop_header
      %s19 = sphi 0, %s23
      %p20 = scmp.ge.s32.totalorder %s19, 4
      %s29 = sphi 0, %s31
      %s32 = sphi 0, %s29
      %s33 = sphi 0, %s32
      %s49 = sphi 0, %s33
      %s53 = sphi 0, %s53
      %s55 = sphi 0, %s53
      %s56 = sphi 0, %s55
      %s70 = sphi 0, %s56
      %s74 = sphi 0, %s74
      %s76 = sphi 0, %s74
      %s77 = sphi 0, %s76
      %s91 = sphi 0, %s77
      %s95 = sphi 0, %s95
      %s97 = sphi 0, %s95
      %s98 = sphi 0, %s97
      %s112 = sphi 0, %s98
      %s116 = sphi 0, %s116
      %s118 = sphi 0, %s116
      %s119 = sphi 0, %s118
      %s133 = sphi 0, %s119
      %s137 = sphi 0, %s137
      %s139 = sphi 0, %s137
      %s140 = sphi 0, %s139
      %s154 = sphi 0, %s140
      %s158 = sphi 0, %s158
      %s160 = sphi 0, %s158
      %s161 = sphi 0, %s160
      %s175 = sphi 0, %s161
      %s179 = sphi 0, %s179
      %s181 = sphi 0, %s179
      %s182 = sphi 0, %s181
      %s196 = sphi 0, %s182
      %s200 = sphi 0, %s200
      %s202 = sphi 0, %s200
      %s203 = sphi 0, %s202
      %s217 = sphi 0, %s203
      %s221 = sphi 0, %s221
      %s223 = sphi 0, %s221
      %s224 = sphi 0, %s223
      %s238 = sphi 0, %s224
      %s242 = sphi 0, %s242
      %s244 = sphi 0, %s242
      %s245 = sphi 0, %s244
      %s259 = sphi 0, %s245
      %s265 = sphi 0, %s267
      %s268 = sphi 0, %s265
      %s269 = sphi 0, %s268
      %s285 = sphi 0, %s269
    $region4: #{_lambda_.14} parent=1 // loop_header_branch
      %22 = sbr.rel (%p20) target = $region8
    $region5: #{_lambda_.14} parent=1 // loop_body
      %s24 = ssub.s32 %s19, 1
      %s25 = ssub.s32 %s19, 2
      %s26 = sadd.s32 %s19, 1
      %s27 = ssub.s32 %s19, %s26
      %p28 = scmp.eq.s32.totalorder %s27, 0
      %s30 = sadd.s32 %s29, 1
      %s31 = scalar_select %p28, %s29, %s30
      %p34 = pneg %p28
      %p35 = scmp.eq.s32.totalorder %s19, 1
      %p36 = por %p34, %p35
      %p37 = scmp.ne.s32.totalorder %s29, %s32
      %p38 = scmp.eq.s32.totalorder %s19, 0
      %p39 = por %p37, %p38
      %p40 = scmp.ne.s32.totalorder %s29, %s32
      %p41 = scmp.eq.s32.totalorder %s24, 1
      %p42 = por %p40, %p41
      %p43 = scmp.ne.s32.totalorder %s32, %s33
      %p44 = scmp.eq.s32.totalorder %s24, 0
      %p45 = por %p43, %p44
      %p46 = scmp.ne.s32.totalorder %s32, %s33
      %p47 = scmp.eq.s32.totalorder %s25, 1
      %p48 = por %p46, %p47
      %p50 = scmp.ne.s32.totalorder %s33, %s49
      %p51 = scmp.eq.s32.totalorder %s25, 0
      %p52 = por %p50, %p51
      %s54 = sadd.s32 %s53, 1
      %p57 = scmp.eq.s32.totalorder %s19, 1
      %p58 = scmp.ne.s32.totalorder %s53, %s55
      %p59 = scmp.eq.s32.totalorder %s19, 0
      %p60 = por %p58, %p59
      %p61 = scmp.ne.s32.totalorder %s53, %s55
      %p62 = scmp.eq.s32.totalorder %s24, 1
      %p63 = por %p61, %p62
      %p64 = scmp.ne.s32.totalorder %s55, %s56
      %p65 = scmp.eq.s32.totalorder %s24, 0
      %p66 = por %p64, %p65
      %p67 = scmp.ne.s32.totalorder %s55, %s56
      %p68 = scmp.eq.s32.totalorder %s25, 1
      %p69 = por %p67, %p68
      %p71 = scmp.ne.s32.totalorder %s56, %s70
      %p72 = scmp.eq.s32.totalorder %s25, 0
      %p73 = por %p71, %p72
      %s75 = sadd.s32 %s74, 1
      %p78 = scmp.eq.s32.totalorder %s19, 1
      %p79 = scmp.ne.s32.totalorder %s74, %s76
      %p80 = scmp.eq.s32.totalorder %s19, 0
      %p81 = por %p79, %p80
      %p82 = scmp.ne.s32.totalorder %s74, %s76
      %p83 = scmp.eq.s32.totalorder %s24, 1
      %p84 = por %p82, %p83
      %p85 = scmp.ne.s32.totalorder %s76, %s77
      %p86 = scmp.eq.s32.totalorder %s24, 0
      %p87 = por %p85, %p86
      %p88 = scmp.ne.s32.totalorder %s76, %s77
      %p89 = scmp.eq.s32.totalorder %s25, 1
      %p90 = por %p88, %p89
      %p92 = scmp.ne.s32.totalorder %s77, %s91
      %p93 = scmp.eq.s32.totalorder %s25, 0
      %p94 = por %p92, %p93
      %s96 = sadd.s32 %s95, 1
      %p99 = scmp.eq.s32.totalorder %s19, 1
      %p100 = scmp.ne.s32.totalorder %s95, %s97
      %p101 = scmp.eq.s32.totalorder %s19, 0
      %p102 = por %p100, %p101
      %p103 = scmp.ne.s32.totalorder %s95, %s97
      %p104 = scmp.eq.s32.totalorder %s24, 1
      %p105 = por %p103, %p104
      %p106 = scmp.ne.s32.totalorder %s97, %s98
      %p107 = scmp.eq.s32.totalorder %s24, 0
      %p108 = por %p106, %p107
      %p109 = scmp.ne.s32.totalorder %s97, %s98
      %p110 = scmp.eq.s32.totalorder %s25, 1
      %p111 = por %p109, %p110
      %p113 = scmp.ne.s32.totalorder %s98, %s112
      %p114 = scmp.eq.s32.totalorder %s25, 0
      %p115 = por %p113, %p114
      %s117 = sadd.s32 %s116, 1
      %p120 = scmp.eq.s32.totalorder %s19, 1
      %p121 = scmp.ne.s32.totalorder %s116, %s118
      %p122 = scmp.eq.s32.totalorder %s19, 0
      %p123 = por %p121, %p122
      %p124 = scmp.ne.s32.totalorder %s116, %s118
      %p125 = scmp.eq.s32.totalorder %s24, 1
      %p126 = por %p124, %p125
      %p127 = scmp.ne.s32.totalorder %s118, %s119
      %p128 = scmp.eq.s32.totalorder %s24, 0
      %p129 = por %p127, %p128
      %p130 = scmp.ne.s32.totalorder %s118, %s119
      %p131 = scmp.eq.s32.totalorder %s25, 1
      %p132 = por %p130, %p131
      %p134 = scmp.ne.s32.totalorder %s119, %s133
      %p135 = scmp.eq.s32.totalorder %s25, 0
      %p136 = por %p134, %p135
      %s138 = sadd.s32 %s137, 1
      %p141 = scmp.eq.s32.totalorder %s19, 1
      %p142 = scmp.ne.s32.totalorder %s137, %s139
      %p143 = scmp.eq.s32.totalorder %s19, 0
      %p144 = por %p142, %p143
      %p145 = scmp.ne.s32.totalorder %s137, %s139
      %p146 = scmp.eq.s32.totalorder %s24, 1
      %p147 = por %p145, %p146
      %p148 = scmp.ne.s32.totalorder %s139, %s140
      %p149 = scmp.eq.s32.totalorder %s24, 0
      %p150 = por %p148, %p149
      %p151 = scmp.ne.s32.totalorder %s139, %s140
      %p152 = scmp.eq.s32.totalorder %s25, 1
      %p153 = por %p151, %p152
      %p155 = scmp.ne.s32.totalorder %s140, %s154
      %p156 = scmp.eq.s32.totalorder %s25, 0
      %p157 = por %p155, %p156
      %s159 = sadd.s32 %s158, 1
      %p162 = scmp.eq.s32.totalorder %s19, 1
      %p163 = scmp.ne.s32.totalorder %s158, %s160
      %p164 = scmp.eq.s32.totalorder %s19, 0
      %p165 = por %p163, %p164
      %p166 = scmp.ne.s32.totalorder %s158, %s160
      %p167 = scmp.eq.s32.totalorder %s24, 1
      %p168 = por %p166, %p167
      %p169 = scmp.ne.s32.totalorder %s160, %s161
      %p170 = scmp.eq.s32.totalorder %s24, 0
      %p171 = por %p169, %p170
      %p172 = scmp.ne.s32.totalorder %s160, %s161
      %p173 = scmp.eq.s32.totalorder %s25, 1
      %p174 = por %p172, %p173
      %p176 = scmp.ne.s32.totalorder %s161, %s175
      %p177 = scmp.eq.s32.totalorder %s25, 0
      %p178 = por %p176, %p177
      %s180 = sadd.s32 %s179, 1
      %p183 = scmp.eq.s32.totalorder %s19, 1
      %p184 = scmp.ne.s32.totalorder %s179, %s181
      %p185 = scmp.eq.s32.totalorder %s19, 0
      %p186 = por %p184, %p185
      %p187 = scmp.ne.s32.totalorder %s179, %s181
      %p188 = scmp.eq.s32.totalorder %s24, 1
      %p189 = por %p187, %p188
      %p190 = scmp.ne.s32.totalorder %s181, %s182
      %p191 = scmp.eq.s32.totalorder %s24, 0
      %p192 = por %p190, %p191
      %p193 = scmp.ne.s32.totalorder %s181, %s182
      %p194 = scmp.eq.s32.totalorder %s25, 1
      %p195 = por %p193, %p194
      %p197 = scmp.ne.s32.totalorder %s182, %s196
      %p198 = scmp.eq.s32.totalorder %s25, 0
      %p199 = por %p197, %p198
      %s201 = sadd.s32 %s200, 1
      %p204 = scmp.eq.s32.totalorder %s19, 1
      %p205 = scmp.ne.s32.totalorder %s200, %s202
      %p206 = scmp.eq.s32.totalorder %s19, 0
      %p207 = por %p205, %p206
      %p208 = scmp.ne.s32.totalorder %s200, %s202
      %p209 = scmp.eq.s32.totalorder %s24, 1
      %p210 = por %p208, %p209
      %p211 = scmp.ne.s32.totalorder %s202, %s203
      %p212 = scmp.eq.s32.totalorder %s24, 0
      %p213 = por %p211, %p212
      %p214 = scmp.ne.s32.totalorder %s202, %s203
      %p215 = scmp.eq.s32.totalorder %s25, 1
      %p216 = por %p214, %p215
      %p218 = scmp.ne.s32.totalorder %s203, %s217
      %p219 = scmp.eq.s32.totalorder %s25, 0
      %p220 = por %p218, %p219
      %s222 = sadd.s32 %s221, 1
      %p225 = scmp.eq.s32.totalorder %s19, 1
      %p226 = scmp.ne.s32.totalorder %s221, %s223
      %p227 = scmp.eq.s32.totalorder %s19, 0
      %p228 = por %p226, %p227
      %p229 = scmp.ne.s32.totalorder %s221, %s223
      %p230 = scmp.eq.s32.totalorder %s24, 1
      %p231 = por %p229, %p230
      %p232 = scmp.ne.s32.totalorder %s223, %s224
      %p233 = scmp.eq.s32.totalorder %s24, 0
      %p234 = por %p232, %p233
      %p235 = scmp.ne.s32.totalorder %s223, %s224
      %p236 = scmp.eq.s32.totalorder %s25, 1
      %p237 = por %p235, %p236
      %p239 = scmp.ne.s32.totalorder %s224, %s238
      %p240 = scmp.eq.s32.totalorder %s25, 0
      %p241 = por %p239, %p240
      %s243 = sadd.s32 %s242, 1
      %p246 = scmp.eq.s32.totalorder %s19, 1
      %p247 = scmp.ne.s32.totalorder %s242, %s244
      %p248 = scmp.eq.s32.totalorder %s19, 0
      %p249 = por %p247, %p248
      %p250 = scmp.ne.s32.totalorder %s242, %s244
      %p251 = scmp.eq.s32.totalorder %s24, 1
      %p252 = por %p250, %p251
      %p253 = scmp.ne.s32.totalorder %s244, %s245
      %p254 = scmp.eq.s32.totalorder %s24, 0
      %p255 = por %p253, %p254
      %p256 = scmp.ne.s32.totalorder %s244, %s245
      %p257 = scmp.eq.s32.totalorder %s25, 1
      %p258 = por %p256, %p257
      %p260 = scmp.ne.s32.totalorder %s245, %s259
      %p261 = scmp.eq.s32.totalorder %s25, 0
      %p262 = por %p260, %p261
      %s263 = ssub.s32 %s19, %s26
      %p264 = scmp.eq.s32.totalorder %s263, 0
      %s266 = sadd.s32 %s265, 1
      %s267 = scalar_select %p264, %s265, %s266
      %p270 = pneg %p264
      %p271 = scmp.eq.s32.totalorder %s19, 1
      %p272 = por %p270, %p271
      %p273 = scmp.ne.s32.totalorder %s265, %s268
      %p274 = scmp.eq.s32.totalorder %s19, 0
      %p275 = por %p273, %p274
      %p276 = scmp.ne.s32.totalorder %s265, %s268
      %p277 = scmp.eq.s32.totalorder %s24, 1
      %p278 = por %p276, %p277
      %p279 = scmp.ne.s32.totalorder %s268, %s269
      %p280 = scmp.eq.s32.totalorder %s24, 0
      %p281 = por %p279, %p280
      %p282 = scmp.ne.s32.totalorder %s268, %s269
      %p283 = scmp.eq.s32.totalorder %s25, 1
      %p284 = por %p282, %p283
      %p286 = scmp.ne.s32.totalorder %s269, %s285
      %p287 = scmp.eq.s32.totalorder %s25, 0
      %p288 = por %p286, %p287
      %p289 = scmp.le.s32.totalorder 1, %s19
      %p290 = scmp.lt.s32.totalorder %s19, 3
      %p291 = pnand %p289, %p290
      %p292 = pneg %p291
      // Predicated region
      $region9: #{_lambda_.14} parent=5 // pred_check
        _
      $region10: #{_lambda_.14} parent=5 // pred_check_branch
        %294 = sbr.rel (%p291) target = $region12
      $region11: #{_lambda_.14} parent=5 // pred_region
        %s295 = ssub.s32 %s19, 1
        // Predicated region
        $region13: #{_lambda_.14} parent=11 // pred_check
          %p296 = pneg %p66
        $region14: #{_lambda_.14} parent=11 // pred_check_branch
          %298 = sbr.rel (%p296) target = $region16
        $region15: #{_lambda_.14} parent=11 // pred_region
          %s300 = ssub.s32 4096, 4096
          %301 = vsyncadd [#allocation3], %s300
          %s302 = sshll.u32 [#allocation2], 4
          %s303 = int_to_ptr.vmem [resolvable:$true] %s302
          %308 = dma.hbm_to_vmem [thread:$0]  %s1, 4096, %s303, [#allocation3], 256, 256, 16
        $region16: #{_lambda_.14} parent=11 // pred_fallthru
          _
        // Predicated region
        $region17: #{_lambda_.14} parent=11 // pred_check
          %p309 = pneg %p87
        $region18: #{_lambda_.14} parent=11 // pred_check_branch
          %311 = sbr.rel (%p309) target = $region20
        $region19: #{_lambda_.14} parent=11 // pred_region
          _
        $region20: #{_lambda_.14} parent=11 // pred_fallthru
          _
        // Predicated region
        $region21: #{_lambda_.14} parent=11 // pred_check
          %p312 = pneg %p108
        $region22: #{_lambda_.14} parent=11 // pred_check_branch
          %314 = sbr.rel (%p312) target = $region24
        $region23: #{_lambda_.14} parent=11 // pred_region
          _
        $region24: #{_lambda_.14} parent=11 // pred_fallthru
          _
        // Predicated region
        $region25: #{_lambda_.14} parent=11 // pred_check
          %p315 = pneg %p129
        $region26: #{_lambda_.14} parent=11 // pred_check_branch
          %317 = sbr.rel (%p315) target = $region28
        $region27: #{_lambda_.14} parent=11 // pred_region
          _
        $region28: #{_lambda_.14} parent=11 // pred_fallthru
          _
        // Predicated region
        $region29: #{_lambda_.14} parent=11 // pred_check
          %p318 = pneg %p150
        $region30: #{_lambda_.14} parent=11 // pred_check_branch
          %320 = sbr.rel (%p318) target = $region32
        $region31: #{_lambda_.14} parent=11 // pred_region
          _
        $region32: #{_lambda_.14} parent=11 // pred_fallthru
          _
        // Predicated region
        $region33: #{_lambda_.14} parent=11 // pred_check
          %p321 = pneg %p171
        $region34: #{_lambda_.14} parent=11 // pred_check_branch
          %323 = sbr.rel (%p321) target = $region36
        $region35: #{_lambda_.14} parent=11 // pred_region
          _
        $region36: #{_lambda_.14} parent=11 // pred_fallthru
          _
        // Predicated region
        $region37: #{_lambda_.14} parent=11 // pred_check
          %p324 = pneg %p192
        $region38: #{_lambda_.14} parent=11 // pred_check_branch
          %326 = sbr.rel (%p324) target = $region40
        $region39: #{_lambda_.14} parent=11 // pred_region
          %s328 = ssub.s32 8192, 8192
          %329 = vsyncadd [#allocation5], %s328
          %s330 = sshll.u32 [#allocation4], 4
          %s331 = int_to_ptr.vmem [resolvable:$true] %s330
          %336 = dma.hbm_to_vmem [thread:$0]  %s7, 8192, %s331, [#allocation5], 512, 512, 32
        $region40: #{_lambda_.14} parent=11 // pred_fallthru
          _
        // Predicated region
        $region41: #{_lambda_.14} parent=11 // pred_check
          %p337 = pneg %p213
        $region42: #{_lambda_.14} parent=11 // pred_check_branch
          %339 = sbr.rel (%p337) target = $region44
        $region43: #{_lambda_.14} parent=11 // pred_region
          _
        $region44: #{_lambda_.14} parent=11 // pred_fallthru
          _
        // Predicated region
        $region45: #{_lambda_.14} parent=11 // pred_check
          %p340 = pneg %p234
        $region46: #{_lambda_.14} parent=11 // pred_check_branch
          %342 = sbr.rel (%p340) target = $region48
        $region47: #{_lambda_.14} parent=11 // pred_region
          _
        $region48: #{_lambda_.14} parent=11 // pred_fallthru
          _
        // Predicated region
        $region49: #{_lambda_.14} parent=11 // pred_check
          %p343 = pneg %p255
        $region50: #{_lambda_.14} parent=11 // pred_check_branch
          %345 = sbr.rel (%p343) target = $region52
        $region51: #{_lambda_.14} parent=11 // pred_region
          _
        $region52: #{_lambda_.14} parent=11 // pred_fallthru
          _
      $region12: #{_lambda_.14} parent=5 // pred_fallthru
        _
      %p346 = scmp.lt.s32.totalorder %s19, 2
      // Predicated region
      $region53: #{_lambda_.14} parent=5 // pred_check
        %p347 = pneg %p346
      $region54: #{_lambda_.14} parent=5 // pred_check_branch
        %349 = sbr.rel (%p347) target = $region56
      $region55: #{_lambda_.14} parent=5 // pred_region
        // Predicated region
        $region57: #{_lambda_.14} parent=55 // pred_check
          %p350 = pneg %p39
        $region58: #{_lambda_.14} parent=55 // pred_check_branch
          %352 = sbr.rel (%p350) target = $region60
        $region59: #{_lambda_.14} parent=55 // pred_region
          %p353 = scmp.lt.s32.totalorder %s19, 1
          %s354 = scalar_select %p353, %s19, 1
          %s355 = smul.addr %s354, 2
          %s356 = smul.addr %s355, 8
          %s357 = scalar_lea.vmem %s0, %s356
        $region60: #{_lambda_.14} parent=55 // pred_fallthru
          _
      $region56: #{_lambda_.14} parent=5 // pred_fallthru
        _
      %p358 = scmp.le.s32.totalorder 1, %s19
      %p359 = scmp.lt.s32.totalorder %s19, 3
      %p360 = pnand %p358, %p359
      %p361 = pneg %p360
      // Predicated region
      $region61: #{_lambda_.14} parent=5 // pred_check
        _
      $region62: #{_lambda_.14} parent=5 // pred_check_branch
        %363 = sbr.rel (%p360) target = $region64
      $region63: #{_lambda_.14} parent=5 // pred_region
        %s364 = ssub.s32 %s19, 1
        // Predicated region
        $region65: #{_lambda_.14} parent=63 // pred_check
          %p365 = pneg %p66
        $region66: #{_lambda_.14} parent=63 // pred_check_branch
          %367 = sbr.rel (%p365) target = $region68
        $region67: #{_lambda_.14} parent=63 // pred_region
          %368 = dma.done [#allocation3], 4096
        $region68: #{_lambda_.14} parent=63 // pred_fallthru
          _
        // Predicated region
        $region69: #{_lambda_.14} parent=63 // pred_check
          %p369 = pneg %p192
        $region70: #{_lambda_.14} parent=63 // pred_check_branch
          %371 = sbr.rel (%p369) target = $region72
        $region71: #{_lambda_.14} parent=63 // pred_region
          %372 = dma.done [#allocation5], 8192
        $region72: #{_lambda_.14} parent=63 // pred_fallthru
          _
        %p373 = scmp.lt.s32.totalorder %s24, 1
        %s374 = scalar_select %p373, %s24, 1
        %s375 = smul.addr %s374, 2
        %s376 = smul.addr %s375, 8
        %s377 = scalar_lea.vmem %s0, %s376
        %p378 = pneg %p45
        %p379 = pneg %p42
        %p380 = pneg %p66
        %p381 = pneg %p63
        %p382 = pneg %p87
        %p383 = pneg %p84
        %p384 = pneg %p108
        %p385 = pneg %p105
        %p386 = pneg %p129
        %p387 = pneg %p126
        %p388 = pneg %p150
        %p389 = pneg %p147
        %p390 = pneg %p171
        %p391 = pneg %p168
        %p392 = pneg %p192
        %p393 = pneg %p189
        %p394 = pneg %p213
        %p395 = pneg %p210
        %p396 = pneg %p234
        %p397 = pneg %p231
        %p398 = pneg %p255
        %p399 = pneg %p252
        %p400 = pneg %p281
        %p401 = pneg %p278
        %p402 = scmp.lt.s32.totalorder %s24, 1
        %s403 = scalar_select %p402, %s24, 1
        %s404 = smul.addr %s403, 2
        %s405 = smul.addr %s404, 8
        %s406 = scalar_lea.vmem %s11, %s405
        %p407 = scmp.lt.s32.totalorder %s24, 1
        %s408 = scalar_select %p407, %s24, 1
        %s409 = smul.addr %s408, 2
        %s410 = smul.addr %s409, 8
        %s411 = scalar_lea.vmem %s0, %s410
        %p412 = scmp.lt.s32.totalorder %s24, 1
        %s413 = scalar_select %p412, %s24, 1
        %s414 = smul.addr %s413, 2
        %s415 = smul.addr %s414, 8
        %s416 = scalar_lea.vmem %s11, %s415
        %v418 = vld [vmem:[%s411] sm:$0xff]
        %v419 = vld [vmem:[%s411 + $0x8] sm:$0xff]
        %v420 = vpack.c.bf16 %v419, %v418
        %v421 = vld [vmem:[#allocation2] sm:$0xff]
        %v422 = vld [vmem:[#allocation2 + $0x8] sm:$0xff]
        %v423 = vld [vmem:[#allocation2 + $0x10] sm:$0xff]
        %v424 = vld [vmem:[#allocation2 + $0x18] sm:$0xff]
        %v425 = vld [vmem:[#allocation2 + $0x20] sm:$0xff]
        %v426 = vld [vmem:[#allocation2 + $0x28] sm:$0xff]
        %v427 = vld [vmem:[#allocation2 + $0x30] sm:$0xff]
        %v428 = vld [vmem:[#allocation2 + $0x38] sm:$0xff]
        %v429 = vld [vmem:[#allocation2 + $0x40] sm:$0xff]
        %v430 = vld [vmem:[#allocation2 + $0x48] sm:$0xff]
        %v431 = vld [vmem:[#allocation2 + $0x50] sm:$0xff]
        %v432 = vld [vmem:[#allocation2 + $0x58] sm:$0xff]
        %v433 = vld [vmem:[#allocation2 + $0x60] sm:$0xff]
        %v434 = vld [vmem:[#allocation2 + $0x68] sm:$0xff]
        %v435 = vld [vmem:[#allocation2 + $0x70] sm:$0xff]
        %v436 = vld [vmem:[#allocation2 + $0x78] sm:$0xff]
        %v437 = vld [vmem:[#allocation2 + $0x80] sm:$0xff]
        %v438 = vld [vmem:[#allocation2 + $0x88] sm:$0xff]
        %v439 = vld [vmem:[#allocation2 + $0x90] sm:$0xff]
        %v440 = vld [vmem:[#allocation2 + $0x98] sm:$0xff]
        %v441 = vld [vmem:[#allocation2 + $0xa0] sm:$0xff]
        %v442 = vld [vmem:[#allocation2 + $0xa8] sm:$0xff]
        %v443 = vld [vmem:[#allocation2 + $0xb0] sm:$0xff]
        %v444 = vld [vmem:[#allocation2 + $0xb8] sm:$0xff]
        %v445 = vld [vmem:[#allocation2 + $0xc0] sm:$0xff]
        %v446 = vld [vmem:[#allocation2 + $0xc8] sm:$0xff]
        %v447 = vld [vmem:[#allocation2 + $0xd0] sm:$0xff]
        %v448 = vld [vmem:[#allocation2 + $0xd8] sm:$0xff]
        %v449 = vld [vmem:[#allocation2 + $0xe0] sm:$0xff]
        %v450 = vld [vmem:[#allocation2 + $0xe8] sm:$0xff]
        %v451 = vld [vmem:[#allocation2 + $0xf0] sm:$0xff]
        %v452 = vld [vmem:[#allocation2 + $0xf8] sm:$0xff]
        %v453 = vpack.c.bf16 %v423, %v421
        %v454 = vpack.c.bf16 %v424, %v422
        %v455 = vpack.c.bf16 %v427, %v425
        %v456 = vpack.c.bf16 %v428, %v426
        %v457 = vpack.c.bf16 %v431, %v429
        %v458 = vpack.c.bf16 %v432, %v430
        %v459 = vpack.c.bf16 %v435, %v433
        %v460 = vpack.c.bf16 %v436, %v434
        %v461 = vpack.c.bf16 %v439, %v437
        %v462 = vpack.c.bf16 %v440, %v438
        %v463 = vpack.c.bf16 %v443, %v441
        %v464 = vpack.c.bf16 %v444, %v442
        %v465 = vpack.c.bf16 %v447, %v445
        %v466 = vpack.c.bf16 %v448, %v446
        %v467 = vpack.c.bf16 %v451, %v449
        %v468 = vpack.c.bf16 %v452, %v450
        %v469 = vld [vmem:[%s2] sm:$0x3]
        %v471 = vlaneseq
        %v472 = vshrl.u32 %v471, 7
        %v473 = vsub.s32 0, %v472
        %v474 = vrot.slane %v469, %v473
        %v475 = vlaneseq
        %v476 = vshrl.u32 %v475, 7
        %v477 = vsub.s32 1, %v476
        %v478 = vrot.slane %v469, %v477
        %481 = vmatprep.subr.bf16.mxu0 %v454
        %482 = vmatpush1.bf16.msra.mxu0 %v453
        %483 = vmatprep.subr.bf16.mxu0 %v456
        %484 = vmatpush1.bf16.msra.mxu0 %v455
        %485 = vmatprep.subr.bf16.mxu0 %v458
        %486 = vmatpush1.bf16.msra.mxu0 %v457
        %487 = vmatprep.subr.bf16.mxu0 %v460
        %488 = vmatpush1.bf16.msra.mxu0 %v459
        %489 = vmatprep.subr.bf16.mxu0 %v462
        %490 = vmatpush1.bf16.msra.mxu0 %v461
        %491 = vmatprep.subr.bf16.mxu0 %v464
        %492 = vmatpush1.bf16.msra.mxu0 %v463
        %493 = vmatprep.subr.bf16.mxu0 %v466
        %494 = vmatpush1.bf16.msra.mxu0 %v465
        %495 = vmatprep.subr.bf16.mxu0 %v468
        %496 = vmatpush1.bf16.msra.mxu0 %v467
        %497 = vmatprep.subr.bf16.mxu0 0
        %498 = vmatpush1.bf16.msra.mxu0 0
        %499 = vmatprep.subr.bf16.mxu0 0
        %500 = vmatpush1.bf16.msra.mxu0 0
        %501 = vmatprep.subr.bf16.mxu0 0
        %502 = vmatpush1.bf16.msra.mxu0 0
        %503 = vmatprep.subr.bf16.mxu0 0
        %504 = vmatpush1.bf16.msra.mxu0 0
        %505 = vmatprep.subr.bf16.mxu0 0
        %506 = vmatpush1.bf16.msra.mxu0 0
        %507 = vmatprep.subr.bf16.mxu0 0
        %508 = vmatpush1.bf16.msra.mxu0 0
        %509 = vmatprep.subr.bf16.mxu0 0
        %510 = vmatpush1.bf16.msra.mxu0 0
        %511 = vmatprep.subr.bf16.mxu0 0
        %512 = vmatpush1.bf16.msra.mxu0 0
        %513 = vmatprep.mubr.bf16.mxu0 0
        %514 = vmatmul.mubr.bf16.gmra.mrb[0].mxu0 %v420
        %v515 = vpop.f32.mrb[0].mxu0
        %v516 = vadd.f32 %v474, %v515
        %v517 = vpop.f32.mrb[0].mxu0
        %v518 = vadd.f32 %v478, %v517
        %v519 = vpop.f32.mrb[0].mxu0
        %v520 = vadd.f32 %v474, %v519
        %v521 = vpop.f32.mrb[0].mxu0
        %v522 = vadd.f32 %v478, %v521
        %523 = vdwg.mxu0
        %v524 = vmax.f32 %v516, 0.0
        %v525 = vmax.f32 %v518, 0.0
        %v526 = vmax.f32 %v520, 0.0
        %v527 = vmax.f32 %v522, 0.0
        %vm532 = vcmask 1041408
        %v533 = vrot.slane %v524, 6
        %v534 = vrot.slane %v525, 6
        %v535 = vrot.slane %v526, 6
        %v536 = vsel %vm532, %v533, %v535
        %v537 = vrot.slane %v527, 6
        %v538 = vsel %vm532, %v534, %v537
        %v545 = vsel %vm532, 0.0, %v533
        %v546 = vsel %vm532, 0.0, %v534
        %v547 = vsel %vm532, %v535, 0.0
        %v548 = vsel %vm532, %v537, 0.0
        %v549 = vld [vmem:[%s3] sm:$0xff]
        %v550 = vld [vmem:[%s3 + $0x8] sm:$0xff]
        %v551 = vld [vmem:[%s3 + $0x10] sm:$0xff]
        %v552 = vld [vmem:[%s3 + $0x18] sm:$0xff]
        %v553 = vld [vmem:[%s3 + $0x20] sm:$0xff]
        %v554 = vld [vmem:[%s3 + $0x28] sm:$0xff]
        %v555 = vld [vmem:[%s3 + $0x30] sm:$0xff]
        %v556 = vld [vmem:[%s3 + $0x38] sm:$0xff]
        %v557 = vld [vmem:[%s3 + $0x40] sm:$0xff]
        %v558 = vld [vmem:[%s3 + $0x48] sm:$0xff]
        %v559 = vld [vmem:[%s3 + $0x50] sm:$0xff]
        %v560 = vld [vmem:[%s3 + $0x58] sm:$0xff]
        %v561 = vld [vmem:[%s3 + $0x60] sm:$0xff]
        %v562 = vld [vmem:[%s3 + $0x68] sm:$0xff]
        %v563 = vld [vmem:[%s3 + $0x70] sm:$0xff]
        %v564 = vld [vmem:[%s3 + $0x78] sm:$0xff]
        %v565 = vld [vmem:[%s3 + $0x80] sm:$0xff]
        %v566 = vld [vmem:[%s3 + $0x88] sm:$0xff]
        %v567 = vld [vmem:[%s3 + $0x90] sm:$0xff]
        %v568 = vld [vmem:[%s3 + $0x98] sm:$0xff]
        %v569 = vld [vmem:[%s3 + $0xa0] sm:$0xff]
        %v570 = vld [vmem:[%s3 + $0xa8] sm:$0xff]
        %v571 = vld [vmem:[%s3 + $0xb0] sm:$0xff]
        %v572 = vld [vmem:[%s3 + $0xb8] sm:$0xff]
        %v573 = vld [vmem:[%s3 + $0xc0] sm:$0xff]
        %v574 = vld [vmem:[%s3 + $0xc8] sm:$0xff]
        %v575 = vld [vmem:[%s3 + $0xd0] sm:$0xff]
        %v576 = vld [vmem:[%s3 + $0xd8] sm:$0xff]
        %v577 = vld [vmem:[%s3 + $0xe0] sm:$0xff]
        %v578 = vld [vmem:[%s3 + $0xe8] sm:$0xff]
        %v579 = vld [vmem:[%s3 + $0xf0] sm:$0xff]
        %v580 = vld [vmem:[%s3 + $0xf8] sm:$0xff]
        %v581 = vld [vmem:[%s3 + $0x100] sm:$0xff]
        %v582 = vld [vmem:[%s3 + $0x108] sm:$0xff]
        %v583 = vld [vmem:[%s3 + $0x110] sm:$0xff]
        %v584 = vld [vmem:[%s3 + $0x118] sm:$0xff]
        %v585 = vld [vmem:[%s3 + $0x120] sm:$0xff]
        %v586 = vld [vmem:[%s3 + $0x128] sm:$0xff]
        %v587 = vld [vmem:[%s3 + $0x130] sm:$0xff]
        %v588 = vld [vmem:[%s3 + $0x138] sm:$0xff]
        %v589 = vld [vmem:[%s3 + $0x140] sm:$0xff]
        %v590 = vld [vmem:[%s3 + $0x148] sm:$0xff]
        %v591 = vld [vmem:[%s3 + $0x150] sm:$0xff]
        %v592 = vld [vmem:[%s3 + $0x158] sm:$0xff]
        %v593 = vld [vmem:[%s3 + $0x160] sm:$0xff]
        %v594 = vld [vmem:[%s3 + $0x168] sm:$0xff]
        %v595 = vld [vmem:[%s3 + $0x170] sm:$0xff]
        %v596 = vld [vmem:[%s3 + $0x178] sm:$0xff]
        %v597 = vld [vmem:[%s3 + $0x180] sm:$0xff]
        %v598 = vld [vmem:[%s3 + $0x188] sm:$0xff]
        %v599 = vld [vmem:[%s3 + $0x190] sm:$0xff]
        %v600 = vld [vmem:[%s3 + $0x198] sm:$0xff]
        %v601 = vld [vmem:[%s3 + $0x1a0] sm:$0xff]
        %v602 = vld [vmem:[%s3 + $0x1a8] sm:$0xff]
        %v603 = vld [vmem:[%s3 + $0x1b0] sm:$0xff]
        %v604 = vld [vmem:[%s3 + $0x1b8] sm:$0xff]
        %v605 = vld [vmem:[%s3 + $0x1c0] sm:$0xff]
        %v606 = vld [vmem:[%s3 + $0x1c8] sm:$0xff]
        %v607 = vld [vmem:[%s3 + $0x1d0] sm:$0xff]
        %v608 = vld [vmem:[%s3 + $0x1d8] sm:$0xff]
        %v609 = vld [vmem:[%s3 + $0x1e0] sm:$0xff]
        %v610 = vld [vmem:[%s3 + $0x1e8] sm:$0xff]
        %v611 = vld [vmem:[%s3 + $0x1f0] sm:$0xff]
        %v612 = vld [vmem:[%s3 + $0x1f8] sm:$0xff]
        %v613 = vld [vmem:[%s3 + $0x200] sm:$0xff]
        %v614 = vld [vmem:[%s3 + $0x208] sm:$0xff]
        %v615 = vld [vmem:[%s3 + $0x210] sm:$0xff]
        %v616 = vld [vmem:[%s3 + $0x218] sm:$0xff]
        %v617 = vld [vmem:[%s3 + $0x220] sm:$0xff]
        %v618 = vld [vmem:[%s3 + $0x228] sm:$0xff]
        %v619 = vld [vmem:[%s3 + $0x230] sm:$0xff]
        %v620 = vld [vmem:[%s3 + $0x238] sm:$0xff]
        %v621 = vld [vmem:[%s3 + $0x240] sm:$0xff]
        %v622 = vld [vmem:[%s3 + $0x248] sm:$0xff]
        %v623 = vld [vmem:[%s3 + $0x250] sm:$0xff]
        %v624 = vld [vmem:[%s3 + $0x258] sm:$0xff]
        %v625 = vld [vmem:[%s3 + $0x260] sm:$0xff]
        %v626 = vld [vmem:[%s3 + $0x268] sm:$0xff]
        %v627 = vld [vmem:[%s3 + $0x270] sm:$0xff]
        %v628 = vld [vmem:[%s3 + $0x278] sm:$0xff]
        %v629 = vld [vmem:[%s3 + $0x280] sm:$0xff]
        %v630 = vld [vmem:[%s3 + $0x288] sm:$0xff]
        %v631 = vld [vmem:[%s3 + $0x290] sm:$0xff]
        %v632 = vld [vmem:[%s3 + $0x298] sm:$0xff]
        %v633 = vld [vmem:[%s3 + $0x2a0] sm:$0xff]
        %v634 = vld [vmem:[%s3 + $0x2a8] sm:$0xff]
        %v635 = vld [vmem:[%s3 + $0x2b0] sm:$0xff]
        %v636 = vld [vmem:[%s3 + $0x2b8] sm:$0xff]
        %v637 = vld [vmem:[%s3 + $0x2c0] sm:$0xff]
        %v638 = vld [vmem:[%s3 + $0x2c8] sm:$0xff]
        %v639 = vld [vmem:[%s3 + $0x2d0] sm:$0xff]
        %v640 = vld [vmem:[%s3 + $0x2d8] sm:$0xff]
        %v641 = vld [vmem:[%s3 + $0x2e0] sm:$0xff]
        %v642 = vld [vmem:[%s3 + $0x2e8] sm:$0xff]
        %v643 = vld [vmem:[%s3 + $0x2f0] sm:$0xff]
        %v644 = vld [vmem:[%s3 + $0x2f8] sm:$0xff]
        %v645 = vld [vmem:[%s3 + $0x300] sm:$0xff]
        %v646 = vld [vmem:[%s3 + $0x308] sm:$0xff]
        %v647 = vld [vmem:[%s3 + $0x310] sm:$0xff]
        %v648 = vld [vmem:[%s3 + $0x318] sm:$0xff]
        %v649 = vld [vmem:[%s3 + $0x320] sm:$0xff]
        %v650 = vld [vmem:[%s3 + $0x328] sm:$0xff]
        %v651 = vld [vmem:[%s3 + $0x330] sm:$0xff]
        %v652 = vld [vmem:[%s3 + $0x338] sm:$0xff]
        %v653 = vld [vmem:[%s3 + $0x340] sm:$0xff]
        %v654 = vld [vmem:[%s3 + $0x348] sm:$0xff]
        %v655 = vld [vmem:[%s3 + $0x350] sm:$0xff]
        %v656 = vld [vmem:[%s3 + $0x358] sm:$0xff]
        %v657 = vld [vmem:[%s3 + $0x360] sm:$0xff]
        %v658 = vld [vmem:[%s3 + $0x368] sm:$0xff]
        %v659 = vld [vmem:[%s3 + $0x370] sm:$0xff]
        %v660 = vld [vmem:[%s3 + $0x378] sm:$0xff]
        %v661 = vld [vmem:[%s3 + $0x380] sm:$0xff]
        %v662 = vld [vmem:[%s3 + $0x388] sm:$0xff]
        %v663 = vld [vmem:[%s3 + $0x390] sm:$0xff]
        %v664 = vld [vmem:[%s3 + $0x398] sm:$0xff]
        %v665 = vld [vmem:[%s3 + $0x3a0] sm:$0xff]
        %v666 = vld [vmem:[%s3 + $0x3a8] sm:$0xff]
        %v667 = vld [vmem:[%s3 + $0x3b0] sm:$0xff]
        %v668 = vld [vmem:[%s3 + $0x3b8] sm:$0xff]
        %v669 = vld [vmem:[%s3 + $0x3c0] sm:$0xff]
        %v670 = vld [vmem:[%s3 + $0x3c8] sm:$0xff]
        %v671 = vld [vmem:[%s3 + $0x3d0] sm:$0xff]
        %v672 = vld [vmem:[%s3 + $0x3d8] sm:$0xff]
        %v673 = vld [vmem:[%s3 + $0x3e0] sm:$0xff]
        %v674 = vld [vmem:[%s3 + $0x3e8] sm:$0xff]
        %v675 = vld [vmem:[%s3 + $0x3f0] sm:$0xff]
        %v676 = vld [vmem:[%s3 + $0x3f8] sm:$0xff]
        %v677 = vld [vmem:[%s3 + $0x400] sm:$0xff]
        %v678 = vld [vmem:[%s3 + $0x408] sm:$0xff]
        %v679 = vld [vmem:[%s3 + $0x410] sm:$0xff]
        %v680 = vld [vmem:[%s3 + $0x418] sm:$0xff]
        %v681 = vld [vmem:[%s3 + $0x420] sm:$0xff]
        %v682 = vld [vmem:[%s3 + $0x428] sm:$0xff]
        %v683 = vld [vmem:[%s3 + $0x430] sm:$0xff]
        %v684 = vld [vmem:[%s3 + $0x438] sm:$0xff]
        %v685 = vld [vmem:[%s3 + $0x440] sm:$0xff]
        %v686 = vld [vmem:[%s3 + $0x448] sm:$0xff]
        %v687 = vld [vmem:[%s3 + $0x450] sm:$0xff]
        %v688 = vld [vmem:[%s3 + $0x458] sm:$0xff]
        %v689 = vld [vmem:[%s3 + $0x460] sm:$0xff]
        %v690 = vld [vmem:[%s3 + $0x468] sm:$0xff]
        %v691 = vld [vmem:[%s3 + $0x470] sm:$0xff]
        %v692 = vld [vmem:[%s3 + $0x478] sm:$0xff]
        %v693 = vld [vmem:[%s3 + $0x480] sm:$0xff]
        %v694 = vld [vmem:[%s3 + $0x488] sm:$0xff]
        %v695 = vld [vmem:[%s3 + $0x490] sm:$0xff]
        %v696 = vld [vmem:[%s3 + $0x498] sm:$0xff]
        %v697 = vld [vmem:[%s3 + $0x4a0] sm:$0xff]
        %v698 = vld [vmem:[%s3 + $0x4a8] sm:$0xff]
        %v699 = vld [vmem:[%s3 + $0x4b0] sm:$0xff]
        %v700 = vld [vmem:[%s3 + $0x4b8] sm:$0xff]
        %v701 = vld [vmem:[%s3 + $0x4c0] sm:$0xff]
        %v702 = vld [vmem:[%s3 + $0x4c8] sm:$0xff]
        %v703 = vld [vmem:[%s3 + $0x4d0] sm:$0xff]
        %v704 = vld [vmem:[%s3 + $0x4d8] sm:$0xff]
        %v705 = vld [vmem:[%s3 + $0x4e0] sm:$0xff]
        %v706 = vld [vmem:[%s3 + $0x4e8] sm:$0xff]
        %v707 = vld [vmem:[%s3 + $0x4f0] sm:$0xff]
        %v708 = vld [vmem:[%s3 + $0x4f8] sm:$0xff]
        %v709 = vpack.c.bf16 %v550, %v549
        %v710 = vpack.c.bf16 %v552, %v551
        %v711 = vpack.c.bf16 %v554, %v553
        %v712 = vpack.c.bf16 %v556, %v555
        %v713 = vpack.c.bf16 %v558, %v557
        %v714 = vpack.c.bf16 %v560, %v559
        %v715 = vpack.c.bf16 %v562, %v561
        %v716 = vpack.c.bf16 %v564, %v563
        %v717 = vpack.c.bf16 %v566, %v565
        %v718 = vpack.c.bf16 %v568, %v567
        %v719 = vpack.c.bf16 %v570, %v569
        %v720 = vpack.c.bf16 %v572, %v571
        %v721 = vpack.c.bf16 %v574, %v573
        %v722 = vpack.c.bf16 %v576, %v575
        %v723 = vpack.c.bf16 %v578, %v577
        %v724 = vpack.c.bf16 %v580, %v579
        %v725 = vpack.c.bf16 %v582, %v581
        %v726 = vpack.c.bf16 %v584, %v583
        %v727 = vpack.c.bf16 %v586, %v585
        %v728 = vpack.c.bf16 %v588, %v587
        %v729 = vpack.c.bf16 %v590, %v589
        %v730 = vpack.c.bf16 %v592, %v591
        %v731 = vpack.c.bf16 %v594, %v593
        %v732 = vpack.c.bf16 %v596, %v595
        %v733 = vpack.c.bf16 %v598, %v597
        %v734 = vpack.c.bf16 %v600, %v599
        %v735 = vpack.c.bf16 %v602, %v601
        %v736 = vpack.c.bf16 %v604, %v603
        %v737 = vpack.c.bf16 %v606, %v605
        %v738 = vpack.c.bf16 %v608, %v607
        %v739 = vpack.c.bf16 %v610, %v609
        %v740 = vpack.c.bf16 %v612, %v611
        %v741 = vpack.c.bf16 %v614, %v613
        %v742 = vpack.c.bf16 %v616, %v615
        %v743 = vpack.c.bf16 %v618, %v617
        %v744 = vpack.c.bf16 %v620, %v619
        %v745 = vpack.c.bf16 %v622, %v621
        %v746 = vpack.c.bf16 %v624, %v623
        %v747 = vpack.c.bf16 %v626, %v625
        %v748 = vpack.c.bf16 %v628, %v627
        %v749 = vpack.c.bf16 %v630, %v629
        %v750 = vpack.c.bf16 %v632, %v631
        %v751 = vpack.c.bf16 %v634, %v633
        %v752 = vpack.c.bf16 %v636, %v635
        %v753 = vpack.c.bf16 %v638, %v637
        %v754 = vpack.c.bf16 %v640, %v639
        %v755 = vpack.c.bf16 %v642, %v641
        %v756 = vpack.c.bf16 %v644, %v643
        %v757 = vpack.c.bf16 %v646, %v645
        %v758 = vpack.c.bf16 %v648, %v647
        %v759 = vpack.c.bf16 %v650, %v649
        %v760 = vpack.c.bf16 %v652, %v651
        %v761 = vpack.c.bf16 %v654, %v653
        %v762 = vpack.c.bf16 %v656, %v655
        %v763 = vpack.c.bf16 %v658, %v657
        %v764 = vpack.c.bf16 %v660, %v659
        %v765 = vpack.c.bf16 %v662, %v661
        %v766 = vpack.c.bf16 %v664, %v663
        %v767 = vpack.c.bf16 %v666, %v665
        %v768 = vpack.c.bf16 %v668, %v667
        %v769 = vpack.c.bf16 %v670, %v669
        %v770 = vpack.c.bf16 %v672, %v671
        %v771 = vpack.c.bf16 %v674, %v673
        %v772 = vpack.c.bf16 %v676, %v675
        %v773 = vpack.c.bf16 %v678, %v677
        %v774 = vpack.c.bf16 %v680, %v679
        %v775 = vpack.c.bf16 %v682, %v681
        %v776 = vpack.c.bf16 %v684, %v683
        %v777 = vpack.c.bf16 %v686, %v685
        %v778 = vpack.c.bf16 %v688, %v687
        %v779 = vpack.c.bf16 %v690, %v689
        %v780 = vpack.c.bf16 %v692, %v691
        %v781 = vpack.c.bf16 %v694, %v693
        %v782 = vpack.c.bf16 %v696, %v695
        %v783 = vpack.c.bf16 %v698, %v697
        %v784 = vpack.c.bf16 %v700, %v699
        %v785 = vpack.c.bf16 %v702, %v701
        %v786 = vpack.c.bf16 %v704, %v703
        %v787 = vpack.c.bf16 %v706, %v705
        %v788 = vpack.c.bf16 %v708, %v707
        %v789 = vpack.c.bf16 %v536, %v545
        %v790 = vpack.c.bf16 %v538, %v546
        %v791 = vpack.c.bf16 %v547, %v547
        %v792 = vpack.c.bf16 %v548, %v548
        %vm793 = vsmask.f32 7424
        %v795 = vshrl.u32 %v789, 16
        %v797 = vshll.u32 %v789, 16
        %v799 = vrot.slane %v797, 1
        %v800 = vor.u32 %v795, %v799
        %v802 = vshll.u32 %v791, 16
        %v804 = vrot.slane %v802, 1
        %v805 = vsel %vm793, %v800, %v804
        %v807 = vshrl.u32 %v790, 16
        %v809 = vshll.u32 %v790, 16
        %v811 = vrot.slane %v809, 1
        %v812 = vor.u32 %v807, %v811
        %v814 = vshll.u32 %v792, 16
        %v816 = vrot.slane %v814, 1
        %v817 = vsel %vm793, %v812, %v816
        %820 = vmatprep.subr.bf16.mxu0 0
        %821 = vmatpush1.bf16.msra.mxu0 %v725
        %822 = vmatprep.subr.bf16.mxu0 0
        %823 = vmatpush1.bf16.msra.mxu0 %v726
        %824 = vmatprep.subr.bf16.mxu0 0
        %825 = vmatpush1.bf16.msra.mxu0 %v727
        %826 = vmatprep.subr.bf16.mxu0 0
        %827 = vmatpush1.bf16.msra.mxu0 %v728
        %828 = vmatprep.subr.bf16.mxu0 0
        %829 = vmatpush1.bf16.msra.mxu0 %v729
        %830 = vmatprep.subr.bf16.mxu0 0
        %831 = vmatpush1.bf16.msra.mxu0 %v730
        %832 = vmatprep.subr.bf16.mxu0 0
        %833 = vmatpush1.bf16.msra.mxu0 %v731
        %834 = vmatprep.subr.bf16.mxu0 0
        %835 = vmatpush1.bf16.msra.mxu0 %v732
        %836 = vmatprep.subr.bf16.mxu0 0
        %837 = vmatpush1.bf16.msra.mxu0 %v733
        %838 = vmatprep.subr.bf16.mxu0 0
        %839 = vmatpush1.bf16.msra.mxu0 %v734
        %840 = vmatprep.subr.bf16.mxu0 0
        %841 = vmatpush1.bf16.msra.mxu0 %v735
        %842 = vmatprep.subr.bf16.mxu0 0
        %843 = vmatpush1.bf16.msra.mxu0 %v736
        %844 = vmatprep.subr.bf16.mxu0 0
        %845 = vmatpush1.bf16.msra.mxu0 %v737
        %846 = vmatprep.subr.bf16.mxu0 0
        %847 = vmatpush1.bf16.msra.mxu0 %v738
        %848 = vmatprep.subr.bf16.mxu0 0
        %849 = vmatpush1.bf16.msra.mxu0 %v739
        %850 = vmatprep.subr.bf16.mxu0 0
        %851 = vmatpush1.bf16.msra.mxu0 %v740
        %852 = vmatprep.mubr.bf16.mxu0 %v817
        %853 = vmatmul.mubr.bf16.gmra.mrb[0].mxu0 %v805
        %v854 = vpop.f32.mrb[0].mxu0
        %v855 = vadd.f32 0.0, %v854
        %v856 = vpop.f32.mrb[0].mxu0
        %v857 = vpop.f32.mrb[0].mxu0
        %v858 = vadd.f32 0.0, %v857
        %v859 = vpop.f32.mrb[0].mxu0
        %860 = vdwg.mxu0
        %861 = vmatprep.subr.bf16.mxu0 0
        %862 = vmatpush1.bf16.msra.mxu0 %v709
        %863 = vmatprep.subr.bf16.mxu0 0
        %864 = vmatpush1.bf16.msra.mxu0 %v710
        %865 = vmatprep.subr.bf16.mxu0 0
        %866 = vmatpush1.bf16.msra.mxu0 %v711
        %867 = vmatprep.subr.bf16.mxu0 0
        %868 = vmatpush1.bf16.msra.mxu0 %v712
        %869 = vmatprep.subr.bf16.mxu0 0
        %870 = vmatpush1.bf16.msra.mxu0 %v713
        %871 = vmatprep.subr.bf16.mxu0 0
        %872 = vmatpush1.bf16.msra.mxu0 %v714
        %873 = vmatprep.subr.bf16.mxu0 0
        %874 = vmatpush1.bf16.msra.mxu0 %v715
        %875 = vmatprep.subr.bf16.mxu0 0
        %876 = vmatpush1.bf16.msra.mxu0 %v716
        %877 = vmatprep.subr.bf16.mxu0 0
        %878 = vmatpush1.bf16.msra.mxu0 %v717
        %879 = vmatprep.subr.bf16.mxu0 0
        %880 = vmatpush1.bf16.msra.mxu0 %v718
        %881 = vmatprep.subr.bf16.mxu0 0
        %882 = vmatpush1.bf16.msra.mxu0 %v719
        %883 = vmatprep.subr.bf16.mxu0 0
        %884 = vmatpush1.bf16.msra.mxu0 %v720
        %885 = vmatprep.subr.bf16.mxu0 0
        %886 = vmatpush1.bf16.msra.mxu0 %v721
        %887 = vmatprep.subr.bf16.mxu0 0
        %888 = vmatpush1.bf16.msra.mxu0 %v722
        %889 = vmatprep.subr.bf16.mxu0 0
        %890 = vmatpush1.bf16.msra.mxu0 %v723
        %891 = vmatprep.subr.bf16.mxu0 0
        %892 = vmatpush1.bf16.msra.mxu0 %v724
        %893 = vmatprep.mubr.bf16.mxu0 %v790
        %894 = vmatmul.mubr.bf16.gmra.mrb[0].mxu0 %v789
        %v895 = vpop.f32.mrb[0].mxu0
        %v896 = vadd.f32 %v855, %v895
        %v897 = vpop.f32.mrb[0].mxu0
        %v898 = vpop.f32.mrb[0].mxu0
        %v899 = vadd.f32 %v858, %v898
        %v900 = vpop.f32.mrb[0].mxu0
        %901 = vdwg.mxu0
        %vm906 = vcmask 1046528
        %v907 = vrot.slane %v789, 1
        %v908 = vrot.slane %v791, 1
        %v909 = vsel %vm906, %v907, %v908
        %v910 = vrot.slane %v790, 1
        %v911 = vrot.slane %v792, 1
        %v912 = vsel %vm906, %v910, %v911
        %915 = vmatprep.subr.bf16.mxu0 0
        %916 = vmatpush1.bf16.msra.mxu0 %v741
        %917 = vmatprep.subr.bf16.mxu0 0
        %918 = vmatpush1.bf16.msra.mxu0 %v742
        %919 = vmatprep.subr.bf16.mxu0 0
        %920 = vmatpush1.bf16.msra.mxu0 %v743
        %921 = vmatprep.subr.bf16.mxu0 0
        %922 = vmatpush1.bf16.msra.mxu0 %v744
        %923 = vmatprep.subr.bf16.mxu0 0
        %924 = vmatpush1.bf16.msra.mxu0 %v745
        %925 = vmatprep.subr.bf16.mxu0 0
        %926 = vmatpush1.bf16.msra.mxu0 %v746
        %927 = vmatprep.subr.bf16.mxu0 0
        %928 = vmatpush1.bf16.msra.mxu0 %v747
        %929 = vmatprep.subr.bf16.mxu0 0
        %930 = vmatpush1.bf16.msra.mxu0 %v748
        %931 = vmatprep.subr.bf16.mxu0 0
        %932 = vmatpush1.bf16.msra.mxu0 %v749
        %933 = vmatprep.subr.bf16.mxu0 0
        %934 = vmatpush1.bf16.msra.mxu0 %v750
        %935 = vmatprep.subr.bf16.mxu0 0
        %936 = vmatpush1.bf16.msra.mxu0 %v751
        %937 = vmatprep.subr.bf16.mxu0 0
        %938 = vmatpush1.bf16.msra.mxu0 %v752
        %939 = vmatprep.subr.bf16.mxu0 0
        %940 = vmatpush1.bf16.msra.mxu0 %v753
        %941 = vmatprep.subr.bf16.mxu0 0
        %942 = vmatpush1.bf16.msra.mxu0 %v754
        %943 = vmatprep.subr.bf16.mxu0 0
        %944 = vmatpush1.bf16.msra.mxu0 %v755
        %945 = vmatprep.subr.bf16.mxu0 0
        %946 = vmatpush1.bf16.msra.mxu0 %v756
        %947 = vmatprep.mubr.bf16.mxu0 %v912
        %948 = vmatmul.mubr.bf16.gmra.mrb[0].mxu0 %v909
        %v949 = vpop.f32.mrb[0].mxu0
        %v950 = vadd.f32 0.0, %v949
        %v951 = vpop.f32.mrb[0].mxu0
        %v952 = vpop.f32.mrb[0].mxu0
        %v953 = vadd.f32 0.0, %v952
        %v954 = vpop.f32.mrb[0].mxu0
        %955 = vdwg.mxu0
        %v956 = vadd.f32 %v896, %v950
        %v957 = vadd.f32 %v899, %v953
        %vm958 = vsmask.f32 6400
        %v959 = vrot.slane %v795, 1
        %v960 = vrot.slane %v797, 2
        %v961 = vor.u32 %v959, %v960
        %v962 = vshrl.u32 %v791, 16
        %v964 = vrot.slane %v962, 1
        %v965 = vrot.slane %v802, 2
        %v966 = vor.u32 %v964, %v965
        %v967 = vsel %vm958, %v961, %v966
        %v968 = vrot.slane %v807, 1
        %v969 = vrot.slane %v809, 2
        %v970 = vor.u32 %v968, %v969
        %v971 = vshrl.u32 %v792, 16
        %v973 = vrot.slane %v971, 1
        %v974 = vrot.slane %v814, 2
        %v975 = vor.u32 %v973, %v974
        %v976 = vsel %vm958, %v970, %v975
        %979 = vmatprep.subr.bf16.mxu0 0
        %980 = vmatpush1.bf16.msra.mxu0 %v757
        %981 = vmatprep.subr.bf16.mxu0 0
        %982 = vmatpush1.bf16.msra.mxu0 %v758
        %983 = vmatprep.subr.bf16.mxu0 0
        %984 = vmatpush1.bf16.msra.mxu0 %v759
        %985 = vmatprep.subr.bf16.mxu0 0
        %986 = vmatpush1.bf16.msra.mxu0 %v760
        %987 = vmatprep.subr.bf16.mxu0 0
        %988 = vmatpush1.bf16.msra.mxu0 %v761
        %989 = vmatprep.subr.bf16.mxu0 0
        %990 = vmatpush1.bf16.msra.mxu0 %v762
        %991 = vmatprep.subr.bf16.mxu0 0
        %992 = vmatpush1.bf16.msra.mxu0 %v763
        %993 = vmatprep.subr.bf16.mxu0 0
        %994 = vmatpush1.bf16.msra.mxu0 %v764
        %995 = vmatprep.subr.bf16.mxu0 0
        %996 = vmatpush1.bf16.msra.mxu0 %v765
        %997 = vmatprep.subr.bf16.mxu0 0
        %998 = vmatpush1.bf16.msra.mxu0 %v766
        %999 = vmatprep.subr.bf16.mxu0 0
        %1000 = vmatpush1.bf16.msra.mxu0 %v767
        %1001 = vmatprep.subr.bf16.mxu0 0
        %1002 = vmatpush1.bf16.msra.mxu0 %v768
        %1003 = vmatprep.subr.bf16.mxu0 0
        %1004 = vmatpush1.bf16.msra.mxu0 %v769
        %1005 = vmatprep.subr.bf16.mxu0 0
        %1006 = vmatpush1.bf16.msra.mxu0 %v770
        %1007 = vmatprep.subr.bf16.mxu0 0
        %1008 = vmatpush1.bf16.msra.mxu0 %v771
        %1009 = vmatprep.subr.bf16.mxu0 0
        %1010 = vmatpush1.bf16.msra.mxu0 %v772
        %1011 = vmatprep.mubr.bf16.mxu0 %v976
        %1012 = vmatmul.mubr.bf16.gmra.mrb[0].mxu0 %v967
        %v1013 = vpop.f32.mrb[0].mxu0
        %v1014 = vadd.f32 0.0, %v1013
        %v1015 = vpop.f32.mrb[0].mxu0
        %v1016 = vpop.f32.mrb[0].mxu0
        %v1017 = vadd.f32 0.0, %v1016
        %v1018 = vpop.f32.mrb[0].mxu0
        %1019 = vdwg.mxu0
        %v1020 = vadd.f32 %v956, %v1014
        %v1021 = vadd.f32 %v957, %v1017
        %vm1022 = vcmask 1045504
        %v1023 = vrot.slane %v789, 2
        %v1024 = vrot.slane %v791, 2
        %v1025 = vsel %vm1022, %v1023, %v1024
        %v1026 = vrot.slane %v790, 2
        %v1027 = vrot.slane %v792, 2
        %v1028 = vsel %vm1022, %v1026, %v1027
        %1031 = vmatprep.subr.bf16.mxu0 0
        %1032 = vmatpush1.bf16.msra.mxu0 %v773
        %1033 = vmatprep.subr.bf16.mxu0 0
        %1034 = vmatpush1.bf16.msra.mxu0 %v774
        %1035 = vmatprep.subr.bf16.mxu0 0
        %1036 = vmatpush1.bf16.msra.mxu0 %v775
        %1037 = vmatprep.subr.bf16.mxu0 0
        %1038 = vmatpush1.bf16.msra.mxu0 %v776
        %1039 = vmatprep.subr.bf16.mxu0 0
        %1040 = vmatpush1.bf16.msra.mxu0 %v777
        %1041 = vmatprep.subr.bf16.mxu0 0
        %1042 = vmatpush1.bf16.msra.mxu0 %v778
        %1043 = vmatprep.subr.bf16.mxu0 0
        %1044 = vmatpush1.bf16.msra.mxu0 %v779
        %1045 = vmatprep.subr.bf16.mxu0 0
        %1046 = vmatpush1.bf16.msra.mxu0 %v780
        %1047 = vmatprep.subr.bf16.mxu0 0
        %1048 = vmatpush1.bf16.msra.mxu0 %v781
        %1049 = vmatprep.subr.bf16.mxu0 0
        %1050 = vmatpush1.bf16.msra.mxu0 %v782
        %1051 = vmatprep.subr.bf16.mxu0 0
        %1052 = vmatpush1.bf16.msra.mxu0 %v783
        %1053 = vmatprep.subr.bf16.mxu0 0
        %1054 = vmatpush1.bf16.msra.mxu0 %v784
        %1055 = vmatprep.subr.bf16.mxu0 0
        %1056 = vmatpush1.bf16.msra.mxu0 %v785
        %1057 = vmatprep.subr.bf16.mxu0 0
        %1058 = vmatpush1.bf16.msra.mxu0 %v786
        %1059 = vmatprep.subr.bf16.mxu0 0
        %1060 = vmatpush1.bf16.msra.mxu0 %v787
        %1061 = vmatprep.subr.bf16.mxu0 0
        %1062 = vmatpush1.bf16.msra.mxu0 %v788
        %1063 = vmatprep.mubr.bf16.mxu0 %v1028
        %1064 = vmatmul.mubr.bf16.gmra.mrb[0].mxu0 %v1025
        %v1065 = vpop.f32.mrb[0].mxu0
        %v1066 = vadd.f32 0.0, %v1065
        %v1067 = vpop.f32.mrb[0].mxu0
        %v1068 = vpop.f32.mrb[0].mxu0
        %v1069 = vadd.f32 0.0, %v1068
        %v1070 = vpop.f32.mrb[0].mxu0
        %1071 = vdwg.mxu0
        %v1072 = vadd.f32 %v1020, %v1066
        %v1073 = vadd.f32 %v1021, %v1069
        %v1074 = vld [vmem:[%s4] sm:$0x1]
        %v1076 = vlaneseq
        %v1077 = vshrl.u32 %v1076, 7
        %v1078 = vsub.s32 0, %v1077
        %v1079 = vrot.slane %v1074, %v1078
        %v1081 = vadd.f32 %v1072, %v1079
        %v1082 = vadd.f32 %v1073, %v1079
        %v1083 = vmax.f32 %v1081, 0.0
        %v1084 = vmax.f32 %v1082, 0.0
        %v1085 = vadd.f32 %v418, %v1083
        %v1086 = vadd.f32 %v419, %v1084
        %v1087 = vld [vmem:[%s5] sm:$0x1]
        %v1088 = vld [vmem:[%s6] sm:$0x1]
        %1089 = vadd.xlane.f32.xlu0 %v1085
        %v1090 = vpop.xlane.xlu0 %1089
        %1091 = vadd.xlane.f32.xlu0 %v1086
        %v1092 = vpop.xlane.xlu0 %1091
        %v1093 = vrcp.pop 128.0
        %v1094 = vmul.f32 %v1090, %v1093
        %v1095 = vmul.f32 %v1092, %v1093
        %v1096 = vsub.f32 %v1085, %v1094
        %v1097 = vsub.f32 %v1086, %v1095
        %v1098 = vmul.f32 %v1096, %v1096
        %v1099 = vmul.f32 %v1097, %v1097
        %1100 = vadd.xlane.f32.xlu0 %v1098
        %v1101 = vpop.xlane.xlu0 %1100
        %1102 = vadd.xlane.f32.xlu0 %v1099
        %v1103 = vpop.xlane.xlu0 %1102
        %v1104 = vmul.f32 %v1101, %v1093
        %v1105 = vmul.f32 %v1103, %v1093
        %v1106 = vadd.f32 %v1104, 1e-05
        %v1107 = vadd.f32 %v1105, 1e-05
        %v1108 = vrsqrt.pop %v1106
        %v1109 = vrsqrt.pop %v1107
        %v1110 = vmul.f32 %v1096, %v1108
        %v1111 = vmul.f32 %v1097, %v1109
        %v1113 = vlaneseq
        %v1114 = vshrl.u32 %v1113, 7
        %v1115 = vsub.s32 0, %v1114
        %v1116 = vrot.slane %v1087, %v1115
        %v1118 = vmul.f32 %v1110, %v1116
        %v1119 = vmul.f32 %v1111, %v1116
        %v1121 = vlaneseq
        %v1122 = vshrl.u32 %v1121, 7
        %v1123 = vsub.s32 0, %v1122
        %v1124 = vrot.slane %v1088, %v1123
        %v1126 = vadd.f32 %v1118, %v1124
        %v1127 = vadd.f32 %v1119, %v1124
        %v1128 = vpack.c.bf16 %v1127, %v1126
        %v1129 = vld [vmem:[#allocation4] sm:$0xff]
        %v1130 = vld [vmem:[#allocation4 + $0x8] sm:$0xff]
        %v1131 = vld [vmem:[#allocation4 + $0x10] sm:$0xff]
        %v1132 = vld [vmem:[#allocation4 + $0x18] sm:$0xff]
        %v1133 = vld [vmem:[#allocation4 + $0x20] sm:$0xff]
        %v1134 = vld [vmem:[#allocation4 + $0x28] sm:$0xff]
        %v1135 = vld [vmem:[#allocation4 + $0x30] sm:$0xff]
        %v1136 = vld [vmem:[#allocation4 + $0x38] sm:$0xff]
        %v1137 = vld [vmem:[#allocation4 + $0x40] sm:$0xff]
        %v1138 = vld [vmem:[#allocation4 + $0x48] sm:$0xff]
        %v1139 = vld [vmem:[#allocation4 + $0x50] sm:$0xff]
        %v1140 = vld [vmem:[#allocation4 + $0x58] sm:$0xff]
        %v1141 = vld [vmem:[#allocation4 + $0x60] sm:$0xff]
        %v1142 = vld [vmem:[#allocation4 + $0x68] sm:$0xff]
        %v1143 = vld [vmem:[#allocation4 + $0x70] sm:$0xff]
        %v1144 = vld [vmem:[#allocation4 + $0x78] sm:$0xff]
        %v1145 = vld [vmem:[#allocation4 + $0x80] sm:$0xff]
        %v1146 = vld [vmem:[#allocation4 + $0x88] sm:$0xff]
        %v1147 = vld [vmem:[#allocation4 + $0x90] sm:$0xff]
        %v1148 = vld [vmem:[#allocation4 + $0x98] sm:$0xff]
        %v1149 = vld [vmem:[#allocation4 + $0xa0] sm:$0xff]
        %v1150 = vld [vmem:[#allocation4 + $0xa8] sm:$0xff]
        %v1151 = vld [vmem:[#allocation4 + $0xb0] sm:$0xff]
        %v1152 = vld [vmem:[#allocation4 + $0xb8] sm:$0xff]
        %v1153 = vld [vmem:[#allocation4 + $0xc0] sm:$0xff]
        %v1154 = vld [vmem:[#allocation4 + $0xc8] sm:$0xff]
        %v1155 = vld [vmem:[#allocation4 + $0xd0] sm:$0xff]
        %v1156 = vld [vmem:[#allocation4 + $0xd8] sm:$0xff]
        %v1157 = vld [vmem:[#allocation4 + $0xe0] sm:$0xff]
        %v1158 = vld [vmem:[#allocation4 + $0xe8] sm:$0xff]
        %v1159 = vld [vmem:[#allocation4 + $0xf0] sm:$0xff]
        %v1160 = vld [vmem:[#allocation4 + $0xf8] sm:$0xff]
        %v1161 = vld [vmem:[#allocation4 + $0x100] sm:$0xff]
        %v1162 = vld [vmem:[#allocation4 + $0x108] sm:$0xff]
        %v1163 = vld [vmem:[#allocation4 + $0x110] sm:$0xff]
        %v1164 = vld [vmem:[#allocation4 + $0x118] sm:$0xff]
        %v1165 = vld [vmem:[#allocation4 + $0x120] sm:$0xff]
        %v1166 = vld [vmem:[#allocation4 + $0x128] sm:$0xff]
        %v1167 = vld [vmem:[#allocation4 + $0x130] sm:$0xff]
        %v1168 = vld [vmem:[#allocation4 + $0x138] sm:$0xff]
        %v1169 = vld [vmem:[#allocation4 + $0x140] sm:$0xff]
        %v1170 = vld [vmem:[#allocation4 + $0x148] sm:$0xff]
        %v1171 = vld [vmem:[#allocation4 + $0x150] sm:$0xff]
        %v1172 = vld [vmem:[#allocation4 + $0x158] sm:$0xff]
        %v1173 = vld [vmem:[#allocation4 + $0x160] sm:$0xff]
        %v1174 = vld [vmem:[#allocation4 + $0x168] sm:$0xff]
        %v1175 = vld [vmem:[#allocation4 + $0x170] sm:$0xff]
        %v1176 = vld [vmem:[#allocation4 + $0x178] sm:$0xff]
        %v1177 = vld [vmem:[#allocation4 + $0x180] sm:$0xff]
        %v1178 = vld [vmem:[#allocation4 + $0x188] sm:$0xff]
        %v1179 = vld [vmem:[#allocation4 + $0x190] sm:$0xff]
        %v1180 = vld [vmem:[#allocation4 + $0x198] sm:$0xff]
        %v1181 = vld [vmem:[#allocation4 + $0x1a0] sm:$0xff]
        %v1182 = vld [vmem:[#allocation4 + $0x1a8] sm:$0xff]
        %v1183 = vld [vmem:[#allocation4 + $0x1b0] sm:$0xff]
        %v1184 = vld [vmem:[#allocation4 + $0x1b8] sm:$0xff]
        %v1185 = vld [vmem:[#allocation4 + $0x1c0] sm:$0xff]
        %v1186 = vld [vmem:[#allocation4 + $0x1c8] sm:$0xff]
        %v1187 = vld [vmem:[#allocation4 + $0x1d0] sm:$0xff]
        %v1188 = vld [vmem:[#allocation4 + $0x1d8] sm:$0xff]
        %v1189 = vld [vmem:[#allocation4 + $0x1e0] sm:$0xff]
        %v1190 = vld [vmem:[#allocation4 + $0x1e8] sm:$0xff]
        %v1191 = vld [vmem:[#allocation4 + $0x1f0] sm:$0xff]
        %v1192 = vld [vmem:[#allocation4 + $0x1f8] sm:$0xff]
        %v1193 = vpack.c.bf16 %v1133, %v1129
        %v1194 = vpack.c.bf16 %v1134, %v1130
        %v1195 = vpack.c.bf16 %v1135, %v1131
        %v1196 = vpack.c.bf16 %v1136, %v1132
        %v1197 = vpack.c.bf16 %v1141, %v1137
        %v1198 = vpack.c.bf16 %v1142, %v1138
        %v1199 = vpack.c.bf16 %v1143, %v1139
        %v1200 = vpack.c.bf16 %v1144, %v1140
        %v1201 = vpack.c.bf16 %v1149, %v1145
        %v1202 = vpack.c.bf16 %v1150, %v1146
        %v1203 = vpack.c.bf16 %v1151, %v1147
        %v1204 = vpack.c.bf16 %v1152, %v1148
        %v1205 = vpack.c.bf16 %v1157, %v1153
        %v1206 = vpack.c.bf16 %v1158, %v1154
        %v1207 = vpack.c.bf16 %v1159, %v1155
        %v1208 = vpack.c.bf16 %v1160, %v1156
        %v1209 = vpack.c.bf16 %v1165, %v1161
        %v1210 = vpack.c.bf16 %v1166, %v1162
        %v1211 = vpack.c.bf16 %v1167, %v1163
        %v1212 = vpack.c.bf16 %v1168, %v1164
        %v1213 = vpack.c.bf16 %v1173, %v1169
        %v1214 = vpack.c.bf16 %v1174, %v1170
        %v1215 = vpack.c.bf16 %v1175, %v1171
        %v1216 = vpack.c.bf16 %v1176, %v1172
        %v1217 = vpack.c.bf16 %v1181, %v1177
        %v1218 = vpack.c.bf16 %v1182, %v1178
        %v1219 = vpack.c.bf16 %v1183, %v1179
        %v1220 = vpack.c.bf16 %v1184, %v1180
        %v1221 = vpack.c.bf16 %v1189, %v1185
        %v1222 = vpack.c.bf16 %v1190, %v1186
        %v1223 = vpack.c.bf16 %v1191, %v1187
        %v1224 = vpack.c.bf16 %v1192, %v1188
        %v1225 = vld [vmem:[%s8] sm:$0xf]
        %v1227 = vlaneseq
        %v1228 = vshrl.u32 %v1227, 7
        %v1229 = vsub.s32 0, %v1228
        %v1230 = vrot.slane %v1225, %v1229
        %v1231 = vlaneseq
        %v1232 = vshrl.u32 %v1231, 7
        %v1233 = vsub.s32 1, %v1232
        %v1234 = vrot.slane %v1225, %v1233
        %v1235 = vlaneseq
        %v1236 = vshrl.u32 %v1235, 7
        %v1237 = vsub.s32 2, %v1236
        %v1238 = vrot.slane %v1225, %v1237
        %v1239 = vlaneseq
        %v1240 = vshrl.u32 %v1239, 7
        %v1241 = vsub.s32 3, %v1240
        %v1242 = vrot.slane %v1225, %v1241
        %1247 = vmatprep.subr.bf16.mxu0 %v1194
        %1248 = vmatpush1.bf16.msra.mxu0 %v1193
        %1249 = vmatprep.subr.bf16.mxu0 %v1198
        %1250 = vmatpush1.bf16.msra.mxu0 %v1197
        %1251 = vmatprep.subr.bf16.mxu0 %v1202
        %1252 = vmatpush1.bf16.msra.mxu0 %v1201
        %1253 = vmatprep.subr.bf16.mxu0 %v1206
        %1254 = vmatpush1.bf16.msra.mxu0 %v1205
        %1255 = vmatprep.subr.bf16.mxu0 %v1210
        %1256 = vmatpush1.bf16.msra.mxu0 %v1209
        %1257 = vmatprep.subr.bf16.mxu0 %v1214
        %1258 = vmatpush1.bf16.msra.mxu0 %v1213
        %1259 = vmatprep.subr.bf16.mxu0 %v1218
        %1260 = vmatpush1.bf16.msra.mxu0 %v1217
        %1261 = vmatprep.subr.bf16.mxu0 %v1222
        %1262 = vmatpush1.bf16.msra.mxu0 %v1221
        %1263 = vmatprep.subr.bf16.mxu0 0
        %1264 = vmatpush1.bf16.msra.mxu0 0
        %1265 = vmatprep.subr.bf16.mxu0 0
        %1266 = vmatpush1.bf16.msra.mxu0 0
        %1267 = vmatprep.subr.bf16.mxu0 0
        %1268 = vmatpush1.bf16.msra.mxu0 0
        %1269 = vmatprep.subr.bf16.mxu0 0
        %1270 = vmatpush1.bf16.msra.mxu0 0
        %1271 = vmatprep.subr.bf16.mxu0 0
        %1272 = vmatpush1.bf16.msra.mxu0 0
        %1273 = vmatprep.subr.bf16.mxu0 0
        %1274 = vmatpush1.bf16.msra.mxu0 0
        %1275 = vmatprep.subr.bf16.mxu0 0
        %1276 = vmatpush1.bf16.msra.mxu0 0
        %1277 = vmatprep.subr.bf16.mxu0 0
        %1278 = vmatpush1.bf16.msra.mxu0 0
        %1279 = vmatprep.mubr.bf16.mxu0 0
        %1280 = vmatmul.mubr.bf16.gmra.mrb[0].mxu0 %v1128
        %v1281 = vpop.f32.mrb[0].mxu0
        %v1282 = vadd.f32 %v1230, %v1281
        %v1283 = vpop.f32.mrb[0].mxu0
        %v1284 = vadd.f32 %v1234, %v1283
        %v1285 = vpop.f32.mrb[0].mxu0
        %v1286 = vadd.f32 %v1230, %v1285
        %v1287 = vpop.f32.mrb[0].mxu0
        %v1288 = vadd.f32 %v1234, %v1287
        %1289 = vdwg.mxu0
        %1290 = vmatprep.subr.bf16.mxu0 %v1196
        %1291 = vmatpush1.bf16.msra.mxu0 %v1195
        %1292 = vmatprep.subr.bf16.mxu0 %v1200
        %1293 = vmatpush1.bf16.msra.mxu0 %v1199
        %1294 = vmatprep.subr.bf16.mxu0 %v1204
        %1295 = vmatpush1.bf16.msra.mxu0 %v1203
        %1296 = vmatprep.subr.bf16.mxu0 %v1208
        %1297 = vmatpush1.bf16.msra.mxu0 %v1207
        %1298 = vmatprep.subr.bf16.mxu0 %v1212
        %1299 = vmatpush1.bf16.msra.mxu0 %v1211
        %1300 = vmatprep.subr.bf16.mxu0 %v1216
        %1301 = vmatpush1.bf16.msra.mxu0 %v1215
        %1302 = vmatprep.subr.bf16.mxu0 %v1220
        %1303 = vmatpush1.bf16.msra.mxu0 %v1219
        %1304 = vmatprep.subr.bf16.mxu0 %v1224
        %1305 = vmatpush1.bf16.msra.mxu0 %v1223
        %1306 = vmatprep.subr.bf16.mxu0 0
        %1307 = vmatpush1.bf16.msra.mxu0 0
        %1308 = vmatprep.subr.bf16.mxu0 0
        %1309 = vmatpush1.bf16.msra.mxu0 0
        %1310 = vmatprep.subr.bf16.mxu0 0
        %1311 = vmatpush1.bf16.msra.mxu0 0
        %1312 = vmatprep.subr.bf16.mxu0 0
        %1313 = vmatpush1.bf16.msra.mxu0 0
        %1314 = vmatprep.subr.bf16.mxu0 0
        %1315 = vmatpush1.bf16.msra.mxu0 0
        %1316 = vmatprep.subr.bf16.mxu0 0
        %1317 = vmatpush1.bf16.msra.mxu0 0
        %1318 = vmatprep.subr.bf16.mxu0 0
        %1319 = vmatpush1.bf16.msra.mxu0 0
        %1320 = vmatprep.subr.bf16.mxu0 0
        %1321 = vmatpush1.bf16.msra.mxu0 0
        %1322 = vmatprep.mubr.bf16.mxu0 0
        %1323 = vmatmul.mubr.bf16.gmra.mrb[0].mxu0 %v1128
        %v1324 = vpop.f32.mrb[0].mxu0
        %v1325 = vadd.f32 %v1238, %v1324
        %v1326 = vpop.f32.mrb[0].mxu0
        %v1327 = vadd.f32 %v1242, %v1326
        %v1328 = vpop.f32.mrb[0].mxu0
        %v1329 = vadd.f32 %v1238, %v1328
        %v1330 = vpop.f32.mrb[0].mxu0
        %v1331 = vadd.f32 %v1242, %v1330
        %1332 = vdwg.mxu0
        %v1333 = vmax.f32 %v1282, 0.0
        %v1334 = vmax.f32 %v1284, 0.0
        %v1335 = vmax.f32 %v1325, 0.0
        %v1336 = vmax.f32 %v1327, 0.0
        %v1337 = vmax.f32 %v1286, 0.0
        %v1338 = vmax.f32 %v1288, 0.0
        %v1339 = vmax.f32 %v1329, 0.0
        %v1340 = vmax.f32 %v1331, 0.0
        %v1341 = vpack.c.bf16 %v1337, %v1333
        %v1342 = vpack.c.bf16 %v1338, %v1334
        %v1343 = vpack.c.bf16 %v1339, %v1335
        %v1344 = vpack.c.bf16 %v1340, %v1336
        %v1345 = vld [vmem:[%s9] sm:$0xff]
        %v1346 = vld [vmem:[%s9 + $0x8] sm:$0xff]
        %v1347 = vld [vmem:[%s9 + $0x10] sm:$0xff]
        %v1348 = vld [vmem:[%s9 + $0x18] sm:$0xff]
        %v1349 = vld [vmem:[%s9 + $0x20] sm:$0xff]
        %v1350 = vld [vmem:[%s9 + $0x28] sm:$0xff]
        %v1351 = vld [vmem:[%s9 + $0x30] sm:$0xff]
        %v1352 = vld [vmem:[%s9 + $0x38] sm:$0xff]
        %v1353 = vld [vmem:[%s9 + $0x40] sm:$0xff]
        %v1354 = vld [vmem:[%s9 + $0x48] sm:$0xff]
        %v1355 = vld [vmem:[%s9 + $0x50] sm:$0xff]
        %v1356 = vld [vmem:[%s9 + $0x58] sm:$0xff]
        %v1357 = vld [vmem:[%s9 + $0x60] sm:$0xff]
        %v1358 = vld [vmem:[%s9 + $0x68] sm:$0xff]
        %v1359 = vld [vmem:[%s9 + $0x70] sm:$0xff]
        %v1360 = vld [vmem:[%s9 + $0x78] sm:$0xff]
        %v1361 = vld [vmem:[%s9 + $0x80] sm:$0xff]
        %v1362 = vld [vmem:[%s9 + $0x88] sm:$0xff]
        %v1363 = vld [vmem:[%s9 + $0x90] sm:$0xff]
        %v1364 = vld [vmem:[%s9 + $0x98] sm:$0xff]
        %v1365 = vld [vmem:[%s9 + $0xa0] sm:$0xff]
        %v1366 = vld [vmem:[%s9 + $0xa8] sm:$0xff]
        %v1367 = vld [vmem:[%s9 + $0xb0] sm:$0xff]
        %v1368 = vld [vmem:[%s9 + $0xb8] sm:$0xff]
        %v1369 = vld [vmem:[%s9 + $0xc0] sm:$0xff]
        %v1370 = vld [vmem:[%s9 + $0xc8] sm:$0xff]
        %v1371 = vld [vmem:[%s9 + $0xd0] sm:$0xff]
        %v1372 = vld [vmem:[%s9 + $0xd8] sm:$0xff]
        %v1373 = vld [vmem:[%s9 + $0xe0] sm:$0xff]
        %v1374 = vld [vmem:[%s9 + $0xe8] sm:$0xff]
        %v1375 = vld [vmem:[%s9 + $0xf0] sm:$0xff]
        %v1376 = vld [vmem:[%s9 + $0xf8] sm:$0xff]
        %v1377 = vld [vmem:[%s9 + $0x100] sm:$0xff]
        %v1378 = vld [vmem:[%s9 + $0x108] sm:$0xff]
        %v1379 = vld [vmem:[%s9 + $0x110] sm:$0xff]
        %v1380 = vld [vmem:[%s9 + $0x118] sm:$0xff]
        %v1381 = vld [vmem:[%s9 + $0x120] sm:$0xff]
        %v1382 = vld [vmem:[%s9 + $0x128] sm:$0xff]
        %v1383 = vld [vmem:[%s9 + $0x130] sm:$0xff]
        %v1384 = vld [vmem:[%s9 + $0x138] sm:$0xff]
        %v1385 = vld [vmem:[%s9 + $0x140] sm:$0xff]
        %v1386 = vld [vmem:[%s9 + $0x148] sm:$0xff]
        %v1387 = vld [vmem:[%s9 + $0x150] sm:$0xff]
        %v1388 = vld [vmem:[%s9 + $0x158] sm:$0xff]
        %v1389 = vld [vmem:[%s9 + $0x160] sm:$0xff]
        %v1390 = vld [vmem:[%s9 + $0x168] sm:$0xff]
        %v1391 = vld [vmem:[%s9 + $0x170] sm:$0xff]
        %v1392 = vld [vmem:[%s9 + $0x178] sm:$0xff]
        %v1393 = vld [vmem:[%s9 + $0x180] sm:$0xff]
        %v1394 = vld [vmem:[%s9 + $0x188] sm:$0xff]
        %v1395 = vld [vmem:[%s9 + $0x190] sm:$0xff]
        %v1396 = vld [vmem:[%s9 + $0x198] sm:$0xff]
        %v1397 = vld [vmem:[%s9 + $0x1a0] sm:$0xff]
        %v1398 = vld [vmem:[%s9 + $0x1a8] sm:$0xff]
        %v1399 = vld [vmem:[%s9 + $0x1b0] sm:$0xff]
        %v1400 = vld [vmem:[%s9 + $0x1b8] sm:$0xff]
        %v1401 = vld [vmem:[%s9 + $0x1c0] sm:$0xff]
        %v1402 = vld [vmem:[%s9 + $0x1c8] sm:$0xff]
        %v1403 = vld [vmem:[%s9 + $0x1d0] sm:$0xff]
        %v1404 = vld [vmem:[%s9 + $0x1d8] sm:$0xff]
        %v1405 = vld [vmem:[%s9 + $0x1e0] sm:$0xff]
        %v1406 = vld [vmem:[%s9 + $0x1e8] sm:$0xff]
        %v1407 = vld [vmem:[%s9 + $0x1f0] sm:$0xff]
        %v1408 = vld [vmem:[%s9 + $0x1f8] sm:$0xff]
        %v1409 = vpack.c.bf16 %v1346, %v1345
        %v1410 = vpack.c.bf16 %v1348, %v1347
        %v1411 = vpack.c.bf16 %v1350, %v1349
        %v1412 = vpack.c.bf16 %v1352, %v1351
        %v1413 = vpack.c.bf16 %v1354, %v1353
        %v1414 = vpack.c.bf16 %v1356, %v1355
        %v1415 = vpack.c.bf16 %v1358, %v1357
        %v1416 = vpack.c.bf16 %v1360, %v1359
        %v1417 = vpack.c.bf16 %v1362, %v1361
        %v1418 = vpack.c.bf16 %v1364, %v1363
        %v1419 = vpack.c.bf16 %v1366, %v1365
        %v1420 = vpack.c.bf16 %v1368, %v1367
        %v1421 = vpack.c.bf16 %v1370, %v1369
        %v1422 = vpack.c.bf16 %v1372, %v1371
        %v1423 = vpack.c.bf16 %v1374, %v1373
        %v1424 = vpack.c.bf16 %v1376, %v1375
        %v1425 = vpack.c.bf16 %v1378, %v1377
        %v1426 = vpack.c.bf16 %v1380, %v1379
        %v1427 = vpack.c.bf16 %v1382, %v1381
        %v1428 = vpack.c.bf16 %v1384, %v1383
        %v1429 = vpack.c.bf16 %v1386, %v1385
        %v1430 = vpack.c.bf16 %v1388, %v1387
        %v1431 = vpack.c.bf16 %v1390, %v1389
        %v1432 = vpack.c.bf16 %v1392, %v1391
        %v1433 = vpack.c.bf16 %v1394, %v1393
        %v1434 = vpack.c.bf16 %v1396, %v1395
        %v1435 = vpack.c.bf16 %v1398, %v1397
        %v1436 = vpack.c.bf16 %v1400, %v1399
        %v1437 = vpack.c.bf16 %v1402, %v1401
        %v1438 = vpack.c.bf16 %v1404, %v1403
        %v1439 = vpack.c.bf16 %v1406, %v1405
        %v1440 = vpack.c.bf16 %v1408, %v1407
        %1441 = vmatprep.subr.bf16.mxu0 0
        %1442 = vmatpush1.bf16.msra.mxu0 %v1409
        %1443 = vmatprep.subr.bf16.mxu0 0
        %1444 = vmatpush1.bf16.msra.mxu0 %v1410
        %1445 = vmatprep.subr.bf16.mxu0 0
        %1446 = vmatpush1.bf16.msra.mxu0 %v1411
        %1447 = vmatprep.subr.bf16.mxu0 0
        %1448 = vmatpush1.bf16.msra.mxu0 %v1412
        %1449 = vmatprep.subr.bf16.mxu0 0
        %1450 = vmatpush1.bf16.msra.mxu0 %v1413
        %1451 = vmatprep.subr.bf16.mxu0 0
        %1452 = vmatpush1.bf16.msra.mxu0 %v1414
        %1453 = vmatprep.subr.bf16.mxu0 0
        %1454 = vmatpush1.bf16.msra.mxu0 %v1415
        %1455 = vmatprep.subr.bf16.mxu0 0
        %1456 = vmatpush1.bf16.msra.mxu0 %v1416
        %1457 = vmatprep.subr.bf16.mxu0 0
        %1458 = vmatpush1.bf16.msra.mxu0 %v1417
        %1459 = vmatprep.subr.bf16.mxu0 0
        %1460 = vmatpush1.bf16.msra.mxu0 %v1418
        %1461 = vmatprep.subr.bf16.mxu0 0
        %1462 = vmatpush1.bf16.msra.mxu0 %v1419
        %1463 = vmatprep.subr.bf16.mxu0 0
        %1464 = vmatpush1.bf16.msra.mxu0 %v1420
        %1465 = vmatprep.subr.bf16.mxu0 0
        %1466 = vmatpush1.bf16.msra.mxu0 %v1421
        %1467 = vmatprep.subr.bf16.mxu0 0
        %1468 = vmatpush1.bf16.msra.mxu0 %v1422
        %1469 = vmatprep.subr.bf16.mxu0 0
        %1470 = vmatpush1.bf16.msra.mxu0 %v1423
        %1471 = vmatprep.subr.bf16.mxu0 0
        %1472 = vmatpush1.bf16.msra.mxu0 %v1424
        %1473 = vmatprep.mubr.bf16.mxu0 %v1342
        %1474 = vmatmul.mubr.bf16.gmra.mrb[0].mxu0 %v1341
        %v1475 = vpop.f32.mrb[0].mxu0
        %v1476 = vadd.f32 0.0, %v1475
        %v1477 = vpop.f32.mrb[0].mxu0
        %v1478 = vpop.f32.mrb[0].mxu0
        %v1479 = vadd.f32 0.0, %v1478
        %v1480 = vpop.f32.mrb[0].mxu0
        %1481 = vdwg.mxu0
        %1482 = vmatprep.subr.bf16.mxu0 0
        %1483 = vmatpush1.bf16.msra.mxu0 %v1425
        %1484 = vmatprep.subr.bf16.mxu0 0
        %1485 = vmatpush1.bf16.msra.mxu0 %v1426
        %1486 = vmatprep.subr.bf16.mxu0 0
        %1487 = vmatpush1.bf16.msra.mxu0 %v1427
        %1488 = vmatprep.subr.bf16.mxu0 0
        %1489 = vmatpush1.bf16.msra.mxu0 %v1428
        %1490 = vmatprep.subr.bf16.mxu0 0
        %1491 = vmatpush1.bf16.msra.mxu0 %v1429
        %1492 = vmatprep.subr.bf16.mxu0 0
        %1493 = vmatpush1.bf16.msra.mxu0 %v1430
        %1494 = vmatprep.subr.bf16.mxu0 0
        %1495 = vmatpush1.bf16.msra.mxu0 %v1431
        %1496 = vmatprep.subr.bf16.mxu0 0
        %1497 = vmatpush1.bf16.msra.mxu0 %v1432
        %1498 = vmatprep.subr.bf16.mxu0 0
        %1499 = vmatpush1.bf16.msra.mxu0 %v1433
        %1500 = vmatprep.subr.bf16.mxu0 0
        %1501 = vmatpush1.bf16.msra.mxu0 %v1434
        %1502 = vmatprep.subr.bf16.mxu0 0
        %1503 = vmatpush1.bf16.msra.mxu0 %v1435
        %1504 = vmatprep.subr.bf16.mxu0 0
        %1505 = vmatpush1.bf16.msra.mxu0 %v1436
        %1506 = vmatprep.subr.bf16.mxu0 0
        %1507 = vmatpush1.bf16.msra.mxu0 %v1437
        %1508 = vmatprep.subr.bf16.mxu0 0
        %1509 = vmatpush1.bf16.msra.mxu0 %v1438
        %1510 = vmatprep.subr.bf16.mxu0 0
        %1511 = vmatpush1.bf16.msra.mxu0 %v1439
        %1512 = vmatprep.subr.bf16.mxu0 0
        %1513 = vmatpush1.bf16.msra.mxu0 %v1440
        %1514 = vmatprep.mubr.bf16.mxu0 %v1344
        %1515 = vmatmul.mubr.bf16.gmra.mrb[0].mxu0 %v1343
        %v1516 = vpop.f32.mrb[0].mxu0
        %v1517 = vadd.f32 %v1476, %v1516
        %v1518 = vpop.f32.mrb[0].mxu0
        %v1519 = vpop.f32.mrb[0].mxu0
        %v1520 = vadd.f32 %v1479, %v1519
        %v1521 = vpop.f32.mrb[0].mxu0
        %1522 = vdwg.mxu0
        %v1523 = vadd.f32 %v1126, %v1517
        %v1524 = vadd.f32 %v1127, %v1520
        %v1525 = vld [vmem:[%s10] sm:$0x1]
        %v1527 = vlaneseq
        %v1528 = vshrl.u32 %v1527, 7
        %v1529 = vsub.s32 0, %v1528
        %v1530 = vrot.slane %v1525, %v1529
        %v1532 = vadd.f32 %v1523, %v1530
        %v1533 = vadd.f32 %v1524, %v1530
        %1534 = vst [vmem:[%s416] sm:$0xff] %v1532
        %1535 = vst [vmem:[%s416 + $0x8] sm:$0xff] %v1533
        %p1536 = scmp.lt.s32.totalorder %s24, 1
        %s1537 = scalar_select %p1536, %s24, 1
        %s1538 = smul.addr %s1537, 2
        %s1539 = smul.addr %s1538, 8
        %s1540 = scalar_lea.vmem %s11, %s1539
        // Predicated region
        $region73: #{_lambda_.14} parent=63 // pred_check
          %p1541 = pneg %p278
        $region74: #{_lambda_.14} parent=63 // pred_check_branch
          %1543 = sbr.rel (%p1541) target = $region76
        $region75: #{_lambda_.14} parent=63 // pred_region
          _
        $region76: #{_lambda_.14} parent=63 // pred_fallthru
          _
      $region64: #{_lambda_.14} parent=5 // pred_fallthru
        _
      %p1544 = scmp.le.s32.totalorder 2, %s19
      // Predicated region
      $region77: #{_lambda_.14} parent=5 // pred_check
        %p1545 = pneg %p1544
      $region78: #{_lambda_.14} parent=5 // pred_check_branch
        %1547 = sbr.rel (%p1545) target = $region80
      $region79: #{_lambda_.14} parent=5 // pred_region
        %s1548 = ssub.s32 %s19, 2
        // Predicated region
        $region81: #{_lambda_.14} parent=79 // pred_check
          %p1549 = pneg %p284
        $region82: #{_lambda_.14} parent=79 // pred_check_branch
          %1551 = sbr.rel (%p1549) target = $region84
        $region83: #{_lambda_.14} parent=79 // pred_region
          %p1552 = scmp.lt.s32.totalorder %s25, 1
          %s1553 = scalar_select %p1552, %s25, 1
          %s1554 = smul.addr %s1553, 2
          %s1555 = smul.addr %s1554, 8
          %s1556 = scalar_lea.vmem %s11, %s1555
        $region84: #{_lambda_.14} parent=79 // pred_fallthru
          _
      $region80: #{_lambda_.14} parent=5 // pred_fallthru
        _
    $region6: #{_lambda_.14} parent=1 // loop_footer
      %s23 = sadd.s32 1, %s19
    $region7: #{_lambda_.14} parent=1 // loop_footer_branch
      %18 = sbr.rel target = $region3
    $region8: #{_lambda_.14} parent=1 // loop_exit
      _
    %1557 = vsyncpa [#allocation3], 1
    %s1558 = scalar_lea.sflag [#allocation3], 1
    %1559 = vsyncpa %s1558, 1
    %1560 = vsyncpa [#allocation5], 1

// kernel: _lambda_.23
$region0: #{_lambda_.23}
  #allocation0 [shape = 'u32[]', space=smem, size = 0x4, offset = 0x4, fixed_abs, tag = 'smem constant byte address 0x4 - core index']
  #allocation1 [shape = 'u32[144,128]{1,0:T(1,128)}', space=vmem, size = 0x12000, scoped, tag = 'internal scratch']
  %s0 = inlined_call_operand.vmem [shape: f32[32,128], index: 0, kind: input, shape index: {}]
  %s1 = inlined_call_operand.vmem [shape: f32[1,128], index: 1, kind: input, shape index: {}]
  %s2 = inlined_call_operand.vmem [shape: f32[1,128], index: 2, kind: input, shape index: {}]
  %s3 = inlined_call_operand.vmem [shape: f32[128,128], index: 3, kind: input, shape index: {}]
  %s4 = inlined_call_operand.vmem [shape: f32[1,128], index: 4, kind: input, shape index: {}]
  %s5 = inlined_call_operand.vmem [shape: f32[32,128], index: 5, kind: output, shape index: {}]
  %s6 = sld [smem:[#allocation0]]
  $region30: #{_lambda_.23} parent=0
    _
  %s8 = ssub.s32 1, %s6
  %s9 = scalar_select 0, %s8, %s6
  // Predicated region
  $region2: #{_lambda_.23} parent=0 // pred_check
    _
  $region3: #{_lambda_.23} parent=0 // pred_check_branch
    %11 = sbr.rel (0) target = $region5
  $region4: #{_lambda_.23} parent=0 // pred_region
    _
  $region5: #{_lambda_.23} parent=0 // pred_fallthru
    _
  // Predicated region
  $region6: #{_lambda_.23} parent=0 // pred_check
    _
  $region7: #{_lambda_.23} parent=0 // pred_check_branch
    %13 = sbr.rel (0) target = $region9
  $region8: #{_lambda_.23} parent=0 // pred_region
    _
  $region9: #{_lambda_.23} parent=0 // pred_fallthru
    _
  // Predicated region
  $region10: #{_lambda_.23} parent=0 // pred_check
    _
  $region11: #{_lambda_.23} parent=0 // pred_check_branch
    %15 = sbr.rel (0) target = $region13
  $region12: #{_lambda_.23} parent=0 // pred_region
    _
  $region13: #{_lambda_.23} parent=0 // pred_fallthru
    _
  // Predicated region
  $region14: #{_lambda_.23} parent=0 // pred_check
    _
  $region15: #{_lambda_.23} parent=0 // pred_check_branch
    %17 = sbr.rel (0) target = $region17
  $region16: #{_lambda_.23} parent=0 // pred_region
    _
  $region17: #{_lambda_.23} parent=0 // pred_fallthru
    _
  // Predicated region
  $region18: #{_lambda_.23} parent=0 // pred_check
    _
  $region19: #{_lambda_.23} parent=0 // pred_check_branch
    %19 = sbr.rel (0) target = $region21
  $region20: #{_lambda_.23} parent=0 // pred_region
    _
  $region21: #{_lambda_.23} parent=0 // pred_fallthru
    _
  %v21 = vld [vmem:[%s0] sm:$0xff]
  %v22 = vld [vmem:[%s0 + $0x8] sm:$0xff]
  %v23 = vld [vmem:[%s0 + $0x10] sm:$0xff]
  %v24 = vld [vmem:[%s0 + $0x18] sm:$0xff]
  %v25 = vld [vmem:[%s1] sm:$0x1]
  %v26 = vld [vmem:[%s2] sm:$0x1]
  %27 = vadd.xlane.f32.xlu0 %v21
  %v28 = vpop.xlane.xlu0 %27
  %29 = vadd.xlane.f32.xlu0 %v22
  %v30 = vpop.xlane.xlu0 %29
  %31 = vadd.xlane.f32.xlu0 %v23
  %v32 = vpop.xlane.xlu0 %31
  %33 = vadd.xlane.f32.xlu0 %v24
  %v34 = vpop.xlane.xlu0 %33
  %v35 = vrcp.pop 128.0
  %v36 = vmul.f32 %v28, %v35
  %v37 = vmul.f32 %v30, %v35
  %v38 = vmul.f32 %v32, %v35
  %v39 = vmul.f32 %v34, %v35
  %v40 = vsub.f32 %v21, %v36
  %v41 = vsub.f32 %v22, %v37
  %v42 = vsub.f32 %v23, %v38
  %v43 = vsub.f32 %v24, %v39
  %v44 = vmul.f32 %v40, %v40
  %v45 = vmul.f32 %v41, %v41
  %v46 = vmul.f32 %v42, %v42
  %v47 = vmul.f32 %v43, %v43
  %48 = vadd.xlane.f32.xlu0 %v44
  %v49 = vpop.xlane.xlu0 %48
  %50 = vadd.xlane.f32.xlu0 %v45
  %v51 = vpop.xlane.xlu0 %50
  %52 = vadd.xlane.f32.xlu0 %v46
  %v53 = vpop.xlane.xlu0 %52
  %54 = vadd.xlane.f32.xlu0 %v47
  %v55 = vpop.xlane.xlu0 %54
  %v56 = vmul.f32 %v49, %v35
  %v57 = vmul.f32 %v51, %v35
  %v58 = vmul.f32 %v53, %v35
  %v59 = vmul.f32 %v55, %v35
  %v60 = vadd.f32 %v56, 1e-05
  %v61 = vadd.f32 %v57, 1e-05
  %v62 = vadd.f32 %v58, 1e-05
  %v63 = vadd.f32 %v59, 1e-05
  %v64 = vrsqrt.pop %v60
  %v65 = vrsqrt.pop %v61
  %v66 = vrsqrt.pop %v62
  %v67 = vrsqrt.pop %v63
  %v68 = vmul.f32 %v40, %v64
  %v69 = vmul.f32 %v41, %v65
  %v70 = vmul.f32 %v42, %v66
  %v71 = vmul.f32 %v43, %v67
  %v73 = vlaneseq
  %v74 = vshrl.u32 %v73, 7
  %v75 = vsub.s32 0, %v74
  %v76 = vrot.slane %v25, %v75
  %v78 = vmul.f32 %v68, %v76
  %v79 = vmul.f32 %v69, %v76
  %v80 = vmul.f32 %v70, %v76
  %v81 = vmul.f32 %v71, %v76
  %v83 = vlaneseq
  %v84 = vshrl.u32 %v83, 7
  %v85 = vsub.s32 0, %v84
  %v86 = vrot.slane %v26, %v85
  %v88 = vadd.f32 %v78, %v86
  %v89 = vadd.f32 %v79, %v86
  %v90 = vadd.f32 %v80, %v86
  %v91 = vadd.f32 %v81, %v86
  %v92 = vpack.c.bf16 %v89, %v88
  %v93 = vpack.c.bf16 %v91, %v90
  %v94 = vld [vmem:[%s3] sm:$0xff]
  %v95 = vld [vmem:[%s3 + $0x8] sm:$0xff]
  %v96 = vld [vmem:[%s3 + $0x10] sm:$0xff]
  %v97 = vld [vmem:[%s3 + $0x18] sm:$0xff]
  %v98 = vld [vmem:[%s3 + $0x20] sm:$0xff]
  %v99 = vld [vmem:[%s3 + $0x28] sm:$0xff]
  %v100 = vld [vmem:[%s3 + $0x30] sm:$0xff]
  %v101 = vld [vmem:[%s3 + $0x38] sm:$0xff]
  %v102 = vld [vmem:[%s3 + $0x40] sm:$0xff]
  %v103 = vld [vmem:[%s3 + $0x48] sm:$0xff]
  %v104 = vld [vmem:[%s3 + $0x50] sm:$0xff]
  %v105 = vld [vmem:[%s3 + $0x58] sm:$0xff]
  %v106 = vld [vmem:[%s3 + $0x60] sm:$0xff]
  %v107 = vld [vmem:[%s3 + $0x68] sm:$0xff]
  %v108 = vld [vmem:[%s3 + $0x70] sm:$0xff]
  %v109 = vld [vmem:[%s3 + $0x78] sm:$0xff]
  %v110 = vpack.c.bf16 %v95, %v94
  %v111 = vpack.c.bf16 %v97, %v96
  %v112 = vpack.c.bf16 %v99, %v98
  %v113 = vpack.c.bf16 %v101, %v100
  %v114 = vpack.c.bf16 %v103, %v102
  %v115 = vpack.c.bf16 %v105, %v104
  %v116 = vpack.c.bf16 %v107, %v106
  %v117 = vpack.c.bf16 %v109, %v108
  %v118 = vld [vmem:[%s4] sm:$0x1]
  %v120 = vlaneseq
  %v121 = vshrl.u32 %v120, 7
  %v122 = vsub.s32 0, %v121
  %v123 = vrot.slane %v118, %v122
  %125 = vmatprep.subr.bf16.mxu0 0
  %126 = vmatpush1.bf16.msra.mxu0 %v110
  %127 = vmatprep.subr.bf16.mxu0 0
  %128 = vmatpush1.bf16.msra.mxu0 %v111
  %129 = vmatprep.subr.bf16.mxu0 0
  %130 = vmatpush1.bf16.msra.mxu0 %v112
  %131 = vmatprep.subr.bf16.mxu0 0
  %132 = vmatpush1.bf16.msra.mxu0 %v113
  %133 = vmatprep.subr.bf16.mxu0 0
  %134 = vmatpush1.bf16.msra.mxu0 %v114
  %135 = vmatprep.subr.bf16.mxu0 0
  %136 = vmatpush1.bf16.msra.mxu0 %v115
  %137 = vmatprep.subr.bf16.mxu0 0
  %138 = vmatpush1.bf16.msra.mxu0 %v116
  %139 = vmatprep.subr.bf16.mxu0 0
  %140 = vmatpush1.bf16.msra.mxu0 %v117
  %141 = vmatprep.subr.bf16.mxu0 0
  %142 = vmatpush1.bf16.msra.mxu0 0
  %143 = vmatprep.subr.bf16.mxu0 0
  %144 = vmatpush1.bf16.msra.mxu0 0
  %145 = vmatprep.subr.bf16.mxu0 0
  %146 = vmatpush1.bf16.msra.mxu0 0
  %147 = vmatprep.subr.bf16.mxu0 0
  %148 = vmatpush1.bf16.msra.mxu0 0
  %149 = vmatprep.subr.bf16.mxu0 0
  %150 = vmatpush1.bf16.msra.mxu0 0
  %151 = vmatprep.subr.bf16.mxu0 0
  %152 = vmatpush1.bf16.msra.mxu0 0
  %153 = vmatprep.subr.bf16.mxu0 0
  %154 = vmatpush1.bf16.msra.mxu0 0
  %155 = vmatprep.subr.bf16.mxu0 0
  %156 = vmatpush1.bf16.msra.mxu0 0
  %157 = vmatprep.mubr.bf16.mxu0 0
  %158 = vmatmul.mubr.bf16.gmra.mrb[0].mxu0 %v92
  %v159 = vpop.f32.mrb[0].mxu0
  %v160 = vadd.f32 %v123, %v159
  %v161 = vpop.f32.mrb[0].mxu0
  %v162 = vpop.f32.mrb[0].mxu0
  %v163 = vadd.f32 %v123, %v162
  %v164 = vpop.f32.mrb[0].mxu0
  %165 = vmatprep.mubr.bf16.mxu0 0
  %166 = vmatmul.mubr.bf16.gmra.mrb[0].mxu0 %v93
  %v167 = vpop.f32.mrb[0].mxu0
  %v168 = vadd.f32 %v123, %v167
  %v169 = vpop.f32.mrb[0].mxu0
  %v170 = vpop.f32.mrb[0].mxu0
  %v171 = vadd.f32 %v123, %v170
  %v172 = vpop.f32.mrb[0].mxu0
  %173 = vdwg.mxu0
  %174 = vst [vmem:[%s5] sm:$0xff] %v160
  %175 = vst [vmem:[%s5 + $0x8] sm:$0xff] %v163
  %176 = vst [vmem:[%s5 + $0x10] sm:$0xff] %v168
  %177 = vst [vmem:[%s5 + $0x18] sm:$0xff] %v171
  // Predicated region
  $region22: #{_lambda_.23} parent=0 // pred_check
    _
  $region23: #{_lambda_.23} parent=0 // pred_check_branch
    %179 = sbr.rel (0) target = $region25
  $region24: #{_lambda_.23} parent=0 // pred_region
    _
  $region25: #{_lambda_.23} parent=0 // pred_fallthru
    _
  // Predicated region
  $region26: #{_lambda_.23} parent=0 // pred_check
    _
  $region27: #{_lambda_.23} parent=0 // pred_check_branch
    %181 = sbr.rel (0) target = $region29
  $region28: #{_lambda_.23} parent=0 // pred_region
    _
  $region29: #{_lambda_.23} parent=0 // pred_fallthru
    _

</llo_original>
